<compile_context>
chip_gen: v7x
topology: tpu7x:2x2x1
jax: 0.10.0
libtpu: 0.0.40
codegen_flags: <defaults>
</compile_context>

<pallas_src>
import math

import jax
import jax.numpy as jnp
from jax.experimental import pallas as pl
from jax.experimental.pallas import tpu as pltpu


def bottleneck_kernel(x_ref, w1_ref, s1_ref, b1_ref,
                      w2_ref, s2_ref, b2_ref,
                      w3_ref, s3_ref, b3_ref,
                      o_ref, pad_ref, acc_ref):
    """Fused Bottleneck forward for one batch block (grid iterates over batch blocks).

    x_ref   : (B, H, W, Cin)      input tile, NHWC, compute dtype (f32 or bf16)
    w1_ref  : (Cin, C1)           1x1 conv1 weight (IO)
    w2_ref  : (9*C1, C2)          3x3 conv2 weight, HWIO flattened row-major
    w3_ref  : (C2, Cout)          1x1 conv3 weight (IO)
    s*_ref/b*_ref : (1, C) f32    folded eval-mode BatchNorm scale / bias
    o_ref   : (B, H, W, Cout)     output tile (compute dtype)
    pad_ref : (B, H+2, W+2, C1)   VMEM scratch: zero-bordered y1 staging buffer
    acc_ref : (B*H*W, C2) f32     VMEM scratch: conv2 accumulator
    """
    B, H, W, Cin = x_ref.shape
    C1 = w1_ref.shape[1]
    C2 = w2_ref.shape[1]
    Cout = w3_ref.shape[1]
    cdt = x_ref.dtype
    M = B * H * W

    # ---- conv1 (1x1) + bn1 + relu: one MXU matmul over the whole block ----------
    y1 = jnp.dot(x_ref[...].reshape(M, Cin), w1_ref[...],
                 preferred_element_type=jnp.float32)
    y1 = jnp.maximum(y1 * s1_ref[...] + b1_ref[...], 0.0)            # (M, C1) f32

    # ---- stage y1 into the zero-bordered padded scratch -------------------------
    # The border is re-zeroed every grid step (cheap: ~2*(H+W) thin slabs), so
    # correctness never depends on scratch persistence when the "parallel" batch
    # axis is split across TensorCores on v7x.
    zr = jnp.zeros((B, 1, W + 2, C1), cdt)
    zc = jnp.zeros((B, H + 2, 1, C1), cdt)
    pad_ref[:, 0:1, :, :] = zr
    pad_ref[:, H + 1:H + 2, :, :] = zr
    pad_ref[:, :, 0:1, :] = zc
    pad_ref[:, :, W + 1:W + 2, :] = zc
    pad_ref[:, 1:H + 1, 1:W + 1, :] = y1.astype(cdt).reshape(B, H, W, C1)

    # ---- conv2 (3x3, pad=1, stride=1): 9 accumulating K=C1 matmuls --------------
    # LHS = shifted window of the padded scratch, RHS = one 3x3 tap of the weight.
    first = True
    for kh in range(3):
        for kw in range(3):
            tap = pad_ref[:, kh:kh + H, kw:kw + W, :].reshape(M, C1)
            w_tap = w2_ref[(kh * 3 + kw) * C1:(kh * 3 + kw + 1) * C1, :]
            part = jnp.dot(tap, w_tap, preferred_element_type=jnp.float32)
            if first:
                acc_ref[...] = part
                first = False
            else:
                acc_ref[...] += part
    y2 = jnp.maximum(acc_ref[...] * s2_ref[...] + b2_ref[...], 0.0)  # (M, C2) f32

    # ---- conv3 (1x1) + bn3 + residual add + relu (epilogue in f32) --------------
    y3 = jnp.dot(y2.astype(cdt), w3_ref[...], preferred_element_type=jnp.float32)
    y3 = y3 * s3_ref[...] + b3_ref[...]
    # Residual re-reads the VMEM-resident input tile (short live range).
    # NOTE: with bf16 compute the residual uses the bf16-cast input; this is a
    # small documented deviation from PyTorch's f32 residual (matched reference
    # does the same).
    res = x_ref[...].reshape(M, Cin).astype(jnp.float32)
    out = jnp.maximum(y3 + res, 0.0)                                  # (M, Cout) f32
    o_ref[...] = out.astype(o_ref.dtype).reshape(B, H, W, Cout)


def _vmem_budget_bytes():
    """Per-generation VMEM limit: ~40 MiB on v7x (64 MiB phys), ~80 MiB on v5e/v6e."""
    phys = 64 << 20
    try:
        phys = int(getattr(pltpu.get_tpu_info(), "vmem_capacity_bytes", phys))
    except Exception:
        pass
    return (80 << 20) if phys >= (128 << 20) else (40 << 20)


def _bytes_per_image(H, W, Cin, C1, C2, Cout, cdt_size):
    """Rough per-image VMEM footprint: double-buffered I/O tiles + scratch + live values."""
    rows = H * W
    tiles = 2 * rows * (Cin + Cout) * cdt_size                       # pipelined x & o
    scratch = (H + 2) * (W + 2) * C1 * cdt_size + rows * C2 * 4      # pad + acc
    values = rows * (C1 * (4 + cdt_size) + C2 * (4 + cdt_size)
                     + 2 * Cout * 4 + Cin * 4)                       # y1/y2/y3/out/res
    return tiles + scratch + values


def _choose_batch_block(n, H, W, Cin, C1, C2, Cout, cdt_size, vmem_budget):
    """Images per grid block.

    Prefer >=512 matmul rows with >=2 grid steps; else accept 256-row blocks to
    keep >=2 steps (pipelining + v7x dual-TC split); else the largest block that
    fits the per-generation VMEM budget.
    """
    per_img = _bytes_per_image(H, W, Cin, C1, C2, Cout, cdt_size)
    weight_bytes = 2 * cdt_size * (Cin * C1 + 9 * C1 * C2 + C2 * Cout)
    avail = max(int(vmem_budget * 0.75) - weight_bytes, per_img)
    rows = H * W
    cands = [d for d in range(1, n + 1) if n % d == 0 and d * per_img <= avail]
    if not cands:
        # TODO(synk): spatial (H) tiling with a 1-row halo for very large images.
        return 1
    for pred in (lambda d: d * rows >= 512 and n // d >= 2,
                 lambda d: d * rows >= 256 and n // d >= 2):
        sel = [d for d in cands if pred(d)]
        if sel:
            return min(sel)
    sel = [d for d in cands if n // d >= 2]
    if sel:
        return max(sel)
    return max(cands)


def bottleneck_forward(x, params, *, compute_dtype=jnp.bfloat16, data_format="NCHW"):
    """Runs the Pallas kernel.

    x: (N, Cin, H, W) for data_format="NCHW" (PyTorch layout) or (N, H, W, Cin)
       for "NHWC" (preferred: avoids two extra HBM passes for the transposes).
    compute_dtype: jnp.bfloat16 (default, throughput path on v5e/v6e/v7x) or
       jnp.float32. Accumulation, BN and the residual add stay f32 either way.
    """
    if data_format == "NCHW":
        # TODO(synk): keep activations NHWC end-to-end in a full network; these two
        # XLA transposes are an extra HBM read+write each (test-only convenience).
        x = jnp.transpose(x, (0, 2, 3, 1))
    N, H, W, Cin = x.shape
    C1 = params["w1"].shape[1]
    C2 = params["w2"].shape[3]
    Cout = params["w3"].shape[1]
    if Cin != Cout:
        raise NotImplementedError(
            "identity residual requires inplanes == planes*expansion "
            "(downsample=None); TODO(synk): downsample path not implemented")

    cdt = jnp.dtype(compute_dtype)
    xk = x.astype(cdt)
    w1 = params["w1"].astype(cdt)                          # (Cin, C1)
    w2 = params["w2"].reshape(9 * C1, C2).astype(cdt)      # HWIO -> (9*C1, C2)
    w3 = params["w3"].astype(cdt)                          # (C2, Cout)
    s1, b1 = params["s1"], params["b1"]                    # f32
    s2, b2 = params["s2"], params["b2"]
    s3, b3 = params["s3"], params["b3"]

    vmem_budget = _vmem_budget_bytes()
    b_blk = _choose_batch_block(N, H, W, Cin, C1, C2, Cout, cdt.itemsize, vmem_budget)
    grid = (N // b_blk,)

    # Loop-invariant weights/scales: constant-index BlockSpecs -> Pallas does not
    # re-issue their DMAs across grid steps.
    const2d = lambda shape: pl.BlockSpec(shape, lambda n: (0, 0))  # noqa: E731

    out = pl.pallas_call(
        bottleneck_kernel,
        out_shape=jax.ShapeDtypeStruct((N, H, W, Cout), cdt),
        grid_spec=pltpu.PrefetchScalarGridSpec(
            num_scalar_prefetch=0,
            grid=grid,
            in_specs=[
                pl.BlockSpec((b_blk, H, W, Cin), lambda n: (n, 0, 0, 0)),
                const2d((Cin, C1)),
                const2d((1, C1)),
                const2d((1, C1)),
                const2d((9 * C1, C2)),
                const2d((1, C2)),
                const2d((1, C2)),
                const2d((C2, Cout)),
                const2d((1, Cout)),
                const2d((1, Cout)),
            ],
            out_specs=pl.BlockSpec((b_blk, H, W, Cout), lambda n: (n, 0, 0, 0)),
            scratch_shapes=[
                pltpu.VMEM((b_blk, H + 2, W + 2, C1), cdt),
                pltpu.VMEM((b_blk * H * W, C2), jnp.float32),
            ],
        ),
        compiler_params=pltpu.CompilerParams(
            dimension_semantics=("parallel",),
            vmem_limit_bytes=int(vmem_budget)),
    )(xk, w1, s1, b1, w2, s2, b2, w3, s3, b3)

    if data_format == "NCHW":
        out = jnp.transpose(out, (0, 3, 1, 2))
    return out


def ref_forward(x_nchw, p, compute_dtype=jnp.float32):
    """Pure-JAX reference with the same eval-mode BN folding and compute dtype."""
    cdt = jnp.dtype(compute_dtype)
    x = jnp.transpose(x_nchw, (0, 2, 3, 1)).astype(cdt)
    xf = x.astype(jnp.float32)
    y = jnp.einsum("nhwc,cd->nhwd", x, p["w1"].astype(cdt),
                   preferred_element_type=jnp.float32)
    y = jnp.maximum(y * p["s1"] + p["b1"], 0.0)
    y = jax.lax.conv_general_dilated(
        y.astype(cdt), p["w2"].astype(cdt), window_strides=(1, 1), padding="SAME",
        dimension_numbers=("NHWC", "HWIO", "NHWC"),
        preferred_element_type=jnp.float32)
    y = jnp.maximum(y * p["s2"] + p["b2"], 0.0)
    y = jnp.einsum("nhwc,cd->nhwd", y.astype(cdt), p["w3"].astype(cdt),
                   preferred_element_type=jnp.float32)
    y = jnp.maximum(y * p["s3"] + p["b3"] + xf, 0.0)
    return jnp.transpose(y, (0, 3, 1, 2))


def make_params(key, inplanes, planes, base_width=64, cardinality=1,
                reduce_first=1, expansion=4, eps=1e-5):
    width = int(math.floor(planes * (base_width / 64)) * cardinality)
    first_planes = width // reduce_first
    outplanes = planes * expansion
    assert outplanes == inplanes, "default Bottleneck (downsample=None) needs in==out"

    keys = jax.random.split(key, 12)

    def bn_fold(kg, kb, km, kv, c):
        gamma = 1.0 + 0.1 * jax.random.normal(kg, (1, c), jnp.float32)
        beta = 0.1 * jax.random.normal(kb, (1, c), jnp.float32)
        mean = 0.05 * jax.random.normal(km, (1, c), jnp.float32)
        var = jnp.abs(jax.random.normal(kv, (1, c), jnp.float32)) + 0.5
        scale = gamma / jnp.sqrt(var + eps)
        bias = beta - mean * scale
        return scale, bias

    # conv weights: PyTorch OIHW -> our IO / HWIO, kaiming-ish scaling
    w1 = jax.random.normal(keys[0], (inplanes, first_planes), jnp.float32)
    w1 = w1 * (2.0 / inplanes) ** 0.5
    w2 = jax.random.normal(keys[1], (3, 3, first_planes, width), jnp.float32)
    w2 = w2 * (2.0 / (9 * first_planes)) ** 0.5
    w3 = jax.random.normal(keys[2], (width, outplanes), jnp.float32)
    w3 = w3 * (2.0 / width) ** 0.5

    s1, b1 = bn_fold(keys[3], keys[4], keys[5], keys[6], first_planes)
    s2, b2 = bn_fold(keys[7], keys[8], keys[9], keys[10], width)
    s3, b3 = bn_fold(keys[11], keys[3], keys[7], keys[0], outplanes)

    return dict(w1=w1, s1=s1, b1=b1, w2=w2, s2=s2, b2=b2,
                w3=w3, s3=s3, b3=b3)


if __name__ == "__main__":
    key = jax.random.PRNGKey(0)
    k_x, k_p = jax.random.split(key)

    # Bottleneck(inplanes=256, planes=64): width=64, outplanes=256 (ResNet-50 style).
    # Cin/Cout = 256 are lane-dense (multiples of 128); 2 grid steps of 256 rows each.
    N, inplanes, H, W = 2, 256, 16, 16
    planes = 64

    x = jax.random.normal(k_x, (N, inplanes, H, W), jnp.float32)
    params = make_params(k_p, inplanes, planes)

    # Strict correctness check: f32 compute path vs f32 reference.
    ref32 = jax.block_until_ready(ref_forward(x, params, jnp.float32))
    out32 = jax.block_until_ready(
        bottleneck_forward(x, params, compute_dtype=jnp.float32))
    assert out32.shape == (N, planes * 4, H, W)
    err32 = float(jnp.max(jnp.abs(out32 - ref32)))
    assert jnp.allclose(out32, ref32, rtol=1e-3, atol=1e-3), err32

    # Throughput path (default): bf16 operands, f32 accumulation, vs matched bf16 ref.
    refbf = jax.block_until_ready(ref_forward(x, params, jnp.bfloat16))
    outbf = jax.block_until_ready(
        bottleneck_forward(x, params, compute_dtype=jnp.bfloat16))
    errbf = float(jnp.max(jnp.abs(outbf.astype(jnp.float32) - refbf)))
    assert jnp.allclose(outbf.astype(jnp.float32), refbf, rtol=1e-2, atol=1e-2), errbf

    print("KERNEL_OK")
</pallas_src>

<mosaic_0001>
module attributes {stable_mosaic.version = 11 : i64} {
  func.func @bottleneck_kernel(%arg0: i32, %arg1: memref<1x16x16x256xf32, #tpu.memory_space<vmem>>, %arg2: memref<256x64xf32, #tpu.memory_space<vmem>>, %arg3: memref<1x64xf32, #tpu.memory_space<vmem>>, %arg4: memref<1x64xf32, #tpu.memory_space<vmem>>, %arg5: memref<576x64xf32, #tpu.memory_space<vmem>>, %arg6: memref<1x64xf32, #tpu.memory_space<vmem>>, %arg7: memref<1x64xf32, #tpu.memory_space<vmem>>, %arg8: memref<64x256xf32, #tpu.memory_space<vmem>>, %arg9: memref<1x256xf32, #tpu.memory_space<vmem>>, %arg10: memref<1x256xf32, #tpu.memory_space<vmem>>, %arg11: memref<1x16x16x256xf32, #tpu.memory_space<vmem>>, %arg12: memref<1x18x18x64xf32, #tpu.memory_space<vmem>>, %arg13: memref<256x64xf32, #tpu.memory_space<vmem>>) attributes {dimension_semantics = [#tpu.dimension_semantics<parallel>], iteration_bounds = array<i64: 2>, scalar_prefetch = 0 : i64, scratch_operands = 2 : i64, tpu.core_type = #tpu.core_type<tc>, window_params = [{transform_indices = @transform_0, window_bounds = array<i64: 1, 16, 16, 256>}, {pipeline_mode = #tpu.pipeline_mode<synchronous>, transform_indices = @transform_1, window_bounds = array<i64: 256, 64>}, {pipeline_mode = #tpu.pipeline_mode<synchronous>, transform_indices = @transform_2, window_bounds = array<i64: 1, 64>}, {pipeline_mode = #tpu.pipeline_mode<synchronous>, transform_indices = @transform_3, window_bounds = array<i64: 1, 64>}, {pipeline_mode = #tpu.pipeline_mode<synchronous>, transform_indices = @transform_4, window_bounds = array<i64: 576, 64>}, {pipeline_mode = #tpu.pipeline_mode<synchronous>, transform_indices = @transform_5, window_bounds = array<i64: 1, 64>}, {pipeline_mode = #tpu.pipeline_mode<synchronous>, transform_indices = @transform_6, window_bounds = array<i64: 1, 64>}, {pipeline_mode = #tpu.pipeline_mode<synchronous>, transform_indices = @transform_7, window_bounds = array<i64: 64, 256>}, {pipeline_mode = #tpu.pipeline_mode<synchronous>, transform_indices = @transform_8, window_bounds = array<i64: 1, 256>}, {pipeline_mode = #tpu.pipeline_mode<synchronous>, transform_indices = @transform_9, window_bounds = array<i64: 1, 256>}, {transform_indices = @transform_10, window_bounds = array<i64: 1, 16, 16, 256>}]} {
    %c0 = arith.constant 0 : index
    %c0_0 = arith.constant 0 : index
    %c0_1 = arith.constant 0 : index
    %c0_2 = arith.constant 0 : index
    %0 = vector.load %arg1[%c0, %c0_0, %c0_1, %c0_2] : memref<1x16x16x256xf32, #tpu.memory_space<vmem>>, vector<1x16x16x256xf32>
    %1 = vector.shape_cast %0 : vector<1x16x16x256xf32> to vector<256x256xf32>
    %c0_3 = arith.constant 0 : index
    %c0_4 = arith.constant 0 : index
    %2 = vector.load %arg2[%c0_3, %c0_4] : memref<256x64xf32, #tpu.memory_space<vmem>>, vector<256x64xf32>
    %cst = arith.constant dense<0.000000e+00> : vector<256x64xf32>
    %3 = tpu.matmul %1, %2, %cst {dimension_numbers = #tpu.dot_dimension_numbers<[1], [0], [0], [1], [0, 0, 1, 1], [], []>} : vector<256x256xf32>, vector<256x64xf32>, vector<256x64xf32> -> vector<256x64xf32>
    %c0_5 = arith.constant 0 : index
    %c0_6 = arith.constant 0 : index
    %4 = vector.load %arg3[%c0_5, %c0_6] : memref<1x64xf32, #tpu.memory_space<vmem>>, vector<1x64xf32>
    %5 = vector.broadcast %4 : vector<1x64xf32> to vector<256x64xf32>
    %6 = arith.mulf %3, %5 : vector<256x64xf32>
    %c0_7 = arith.constant 0 : index
    %c0_8 = arith.constant 0 : index
    %7 = vector.load %arg4[%c0_7, %c0_8] : memref<1x64xf32, #tpu.memory_space<vmem>>, vector<1x64xf32>
    %8 = vector.broadcast %7 : vector<1x64xf32> to vector<256x64xf32>
    %9 = arith.addf %6, %8 : vector<256x64xf32>
    %cst_9 = arith.constant 0.000000e+00 : f32
    %10 = vector.broadcast %cst_9 : f32 to vector<256x64xf32>
    %11 = arith.maximumf %9, %10 : vector<256x64xf32>
    %cst_10 = arith.constant 0.000000e+00 : f32
    %12 = vector.broadcast %cst_10 : f32 to vector<1x1x18x64xf32>
    %cst_11 = arith.constant 0.000000e+00 : f32
    %13 = vector.broadcast %cst_11 : f32 to vector<1x18x1x64xf32>
    %c0_12 = arith.constant 0 : index
    %c0_13 = arith.constant 0 : index
    %c0_14 = arith.constant 0 : index
    %c0_15 = arith.constant 0 : index
    %14 = vector.load %arg12[%c0_12, %c0_13, %c0_14, %c0_15] : memref<1x18x18x64xf32, #tpu.memory_space<vmem>>, vector<1x1x18x64xf32>
    tpu.vector_store %arg12[%c0_12, %c0_13, %c0_14, %c0_15], %12 {strides = array<i32>} : memref<1x18x18x64xf32, #tpu.memory_space<vmem>>, vector<1x1x18x64xf32>,
    %c0_16 = arith.constant 0 : index
    %c17 = arith.constant 17 : index
    %c0_17 = arith.constant 0 : index
    %c0_18 = arith.constant 0 : index
    %15 = vector.load %arg12[%c0_16, %c17, %c0_17, %c0_18] : memref<1x18x18x64xf32, #tpu.memory_space<vmem>>, vector<1x1x18x64xf32>
    tpu.vector_store %arg12[%c0_16, %c17, %c0_17, %c0_18], %12 {strides = array<i32>} : memref<1x18x18x64xf32, #tpu.memory_space<vmem>>, vector<1x1x18x64xf32>,
    %c0_19 = arith.constant 0 : index
    %c0_20 = arith.constant 0 : index
    %c0_21 = arith.constant 0 : index
    %c0_22 = arith.constant 0 : index
    %16 = vector.load %arg12[%c0_19, %c0_20, %c0_21, %c0_22] : memref<1x18x18x64xf32, #tpu.memory_space<vmem>>, vector<1x18x1x64xf32>
    tpu.vector_store %arg12[%c0_19, %c0_20, %c0_21, %c0_22], %13 {strides = array<i32>} : memref<1x18x18x64xf32, #tpu.memory_space<vmem>>, vector<1x18x1x64xf32>,
    %c0_23 = arith.constant 0 : index
    %c0_24 = arith.constant 0 : index
    %c17_25 = arith.constant 17 : index
    %c0_26 = arith.constant 0 : index
    %17 = vector.load %arg12[%c0_23, %c0_24, %c17_25, %c0_26] : memref<1x18x18x64xf32, #tpu.memory_space<vmem>>, vector<1x18x1x64xf32>
    tpu.vector_store %arg12[%c0_23, %c0_24, %c17_25, %c0_26], %13 {strides = array<i32>} : memref<1x18x18x64xf32, #tpu.memory_space<vmem>>, vector<1x18x1x64xf32>,
    %18 = vector.shape_cast %11 : vector<256x64xf32> to vector<1x16x16x64xf32>
    %c0_27 = arith.constant 0 : index
    %c1 = arith.constant 1 : index
    %c1_28 = arith.constant 1 : index
    %c0_29 = arith.constant 0 : index
    %19 = vector.load %arg12[%c0_27, %c1, %c1_28, %c0_29] : memref<1x18x18x64xf32, #tpu.memory_space<vmem>>, vector<1x16x16x64xf32>
    tpu.vector_store %arg12[%c0_27, %c1, %c1_28, %c0_29], %18 {strides = array<i32>} : memref<1x18x18x64xf32, #tpu.memory_space<vmem>>, vector<1x16x16x64xf32>,
    %c0_30 = arith.constant 0 : index
    %c0_31 = arith.constant 0 : index
    %c0_32 = arith.constant 0 : index
    %c0_33 = arith.constant 0 : index
    %20 = vector.load %arg12[%c0_30, %c0_31, %c0_32, %c0_33] : memref<1x18x18x64xf32, #tpu.memory_space<vmem>>, vector<1x16x16x64xf32>
    %21 = vector.shape_cast %20 : vector<1x16x16x64xf32> to vector<256x64xf32>
    %c0_34 = arith.constant 0 : index
    %c0_35 = arith.constant 0 : index
    %22 = vector.load %arg5[%c0_34, %c0_35] : memref<576x64xf32, #tpu.memory_space<vmem>>, vector<64x64xf32>
    %cst_36 = arith.constant dense<0.000000e+00> : vector<256x64xf32>
    %23 = tpu.matmul %21, %22, %cst_36 {dimension_numbers = #tpu.dot_dimension_numbers<[1], [0], [0], [1], [0, 0, 1, 1], [], []>} : vector<256x64xf32>, vector<64x64xf32>, vector<256x64xf32> -> vector<256x64xf32>
    %c0_37 = arith.constant 0 : index
    %c0_38 = arith.constant 0 : index
    %24 = vector.load %arg13[%c0_37, %c0_38] : memref<256x64xf32, #tpu.memory_space<vmem>>, vector<256x64xf32>
    tpu.vector_store %arg13[%c0_37, %c0_38], %23 {strides = array<i32>} : memref<256x64xf32, #tpu.memory_space<vmem>>, vector<256x64xf32>,
    %c0_39 = arith.constant 0 : index
    %c0_40 = arith.constant 0 : index
    %c1_41 = arith.constant 1 : index
    %c0_42 = arith.constant 0 : index
    %25 = vector.load %arg12[%c0_39, %c0_40, %c1_41, %c0_42] : memref<1x18x18x64xf32, #tpu.memory_space<vmem>>, vector<1x16x16x64xf32>
    %26 = vector.shape_cast %25 : vector<1x16x16x64xf32> to vector<256x64xf32>
    %c64 = arith.constant 64 : index
    %c0_43 = arith.constant 0 : index
    %27 = vector.load %arg5[%c64, %c0_43] : memref<576x64xf32, #tpu.memory_space<vmem>>, vector<64x64xf32>
    %cst_44 = arith.constant dense<0.000000e+00> : vector<256x64xf32>
    %28 = tpu.matmul %26, %27, %cst_44 {dimension_numbers = #tpu.dot_dimension_numbers<[1], [0], [0], [1], [0, 0, 1, 1], [], []>} : vector<256x64xf32>, vector<64x64xf32>, vector<256x64xf32> -> vector<256x64xf32>
    %c0_45 = arith.constant 0 : index
    %c0_46 = arith.constant 0 : index
    %29 = vector.load %arg13[%c0_45, %c0_46] : memref<256x64xf32, #tpu.memory_space<vmem>>, vector<256x64xf32>
    %30 = arith.addf %29, %28 : vector<256x64xf32>
    %c0_47 = arith.constant 0 : index
    %c0_48 = arith.constant 0 : index
    %31 = vector.load %arg13[%c0_47, %c0_48] : memref<256x64xf32, #tpu.memory_space<vmem>>, vector<256x64xf32>
    tpu.vector_store %arg13[%c0_47, %c0_48], %30 {strides = array<i32>} : memref<256x64xf32, #tpu.memory_space<vmem>>, vector<256x64xf32>,
    %c0_49 = arith.constant 0 : index
    %c0_50 = arith.constant 0 : index
    %c2 = arith.constant 2 : index
    %c0_51 = arith.constant 0 : index
    %32 = vector.load %arg12[%c0_49, %c0_50, %c2, %c0_51] : memref<1x18x18x64xf32, #tpu.memory_space<vmem>>, vector<1x16x16x64xf32>
    %33 = vector.shape_cast %32 : vector<1x16x16x64xf32> to vector<256x64xf32>
    %c128 = arith.constant 128 : index
    %c0_52 = arith.constant 0 : index
    %34 = vector.load %arg5[%c128, %c0_52] : memref<576x64xf32, #tpu.memory_space<vmem>>, vector<64x64xf32>
    %cst_53 = arith.constant dense<0.000000e+00> : vector<256x64xf32>
    %35 = tpu.matmul %33, %34, %cst_53 {dimension_numbers = #tpu.dot_dimension_numbers<[1], [0], [0], [1], [0, 0, 1, 1], [], []>} : vector<256x64xf32>, vector<64x64xf32>, vector<256x64xf32> -> vector<256x64xf32>
    %c0_54 = arith.constant 0 : index
    %c0_55 = arith.constant 0 : index
    %36 = vector.load %arg13[%c0_54, %c0_55] : memref<256x64xf32, #tpu.memory_space<vmem>>, vector<256x64xf32>
    %37 = arith.addf %36, %35 : vector<256x64xf32>
    %c0_56 = arith.constant 0 : index
    %c0_57 = arith.constant 0 : index
    %38 = vector.load %arg13[%c0_56, %c0_57] : memref<256x64xf32, #tpu.memory_space<vmem>>, vector<256x64xf32>
    tpu.vector_store %arg13[%c0_56, %c0_57], %37 {strides = array<i32>} : memref<256x64xf32, #tpu.memory_space<vmem>>, vector<256x64xf32>,
    %c0_58 = arith.constant 0 : index
    %c1_59 = arith.constant 1 : index
    %c0_60 = arith.constant 0 : index
    %c0_61 = arith.constant 0 : index
    %39 = vector.load %arg12[%c0_58, %c1_59, %c0_60, %c0_61] : memref<1x18x18x64xf32, #tpu.memory_space<vmem>>, vector<1x16x16x64xf32>
    %40 = vector.shape_cast %39 : vector<1x16x16x64xf32> to vector<256x64xf32>
    %c192 = arith.constant 192 : index
    %c0_62 = arith.constant 0 : index
    %41 = vector.load %arg5[%c192, %c0_62] : memref<576x64xf32, #tpu.memory_space<vmem>>, vector<64x64xf32>
    %cst_63 = arith.constant dense<0.000000e+00> : vector<256x64xf32>
    %42 = tpu.matmul %40, %41, %cst_63 {dimension_numbers = #tpu.dot_dimension_numbers<[1], [0], [0], [1], [0, 0, 1, 1], [], []>} : vector<256x64xf32>, vector<64x64xf32>, vector<256x64xf32> -> vector<256x64xf32>
    %c0_64 = arith.constant 0 : index
    %c0_65 = arith.constant 0 : index
    %43 = vector.load %arg13[%c0_64, %c0_65] : memref<256x64xf32, #tpu.memory_space<vmem>>, vector<256x64xf32>
    %44 = arith.addf %43, %42 : vector<256x64xf32>
    %c0_66 = arith.constant 0 : index
    %c0_67 = arith.constant 0 : index
    %45 = vector.load %arg13[%c0_66, %c0_67] : memref<256x64xf32, #tpu.memory_space<vmem>>, vector<256x64xf32>
    tpu.vector_store %arg13[%c0_66, %c0_67], %44 {strides = array<i32>} : memref<256x64xf32, #tpu.memory_space<vmem>>, vector<256x64xf32>,
    %c0_68 = arith.constant 0 : index
    %c1_69 = arith.constant 1 : index
    %c1_70 = arith.constant 1 : index
    %c0_71 = arith.constant 0 : index
    %46 = vector.load %arg12[%c0_68, %c1_69, %c1_70, %c0_71] : memref<1x18x18x64xf32, #tpu.memory_space<vmem>>, vector<1x16x16x64xf32>
    %47 = vector.shape_cast %46 : vector<1x16x16x64xf32> to vector<256x64xf32>
    %c256 = arith.constant 256 : index
    %c0_72 = arith.constant 0 : index
    %48 = vector.load %arg5[%c256, %c0_72] : memref<576x64xf32, #tpu.memory_space<vmem>>, vector<64x64xf32>
    %cst_73 = arith.constant dense<0.000000e+00> : vector<256x64xf32>
    %49 = tpu.matmul %47, %48, %cst_73 {dimension_numbers = #tpu.dot_dimension_numbers<[1], [0], [0], [1], [0, 0, 1, 1], [], []>} : vector<256x64xf32>, vector<64x64xf32>, vector<256x64xf32> -> vector<256x64xf32>
    %c0_74 = arith.constant 0 : index
    %c0_75 = arith.constant 0 : index
    %50 = vector.load %arg13[%c0_74, %c0_75] : memref<256x64xf32, #tpu.memory_space<vmem>>, vector<256x64xf32>
    %51 = arith.addf %50, %49 : vector<256x64xf32>
    %c0_76 = arith.constant 0 : index
    %c0_77 = arith.constant 0 : index
    %52 = vector.load %arg13[%c0_76, %c0_77] : memref<256x64xf32, #tpu.memory_space<vmem>>, vector<256x64xf32>
    tpu.vector_store %arg13[%c0_76, %c0_77], %51 {strides = array<i32>} : memref<256x64xf32, #tpu.memory_space<vmem>>, vector<256x64xf32>,
    %c0_78 = arith.constant 0 : index
    %c1_79 = arith.constant 1 : index
    %c2_80 = arith.constant 2 : index
    %c0_81 = arith.constant 0 : index
    %53 = vector.load %arg12[%c0_78, %c1_79, %c2_80, %c0_81] : memref<1x18x18x64xf32, #tpu.memory_space<vmem>>, vector<1x16x16x64xf32>
    %54 = vector.shape_cast %53 : vector<1x16x16x64xf32> to vector<256x64xf32>
    %c320 = arith.constant 320 : index
    %c0_82 = arith.constant 0 : index
    %55 = vector.load %arg5[%c320, %c0_82] : memref<576x64xf32, #tpu.memory_space<vmem>>, vector<64x64xf32>
    %cst_83 = arith.constant dense<0.000000e+00> : vector<256x64xf32>
    %56 = tpu.matmul %54, %55, %cst_83 {dimension_numbers = #tpu.dot_dimension_numbers<[1], [0], [0], [1], [0, 0, 1, 1], [], []>} : vector<256x64xf32>, vector<64x64xf32>, vector<256x64xf32> -> vector<256x64xf32>
    %c0_84 = arith.constant 0 : index
    %c0_85 = arith.constant 0 : index
    %57 = vector.load %arg13[%c0_84, %c0_85] : memref<256x64xf32, #tpu.memory_space<vmem>>, vector<256x64xf32>
    %58 = arith.addf %57, %56 : vector<256x64xf32>
    %c0_86 = arith.constant 0 : index
    %c0_87 = arith.constant 0 : index
    %59 = vector.load %arg13[%c0_86, %c0_87] : memref<256x64xf32, #tpu.memory_space<vmem>>, vector<256x64xf32>
    tpu.vector_store %arg13[%c0_86, %c0_87], %58 {strides = array<i32>} : memref<256x64xf32, #tpu.memory_space<vmem>>, vector<256x64xf32>,
    %c0_88 = arith.constant 0 : index
    %c2_89 = arith.constant 2 : index
    %c0_90 = arith.constant 0 : index
    %c0_91 = arith.constant 0 : index
    %60 = vector.load %arg12[%c0_88, %c2_89, %c0_90, %c0_91] : memref<1x18x18x64xf32, #tpu.memory_space<vmem>>, vector<1x16x16x64xf32>
    %61 = vector.shape_cast %60 : vector<1x16x16x64xf32> to vector<256x64xf32>
    %c384 = arith.constant 384 : index
    %c0_92 = arith.constant 0 : index
    %62 = vector.load %arg5[%c384, %c0_92] : memref<576x64xf32, #tpu.memory_space<vmem>>, vector<64x64xf32>
    %cst_93 = arith.constant dense<0.000000e+00> : vector<256x64xf32>
    %63 = tpu.matmul %61, %62, %cst_93 {dimension_numbers = #tpu.dot_dimension_numbers<[1], [0], [0], [1], [0, 0, 1, 1], [], []>} : vector<256x64xf32>, vector<64x64xf32>, vector<256x64xf32> -> vector<256x64xf32>
    %c0_94 = arith.constant 0 : index
    %c0_95 = arith.constant 0 : index
    %64 = vector.load %arg13[%c0_94, %c0_95] : memref<256x64xf32, #tpu.memory_space<vmem>>, vector<256x64xf32>
    %65 = arith.addf %64, %63 : vector<256x64xf32>
    %c0_96 = arith.constant 0 : index
    %c0_97 = arith.constant 0 : index
    %66 = vector.load %arg13[%c0_96, %c0_97] : memref<256x64xf32, #tpu.memory_space<vmem>>, vector<256x64xf32>
    tpu.vector_store %arg13[%c0_96, %c0_97], %65 {strides = array<i32>} : memref<256x64xf32, #tpu.memory_space<vmem>>, vector<256x64xf32>,
    %c0_98 = arith.constant 0 : index
    %c2_99 = arith.constant 2 : index
    %c1_100 = arith.constant 1 : index
    %c0_101 = arith.constant 0 : index
    %67 = vector.load %arg12[%c0_98, %c2_99, %c1_100, %c0_101] : memref<1x18x18x64xf32, #tpu.memory_space<vmem>>, vector<1x16x16x64xf32>
    %68 = vector.shape_cast %67 : vector<1x16x16x64xf32> to vector<256x64xf32>
    %c448 = arith.constant 448 : index
    %c0_102 = arith.constant 0 : index
    %69 = vector.load %arg5[%c448, %c0_102] : memref<576x64xf32, #tpu.memory_space<vmem>>, vector<64x64xf32>
    %cst_103 = arith.constant dense<0.000000e+00> : vector<256x64xf32>
    %70 = tpu.matmul %68, %69, %cst_103 {dimension_numbers = #tpu.dot_dimension_numbers<[1], [0], [0], [1], [0, 0, 1, 1], [], []>} : vector<256x64xf32>, vector<64x64xf32>, vector<256x64xf32> -> vector<256x64xf32>
    %c0_104 = arith.constant 0 : index
    %c0_105 = arith.constant 0 : index
    %71 = vector.load %arg13[%c0_104, %c0_105] : memref<256x64xf32, #tpu.memory_space<vmem>>, vector<256x64xf32>
    %72 = arith.addf %71, %70 : vector<256x64xf32>
    %c0_106 = arith.constant 0 : index
    %c0_107 = arith.constant 0 : index
    %73 = vector.load %arg13[%c0_106, %c0_107] : memref<256x64xf32, #tpu.memory_space<vmem>>, vector<256x64xf32>
    tpu.vector_store %arg13[%c0_106, %c0_107], %72 {strides = array<i32>} : memref<256x64xf32, #tpu.memory_space<vmem>>, vector<256x64xf32>,
    %c0_108 = arith.constant 0 : index
    %c2_109 = arith.constant 2 : index
    %c2_110 = arith.constant 2 : index
    %c0_111 = arith.constant 0 : index
    %74 = vector.load %arg12[%c0_108, %c2_109, %c2_110, %c0_111] : memref<1x18x18x64xf32, #tpu.memory_space<vmem>>, vector<1x16x16x64xf32>
    %75 = vector.shape_cast %74 : vector<1x16x16x64xf32> to vector<256x64xf32>
    %c512 = arith.constant 512 : index
    %c0_112 = arith.constant 0 : index
    %76 = vector.load %arg5[%c512, %c0_112] : memref<576x64xf32, #tpu.memory_space<vmem>>, vector<64x64xf32>
    %cst_113 = arith.constant dense<0.000000e+00> : vector<256x64xf32>
    %77 = tpu.matmul %75, %76, %cst_113 {dimension_numbers = #tpu.dot_dimension_numbers<[1], [0], [0], [1], [0, 0, 1, 1], [], []>} : vector<256x64xf32>, vector<64x64xf32>, vector<256x64xf32> -> vector<256x64xf32>
    %c0_114 = arith.constant 0 : index
    %c0_115 = arith.constant 0 : index
    %78 = vector.load %arg13[%c0_114, %c0_115] : memref<256x64xf32, #tpu.memory_space<vmem>>, vector<256x64xf32>
    %79 = arith.addf %78, %77 : vector<256x64xf32>
    %c0_116 = arith.constant 0 : index
    %c0_117 = arith.constant 0 : index
    %80 = vector.load %arg13[%c0_116, %c0_117] : memref<256x64xf32, #tpu.memory_space<vmem>>, vector<256x64xf32>
    tpu.vector_store %arg13[%c0_116, %c0_117], %79 {strides = array<i32>} : memref<256x64xf32, #tpu.memory_space<vmem>>, vector<256x64xf32>,
    %c0_118 = arith.constant 0 : index
    %c0_119 = arith.constant 0 : index
    %81 = vector.load %arg13[%c0_118, %c0_119] : memref<256x64xf32, #tpu.memory_space<vmem>>, vector<256x64xf32>
    %c0_120 = arith.constant 0 : index
    %c0_121 = arith.constant 0 : index
    %82 = vector.load %arg6[%c0_120, %c0_121] : memref<1x64xf32, #tpu.memory_space<vmem>>, vector<1x64xf32>
    %83 = vector.broadcast %82 : vector<1x64xf32> to vector<256x64xf32>
    %84 = arith.mulf %81, %83 : vector<256x64xf32>
    %c0_122 = arith.constant 0 : index
    %c0_123 = arith.constant 0 : index
    %85 = vector.load %arg7[%c0_122, %c0_123] : memref<1x64xf32, #tpu.memory_space<vmem>>, vector<1x64xf32>
    %86 = vector.broadcast %85 : vector<1x64xf32> to vector<256x64xf32>
    %87 = arith.addf %84, %86 : vector<256x64xf32>
    %cst_124 = arith.constant 0.000000e+00 : f32
    %88 = vector.broadcast %cst_124 : f32 to vector<256x64xf32>
    %89 = arith.maximumf %87, %88 : vector<256x64xf32>
    %c0_125 = arith.constant 0 : index
    %c0_126 = arith.constant 0 : index
    %90 = vector.load %arg8[%c0_125, %c0_126] : memref<64x256xf32, #tpu.memory_space<vmem>>, vector<64x256xf32>
    %cst_127 = arith.constant dense<0.000000e+00> : vector<256x256xf32>
    %91 = tpu.matmul %89, %90, %cst_127 {dimension_numbers = #tpu.dot_dimension_numbers<[1], [0], [0], [1], [0, 0, 1, 1], [], []>} : vector<256x64xf32>, vector<64x256xf32>, vector<256x256xf32> -> vector<256x256xf32>
    %c0_128 = arith.constant 0 : index
    %c0_129 = arith.constant 0 : index
    %92 = vector.load %arg9[%c0_128, %c0_129] : memref<1x256xf32, #tpu.memory_space<vmem>>, vector<1x256xf32>
    %93 = vector.broadcast %92 : vector<1x256xf32> to vector<256x256xf32>
    %94 = arith.mulf %91, %93 : vector<256x256xf32>
    %c0_130 = arith.constant 0 : index
    %c0_131 = arith.constant 0 : index
    %95 = vector.load %arg10[%c0_130, %c0_131] : memref<1x256xf32, #tpu.memory_space<vmem>>, vector<1x256xf32>
    %96 = vector.broadcast %95 : vector<1x256xf32> to vector<256x256xf32>
    %97 = arith.addf %94, %96 : vector<256x256xf32>
    %c0_132 = arith.constant 0 : index
    %c0_133 = arith.constant 0 : index
    %c0_134 = arith.constant 0 : index
    %c0_135 = arith.constant 0 : index
    %98 = vector.load %arg1[%c0_132, %c0_133, %c0_134, %c0_135] : memref<1x16x16x256xf32, #tpu.memory_space<vmem>>, vector<1x16x16x256xf32>
    %99 = vector.shape_cast %98 : vector<1x16x16x256xf32> to vector<256x256xf32>
    %100 = arith.addf %97, %99 : vector<256x256xf32>
    %cst_136 = arith.constant 0.000000e+00 : f32
    %101 = vector.broadcast %cst_136 : f32 to vector<256x256xf32>
    %102 = arith.maximumf %100, %101 : vector<256x256xf32>
    %103 = vector.shape_cast %102 : vector<256x256xf32> to vector<1x16x16x256xf32>
    %c0_137 = arith.constant 0 : index
    %c0_138 = arith.constant 0 : index
    %c0_139 = arith.constant 0 : index
    %c0_140 = arith.constant 0 : index
    %104 = vector.load %arg11[%c0_137, %c0_138, %c0_139, %c0_140] : memref<1x16x16x256xf32, #tpu.memory_space<vmem>>, vector<1x16x16x256xf32>
    tpu.vector_store %arg11[%c0_137, %c0_138, %c0_139, %c0_140], %103 {strides = array<i32>} : memref<1x16x16x256xf32, #tpu.memory_space<vmem>>, vector<1x16x16x256xf32>,
    return
  }
  func.func @transform_0(%arg0: i32) -> (i32, i32, i32, i32) {
    %c0_i32 = arith.constant 0 : i32
    %c0_i32_0 = arith.constant 0 : i32
    %c0_i32_1 = arith.constant 0 : i32
    %c0_i32_2 = arith.constant 0 : i32
    return %arg0, %c0_i32, %c0_i32_0, %c0_i32_1 : i32, i32, i32, i32
  }
  func.func @transform_1(%arg0: i32) -> (i32, i32) {
    %c0_i32 = arith.constant 0 : i32
    %c0_i32_0 = arith.constant 0 : i32
    %c0_i32_1 = arith.constant 0 : i32
    return %c0_i32, %c0_i32_0 : i32, i32
  }
  func.func @transform_2(%arg0: i32) -> (i32, i32) {
    %c0_i32 = arith.constant 0 : i32
    %c0_i32_0 = arith.constant 0 : i32
    %c0_i32_1 = arith.constant 0 : i32
    return %c0_i32, %c0_i32_0 : i32, i32
  }
  func.func @transform_3(%arg0: i32) -> (i32, i32) {
    %c0_i32 = arith.constant 0 : i32
    %c0_i32_0 = arith.constant 0 : i32
    %c0_i32_1 = arith.constant 0 : i32
    return %c0_i32, %c0_i32_0 : i32, i32
  }
  func.func @transform_4(%arg0: i32) -> (i32, i32) {
    %c0_i32 = arith.constant 0 : i32
    %c0_i32_0 = arith.constant 0 : i32
    %c0_i32_1 = arith.constant 0 : i32
    return %c0_i32, %c0_i32_0 : i32, i32
  }
  func.func @transform_5(%arg0: i32) -> (i32, i32) {
    %c0_i32 = arith.constant 0 : i32
    %c0_i32_0 = arith.constant 0 : i32
    %c0_i32_1 = arith.constant 0 : i32
    return %c0_i32, %c0_i32_0 : i32, i32
  }
  func.func @transform_6(%arg0: i32) -> (i32, i32) {
    %c0_i32 = arith.constant 0 : i32
    %c0_i32_0 = arith.constant 0 : i32
    %c0_i32_1 = arith.constant 0 : i32
    return %c0_i32, %c0_i32_0 : i32, i32
  }
  func.func @transform_7(%arg0: i32) -> (i32, i32) {
    %c0_i32 = arith.constant 0 : i32
    %c0_i32_0 = arith.constant 0 : i32
    %c0_i32_1 = arith.constant 0 : i32
    return %c0_i32, %c0_i32_0 : i32, i32
  }
  func.func @transform_8(%arg0: i32) -> (i32, i32) {
    %c0_i32 = arith.constant 0 : i32
    %c0_i32_0 = arith.constant 0 : i32
    %c0_i32_1 = arith.constant 0 : i32
    return %c0_i32, %c0_i32_0 : i32, i32
  }
  func.func @transform_9(%arg0: i32) -> (i32, i32) {
    %c0_i32 = arith.constant 0 : i32
    %c0_i32_0 = arith.constant 0 : i32
    %c0_i32_1 = arith.constant 0 : i32
    return %c0_i32, %c0_i32_0 : i32, i32
  }
  func.func @transform_10(%arg0: i32) -> (i32, i32, i32, i32) {
    %c0_i32 = arith.constant 0 : i32
    %c0_i32_0 = arith.constant 0 : i32
    %c0_i32_1 = arith.constant 0 : i32
    %c0_i32_2 = arith.constant 0 : i32
    return %arg0, %c0_i32, %c0_i32_0, %c0_i32_1 : i32, i32, i32, i32
  }
}

</mosaic_0001>

<llo_original>
// kernel: tpu_custom_call.1
$region0: #{tpu_custom_call.1}
  #allocation0 [shape = 'u32[]', space=smem, size = 0x4, offset = 0x4, fixed_abs, tag = 'smem constant byte address 0x4 - core index']
  #allocation1 [shape = 'u32[144,128]{1,0:T(1,128)}', space=vmem, size = 0x12000, scoped, tag = 'internal scratch']
  #allocation2 [shape = 'f32[1,18,18,64]{3,2,1,0:T(8,128)}', space=vmem, size = 0x36000, scoped, tag = 'scratch operand']
  #allocation3 [shape = 'f32[256,64]{1,0:T(8,128)}', space=vmem, size = 0x20000, scoped, tag = 'scratch operand']
  %s0 = inlined_call_operand.vmem [shape: f32[2,16,16,256], index: 0, kind: input, shape index: {}]
  %s1 = inlined_call_operand.vmem [shape: f32[256,64], index: 1, kind: input, shape index: {}]
  %s2 = inlined_call_operand.vmem [shape: f32[1,64], index: 2, kind: input, shape index: {}]
  %s3 = inlined_call_operand.vmem [shape: f32[1,64], index: 3, kind: input, shape index: {}]
  %s4 = inlined_call_operand.vmem [shape: f32[576,64], index: 4, kind: input, shape index: {}]
  %s5 = inlined_call_operand.vmem [shape: f32[1,64], index: 5, kind: input, shape index: {}]
  %s6 = inlined_call_operand.vmem [shape: f32[1,64], index: 6, kind: input, shape index: {}]
  %s7 = inlined_call_operand.vmem [shape: f32[64,256], index: 7, kind: input, shape index: {}]
  %s8 = inlined_call_operand.vmem [shape: f32[1,256], index: 8, kind: input, shape index: {}]
  %s9 = inlined_call_operand.vmem [shape: f32[1,256], index: 9, kind: input, shape index: {}]
  %s10 = inlined_call_operand.hbm [shape: f32[2,16,16,256], index: 10, kind: output, shape index: {}]
  %s11 = sld [smem:[#allocation0]]
  $region73: #{tpu_custom_call.1} parent=0
    _
  %s13 = ssub.s32 1, %s11
  %s14 = scalar_select 0, %s13, %s11
  $region1: #{tpu_custom_call.1} parent=0
    #allocation4 [shape = 'u8[524288]{0}', space=vmem, size = 0x80000, scoped, tag = 'output window, operand 0']
    #allocation5 [shape = 's32[2]{0}', space=sflag, size = 0x8, scoped, tag = 'scoped memory for tpu_custom_call.1']
    %15 = vsyncpa [#allocation5], 0
    %s16 = scalar_lea.sflag [#allocation5], 1
    %17 = vsyncpa %s16, 0
    loop: start=0, step=1, limit=4
    $region2: #{tpu_custom_call.1} parent=1 // loop_pre_header
      _
    $region3: #{tpu_custom_call.1} parent=1 // loop_header
      %s19 = sphi 0, %s23
      %p20 = scmp.ge.s32.totalorder %s19, 4
      %s29 = sphi 0, %s31
      %s32 = sphi 0, %s29
      %s33 = sphi 0, %s32
      %s49 = sphi 0, %s33
      %s53 = sphi 0, %s53
      %s55 = sphi 0, %s53
      %s56 = sphi 0, %s55
      %s70 = sphi 0, %s56
      %s74 = sphi 0, %s74
      %s76 = sphi 0, %s74
      %s77 = sphi 0, %s76
      %s91 = sphi 0, %s77
      %s95 = sphi 0, %s95
      %s97 = sphi 0, %s95
      %s98 = sphi 0, %s97
      %s112 = sphi 0, %s98
      %s116 = sphi 0, %s116
      %s118 = sphi 0, %s116
      %s119 = sphi 0, %s118
      %s133 = sphi 0, %s119
      %s137 = sphi 0, %s137
      %s139 = sphi 0, %s137
      %s140 = sphi 0, %s139
      %s154 = sphi 0, %s140
      %s158 = sphi 0, %s158
      %s160 = sphi 0, %s158
      %s161 = sphi 0, %s160
      %s175 = sphi 0, %s161
      %s179 = sphi 0, %s179
      %s181 = sphi 0, %s179
      %s182 = sphi 0, %s181
      %s196 = sphi 0, %s182
      %s200 = sphi 0, %s200
      %s202 = sphi 0, %s200
      %s203 = sphi 0, %s202
      %s217 = sphi 0, %s203
      %s221 = sphi 0, %s221
      %s223 = sphi 0, %s221
      %s224 = sphi 0, %s223
      %s238 = sphi 0, %s224
      %s244 = sphi 0, %s246
      %s247 = sphi 0, %s244
      %s248 = sphi 0, %s247
      %s264 = sphi 0, %s248
    $region4: #{tpu_custom_call.1} parent=1 // loop_header_branch
      %22 = sbr.rel (%p20) target = $region8
    $region5: #{tpu_custom_call.1} parent=1 // loop_body
      %s24 = ssub.s32 %s19, 1
      %s25 = ssub.s32 %s19, 2
      %s26 = sadd.s32 %s19, 1
      %s27 = ssub.s32 %s19, %s26
      %p28 = scmp.eq.s32.totalorder %s27, 0
      %s30 = sadd.s32 %s29, 1
      %s31 = scalar_select %p28, %s29, %s30
      %p34 = pneg %p28
      %p35 = scmp.eq.s32.totalorder %s19, 1
      %p36 = por %p34, %p35
      %p37 = scmp.ne.s32.totalorder %s29, %s32
      %p38 = scmp.eq.s32.totalorder %s19, 0
      %p39 = por %p37, %p38
      %p40 = scmp.ne.s32.totalorder %s29, %s32
      %p41 = scmp.eq.s32.totalorder %s24, 1
      %p42 = por %p40, %p41
      %p43 = scmp.ne.s32.totalorder %s32, %s33
      %p44 = scmp.eq.s32.totalorder %s24, 0
      %p45 = por %p43, %p44
      %p46 = scmp.ne.s32.totalorder %s32, %s33
      %p47 = scmp.eq.s32.totalorder %s25, 1
      %p48 = por %p46, %p47
      %p50 = scmp.ne.s32.totalorder %s33, %s49
      %p51 = scmp.eq.s32.totalorder %s25, 0
      %p52 = por %p50, %p51
      %s54 = sadd.s32 %s53, 1
      %p57 = scmp.eq.s32.totalorder %s19, 1
      %p58 = scmp.ne.s32.totalorder %s53, %s55
      %p59 = scmp.eq.s32.totalorder %s19, 0
      %p60 = por %p58, %p59
      %p61 = scmp.ne.s32.totalorder %s53, %s55
      %p62 = scmp.eq.s32.totalorder %s24, 1
      %p63 = por %p61, %p62
      %p64 = scmp.ne.s32.totalorder %s55, %s56
      %p65 = scmp.eq.s32.totalorder %s24, 0
      %p66 = por %p64, %p65
      %p67 = scmp.ne.s32.totalorder %s55, %s56
      %p68 = scmp.eq.s32.totalorder %s25, 1
      %p69 = por %p67, %p68
      %p71 = scmp.ne.s32.totalorder %s56, %s70
      %p72 = scmp.eq.s32.totalorder %s25, 0
      %p73 = por %p71, %p72
      %s75 = sadd.s32 %s74, 1
      %p78 = scmp.eq.s32.totalorder %s19, 1
      %p79 = scmp.ne.s32.totalorder %s74, %s76
      %p80 = scmp.eq.s32.totalorder %s19, 0
      %p81 = por %p79, %p80
      %p82 = scmp.ne.s32.totalorder %s74, %s76
      %p83 = scmp.eq.s32.totalorder %s24, 1
      %p84 = por %p82, %p83
      %p85 = scmp.ne.s32.totalorder %s76, %s77
      %p86 = scmp.eq.s32.totalorder %s24, 0
      %p87 = por %p85, %p86
      %p88 = scmp.ne.s32.totalorder %s76, %s77
      %p89 = scmp.eq.s32.totalorder %s25, 1
      %p90 = por %p88, %p89
      %p92 = scmp.ne.s32.totalorder %s77, %s91
      %p93 = scmp.eq.s32.totalorder %s25, 0
      %p94 = por %p92, %p93
      %s96 = sadd.s32 %s95, 1
      %p99 = scmp.eq.s32.totalorder %s19, 1
      %p100 = scmp.ne.s32.totalorder %s95, %s97
      %p101 = scmp.eq.s32.totalorder %s19, 0
      %p102 = por %p100, %p101
      %p103 = scmp.ne.s32.totalorder %s95, %s97
      %p104 = scmp.eq.s32.totalorder %s24, 1
      %p105 = por %p103, %p104
      %p106 = scmp.ne.s32.totalorder %s97, %s98
      %p107 = scmp.eq.s32.totalorder %s24, 0
      %p108 = por %p106, %p107
      %p109 = scmp.ne.s32.totalorder %s97, %s98
      %p110 = scmp.eq.s32.totalorder %s25, 1
      %p111 = por %p109, %p110
      %p113 = scmp.ne.s32.totalorder %s98, %s112
      %p114 = scmp.eq.s32.totalorder %s25, 0
      %p115 = por %p113, %p114
      %s117 = sadd.s32 %s116, 1
      %p120 = scmp.eq.s32.totalorder %s19, 1
      %p121 = scmp.ne.s32.totalorder %s116, %s118
      %p122 = scmp.eq.s32.totalorder %s19, 0
      %p123 = por %p121, %p122
      %p124 = scmp.ne.s32.totalorder %s116, %s118
      %p125 = scmp.eq.s32.totalorder %s24, 1
      %p126 = por %p124, %p125
      %p127 = scmp.ne.s32.totalorder %s118, %s119
      %p128 = scmp.eq.s32.totalorder %s24, 0
      %p129 = por %p127, %p128
      %p130 = scmp.ne.s32.totalorder %s118, %s119
      %p131 = scmp.eq.s32.totalorder %s25, 1
      %p132 = por %p130, %p131
      %p134 = scmp.ne.s32.totalorder %s119, %s133
      %p135 = scmp.eq.s32.totalorder %s25, 0
      %p136 = por %p134, %p135
      %s138 = sadd.s32 %s137, 1
      %p141 = scmp.eq.s32.totalorder %s19, 1
      %p142 = scmp.ne.s32.totalorder %s137, %s139
      %p143 = scmp.eq.s32.totalorder %s19, 0
      %p144 = por %p142, %p143
      %p145 = scmp.ne.s32.totalorder %s137, %s139
      %p146 = scmp.eq.s32.totalorder %s24, 1
      %p147 = por %p145, %p146
      %p148 = scmp.ne.s32.totalorder %s139, %s140
      %p149 = scmp.eq.s32.totalorder %s24, 0
      %p150 = por %p148, %p149
      %p151 = scmp.ne.s32.totalorder %s139, %s140
      %p152 = scmp.eq.s32.totalorder %s25, 1
      %p153 = por %p151, %p152
      %p155 = scmp.ne.s32.totalorder %s140, %s154
      %p156 = scmp.eq.s32.totalorder %s25, 0
      %p157 = por %p155, %p156
      %s159 = sadd.s32 %s158, 1
      %p162 = scmp.eq.s32.totalorder %s19, 1
      %p163 = scmp.ne.s32.totalorder %s158, %s160
      %p164 = scmp.eq.s32.totalorder %s19, 0
      %p165 = por %p163, %p164
      %p166 = scmp.ne.s32.totalorder %s158, %s160
      %p167 = scmp.eq.s32.totalorder %s24, 1
      %p168 = por %p166, %p167
      %p169 = scmp.ne.s32.totalorder %s160, %s161
      %p170 = scmp.eq.s32.totalorder %s24, 0
      %p171 = por %p169, %p170
      %p172 = scmp.ne.s32.totalorder %s160, %s161
      %p173 = scmp.eq.s32.totalorder %s25, 1
      %p174 = por %p172, %p173
      %p176 = scmp.ne.s32.totalorder %s161, %s175
      %p177 = scmp.eq.s32.totalorder %s25, 0
      %p178 = por %p176, %p177
      %s180 = sadd.s32 %s179, 1
      %p183 = scmp.eq.s32.totalorder %s19, 1
      %p184 = scmp.ne.s32.totalorder %s179, %s181
      %p185 = scmp.eq.s32.totalorder %s19, 0
      %p186 = por %p184, %p185
      %p187 = scmp.ne.s32.totalorder %s179, %s181
      %p188 = scmp.eq.s32.totalorder %s24, 1
      %p189 = por %p187, %p188
      %p190 = scmp.ne.s32.totalorder %s181, %s182
      %p191 = scmp.eq.s32.totalorder %s24, 0
      %p192 = por %p190, %p191
      %p193 = scmp.ne.s32.totalorder %s181, %s182
      %p194 = scmp.eq.s32.totalorder %s25, 1
      %p195 = por %p193, %p194
      %p197 = scmp.ne.s32.totalorder %s182, %s196
      %p198 = scmp.eq.s32.totalorder %s25, 0
      %p199 = por %p197, %p198
      %s201 = sadd.s32 %s200, 1
      %p204 = scmp.eq.s32.totalorder %s19, 1
      %p205 = scmp.ne.s32.totalorder %s200, %s202
      %p206 = scmp.eq.s32.totalorder %s19, 0
      %p207 = por %p205, %p206
      %p208 = scmp.ne.s32.totalorder %s200, %s202
      %p209 = scmp.eq.s32.totalorder %s24, 1
      %p210 = por %p208, %p209
      %p211 = scmp.ne.s32.totalorder %s202, %s203
      %p212 = scmp.eq.s32.totalorder %s24, 0
      %p213 = por %p211, %p212
      %p214 = scmp.ne.s32.totalorder %s202, %s203
      %p215 = scmp.eq.s32.totalorder %s25, 1
      %p216 = por %p214, %p215
      %p218 = scmp.ne.s32.totalorder %s203, %s217
      %p219 = scmp.eq.s32.totalorder %s25, 0
      %p220 = por %p218, %p219
      %s222 = sadd.s32 %s221, 1
      %p225 = scmp.eq.s32.totalorder %s19, 1
      %p226 = scmp.ne.s32.totalorder %s221, %s223
      %p227 = scmp.eq.s32.totalorder %s19, 0
      %p228 = por %p226, %p227
      %p229 = scmp.ne.s32.totalorder %s221, %s223
      %p230 = scmp.eq.s32.totalorder %s24, 1
      %p231 = por %p229, %p230
      %p232 = scmp.ne.s32.totalorder %s223, %s224
      %p233 = scmp.eq.s32.totalorder %s24, 0
      %p234 = por %p232, %p233
      %p235 = scmp.ne.s32.totalorder %s223, %s224
      %p236 = scmp.eq.s32.totalorder %s25, 1
      %p237 = por %p235, %p236
      %p239 = scmp.ne.s32.totalorder %s224, %s238
      %p240 = scmp.eq.s32.totalorder %s25, 0
      %p241 = por %p239, %p240
      %s242 = ssub.s32 %s19, %s26
      %p243 = scmp.eq.s32.totalorder %s242, 0
      %s245 = sadd.s32 %s244, 1
      %s246 = scalar_select %p243, %s244, %s245
      %p249 = pneg %p243
      %p250 = scmp.eq.s32.totalorder %s19, 1
      %p251 = por %p249, %p250
      %p252 = scmp.ne.s32.totalorder %s244, %s247
      %p253 = scmp.eq.s32.totalorder %s19, 0
      %p254 = por %p252, %p253
      %p255 = scmp.ne.s32.totalorder %s244, %s247
      %p256 = scmp.eq.s32.totalorder %s24, 1
      %p257 = por %p255, %p256
      %p258 = scmp.ne.s32.totalorder %s247, %s248
      %p259 = scmp.eq.s32.totalorder %s24, 0
      %p260 = por %p258, %p259
      %p261 = scmp.ne.s32.totalorder %s247, %s248
      %p262 = scmp.eq.s32.totalorder %s25, 1
      %p263 = por %p261, %p262
      %p265 = scmp.ne.s32.totalorder %s248, %s264
      %p266 = scmp.eq.s32.totalorder %s25, 0
      %p267 = por %p265, %p266
      %p268 = scmp.le.s32.totalorder 1, %s19
      %p269 = scmp.lt.s32.totalorder %s19, 3
      %p270 = pnand %p268, %p269
      %p271 = pneg %p270
      // Predicated region
      $region9: #{tpu_custom_call.1} parent=5 // pred_check
        _
      $region10: #{tpu_custom_call.1} parent=5 // pred_check_branch
        %273 = sbr.rel (%p270) target = $region12
      $region11: #{tpu_custom_call.1} parent=5 // pred_region
        %s274 = ssub.s32 %s19, 1
        // Predicated region
        $region13: #{tpu_custom_call.1} parent=11 // pred_check
          %p275 = pneg %p66
        $region14: #{tpu_custom_call.1} parent=11 // pred_check_branch
          %277 = sbr.rel (%p275) target = $region16
        $region15: #{tpu_custom_call.1} parent=11 // pred_region
          _
        $region16: #{tpu_custom_call.1} parent=11 // pred_fallthru
          _
        // Predicated region
        $region17: #{tpu_custom_call.1} parent=11 // pred_check
          %p278 = pneg %p87
        $region18: #{tpu_custom_call.1} parent=11 // pred_check_branch
          %280 = sbr.rel (%p278) target = $region20
        $region19: #{tpu_custom_call.1} parent=11 // pred_region
          _
        $region20: #{tpu_custom_call.1} parent=11 // pred_fallthru
          _
        // Predicated region
        $region21: #{tpu_custom_call.1} parent=11 // pred_check
          %p281 = pneg %p108
        $region22: #{tpu_custom_call.1} parent=11 // pred_check_branch
          %283 = sbr.rel (%p281) target = $region24
        $region23: #{tpu_custom_call.1} parent=11 // pred_region
          _
        $region24: #{tpu_custom_call.1} parent=11 // pred_fallthru
          _
        // Predicated region
        $region25: #{tpu_custom_call.1} parent=11 // pred_check
          %p284 = pneg %p129
        $region26: #{tpu_custom_call.1} parent=11 // pred_check_branch
          %286 = sbr.rel (%p284) target = $region28
        $region27: #{tpu_custom_call.1} parent=11 // pred_region
          _
        $region28: #{tpu_custom_call.1} parent=11 // pred_fallthru
          _
        // Predicated region
        $region29: #{tpu_custom_call.1} parent=11 // pred_check
          %p287 = pneg %p150
        $region30: #{tpu_custom_call.1} parent=11 // pred_check_branch
          %289 = sbr.rel (%p287) target = $region32
        $region31: #{tpu_custom_call.1} parent=11 // pred_region
          _
        $region32: #{tpu_custom_call.1} parent=11 // pred_fallthru
          _
        // Predicated region
        $region33: #{tpu_custom_call.1} parent=11 // pred_check
          %p290 = pneg %p171
        $region34: #{tpu_custom_call.1} parent=11 // pred_check_branch
          %292 = sbr.rel (%p290) target = $region36
        $region35: #{tpu_custom_call.1} parent=11 // pred_region
          _
        $region36: #{tpu_custom_call.1} parent=11 // pred_fallthru
          _
        // Predicated region
        $region37: #{tpu_custom_call.1} parent=11 // pred_check
          %p293 = pneg %p192
        $region38: #{tpu_custom_call.1} parent=11 // pred_check_branch
          %295 = sbr.rel (%p293) target = $region40
        $region39: #{tpu_custom_call.1} parent=11 // pred_region
          _
        $region40: #{tpu_custom_call.1} parent=11 // pred_fallthru
          _
        // Predicated region
        $region41: #{tpu_custom_call.1} parent=11 // pred_check
          %p296 = pneg %p213
        $region42: #{tpu_custom_call.1} parent=11 // pred_check_branch
          %298 = sbr.rel (%p296) target = $region44
        $region43: #{tpu_custom_call.1} parent=11 // pred_region
          _
        $region44: #{tpu_custom_call.1} parent=11 // pred_fallthru
          _
        // Predicated region
        $region45: #{tpu_custom_call.1} parent=11 // pred_check
          %p299 = pneg %p234
        $region46: #{tpu_custom_call.1} parent=11 // pred_check_branch
          %301 = sbr.rel (%p299) target = $region48
        $region47: #{tpu_custom_call.1} parent=11 // pred_region
          _
        $region48: #{tpu_custom_call.1} parent=11 // pred_fallthru
          _
      $region12: #{tpu_custom_call.1} parent=5 // pred_fallthru
        _
      %p302 = scmp.lt.s32.totalorder %s19, 2
      // Predicated region
      $region49: #{tpu_custom_call.1} parent=5 // pred_check
        %p303 = pneg %p302
      $region50: #{tpu_custom_call.1} parent=5 // pred_check_branch
        %305 = sbr.rel (%p303) target = $region52
      $region51: #{tpu_custom_call.1} parent=5 // pred_region
        // Predicated region
        $region53: #{tpu_custom_call.1} parent=51 // pred_check
          %p306 = pneg %p39
        $region54: #{tpu_custom_call.1} parent=51 // pred_check_branch
          %308 = sbr.rel (%p306) target = $region56
        $region55: #{tpu_custom_call.1} parent=51 // pred_region
          %p309 = scmp.lt.s32.totalorder %s19, 1
          %s310 = scalar_select %p309, %s19, 1
          %s311 = smul.addr %s310, 64
          %s312 = smul.addr %s311, 8
          %s313 = scalar_lea.vmem %s0, %s312
        $region56: #{tpu_custom_call.1} parent=51 // pred_fallthru
          _
      $region52: #{tpu_custom_call.1} parent=5 // pred_fallthru
        _
      %p314 = scmp.le.s32.totalorder 1, %s19
      %p315 = scmp.lt.s32.totalorder %s19, 3
      %p316 = pnand %p314, %p315
      %p317 = pneg %p316
      // Predicated region
      $region57: #{tpu_custom_call.1} parent=5 // pred_check
        _
      $region58: #{tpu_custom_call.1} parent=5 // pred_check_branch
        %319 = sbr.rel (%p316) target = $region60
      $region59: #{tpu_custom_call.1} parent=5 // pred_region
        %s320 = ssub.s32 %s19, 1
        %p321 = scmp.lt.s32.totalorder %s24, 1
        %s322 = scalar_select %p321, %s24, 1
        %s323 = smul.addr %s322, 64
        %s324 = smul.addr %s323, 8
        %s325 = scalar_lea.vmem %s0, %s324
        %p326 = pneg %p45
        %p327 = pneg %p42
        %p328 = pneg %p66
        %p329 = pneg %p63
        %p330 = pneg %p87
        %p331 = pneg %p84
        %p332 = pneg %p108
        %p333 = pneg %p105
        %p334 = pneg %p129
        %p335 = pneg %p126
        %p336 = pneg %p150
        %p337 = pneg %p147
        %p338 = pneg %p171
        %p339 = pneg %p168
        %p340 = pneg %p192
        %p341 = pneg %p189
        %p342 = pneg %p213
        %p343 = pneg %p210
        %p344 = pneg %p234
        %p345 = pneg %p231
        %p346 = pneg %p260
        %p347 = pneg %p257
        %s348 = sand.u32 %s247, 1
        %s349 = scalar_lea.sflag [#allocation5], %s348
        %s350 = sand.u32 %s247, 1
        %s351 = smul.addr %s350, 512
        %s352 = scalar_lea.vmem [#allocation4], %s351
        %p353 = scmp.lt.s32.totalorder %s24, 1
        %s354 = scalar_select %p353, %s24, 1
        %s355 = smul.addr %s354, 64
        %s356 = smul.addr %s355, 8
        %s357 = scalar_lea.vmem %s0, %s356
        %v358 = vld [vmem:[%s357] sm:$0xff]
        %v359 = vld [vmem:[%s357 + $0x8] sm:$0xff]
        %v360 = vld [vmem:[%s357 + $0x10] sm:$0xff]
        %v361 = vld [vmem:[%s357 + $0x18] sm:$0xff]
        %v362 = vld [vmem:[%s357 + $0x20] sm:$0xff]
        %v363 = vld [vmem:[%s357 + $0x28] sm:$0xff]
        %v364 = vld [vmem:[%s357 + $0x30] sm:$0xff]
        %v365 = vld [vmem:[%s357 + $0x38] sm:$0xff]
        %v366 = vld [vmem:[%s357 + $0x40] sm:$0xff]
        %v367 = vld [vmem:[%s357 + $0x48] sm:$0xff]
        %v368 = vld [vmem:[%s357 + $0x50] sm:$0xff]
        %v369 = vld [vmem:[%s357 + $0x58] sm:$0xff]
        %v370 = vld [vmem:[%s357 + $0x60] sm:$0xff]
        %v371 = vld [vmem:[%s357 + $0x68] sm:$0xff]
        %v372 = vld [vmem:[%s357 + $0x70] sm:$0xff]
        %v373 = vld [vmem:[%s357 + $0x78] sm:$0xff]
        %v374 = vld [vmem:[%s357 + $0x80] sm:$0xff]
        %v375 = vld [vmem:[%s357 + $0x88] sm:$0xff]
        %v376 = vld [vmem:[%s357 + $0x90] sm:$0xff]
        %v377 = vld [vmem:[%s357 + $0x98] sm:$0xff]
        %v378 = vld [vmem:[%s357 + $0xa0] sm:$0xff]
        %v379 = vld [vmem:[%s357 + $0xa8] sm:$0xff]
        %v380 = vld [vmem:[%s357 + $0xb0] sm:$0xff]
        %v381 = vld [vmem:[%s357 + $0xb8] sm:$0xff]
        %v382 = vld [vmem:[%s357 + $0xc0] sm:$0xff]
        %v383 = vld [vmem:[%s357 + $0xc8] sm:$0xff]
        %v384 = vld [vmem:[%s357 + $0xd0] sm:$0xff]
        %v385 = vld [vmem:[%s357 + $0xd8] sm:$0xff]
        %v386 = vld [vmem:[%s357 + $0xe0] sm:$0xff]
        %v387 = vld [vmem:[%s357 + $0xe8] sm:$0xff]
        %v388 = vld [vmem:[%s357 + $0xf0] sm:$0xff]
        %v389 = vld [vmem:[%s357 + $0xf8] sm:$0xff]
        %v390 = vld [vmem:[%s357 + $0x100] sm:$0xff]
        %v391 = vld [vmem:[%s357 + $0x108] sm:$0xff]
        %v392 = vld [vmem:[%s357 + $0x110] sm:$0xff]
        %v393 = vld [vmem:[%s357 + $0x118] sm:$0xff]
        %v394 = vld [vmem:[%s357 + $0x120] sm:$0xff]
        %v395 = vld [vmem:[%s357 + $0x128] sm:$0xff]
        %v396 = vld [vmem:[%s357 + $0x130] sm:$0xff]
        %v397 = vld [vmem:[%s357 + $0x138] sm:$0xff]
        %v398 = vld [vmem:[%s357 + $0x140] sm:$0xff]
        %v399 = vld [vmem:[%s357 + $0x148] sm:$0xff]
        %v400 = vld [vmem:[%s357 + $0x150] sm:$0xff]
        %v401 = vld [vmem:[%s357 + $0x158] sm:$0xff]
        %v402 = vld [vmem:[%s357 + $0x160] sm:$0xff]
        %v403 = vld [vmem:[%s357 + $0x168] sm:$0xff]
        %v404 = vld [vmem:[%s357 + $0x170] sm:$0xff]
        %v405 = vld [vmem:[%s357 + $0x178] sm:$0xff]
        %v406 = vld [vmem:[%s357 + $0x180] sm:$0xff]
        %v407 = vld [vmem:[%s357 + $0x188] sm:$0xff]
        %v408 = vld [vmem:[%s357 + $0x190] sm:$0xff]
        %v409 = vld [vmem:[%s357 + $0x198] sm:$0xff]
        %v410 = vld [vmem:[%s357 + $0x1a0] sm:$0xff]
        %v411 = vld [vmem:[%s357 + $0x1a8] sm:$0xff]
        %v412 = vld [vmem:[%s357 + $0x1b0] sm:$0xff]
        %v413 = vld [vmem:[%s357 + $0x1b8] sm:$0xff]
        %v414 = vld [vmem:[%s357 + $0x1c0] sm:$0xff]
        %v415 = vld [vmem:[%s357 + $0x1c8] sm:$0xff]
        %v416 = vld [vmem:[%s357 + $0x1d0] sm:$0xff]
        %v417 = vld [vmem:[%s357 + $0x1d8] sm:$0xff]
        %v418 = vld [vmem:[%s357 + $0x1e0] sm:$0xff]
        %v419 = vld [vmem:[%s357 + $0x1e8] sm:$0xff]
        %v420 = vld [vmem:[%s357 + $0x1f0] sm:$0xff]
        %v421 = vld [vmem:[%s357 + $0x1f8] sm:$0xff]
        %v422 = vld [vmem:[%s1] sm:$0xff]
        %v423 = vld [vmem:[%s1 + $0x8] sm:$0xff]
        %v424 = vld [vmem:[%s1 + $0x10] sm:$0xff]
        %v425 = vld [vmem:[%s1 + $0x18] sm:$0xff]
        %v426 = vld [vmem:[%s1 + $0x20] sm:$0xff]
        %v427 = vld [vmem:[%s1 + $0x28] sm:$0xff]
        %v428 = vld [vmem:[%s1 + $0x30] sm:$0xff]
        %v429 = vld [vmem:[%s1 + $0x38] sm:$0xff]
        %v430 = vld [vmem:[%s1 + $0x40] sm:$0xff]
        %v431 = vld [vmem:[%s1 + $0x48] sm:$0xff]
        %v432 = vld [vmem:[%s1 + $0x50] sm:$0xff]
        %v433 = vld [vmem:[%s1 + $0x58] sm:$0xff]
        %v434 = vld [vmem:[%s1 + $0x60] sm:$0xff]
        %v435 = vld [vmem:[%s1 + $0x68] sm:$0xff]
        %v436 = vld [vmem:[%s1 + $0x70] sm:$0xff]
        %v437 = vld [vmem:[%s1 + $0x78] sm:$0xff]
        %v438 = vld [vmem:[%s1 + $0x80] sm:$0xff]
        %v439 = vld [vmem:[%s1 + $0x88] sm:$0xff]
        %v440 = vld [vmem:[%s1 + $0x90] sm:$0xff]
        %v441 = vld [vmem:[%s1 + $0x98] sm:$0xff]
        %v442 = vld [vmem:[%s1 + $0xa0] sm:$0xff]
        %v443 = vld [vmem:[%s1 + $0xa8] sm:$0xff]
        %v444 = vld [vmem:[%s1 + $0xb0] sm:$0xff]
        %v445 = vld [vmem:[%s1 + $0xb8] sm:$0xff]
        %v446 = vld [vmem:[%s1 + $0xc0] sm:$0xff]
        %v447 = vld [vmem:[%s1 + $0xc8] sm:$0xff]
        %v448 = vld [vmem:[%s1 + $0xd0] sm:$0xff]
        %v449 = vld [vmem:[%s1 + $0xd8] sm:$0xff]
        %v450 = vld [vmem:[%s1 + $0xe0] sm:$0xff]
        %v451 = vld [vmem:[%s1 + $0xe8] sm:$0xff]
        %v452 = vld [vmem:[%s1 + $0xf0] sm:$0xff]
        %v453 = vld [vmem:[%s1 + $0xf8] sm:$0xff]
        %454 = vmatprep.subr.mxu0 0.0
        %455 = vmatpush1.msra.mxu0 %v422
        %456 = vmatprep.subr.mxu0 0.0
        %457 = vmatpush1.msra.mxu0 %v423
        %458 = vmatprep.subr.mxu0 0.0
        %459 = vmatpush1.msra.mxu0 %v424
        %460 = vmatprep.subr.mxu0 0.0
        %461 = vmatpush1.msra.mxu0 %v425
        %462 = vmatprep.subr.mxu0 0.0
        %463 = vmatpush1.msra.mxu0 %v426
        %464 = vmatprep.subr.mxu0 0.0
        %465 = vmatpush1.msra.mxu0 %v427
        %466 = vmatprep.subr.mxu0 0.0
        %467 = vmatpush1.msra.mxu0 %v428
        %468 = vmatprep.subr.mxu0 0.0
        %469 = vmatpush1.msra.mxu0 %v429
        %470 = vmatprep.subr.mxu0 0.0
        %471 = vmatpush1.msra.mxu0 %v430
        %472 = vmatprep.subr.mxu0 0.0
        %473 = vmatpush1.msra.mxu0 %v431
        %474 = vmatprep.subr.mxu0 0.0
        %475 = vmatpush1.msra.mxu0 %v432
        %476 = vmatprep.subr.mxu0 0.0
        %477 = vmatpush1.msra.mxu0 %v433
        %478 = vmatprep.subr.mxu0 0.0
        %479 = vmatpush1.msra.mxu0 %v434
        %480 = vmatprep.subr.mxu0 0.0
        %481 = vmatpush1.msra.mxu0 %v435
        %482 = vmatprep.subr.mxu0 0.0
        %483 = vmatpush1.msra.mxu0 %v436
        %484 = vmatprep.subr.mxu0 0.0
        %485 = vmatpush1.msra.mxu0 %v437
        %486 = vmatprep.subr.mxu0 0.0
        %487 = vmatpush1.msra.mxu0 %v438
        %488 = vmatprep.subr.mxu0 0.0
        %489 = vmatpush1.msra.mxu0 %v439
        %490 = vmatprep.subr.mxu0 0.0
        %491 = vmatpush1.msra.mxu0 %v440
        %492 = vmatprep.subr.mxu0 0.0
        %493 = vmatpush1.msra.mxu0 %v441
        %494 = vmatprep.subr.mxu0 0.0
        %495 = vmatpush1.msra.mxu0 %v442
        %496 = vmatprep.subr.mxu0 0.0
        %497 = vmatpush1.msra.mxu0 %v443
        %498 = vmatprep.subr.mxu0 0.0
        %499 = vmatpush1.msra.mxu0 %v444
        %500 = vmatprep.subr.mxu0 0.0
        %501 = vmatpush1.msra.mxu0 %v445
        %502 = vmatprep.subr.mxu0 0.0
        %503 = vmatpush1.msra.mxu0 %v446
        %504 = vmatprep.subr.mxu0 0.0
        %505 = vmatpush1.msra.mxu0 %v447
        %506 = vmatprep.subr.mxu0 0.0
        %507 = vmatpush1.msra.mxu0 %v448
        %508 = vmatprep.subr.mxu0 0.0
        %509 = vmatpush1.msra.mxu0 %v449
        %510 = vmatprep.subr.mxu0 0.0
        %511 = vmatpush1.msra.mxu0 %v450
        %512 = vmatprep.subr.mxu0 0.0
        %513 = vmatpush1.msra.mxu0 %v451
        %514 = vmatprep.subr.mxu0 0.0
        %515 = vmatpush1.msra.mxu0 %v452
        %516 = vmatprep.subr.mxu0 0.0
        %517 = vmatpush1.msra.mxu0 %v453
        %518 = vmatprep.mubr.f32.mxu0 %v359
        %519 = vmatmul.mubr.f32.gmra.mrb[0].mxu0 %v358
        %v520 = vpop.f32.mrb[0].mxu0
        %v521 = vadd.f32 0.0, %v520
        %v522 = vpop.f32.mrb[0].mxu0
        %523 = vmatprep.mubr.f32.mxu0 %v361
        %524 = vmatmul.mubr.f32.gmra.mrb[0].mxu0 %v360
        %v525 = vpop.f32.mrb[0].mxu0
        %v526 = vadd.f32 0.0, %v525
        %v527 = vpop.f32.mrb[0].mxu0
        %528 = vmatprep.mubr.f32.mxu0 %v363
        %529 = vmatmul.mubr.f32.gmra.mrb[0].mxu0 %v362
        %v530 = vpop.f32.mrb[0].mxu0
        %v531 = vadd.f32 0.0, %v530
        %v532 = vpop.f32.mrb[0].mxu0
        %533 = vmatprep.mubr.f32.mxu0 %v365
        %534 = vmatmul.mubr.f32.gmra.mrb[0].mxu0 %v364
        %v535 = vpop.f32.mrb[0].mxu0
        %v536 = vadd.f32 0.0, %v535
        %v537 = vpop.f32.mrb[0].mxu0
        %538 = vmatprep.mubr.f32.mxu0 %v367
        %539 = vmatmul.mubr.f32.gmra.mrb[0].mxu0 %v366
        %v540 = vpop.f32.mrb[0].mxu0
        %v541 = vadd.f32 0.0, %v540
        %v542 = vpop.f32.mrb[0].mxu0
        %543 = vmatprep.mubr.f32.mxu0 %v369
        %544 = vmatmul.mubr.f32.gmra.mrb[0].mxu0 %v368
        %v545 = vpop.f32.mrb[0].mxu0
        %v546 = vadd.f32 0.0, %v545
        %v547 = vpop.f32.mrb[0].mxu0
        %548 = vmatprep.mubr.f32.mxu0 %v371
        %549 = vmatmul.mubr.f32.gmra.mrb[0].mxu0 %v370
        %v550 = vpop.f32.mrb[0].mxu0
        %v551 = vadd.f32 0.0, %v550
        %v552 = vpop.f32.mrb[0].mxu0
        %553 = vmatprep.mubr.f32.mxu0 %v373
        %554 = vmatmul.mubr.f32.gmra.mrb[0].mxu0 %v372
        %v555 = vpop.f32.mrb[0].mxu0
        %v556 = vadd.f32 0.0, %v555
        %v557 = vpop.f32.mrb[0].mxu0
        %558 = vmatprep.mubr.f32.mxu0 %v375
        %559 = vmatmul.mubr.f32.gmra.mrb[0].mxu0 %v374
        %v560 = vpop.f32.mrb[0].mxu0
        %v561 = vadd.f32 0.0, %v560
        %v562 = vpop.f32.mrb[0].mxu0
        %563 = vmatprep.mubr.f32.mxu0 %v377
        %564 = vmatmul.mubr.f32.gmra.mrb[0].mxu0 %v376
        %v565 = vpop.f32.mrb[0].mxu0
        %v566 = vadd.f32 0.0, %v565
        %v567 = vpop.f32.mrb[0].mxu0
        %568 = vmatprep.mubr.f32.mxu0 %v379
        %569 = vmatmul.mubr.f32.gmra.mrb[0].mxu0 %v378
        %v570 = vpop.f32.mrb[0].mxu0
        %v571 = vadd.f32 0.0, %v570
        %v572 = vpop.f32.mrb[0].mxu0
        %573 = vmatprep.mubr.f32.mxu0 %v381
        %574 = vmatmul.mubr.f32.gmra.mrb[0].mxu0 %v380
        %v575 = vpop.f32.mrb[0].mxu0
        %v576 = vadd.f32 0.0, %v575
        %v577 = vpop.f32.mrb[0].mxu0
        %578 = vmatprep.mubr.f32.mxu0 %v383
        %579 = vmatmul.mubr.f32.gmra.mrb[0].mxu0 %v382
        %v580 = vpop.f32.mrb[0].mxu0
        %v581 = vadd.f32 0.0, %v580
        %v582 = vpop.f32.mrb[0].mxu0
        %583 = vmatprep.mubr.f32.mxu0 %v385
        %584 = vmatmul.mubr.f32.gmra.mrb[0].mxu0 %v384
        %v585 = vpop.f32.mrb[0].mxu0
        %v586 = vadd.f32 0.0, %v585
        %v587 = vpop.f32.mrb[0].mxu0
        %588 = vmatprep.mubr.f32.mxu0 %v387
        %589 = vmatmul.mubr.f32.gmra.mrb[0].mxu0 %v386
        %v590 = vpop.f32.mrb[0].mxu0
        %v591 = vadd.f32 0.0, %v590
        %v592 = vpop.f32.mrb[0].mxu0
        %593 = vmatprep.mubr.f32.mxu0 %v389
        %594 = vmatmul.mubr.f32.gmra.mrb[0].mxu0 %v388
        %v595 = vpop.f32.mrb[0].mxu0
        %v596 = vadd.f32 0.0, %v595
        %v597 = vpop.f32.mrb[0].mxu0
        %598 = vmatprep.mubr.f32.mxu0 %v391
        %599 = vmatmul.mubr.f32.gmra.mrb[0].mxu0 %v390
        %v600 = vpop.f32.mrb[0].mxu0
        %v601 = vadd.f32 0.0, %v600
        %v602 = vpop.f32.mrb[0].mxu0
        %603 = vmatprep.mubr.f32.mxu0 %v393
        %604 = vmatmul.mubr.f32.gmra.mrb[0].mxu0 %v392
        %v605 = vpop.f32.mrb[0].mxu0
        %v606 = vadd.f32 0.0, %v605
        %v607 = vpop.f32.mrb[0].mxu0
        %608 = vmatprep.mubr.f32.mxu0 %v395
        %609 = vmatmul.mubr.f32.gmra.mrb[0].mxu0 %v394
        %v610 = vpop.f32.mrb[0].mxu0
        %v611 = vadd.f32 0.0, %v610
        %v612 = vpop.f32.mrb[0].mxu0
        %613 = vmatprep.mubr.f32.mxu0 %v397
        %614 = vmatmul.mubr.f32.gmra.mrb[0].mxu0 %v396
        %v615 = vpop.f32.mrb[0].mxu0
        %v616 = vadd.f32 0.0, %v615
        %v617 = vpop.f32.mrb[0].mxu0
        %618 = vmatprep.mubr.f32.mxu0 %v399
        %619 = vmatmul.mubr.f32.gmra.mrb[0].mxu0 %v398
        %v620 = vpop.f32.mrb[0].mxu0
        %v621 = vadd.f32 0.0, %v620
        %v622 = vpop.f32.mrb[0].mxu0
        %623 = vmatprep.mubr.f32.mxu0 %v401
        %624 = vmatmul.mubr.f32.gmra.mrb[0].mxu0 %v400
        %v625 = vpop.f32.mrb[0].mxu0
        %v626 = vadd.f32 0.0, %v625
        %v627 = vpop.f32.mrb[0].mxu0
        %628 = vmatprep.mubr.f32.mxu0 %v403
        %629 = vmatmul.mubr.f32.gmra.mrb[0].mxu0 %v402
        %v630 = vpop.f32.mrb[0].mxu0
        %v631 = vadd.f32 0.0, %v630
        %v632 = vpop.f32.mrb[0].mxu0
        %633 = vmatprep.mubr.f32.mxu0 %v405
        %634 = vmatmul.mubr.f32.gmra.mrb[0].mxu0 %v404
        %v635 = vpop.f32.mrb[0].mxu0
        %v636 = vadd.f32 0.0, %v635
        %v637 = vpop.f32.mrb[0].mxu0
        %638 = vmatprep.mubr.f32.mxu0 %v407
        %639 = vmatmul.mubr.f32.gmra.mrb[0].mxu0 %v406
        %v640 = vpop.f32.mrb[0].mxu0
        %v641 = vadd.f32 0.0, %v640
        %v642 = vpop.f32.mrb[0].mxu0
        %643 = vmatprep.mubr.f32.mxu0 %v409
        %644 = vmatmul.mubr.f32.gmra.mrb[0].mxu0 %v408
        %v645 = vpop.f32.mrb[0].mxu0
        %v646 = vadd.f32 0.0, %v645
        %v647 = vpop.f32.mrb[0].mxu0
        %648 = vmatprep.mubr.f32.mxu0 %v411
        %649 = vmatmul.mubr.f32.gmra.mrb[0].mxu0 %v410
        %v650 = vpop.f32.mrb[0].mxu0
        %v651 = vadd.f32 0.0, %v650
        %v652 = vpop.f32.mrb[0].mxu0
        %653 = vmatprep.mubr.f32.mxu0 %v413
        %654 = vmatmul.mubr.f32.gmra.mrb[0].mxu0 %v412
        %v655 = vpop.f32.mrb[0].mxu0
        %v656 = vadd.f32 0.0, %v655
        %v657 = vpop.f32.mrb[0].mxu0
        %658 = vmatprep.mubr.f32.mxu0 %v415
        %659 = vmatmul.mubr.f32.gmra.mrb[0].mxu0 %v414
        %v660 = vpop.f32.mrb[0].mxu0
        %v661 = vadd.f32 0.0, %v660
        %v662 = vpop.f32.mrb[0].mxu0
        %663 = vmatprep.mubr.f32.mxu0 %v417
        %664 = vmatmul.mubr.f32.gmra.mrb[0].mxu0 %v416
        %v665 = vpop.f32.mrb[0].mxu0
        %v666 = vadd.f32 0.0, %v665
        %v667 = vpop.f32.mrb[0].mxu0
        %668 = vmatprep.mubr.f32.mxu0 %v419
        %669 = vmatmul.mubr.f32.gmra.mrb[0].mxu0 %v418
        %v670 = vpop.f32.mrb[0].mxu0
        %v671 = vadd.f32 0.0, %v670
        %v672 = vpop.f32.mrb[0].mxu0
        %673 = vmatprep.mubr.f32.mxu0 %v421
        %674 = vmatmul.mubr.f32.gmra.mrb[0].mxu0 %v420
        %v675 = vpop.f32.mrb[0].mxu0
        %v676 = vadd.f32 0.0, %v675
        %v677 = vpop.f32.mrb[0].mxu0
        %678 = vdwg.mxu0
        %v679 = vld [vmem:[%s2] sm:$0x1]
        %v681 = vlaneseq
        %v682 = vshrl.u32 %v681, 7
        %v683 = vsub.s32 0, %v682
        %v684 = vrot.slane %v679, %v683
        %v686 = vmul.f32 %v521, %v684
        %v687 = vmul.f32 %v526, %v684
        %v688 = vmul.f32 %v531, %v684
        %v689 = vmul.f32 %v536, %v684
        %v690 = vmul.f32 %v541, %v684
        %v691 = vmul.f32 %v546, %v684
        %v692 = vmul.f32 %v551, %v684
        %v693 = vmul.f32 %v556, %v684
        %v694 = vmul.f32 %v561, %v684
        %v695 = vmul.f32 %v566, %v684
        %v696 = vmul.f32 %v571, %v684
        %v697 = vmul.f32 %v576, %v684
        %v698 = vmul.f32 %v581, %v684
        %v699 = vmul.f32 %v586, %v684
        %v700 = vmul.f32 %v591, %v684
        %v701 = vmul.f32 %v596, %v684
        %v702 = vmul.f32 %v601, %v684
        %v703 = vmul.f32 %v606, %v684
        %v704 = vmul.f32 %v611, %v684
        %v705 = vmul.f32 %v616, %v684
        %v706 = vmul.f32 %v621, %v684
        %v707 = vmul.f32 %v626, %v684
        %v708 = vmul.f32 %v631, %v684
        %v709 = vmul.f32 %v636, %v684
        %v710 = vmul.f32 %v641, %v684
        %v711 = vmul.f32 %v646, %v684
        %v712 = vmul.f32 %v651, %v684
        %v713 = vmul.f32 %v656, %v684
        %v714 = vmul.f32 %v661, %v684
        %v715 = vmul.f32 %v666, %v684
        %v716 = vmul.f32 %v671, %v684
        %v717 = vmul.f32 %v676, %v684
        %v718 = vld [vmem:[%s3] sm:$0x1]
        %v720 = vlaneseq
        %v721 = vshrl.u32 %v720, 7
        %v722 = vsub.s32 0, %v721
        %v723 = vrot.slane %v718, %v722
        %v725 = vadd.f32 %v686, %v723
        %v726 = vadd.f32 %v687, %v723
        %v727 = vadd.f32 %v688, %v723
        %v728 = vadd.f32 %v689, %v723
        %v729 = vadd.f32 %v690, %v723
        %v730 = vadd.f32 %v691, %v723
        %v731 = vadd.f32 %v692, %v723
        %v732 = vadd.f32 %v693, %v723
        %v733 = vadd.f32 %v694, %v723
        %v734 = vadd.f32 %v695, %v723
        %v735 = vadd.f32 %v696, %v723
        %v736 = vadd.f32 %v697, %v723
        %v737 = vadd.f32 %v698, %v723
        %v738 = vadd.f32 %v699, %v723
        %v739 = vadd.f32 %v700, %v723
        %v740 = vadd.f32 %v701, %v723
        %v741 = vadd.f32 %v702, %v723
        %v742 = vadd.f32 %v703, %v723
        %v743 = vadd.f32 %v704, %v723
        %v744 = vadd.f32 %v705, %v723
        %v745 = vadd.f32 %v706, %v723
        %v746 = vadd.f32 %v707, %v723
        %v747 = vadd.f32 %v708, %v723
        %v748 = vadd.f32 %v709, %v723
        %v749 = vadd.f32 %v710, %v723
        %v750 = vadd.f32 %v711, %v723
        %v751 = vadd.f32 %v712, %v723
        %v752 = vadd.f32 %v713, %v723
        %v753 = vadd.f32 %v714, %v723
        %v754 = vadd.f32 %v715, %v723
        %v755 = vadd.f32 %v716, %v723
        %v756 = vadd.f32 %v717, %v723
        %v757 = vmax.f32 %v725, 0.0
        %v758 = vmax.f32 %v726, 0.0
        %v759 = vmax.f32 %v727, 0.0
        %v760 = vmax.f32 %v728, 0.0
        %v761 = vmax.f32 %v729, 0.0
        %v762 = vmax.f32 %v730, 0.0
        %v763 = vmax.f32 %v731, 0.0
        %v764 = vmax.f32 %v732, 0.0
        %v765 = vmax.f32 %v733, 0.0
        %v766 = vmax.f32 %v734, 0.0
        %v767 = vmax.f32 %v735, 0.0
        %v768 = vmax.f32 %v736, 0.0
        %v769 = vmax.f32 %v737, 0.0
        %v770 = vmax.f32 %v738, 0.0
        %v771 = vmax.f32 %v739, 0.0
        %v772 = vmax.f32 %v740, 0.0
        %v773 = vmax.f32 %v741, 0.0
        %v774 = vmax.f32 %v742, 0.0
        %v775 = vmax.f32 %v743, 0.0
        %v776 = vmax.f32 %v744, 0.0
        %v777 = vmax.f32 %v745, 0.0
        %v778 = vmax.f32 %v746, 0.0
        %v779 = vmax.f32 %v747, 0.0
        %v780 = vmax.f32 %v748, 0.0
        %v781 = vmax.f32 %v749, 0.0
        %v782 = vmax.f32 %v750, 0.0
        %v783 = vmax.f32 %v751, 0.0
        %v784 = vmax.f32 %v752, 0.0
        %v785 = vmax.f32 %v753, 0.0
        %v786 = vmax.f32 %v754, 0.0
        %v787 = vmax.f32 %v755, 0.0
        %v788 = vmax.f32 %v756, 0.0
        %vm789 = vcmask 523264
        %790 = vst.msk [vmem:[#allocation2] sm:$0xff] %vm789, 0.0
        %791 = vst.msk [vmem:[#allocation2 + $0x8] sm:$0xff] %vm789, 0.0
        %vm792 = vcmask 517120
        %793 = vst.msk [vmem:[#allocation2 + $0x10] sm:$0x3] %vm792, 0.0
        %s794 = scalar_lea.vmem [#allocation2], 408
        %795 = vst.msk [vmem:[%s794] sm:$0xff] %vm789, 0.0
        %796 = vst.msk [vmem:[%s794 + $0x8] sm:$0xff] %vm789, 0.0
        %797 = vst.msk [vmem:[%s794 + $0x10] sm:$0x3] %vm792, 0.0
        %vm798 = vcmask 516096
        %799 = vst.msk [vmem:[#allocation2] sm:$0x1] %vm798, 0.0
        %800 = vst.msk [vmem:[#allocation2 + $0x18] sm:$0x1] %vm798, 0.0
        %801 = vst.msk [vmem:[#allocation2 + $0x30] sm:$0x1] %vm798, 0.0
        %802 = vst.msk [vmem:[#allocation2 + $0x48] sm:$0x1] %vm798, 0.0
        %803 = vst.msk [vmem:[#allocation2 + $0x60] sm:$0x1] %vm798, 0.0
        %804 = vst.msk [vmem:[#allocation2 + $0x78] sm:$0x1] %vm798, 0.0
        %805 = vst.msk [vmem:[#allocation2 + $0x90] sm:$0x1] %vm798, 0.0
        %806 = vst.msk [vmem:[#allocation2 + $0xa8] sm:$0x1] %vm798, 0.0
        %807 = vst.msk [vmem:[#allocation2 + $0xc0] sm:$0x1] %vm798, 0.0
        %808 = vst.msk [vmem:[#allocation2 + $0xd8] sm:$0x1] %vm798, 0.0
        %809 = vst.msk [vmem:[#allocation2 + $0xf0] sm:$0x1] %vm798, 0.0
        %810 = vst.msk [vmem:[#allocation2 + $0x108] sm:$0x1] %vm798, 0.0
        %811 = vst.msk [vmem:[#allocation2 + $0x120] sm:$0x1] %vm798, 0.0
        %812 = vst.msk [vmem:[#allocation2 + $0x138] sm:$0x1] %vm798, 0.0
        %813 = vst.msk [vmem:[#allocation2 + $0x150] sm:$0x1] %vm798, 0.0
        %814 = vst.msk [vmem:[#allocation2 + $0x168] sm:$0x1] %vm798, 0.0
        %815 = vst.msk [vmem:[#allocation2 + $0x180] sm:$0x1] %vm798, 0.0
        %816 = vst.msk [vmem:[#allocation2 + $0x198] sm:$0x1] %vm798, 0.0
        %817 = vst.msk [vmem:[#allocation2 + $0x11] sm:$0x1] %vm798, 0.0
        %818 = vst.msk [vmem:[#allocation2 + $0x29] sm:$0x1] %vm798, 0.0
        %819 = vst.msk [vmem:[#allocation2 + $0x41] sm:$0x1] %vm798, 0.0
        %820 = vst.msk [vmem:[#allocation2 + $0x59] sm:$0x1] %vm798, 0.0
        %821 = vst.msk [vmem:[#allocation2 + $0x71] sm:$0x1] %vm798, 0.0
        %822 = vst.msk [vmem:[#allocation2 + $0x89] sm:$0x1] %vm798, 0.0
        %823 = vst.msk [vmem:[#allocation2 + $0xa1] sm:$0x1] %vm798, 0.0
        %824 = vst.msk [vmem:[#allocation2 + $0xb9] sm:$0x1] %vm798, 0.0
        %825 = vst.msk [vmem:[#allocation2 + $0xd1] sm:$0x1] %vm798, 0.0
        %826 = vst.msk [vmem:[#allocation2 + $0xe9] sm:$0x1] %vm798, 0.0
        %827 = vst.msk [vmem:[#allocation2 + $0x101] sm:$0x1] %vm798, 0.0
        %828 = vst.msk [vmem:[#allocation2 + $0x119] sm:$0x1] %vm798, 0.0
        %829 = vst.msk [vmem:[#allocation2 + $0x131] sm:$0x1] %vm798, 0.0
        %830 = vst.msk [vmem:[#allocation2 + $0x149] sm:$0x1] %vm798, 0.0
        %831 = vst.msk [vmem:[#allocation2 + $0x161] sm:$0x1] %vm798, 0.0
        %832 = vst.msk [vmem:[#allocation2 + $0x179] sm:$0x1] %vm798, 0.0
        %833 = vst.msk [vmem:[#allocation2 + $0x191] sm:$0x1] %vm798, 0.0
        %834 = vst.msk [vmem:[#allocation2 + $0x1a9] sm:$0x1] %vm798, 0.0
        %s835 = scalar_lea.vmem [#allocation2], 24
        %836 = vst.msk [vmem:[%s835 + $0x1] sm:$0xff] %vm789, %v757
        %837 = vst.msk [vmem:[%s835 + $0x9] sm:$0xff] %vm789, %v758
        %838 = vst.msk [vmem:[%s835 + $0x19] sm:$0xff] %vm789, %v759
        %839 = vst.msk [vmem:[%s835 + $0x21] sm:$0xff] %vm789, %v760
        %840 = vst.msk [vmem:[%s835 + $0x31] sm:$0xff] %vm789, %v761
        %841 = vst.msk [vmem:[%s835 + $0x39] sm:$0xff] %vm789, %v762
        %842 = vst.msk [vmem:[%s835 + $0x49] sm:$0xff] %vm789, %v763
        %843 = vst.msk [vmem:[%s835 + $0x51] sm:$0xff] %vm789, %v764
        %844 = vst.msk [vmem:[%s835 + $0x61] sm:$0xff] %vm789, %v765
        %845 = vst.msk [vmem:[%s835 + $0x69] sm:$0xff] %vm789, %v766
        %846 = vst.msk [vmem:[%s835 + $0x79] sm:$0xff] %vm789, %v767
        %847 = vst.msk [vmem:[%s835 + $0x81] sm:$0xff] %vm789, %v768
        %848 = vst.msk [vmem:[%s835 + $0x91] sm:$0xff] %vm789, %v769
        %849 = vst.msk [vmem:[%s835 + $0x99] sm:$0xff] %vm789, %v770
        %850 = vst.msk [vmem:[%s835 + $0xa9] sm:$0xff] %vm789, %v771
        %851 = vst.msk [vmem:[%s835 + $0xb1] sm:$0xff] %vm789, %v772
        %852 = vst.msk [vmem:[%s835 + $0xc1] sm:$0xff] %vm789, %v773
        %853 = vst.msk [vmem:[%s835 + $0xc9] sm:$0xff] %vm789, %v774
        %854 = vst.msk [vmem:[%s835 + $0xd9] sm:$0xff] %vm789, %v775
        %855 = vst.msk [vmem:[%s835 + $0xe1] sm:$0xff] %vm789, %v776
        %856 = vst.msk [vmem:[%s835 + $0xf1] sm:$0xff] %vm789, %v777
        %857 = vst.msk [vmem:[%s835 + $0xf9] sm:$0xff] %vm789, %v778
        %858 = vst.msk [vmem:[%s835 + $0x109] sm:$0xff] %vm789, %v779
        %859 = vst.msk [vmem:[%s835 + $0x111] sm:$0xff] %vm789, %v780
        %860 = vst.msk [vmem:[%s835 + $0x121] sm:$0xff] %vm789, %v781
        %861 = vst.msk [vmem:[%s835 + $0x129] sm:$0xff] %vm789, %v782
        %862 = vst.msk [vmem:[%s835 + $0x139] sm:$0xff] %vm789, %v783
        %863 = vst.msk [vmem:[%s835 + $0x141] sm:$0xff] %vm789, %v784
        %864 = vst.msk [vmem:[%s835 + $0x151] sm:$0xff] %vm789, %v785
        %865 = vst.msk [vmem:[%s835 + $0x159] sm:$0xff] %vm789, %v786
        %866 = vst.msk [vmem:[%s835 + $0x169] sm:$0xff] %vm789, %v787
        %867 = vst.msk [vmem:[%s835 + $0x171] sm:$0xff] %vm789, %v788
        %v868 = vld [vmem:[#allocation2] sm:$0xff]
        %v869 = vld [vmem:[#allocation2 + $0x8] sm:$0xff]
        %v870 = vld [vmem:[#allocation2 + $0x18] sm:$0xff]
        %v871 = vld [vmem:[#allocation2 + $0x20] sm:$0xff]
        %v872 = vld [vmem:[#allocation2 + $0x30] sm:$0xff]
        %v873 = vld [vmem:[#allocation2 + $0x38] sm:$0xff]
        %v874 = vld [vmem:[#allocation2 + $0x48] sm:$0xff]
        %v875 = vld [vmem:[#allocation2 + $0x50] sm:$0xff]
        %v876 = vld [vmem:[#allocation2 + $0x60] sm:$0xff]
        %v877 = vld [vmem:[#allocation2 + $0x68] sm:$0xff]
        %v878 = vld [vmem:[#allocation2 + $0x78] sm:$0xff]
        %v879 = vld [vmem:[#allocation2 + $0x80] sm:$0xff]
        %v880 = vld [vmem:[#allocation2 + $0x90] sm:$0xff]
        %v881 = vld [vmem:[#allocation2 + $0x98] sm:$0xff]
        %v882 = vld [vmem:[#allocation2 + $0xa8] sm:$0xff]
        %v883 = vld [vmem:[#allocation2 + $0xb0] sm:$0xff]
        %v884 = vld [vmem:[#allocation2 + $0xc0] sm:$0xff]
        %v885 = vld [vmem:[#allocation2 + $0xc8] sm:$0xff]
        %v886 = vld [vmem:[#allocation2 + $0xd8] sm:$0xff]
        %v887 = vld [vmem:[#allocation2 + $0xe0] sm:$0xff]
        %v888 = vld [vmem:[#allocation2 + $0xf0] sm:$0xff]
        %v889 = vld [vmem:[#allocation2 + $0xf8] sm:$0xff]
        %v890 = vld [vmem:[#allocation2 + $0x108] sm:$0xff]
        %v891 = vld [vmem:[#allocation2 + $0x110] sm:$0xff]
        %v892 = vld [vmem:[#allocation2 + $0x120] sm:$0xff]
        %v893 = vld [vmem:[#allocation2 + $0x128] sm:$0xff]
        %v894 = vld [vmem:[#allocation2 + $0x138] sm:$0xff]
        %v895 = vld [vmem:[#allocation2 + $0x140] sm:$0xff]
        %v896 = vld [vmem:[#allocation2 + $0x150] sm:$0xff]
        %v897 = vld [vmem:[#allocation2 + $0x158] sm:$0xff]
        %v898 = vld [vmem:[#allocation2 + $0x168] sm:$0xff]
        %v899 = vld [vmem:[#allocation2 + $0x170] sm:$0xff]
        %v900 = vld [vmem:[%s4] sm:$0xff]
        %v901 = vld [vmem:[%s4 + $0x8] sm:$0xff]
        %v902 = vld [vmem:[%s4 + $0x10] sm:$0xff]
        %v903 = vld [vmem:[%s4 + $0x18] sm:$0xff]
        %v904 = vld [vmem:[%s4 + $0x20] sm:$0xff]
        %v905 = vld [vmem:[%s4 + $0x28] sm:$0xff]
        %v906 = vld [vmem:[%s4 + $0x30] sm:$0xff]
        %v907 = vld [vmem:[%s4 + $0x38] sm:$0xff]
        %v909 = vsel %vm789, %v868, 0
        %v912 = vsel %vm789, %v869, 0
        %v915 = vsel %vm789, %v870, 0
        %v918 = vsel %vm789, %v871, 0
        %v921 = vsel %vm789, %v872, 0
        %v924 = vsel %vm789, %v873, 0
        %v927 = vsel %vm789, %v874, 0
        %v930 = vsel %vm789, %v875, 0
        %v933 = vsel %vm789, %v876, 0
        %v936 = vsel %vm789, %v877, 0
        %v939 = vsel %vm789, %v878, 0
        %v942 = vsel %vm789, %v879, 0
        %v945 = vsel %vm789, %v880, 0
        %v948 = vsel %vm789, %v881, 0
        %v951 = vsel %vm789, %v882, 0
        %v954 = vsel %vm789, %v883, 0
        %v957 = vsel %vm789, %v884, 0
        %v960 = vsel %vm789, %v885, 0
        %v963 = vsel %vm789, %v886, 0
        %v966 = vsel %vm789, %v887, 0
        %v969 = vsel %vm789, %v888, 0
        %v972 = vsel %vm789, %v889, 0
        %v975 = vsel %vm789, %v890, 0
        %v978 = vsel %vm789, %v891, 0
        %v981 = vsel %vm789, %v892, 0
        %v984 = vsel %vm789, %v893, 0
        %v987 = vsel %vm789, %v894, 0
        %v990 = vsel %vm789, %v895, 0
        %v993 = vsel %vm789, %v896, 0
        %v996 = vsel %vm789, %v897, 0
        %v999 = vsel %vm789, %v898, 0
        %v1002 = vsel %vm789, %v899, 0
        %1004 = vmatprep.subr.mxu0 0.0
        %1005 = vmatpush1.msra.mxu0 %v900
        %1006 = vmatprep.subr.mxu0 0.0
        %1007 = vmatpush1.msra.mxu0 %v901
        %1008 = vmatprep.subr.mxu0 0.0
        %1009 = vmatpush1.msra.mxu0 %v902
        %1010 = vmatprep.subr.mxu0 0.0
        %1011 = vmatpush1.msra.mxu0 %v903
        %1012 = vmatprep.subr.mxu0 0.0
        %1013 = vmatpush1.msra.mxu0 %v904
        %1014 = vmatprep.subr.mxu0 0.0
        %1015 = vmatpush1.msra.mxu0 %v905
        %1016 = vmatprep.subr.mxu0 0.0
        %1017 = vmatpush1.msra.mxu0 %v906
        %1018 = vmatprep.subr.mxu0 0.0
        %1019 = vmatpush1.msra.mxu0 %v907
        %1020 = vmatprep.subr.mxu0 0.0
        %1021 = vmatpush1.msra.mxu0 0.0
        %1022 = vmatprep.subr.mxu0 0.0
        %1023 = vmatpush1.msra.mxu0 0.0
        %1024 = vmatprep.subr.mxu0 0.0
        %1025 = vmatpush1.msra.mxu0 0.0
        %1026 = vmatprep.subr.mxu0 0.0
        %1027 = vmatpush1.msra.mxu0 0.0
        %1028 = vmatprep.subr.mxu0 0.0
        %1029 = vmatpush1.msra.mxu0 0.0
        %1030 = vmatprep.subr.mxu0 0.0
        %1031 = vmatpush1.msra.mxu0 0.0
        %1032 = vmatprep.subr.mxu0 0.0
        %1033 = vmatpush1.msra.mxu0 0.0
        %1034 = vmatprep.subr.mxu0 0.0
        %1035 = vmatpush1.msra.mxu0 0.0
        %1036 = vmatprep.subr.mxu0 0.0
        %1037 = vmatpush1.msra.mxu0 0.0
        %1038 = vmatprep.subr.mxu0 0.0
        %1039 = vmatpush1.msra.mxu0 0.0
        %1040 = vmatprep.subr.mxu0 0.0
        %1041 = vmatpush1.msra.mxu0 0.0
        %1042 = vmatprep.subr.mxu0 0.0
        %1043 = vmatpush1.msra.mxu0 0.0
        %1044 = vmatprep.subr.mxu0 0.0
        %1045 = vmatpush1.msra.mxu0 0.0
        %1046 = vmatprep.subr.mxu0 0.0
        %1047 = vmatpush1.msra.mxu0 0.0
        %1048 = vmatprep.subr.mxu0 0.0
        %1049 = vmatpush1.msra.mxu0 0.0
        %1050 = vmatprep.subr.mxu0 0.0
        %1051 = vmatpush1.msra.mxu0 0.0
        %1052 = vmatprep.subr.mxu0 0.0
        %1053 = vmatpush1.msra.mxu0 0.0
        %1054 = vmatprep.subr.mxu0 0.0
        %1055 = vmatpush1.msra.mxu0 0.0
        %1056 = vmatprep.subr.mxu0 0.0
        %1057 = vmatpush1.msra.mxu0 0.0
        %1058 = vmatprep.subr.mxu0 0.0
        %1059 = vmatpush1.msra.mxu0 0.0
        %1060 = vmatprep.subr.mxu0 0.0
        %1061 = vmatpush1.msra.mxu0 0.0
        %1062 = vmatprep.subr.mxu0 0.0
        %1063 = vmatpush1.msra.mxu0 0.0
        %1064 = vmatprep.subr.mxu0 0.0
        %1065 = vmatpush1.msra.mxu0 0.0
        %1066 = vmatprep.subr.mxu0 0.0
        %1067 = vmatpush1.msra.mxu0 0.0
        %1068 = vmatprep.mubr.f32.mxu0 0.0
        %1069 = vmatmul.mubr.f32.gmra.mrb[0].mxu0 %v909
        %v1070 = vpop.f32.mrb[0].mxu0
        %v1071 = vadd.f32 0.0, %v1070
        %v1072 = vpop.f32.mrb[0].mxu0
        %1073 = vmatprep.mubr.f32.mxu0 0.0
        %1074 = vmatmul.mubr.f32.gmra.mrb[0].mxu0 %v912
        %v1075 = vpop.f32.mrb[0].mxu0
        %v1076 = vadd.f32 0.0, %v1075
        %v1077 = vpop.f32.mrb[0].mxu0
        %1078 = vmatprep.mubr.f32.mxu0 0.0
        %1079 = vmatmul.mubr.f32.gmra.mrb[0].mxu0 %v915
        %v1080 = vpop.f32.mrb[0].mxu0
        %v1081 = vadd.f32 0.0, %v1080
        %v1082 = vpop.f32.mrb[0].mxu0
        %1083 = vmatprep.mubr.f32.mxu0 0.0
        %1084 = vmatmul.mubr.f32.gmra.mrb[0].mxu0 %v918
        %v1085 = vpop.f32.mrb[0].mxu0
        %v1086 = vadd.f32 0.0, %v1085
        %v1087 = vpop.f32.mrb[0].mxu0
        %1088 = vmatprep.mubr.f32.mxu0 0.0
        %1089 = vmatmul.mubr.f32.gmra.mrb[0].mxu0 %v921
        %v1090 = vpop.f32.mrb[0].mxu0
        %v1091 = vadd.f32 0.0, %v1090
        %v1092 = vpop.f32.mrb[0].mxu0
        %1093 = vmatprep.mubr.f32.mxu0 0.0
        %1094 = vmatmul.mubr.f32.gmra.mrb[0].mxu0 %v924
        %v1095 = vpop.f32.mrb[0].mxu0
        %v1096 = vadd.f32 0.0, %v1095
        %v1097 = vpop.f32.mrb[0].mxu0
        %1098 = vmatprep.mubr.f32.mxu0 0.0
        %1099 = vmatmul.mubr.f32.gmra.mrb[0].mxu0 %v927
        %v1100 = vpop.f32.mrb[0].mxu0
        %v1101 = vadd.f32 0.0, %v1100
        %v1102 = vpop.f32.mrb[0].mxu0
        %1103 = vmatprep.mubr.f32.mxu0 0.0
        %1104 = vmatmul.mubr.f32.gmra.mrb[0].mxu0 %v930
        %v1105 = vpop.f32.mrb[0].mxu0
        %v1106 = vadd.f32 0.0, %v1105
        %v1107 = vpop.f32.mrb[0].mxu0
        %1108 = vmatprep.mubr.f32.mxu0 0.0
        %1109 = vmatmul.mubr.f32.gmra.mrb[0].mxu0 %v933
        %v1110 = vpop.f32.mrb[0].mxu0
        %v1111 = vadd.f32 0.0, %v1110
        %v1112 = vpop.f32.mrb[0].mxu0
        %1113 = vmatprep.mubr.f32.mxu0 0.0
        %1114 = vmatmul.mubr.f32.gmra.mrb[0].mxu0 %v936
        %v1115 = vpop.f32.mrb[0].mxu0
        %v1116 = vadd.f32 0.0, %v1115
        %v1117 = vpop.f32.mrb[0].mxu0
        %1118 = vmatprep.mubr.f32.mxu0 0.0
        %1119 = vmatmul.mubr.f32.gmra.mrb[0].mxu0 %v939
        %v1120 = vpop.f32.mrb[0].mxu0
        %v1121 = vadd.f32 0.0, %v1120
        %v1122 = vpop.f32.mrb[0].mxu0
        %1123 = vmatprep.mubr.f32.mxu0 0.0
        %1124 = vmatmul.mubr.f32.gmra.mrb[0].mxu0 %v942
        %v1125 = vpop.f32.mrb[0].mxu0
        %v1126 = vadd.f32 0.0, %v1125
        %v1127 = vpop.f32.mrb[0].mxu0
        %1128 = vmatprep.mubr.f32.mxu0 0.0
        %1129 = vmatmul.mubr.f32.gmra.mrb[0].mxu0 %v945
        %v1130 = vpop.f32.mrb[0].mxu0
        %v1131 = vadd.f32 0.0, %v1130
        %v1132 = vpop.f32.mrb[0].mxu0
        %1133 = vmatprep.mubr.f32.mxu0 0.0
        %1134 = vmatmul.mubr.f32.gmra.mrb[0].mxu0 %v948
        %v1135 = vpop.f32.mrb[0].mxu0
        %v1136 = vadd.f32 0.0, %v1135
        %v1137 = vpop.f32.mrb[0].mxu0
        %1138 = vmatprep.mubr.f32.mxu0 0.0
        %1139 = vmatmul.mubr.f32.gmra.mrb[0].mxu0 %v951
        %v1140 = vpop.f32.mrb[0].mxu0
        %v1141 = vadd.f32 0.0, %v1140
        %v1142 = vpop.f32.mrb[0].mxu0
        %1143 = vmatprep.mubr.f32.mxu0 0.0
        %1144 = vmatmul.mubr.f32.gmra.mrb[0].mxu0 %v954
        %v1145 = vpop.f32.mrb[0].mxu0
        %v1146 = vadd.f32 0.0, %v1145
        %v1147 = vpop.f32.mrb[0].mxu0
        %1148 = vmatprep.mubr.f32.mxu0 0.0
        %1149 = vmatmul.mubr.f32.gmra.mrb[0].mxu0 %v957
        %v1150 = vpop.f32.mrb[0].mxu0
        %v1151 = vadd.f32 0.0, %v1150
        %v1152 = vpop.f32.mrb[0].mxu0
        %1153 = vmatprep.mubr.f32.mxu0 0.0
        %1154 = vmatmul.mubr.f32.gmra.mrb[0].mxu0 %v960
        %v1155 = vpop.f32.mrb[0].mxu0
        %v1156 = vadd.f32 0.0, %v1155
        %v1157 = vpop.f32.mrb[0].mxu0
        %1158 = vmatprep.mubr.f32.mxu0 0.0
        %1159 = vmatmul.mubr.f32.gmra.mrb[0].mxu0 %v963
        %v1160 = vpop.f32.mrb[0].mxu0
        %v1161 = vadd.f32 0.0, %v1160
        %v1162 = vpop.f32.mrb[0].mxu0
        %1163 = vmatprep.mubr.f32.mxu0 0.0
        %1164 = vmatmul.mubr.f32.gmra.mrb[0].mxu0 %v966
        %v1165 = vpop.f32.mrb[0].mxu0
        %v1166 = vadd.f32 0.0, %v1165
        %v1167 = vpop.f32.mrb[0].mxu0
        %1168 = vmatprep.mubr.f32.mxu0 0.0
        %1169 = vmatmul.mubr.f32.gmra.mrb[0].mxu0 %v969
        %v1170 = vpop.f32.mrb[0].mxu0
        %v1171 = vadd.f32 0.0, %v1170
        %v1172 = vpop.f32.mrb[0].mxu0
        %1173 = vmatprep.mubr.f32.mxu0 0.0
        %1174 = vmatmul.mubr.f32.gmra.mrb[0].mxu0 %v972
        %v1175 = vpop.f32.mrb[0].mxu0
        %v1176 = vadd.f32 0.0, %v1175
        %v1177 = vpop.f32.mrb[0].mxu0
        %1178 = vmatprep.mubr.f32.mxu0 0.0
        %1179 = vmatmul.mubr.f32.gmra.mrb[0].mxu0 %v975
        %v1180 = vpop.f32.mrb[0].mxu0
        %v1181 = vadd.f32 0.0, %v1180
        %v1182 = vpop.f32.mrb[0].mxu0
        %1183 = vmatprep.mubr.f32.mxu0 0.0
        %1184 = vmatmul.mubr.f32.gmra.mrb[0].mxu0 %v978
        %v1185 = vpop.f32.mrb[0].mxu0
        %v1186 = vadd.f32 0.0, %v1185
        %v1187 = vpop.f32.mrb[0].mxu0
        %1188 = vmatprep.mubr.f32.mxu0 0.0
        %1189 = vmatmul.mubr.f32.gmra.mrb[0].mxu0 %v981
        %v1190 = vpop.f32.mrb[0].mxu0
        %v1191 = vadd.f32 0.0, %v1190
        %v1192 = vpop.f32.mrb[0].mxu0
        %1193 = vmatprep.mubr.f32.mxu0 0.0
        %1194 = vmatmul.mubr.f32.gmra.mrb[0].mxu0 %v984
        %v1195 = vpop.f32.mrb[0].mxu0
        %v1196 = vadd.f32 0.0, %v1195
        %v1197 = vpop.f32.mrb[0].mxu0
        %1198 = vmatprep.mubr.f32.mxu0 0.0
        %1199 = vmatmul.mubr.f32.gmra.mrb[0].mxu0 %v987
        %v1200 = vpop.f32.mrb[0].mxu0
        %v1201 = vadd.f32 0.0, %v1200
        %v1202 = vpop.f32.mrb[0].mxu0
        %1203 = vmatprep.mubr.f32.mxu0 0.0
        %1204 = vmatmul.mubr.f32.gmra.mrb[0].mxu0 %v990
        %v1205 = vpop.f32.mrb[0].mxu0
        %v1206 = vadd.f32 0.0, %v1205
        %v1207 = vpop.f32.mrb[0].mxu0
        %1208 = vmatprep.mubr.f32.mxu0 0.0
        %1209 = vmatmul.mubr.f32.gmra.mrb[0].mxu0 %v993
        %v1210 = vpop.f32.mrb[0].mxu0
        %v1211 = vadd.f32 0.0, %v1210
        %v1212 = vpop.f32.mrb[0].mxu0
        %1213 = vmatprep.mubr.f32.mxu0 0.0
        %1214 = vmatmul.mubr.f32.gmra.mrb[0].mxu0 %v996
        %v1215 = vpop.f32.mrb[0].mxu0
        %v1216 = vadd.f32 0.0, %v1215
        %v1217 = vpop.f32.mrb[0].mxu0
        %1218 = vmatprep.mubr.f32.mxu0 0.0
        %1219 = vmatmul.mubr.f32.gmra.mrb[0].mxu0 %v999
        %v1220 = vpop.f32.mrb[0].mxu0
        %v1221 = vadd.f32 0.0, %v1220
        %v1222 = vpop.f32.mrb[0].mxu0
        %1223 = vmatprep.mubr.f32.mxu0 0.0
        %1224 = vmatmul.mubr.f32.gmra.mrb[0].mxu0 %v1002
        %v1225 = vpop.f32.mrb[0].mxu0
        %v1226 = vadd.f32 0.0, %v1225
        %v1227 = vpop.f32.mrb[0].mxu0
        %1228 = vdwg.mxu0
        %1229 = vst.msk [vmem:[#allocation3] sm:$0xff] %vm789, %v1071
        %1230 = vst.msk [vmem:[#allocation3 + $0x8] sm:$0xff] %vm789, %v1076
        %1231 = vst.msk [vmem:[#allocation3 + $0x10] sm:$0xff] %vm789, %v1081
        %1232 = vst.msk [vmem:[#allocation3 + $0x18] sm:$0xff] %vm789, %v1086
        %1233 = vst.msk [vmem:[#allocation3 + $0x20] sm:$0xff] %vm789, %v1091
        %1234 = vst.msk [vmem:[#allocation3 + $0x28] sm:$0xff] %vm789, %v1096
        %1235 = vst.msk [vmem:[#allocation3 + $0x30] sm:$0xff] %vm789, %v1101
        %1236 = vst.msk [vmem:[#allocation3 + $0x38] sm:$0xff] %vm789, %v1106
        %1237 = vst.msk [vmem:[#allocation3 + $0x40] sm:$0xff] %vm789, %v1111
        %1238 = vst.msk [vmem:[#allocation3 + $0x48] sm:$0xff] %vm789, %v1116
        %1239 = vst.msk [vmem:[#allocation3 + $0x50] sm:$0xff] %vm789, %v1121
        %1240 = vst.msk [vmem:[#allocation3 + $0x58] sm:$0xff] %vm789, %v1126
        %1241 = vst.msk [vmem:[#allocation3 + $0x60] sm:$0xff] %vm789, %v1131
        %1242 = vst.msk [vmem:[#allocation3 + $0x68] sm:$0xff] %vm789, %v1136
        %1243 = vst.msk [vmem:[#allocation3 + $0x70] sm:$0xff] %vm789, %v1141
        %1244 = vst.msk [vmem:[#allocation3 + $0x78] sm:$0xff] %vm789, %v1146
        %1245 = vst.msk [vmem:[#allocation3 + $0x80] sm:$0xff] %vm789, %v1151
        %1246 = vst.msk [vmem:[#allocation3 + $0x88] sm:$0xff] %vm789, %v1156
        %1247 = vst.msk [vmem:[#allocation3 + $0x90] sm:$0xff] %vm789, %v1161
        %1248 = vst.msk [vmem:[#allocation3 + $0x98] sm:$0xff] %vm789, %v1166
        %1249 = vst.msk [vmem:[#allocation3 + $0xa0] sm:$0xff] %vm789, %v1171
        %1250 = vst.msk [vmem:[#allocation3 + $0xa8] sm:$0xff] %vm789, %v1176
        %1251 = vst.msk [vmem:[#allocation3 + $0xb0] sm:$0xff] %vm789, %v1181
        %1252 = vst.msk [vmem:[#allocation3 + $0xb8] sm:$0xff] %vm789, %v1186
        %1253 = vst.msk [vmem:[#allocation3 + $0xc0] sm:$0xff] %vm789, %v1191
        %1254 = vst.msk [vmem:[#allocation3 + $0xc8] sm:$0xff] %vm789, %v1196
        %1255 = vst.msk [vmem:[#allocation3 + $0xd0] sm:$0xff] %vm789, %v1201
        %1256 = vst.msk [vmem:[#allocation3 + $0xd8] sm:$0xff] %vm789, %v1206
        %1257 = vst.msk [vmem:[#allocation3 + $0xe0] sm:$0xff] %vm789, %v1211
        %1258 = vst.msk [vmem:[#allocation3 + $0xe8] sm:$0xff] %vm789, %v1216
        %1259 = vst.msk [vmem:[#allocation3 + $0xf0] sm:$0xff] %vm789, %v1221
        %1260 = vst.msk [vmem:[#allocation3 + $0xf8] sm:$0xff] %vm789, %v1226
        %v1261 = vld [vmem:[#allocation2 + $0x1] sm:$0xff]
        %v1262 = vld [vmem:[#allocation2 + $0x9] sm:$0xff]
        %v1263 = vld [vmem:[#allocation2 + $0x19] sm:$0xff]
        %v1264 = vld [vmem:[#allocation2 + $0x21] sm:$0xff]
        %v1265 = vld [vmem:[#allocation2 + $0x31] sm:$0xff]
        %v1266 = vld [vmem:[#allocation2 + $0x39] sm:$0xff]
        %v1267 = vld [vmem:[#allocation2 + $0x49] sm:$0xff]
        %v1268 = vld [vmem:[#allocation2 + $0x51] sm:$0xff]
        %v1269 = vld [vmem:[#allocation2 + $0x61] sm:$0xff]
        %v1270 = vld [vmem:[#allocation2 + $0x69] sm:$0xff]
        %v1271 = vld [vmem:[#allocation2 + $0x79] sm:$0xff]
        %v1272 = vld [vmem:[#allocation2 + $0x81] sm:$0xff]
        %v1273 = vld [vmem:[#allocation2 + $0x91] sm:$0xff]
        %v1274 = vld [vmem:[#allocation2 + $0x99] sm:$0xff]
        %v1275 = vld [vmem:[#allocation2 + $0xa9] sm:$0xff]
        %v1276 = vld [vmem:[#allocation2 + $0xb1] sm:$0xff]
        %v1277 = vld [vmem:[#allocation2 + $0xc1] sm:$0xff]
        %v1278 = vld [vmem:[#allocation2 + $0xc9] sm:$0xff]
        %v1279 = vld [vmem:[#allocation2 + $0xd9] sm:$0xff]
        %v1280 = vld [vmem:[#allocation2 + $0xe1] sm:$0xff]
        %v1281 = vld [vmem:[#allocation2 + $0xf1] sm:$0xff]
        %v1282 = vld [vmem:[#allocation2 + $0xf9] sm:$0xff]
        %v1283 = vld [vmem:[#allocation2 + $0x109] sm:$0xff]
        %v1284 = vld [vmem:[#allocation2 + $0x111] sm:$0xff]
        %v1285 = vld [vmem:[#allocation2 + $0x121] sm:$0xff]
        %v1286 = vld [vmem:[#allocation2 + $0x129] sm:$0xff]
        %v1287 = vld [vmem:[#allocation2 + $0x139] sm:$0xff]
        %v1288 = vld [vmem:[#allocation2 + $0x141] sm:$0xff]
        %v1289 = vld [vmem:[#allocation2 + $0x151] sm:$0xff]
        %v1290 = vld [vmem:[#allocation2 + $0x159] sm:$0xff]
        %v1291 = vld [vmem:[#allocation2 + $0x169] sm:$0xff]
        %v1292 = vld [vmem:[#allocation2 + $0x171] sm:$0xff]
        %v1293 = vld [vmem:[%s4 + $0x40] sm:$0xff]
        %v1294 = vld [vmem:[%s4 + $0x48] sm:$0xff]
        %v1295 = vld [vmem:[%s4 + $0x50] sm:$0xff]
        %v1296 = vld [vmem:[%s4 + $0x58] sm:$0xff]
        %v1297 = vld [vmem:[%s4 + $0x60] sm:$0xff]
        %v1298 = vld [vmem:[%s4 + $0x68] sm:$0xff]
        %v1299 = vld [vmem:[%s4 + $0x70] sm:$0xff]
        %v1300 = vld [vmem:[%s4 + $0x78] sm:$0xff]
        %v1302 = vsel %vm789, %v1261, 0
        %v1305 = vsel %vm789, %v1262, 0
        %v1308 = vsel %vm789, %v1263, 0
        %v1311 = vsel %vm789, %v1264, 0
        %v1314 = vsel %vm789, %v1265, 0
        %v1317 = vsel %vm789, %v1266, 0
        %v1320 = vsel %vm789, %v1267, 0
        %v1323 = vsel %vm789, %v1268, 0
        %v1326 = vsel %vm789, %v1269, 0
        %v1329 = vsel %vm789, %v1270, 0
        %v1332 = vsel %vm789, %v1271, 0
        %v1335 = vsel %vm789, %v1272, 0
        %v1338 = vsel %vm789, %v1273, 0
        %v1341 = vsel %vm789, %v1274, 0
        %v1344 = vsel %vm789, %v1275, 0
        %v1347 = vsel %vm789, %v1276, 0
        %v1350 = vsel %vm789, %v1277, 0
        %v1353 = vsel %vm789, %v1278, 0
        %v1356 = vsel %vm789, %v1279, 0
        %v1359 = vsel %vm789, %v1280, 0
        %v1362 = vsel %vm789, %v1281, 0
        %v1365 = vsel %vm789, %v1282, 0
        %v1368 = vsel %vm789, %v1283, 0
        %v1371 = vsel %vm789, %v1284, 0
        %v1374 = vsel %vm789, %v1285, 0
        %v1377 = vsel %vm789, %v1286, 0
        %v1380 = vsel %vm789, %v1287, 0
        %v1383 = vsel %vm789, %v1288, 0
        %v1386 = vsel %vm789, %v1289, 0
        %v1389 = vsel %vm789, %v1290, 0
        %v1392 = vsel %vm789, %v1291, 0
        %v1395 = vsel %vm789, %v1292, 0
        %1397 = vmatprep.subr.mxu0 0.0
        %1398 = vmatpush1.msra.mxu0 %v1293
        %1399 = vmatprep.subr.mxu0 0.0
        %1400 = vmatpush1.msra.mxu0 %v1294
        %1401 = vmatprep.subr.mxu0 0.0
        %1402 = vmatpush1.msra.mxu0 %v1295
        %1403 = vmatprep.subr.mxu0 0.0
        %1404 = vmatpush1.msra.mxu0 %v1296
        %1405 = vmatprep.subr.mxu0 0.0
        %1406 = vmatpush1.msra.mxu0 %v1297
        %1407 = vmatprep.subr.mxu0 0.0
        %1408 = vmatpush1.msra.mxu0 %v1298
        %1409 = vmatprep.subr.mxu0 0.0
        %1410 = vmatpush1.msra.mxu0 %v1299
        %1411 = vmatprep.subr.mxu0 0.0
        %1412 = vmatpush1.msra.mxu0 %v1300
        %1413 = vmatprep.subr.mxu0 0.0
        %1414 = vmatpush1.msra.mxu0 0.0
        %1415 = vmatprep.subr.mxu0 0.0
        %1416 = vmatpush1.msra.mxu0 0.0
        %1417 = vmatprep.subr.mxu0 0.0
        %1418 = vmatpush1.msra.mxu0 0.0
        %1419 = vmatprep.subr.mxu0 0.0
        %1420 = vmatpush1.msra.mxu0 0.0
        %1421 = vmatprep.subr.mxu0 0.0
        %1422 = vmatpush1.msra.mxu0 0.0
        %1423 = vmatprep.subr.mxu0 0.0
        %1424 = vmatpush1.msra.mxu0 0.0
        %1425 = vmatprep.subr.mxu0 0.0
        %1426 = vmatpush1.msra.mxu0 0.0
        %1427 = vmatprep.subr.mxu0 0.0
        %1428 = vmatpush1.msra.mxu0 0.0
        %1429 = vmatprep.subr.mxu0 0.0
        %1430 = vmatpush1.msra.mxu0 0.0
        %1431 = vmatprep.subr.mxu0 0.0
        %1432 = vmatpush1.msra.mxu0 0.0
        %1433 = vmatprep.subr.mxu0 0.0
        %1434 = vmatpush1.msra.mxu0 0.0
        %1435 = vmatprep.subr.mxu0 0.0
        %1436 = vmatpush1.msra.mxu0 0.0
        %1437 = vmatprep.subr.mxu0 0.0
        %1438 = vmatpush1.msra.mxu0 0.0
        %1439 = vmatprep.subr.mxu0 0.0
        %1440 = vmatpush1.msra.mxu0 0.0
        %1441 = vmatprep.subr.mxu0 0.0
        %1442 = vmatpush1.msra.mxu0 0.0
        %1443 = vmatprep.subr.mxu0 0.0
        %1444 = vmatpush1.msra.mxu0 0.0
        %1445 = vmatprep.subr.mxu0 0.0
        %1446 = vmatpush1.msra.mxu0 0.0
        %1447 = vmatprep.subr.mxu0 0.0
        %1448 = vmatpush1.msra.mxu0 0.0
        %1449 = vmatprep.subr.mxu0 0.0
        %1450 = vmatpush1.msra.mxu0 0.0
        %1451 = vmatprep.subr.mxu0 0.0
        %1452 = vmatpush1.msra.mxu0 0.0
        %1453 = vmatprep.subr.mxu0 0.0
        %1454 = vmatpush1.msra.mxu0 0.0
        %1455 = vmatprep.subr.mxu0 0.0
        %1456 = vmatpush1.msra.mxu0 0.0
        %1457 = vmatprep.subr.mxu0 0.0
        %1458 = vmatpush1.msra.mxu0 0.0
        %1459 = vmatprep.subr.mxu0 0.0
        %1460 = vmatpush1.msra.mxu0 0.0
        %1461 = vmatprep.mubr.f32.mxu0 0.0
        %1462 = vmatmul.mubr.f32.gmra.mrb[0].mxu0 %v1302
        %v1463 = vpop.f32.mrb[0].mxu0
        %v1464 = vadd.f32 0.0, %v1463
        %v1465 = vpop.f32.mrb[0].mxu0
        %1466 = vmatprep.mubr.f32.mxu0 0.0
        %1467 = vmatmul.mubr.f32.gmra.mrb[0].mxu0 %v1305
        %v1468 = vpop.f32.mrb[0].mxu0
        %v1469 = vadd.f32 0.0, %v1468
        %v1470 = vpop.f32.mrb[0].mxu0
        %1471 = vmatprep.mubr.f32.mxu0 0.0
        %1472 = vmatmul.mubr.f32.gmra.mrb[0].mxu0 %v1308
        %v1473 = vpop.f32.mrb[0].mxu0
        %v1474 = vadd.f32 0.0, %v1473
        %v1475 = vpop.f32.mrb[0].mxu0
        %1476 = vmatprep.mubr.f32.mxu0 0.0
        %1477 = vmatmul.mubr.f32.gmra.mrb[0].mxu0 %v1311
        %v1478 = vpop.f32.mrb[0].mxu0
        %v1479 = vadd.f32 0.0, %v1478
        %v1480 = vpop.f32.mrb[0].mxu0
        %1481 = vmatprep.mubr.f32.mxu0 0.0
        %1482 = vmatmul.mubr.f32.gmra.mrb[0].mxu0 %v1314
        %v1483 = vpop.f32.mrb[0].mxu0
        %v1484 = vadd.f32 0.0, %v1483
        %v1485 = vpop.f32.mrb[0].mxu0
        %1486 = vmatprep.mubr.f32.mxu0 0.0
        %1487 = vmatmul.mubr.f32.gmra.mrb[0].mxu0 %v1317
        %v1488 = vpop.f32.mrb[0].mxu0
        %v1489 = vadd.f32 0.0, %v1488
        %v1490 = vpop.f32.mrb[0].mxu0
        %1491 = vmatprep.mubr.f32.mxu0 0.0
        %1492 = vmatmul.mubr.f32.gmra.mrb[0].mxu0 %v1320
        %v1493 = vpop.f32.mrb[0].mxu0
        %v1494 = vadd.f32 0.0, %v1493
        %v1495 = vpop.f32.mrb[0].mxu0
        %1496 = vmatprep.mubr.f32.mxu0 0.0
        %1497 = vmatmul.mubr.f32.gmra.mrb[0].mxu0 %v1323
        %v1498 = vpop.f32.mrb[0].mxu0
        %v1499 = vadd.f32 0.0, %v1498
        %v1500 = vpop.f32.mrb[0].mxu0
        %1501 = vmatprep.mubr.f32.mxu0 0.0
        %1502 = vmatmul.mubr.f32.gmra.mrb[0].mxu0 %v1326
        %v1503 = vpop.f32.mrb[0].mxu0
        %v1504 = vadd.f32 0.0, %v1503
        %v1505 = vpop.f32.mrb[0].mxu0
        %1506 = vmatprep.mubr.f32.mxu0 0.0
        %1507 = vmatmul.mubr.f32.gmra.mrb[0].mxu0 %v1329
        %v1508 = vpop.f32.mrb[0].mxu0
        %v1509 = vadd.f32 0.0, %v1508
        %v1510 = vpop.f32.mrb[0].mxu0
        %1511 = vmatprep.mubr.f32.mxu0 0.0
        %1512 = vmatmul.mubr.f32.gmra.mrb[0].mxu0 %v1332
        %v1513 = vpop.f32.mrb[0].mxu0
        %v1514 = vadd.f32 0.0, %v1513
        %v1515 = vpop.f32.mrb[0].mxu0
        %1516 = vmatprep.mubr.f32.mxu0 0.0
        %1517 = vmatmul.mubr.f32.gmra.mrb[0].mxu0 %v1335
        %v1518 = vpop.f32.mrb[0].mxu0
        %v1519 = vadd.f32 0.0, %v1518
        %v1520 = vpop.f32.mrb[0].mxu0
        %1521 = vmatprep.mubr.f32.mxu0 0.0
        %1522 = vmatmul.mubr.f32.gmra.mrb[0].mxu0 %v1338
        %v1523 = vpop.f32.mrb[0].mxu0
        %v1524 = vadd.f32 0.0, %v1523
        %v1525 = vpop.f32.mrb[0].mxu0
        %1526 = vmatprep.mubr.f32.mxu0 0.0
        %1527 = vmatmul.mubr.f32.gmra.mrb[0].mxu0 %v1341
        %v1528 = vpop.f32.mrb[0].mxu0
        %v1529 = vadd.f32 0.0, %v1528
        %v1530 = vpop.f32.mrb[0].mxu0
        %1531 = vmatprep.mubr.f32.mxu0 0.0
        %1532 = vmatmul.mubr.f32.gmra.mrb[0].mxu0 %v1344
        %v1533 = vpop.f32.mrb[0].mxu0
        %v1534 = vadd.f32 0.0, %v1533
        %v1535 = vpop.f32.mrb[0].mxu0
        %1536 = vmatprep.mubr.f32.mxu0 0.0
        %1537 = vmatmul.mubr.f32.gmra.mrb[0].mxu0 %v1347
        %v1538 = vpop.f32.mrb[0].mxu0
        %v1539 = vadd.f32 0.0, %v1538
        %v1540 = vpop.f32.mrb[0].mxu0
        %1541 = vmatprep.mubr.f32.mxu0 0.0
        %1542 = vmatmul.mubr.f32.gmra.mrb[0].mxu0 %v1350
        %v1543 = vpop.f32.mrb[0].mxu0
        %v1544 = vadd.f32 0.0, %v1543
        %v1545 = vpop.f32.mrb[0].mxu0
        %1546 = vmatprep.mubr.f32.mxu0 0.0
        %1547 = vmatmul.mubr.f32.gmra.mrb[0].mxu0 %v1353
        %v1548 = vpop.f32.mrb[0].mxu0
        %v1549 = vadd.f32 0.0, %v1548
        %v1550 = vpop.f32.mrb[0].mxu0
        %1551 = vmatprep.mubr.f32.mxu0 0.0
        %1552 = vmatmul.mubr.f32.gmra.mrb[0].mxu0 %v1356
        %v1553 = vpop.f32.mrb[0].mxu0
        %v1554 = vadd.f32 0.0, %v1553
        %v1555 = vpop.f32.mrb[0].mxu0
        %1556 = vmatprep.mubr.f32.mxu0 0.0
        %1557 = vmatmul.mubr.f32.gmra.mrb[0].mxu0 %v1359
        %v1558 = vpop.f32.mrb[0].mxu0
        %v1559 = vadd.f32 0.0, %v1558
        %v1560 = vpop.f32.mrb[0].mxu0
        %1561 = vmatprep.mubr.f32.mxu0 0.0
        %1562 = vmatmul.mubr.f32.gmra.mrb[0].mxu0 %v1362
        %v1563 = vpop.f32.mrb[0].mxu0
        %v1564 = vadd.f32 0.0, %v1563
        %v1565 = vpop.f32.mrb[0].mxu0
        %1566 = vmatprep.mubr.f32.mxu0 0.0
        %1567 = vmatmul.mubr.f32.gmra.mrb[0].mxu0 %v1365
        %v1568 = vpop.f32.mrb[0].mxu0
        %v1569 = vadd.f32 0.0, %v1568
        %v1570 = vpop.f32.mrb[0].mxu0
        %1571 = vmatprep.mubr.f32.mxu0 0.0
        %1572 = vmatmul.mubr.f32.gmra.mrb[0].mxu0 %v1368
        %v1573 = vpop.f32.mrb[0].mxu0
        %v1574 = vadd.f32 0.0, %v1573
        %v1575 = vpop.f32.mrb[0].mxu0
        %1576 = vmatprep.mubr.f32.mxu0 0.0
        %1577 = vmatmul.mubr.f32.gmra.mrb[0].mxu0 %v1371
        %v1578 = vpop.f32.mrb[0].mxu0
        %v1579 = vadd.f32 0.0, %v1578
        %v1580 = vpop.f32.mrb[0].mxu0
        %1581 = vmatprep.mubr.f32.mxu0 0.0
        %1582 = vmatmul.mubr.f32.gmra.mrb[0].mxu0 %v1374
        %v1583 = vpop.f32.mrb[0].mxu0
        %v1584 = vadd.f32 0.0, %v1583
        %v1585 = vpop.f32.mrb[0].mxu0
        %1586 = vmatprep.mubr.f32.mxu0 0.0
        %1587 = vmatmul.mubr.f32.gmra.mrb[0].mxu0 %v1377
        %v1588 = vpop.f32.mrb[0].mxu0
        %v1589 = vadd.f32 0.0, %v1588
        %v1590 = vpop.f32.mrb[0].mxu0
        %1591 = vmatprep.mubr.f32.mxu0 0.0
        %1592 = vmatmul.mubr.f32.gmra.mrb[0].mxu0 %v1380
        %v1593 = vpop.f32.mrb[0].mxu0
        %v1594 = vadd.f32 0.0, %v1593
        %v1595 = vpop.f32.mrb[0].mxu0
        %1596 = vmatprep.mubr.f32.mxu0 0.0
        %1597 = vmatmul.mubr.f32.gmra.mrb[0].mxu0 %v1383
        %v1598 = vpop.f32.mrb[0].mxu0
        %v1599 = vadd.f32 0.0, %v1598
        %v1600 = vpop.f32.mrb[0].mxu0
        %1601 = vmatprep.mubr.f32.mxu0 0.0
        %1602 = vmatmul.mubr.f32.gmra.mrb[0].mxu0 %v1386
        %v1603 = vpop.f32.mrb[0].mxu0
        %v1604 = vadd.f32 0.0, %v1603
        %v1605 = vpop.f32.mrb[0].mxu0
        %1606 = vmatprep.mubr.f32.mxu0 0.0
        %1607 = vmatmul.mubr.f32.gmra.mrb[0].mxu0 %v1389
        %v1608 = vpop.f32.mrb[0].mxu0
        %v1609 = vadd.f32 0.0, %v1608
        %v1610 = vpop.f32.mrb[0].mxu0
        %1611 = vmatprep.mubr.f32.mxu0 0.0
        %1612 = vmatmul.mubr.f32.gmra.mrb[0].mxu0 %v1392
        %v1613 = vpop.f32.mrb[0].mxu0
        %v1614 = vadd.f32 0.0, %v1613
        %v1615 = vpop.f32.mrb[0].mxu0
        %1616 = vmatprep.mubr.f32.mxu0 0.0
        %1617 = vmatmul.mubr.f32.gmra.mrb[0].mxu0 %v1395
        %v1618 = vpop.f32.mrb[0].mxu0
        %v1619 = vadd.f32 0.0, %v1618
        %v1620 = vpop.f32.mrb[0].mxu0
        %1621 = vdwg.mxu0
        %v1622 = vld [vmem:[#allocation3] sm:$0xff]
        %v1623 = vld [vmem:[#allocation3 + $0x8] sm:$0xff]
        %v1624 = vld [vmem:[#allocation3 + $0x10] sm:$0xff]
        %v1625 = vld [vmem:[#allocation3 + $0x18] sm:$0xff]
        %v1626 = vld [vmem:[#allocation3 + $0x20] sm:$0xff]
        %v1627 = vld [vmem:[#allocation3 + $0x28] sm:$0xff]
        %v1628 = vld [vmem:[#allocation3 + $0x30] sm:$0xff]
        %v1629 = vld [vmem:[#allocation3 + $0x38] sm:$0xff]
        %v1630 = vld [vmem:[#allocation3 + $0x40] sm:$0xff]
        %v1631 = vld [vmem:[#allocation3 + $0x48] sm:$0xff]
        %v1632 = vld [vmem:[#allocation3 + $0x50] sm:$0xff]
        %v1633 = vld [vmem:[#allocation3 + $0x58] sm:$0xff]
        %v1634 = vld [vmem:[#allocation3 + $0x60] sm:$0xff]
        %v1635 = vld [vmem:[#allocation3 + $0x68] sm:$0xff]
        %v1636 = vld [vmem:[#allocation3 + $0x70] sm:$0xff]
        %v1637 = vld [vmem:[#allocation3 + $0x78] sm:$0xff]
        %v1638 = vld [vmem:[#allocation3 + $0x80] sm:$0xff]
        %v1639 = vld [vmem:[#allocation3 + $0x88] sm:$0xff]
        %v1640 = vld [vmem:[#allocation3 + $0x90] sm:$0xff]
        %v1641 = vld [vmem:[#allocation3 + $0x98] sm:$0xff]
        %v1642 = vld [vmem:[#allocation3 + $0xa0] sm:$0xff]
        %v1643 = vld [vmem:[#allocation3 + $0xa8] sm:$0xff]
        %v1644 = vld [vmem:[#allocation3 + $0xb0] sm:$0xff]
        %v1645 = vld [vmem:[#allocation3 + $0xb8] sm:$0xff]
        %v1646 = vld [vmem:[#allocation3 + $0xc0] sm:$0xff]
        %v1647 = vld [vmem:[#allocation3 + $0xc8] sm:$0xff]
        %v1648 = vld [vmem:[#allocation3 + $0xd0] sm:$0xff]
        %v1649 = vld [vmem:[#allocation3 + $0xd8] sm:$0xff]
        %v1650 = vld [vmem:[#allocation3 + $0xe0] sm:$0xff]
        %v1651 = vld [vmem:[#allocation3 + $0xe8] sm:$0xff]
        %v1652 = vld [vmem:[#allocation3 + $0xf0] sm:$0xff]
        %v1653 = vld [vmem:[#allocation3 + $0xf8] sm:$0xff]
        %v1654 = vadd.f32 %v1622, %v1464
        %v1655 = vadd.f32 %v1623, %v1469
        %v1656 = vadd.f32 %v1624, %v1474
        %v1657 = vadd.f32 %v1625, %v1479
        %v1658 = vadd.f32 %v1626, %v1484
        %v1659 = vadd.f32 %v1627, %v1489
        %v1660 = vadd.f32 %v1628, %v1494
        %v1661 = vadd.f32 %v1629, %v1499
        %v1662 = vadd.f32 %v1630, %v1504
        %v1663 = vadd.f32 %v1631, %v1509
        %v1664 = vadd.f32 %v1632, %v1514
        %v1665 = vadd.f32 %v1633, %v1519
        %v1666 = vadd.f32 %v1634, %v1524
        %v1667 = vadd.f32 %v1635, %v1529
        %v1668 = vadd.f32 %v1636, %v1534
        %v1669 = vadd.f32 %v1637, %v1539
        %v1670 = vadd.f32 %v1638, %v1544
        %v1671 = vadd.f32 %v1639, %v1549
        %v1672 = vadd.f32 %v1640, %v1554
        %v1673 = vadd.f32 %v1641, %v1559
        %v1674 = vadd.f32 %v1642, %v1564
        %v1675 = vadd.f32 %v1643, %v1569
        %v1676 = vadd.f32 %v1644, %v1574
        %v1677 = vadd.f32 %v1645, %v1579
        %v1678 = vadd.f32 %v1646, %v1584
        %v1679 = vadd.f32 %v1647, %v1589
        %v1680 = vadd.f32 %v1648, %v1594
        %v1681 = vadd.f32 %v1649, %v1599
        %v1682 = vadd.f32 %v1650, %v1604
        %v1683 = vadd.f32 %v1651, %v1609
        %v1684 = vadd.f32 %v1652, %v1614
        %v1685 = vadd.f32 %v1653, %v1619
        %1686 = vst.msk [vmem:[#allocation3] sm:$0xff] %vm789, %v1654
        %1687 = vst.msk [vmem:[#allocation3 + $0x8] sm:$0xff] %vm789, %v1655
        %1688 = vst.msk [vmem:[#allocation3 + $0x10] sm:$0xff] %vm789, %v1656
        %1689 = vst.msk [vmem:[#allocation3 + $0x18] sm:$0xff] %vm789, %v1657
        %1690 = vst.msk [vmem:[#allocation3 + $0x20] sm:$0xff] %vm789, %v1658
        %1691 = vst.msk [vmem:[#allocation3 + $0x28] sm:$0xff] %vm789, %v1659
        %1692 = vst.msk [vmem:[#allocation3 + $0x30] sm:$0xff] %vm789, %v1660
        %1693 = vst.msk [vmem:[#allocation3 + $0x38] sm:$0xff] %vm789, %v1661
        %1694 = vst.msk [vmem:[#allocation3 + $0x40] sm:$0xff] %vm789, %v1662
        %1695 = vst.msk [vmem:[#allocation3 + $0x48] sm:$0xff] %vm789, %v1663
        %1696 = vst.msk [vmem:[#allocation3 + $0x50] sm:$0xff] %vm789, %v1664
        %1697 = vst.msk [vmem:[#allocation3 + $0x58] sm:$0xff] %vm789, %v1665
        %1698 = vst.msk [vmem:[#allocation3 + $0x60] sm:$0xff] %vm789, %v1666
        %1699 = vst.msk [vmem:[#allocation3 + $0x68] sm:$0xff] %vm789, %v1667
        %1700 = vst.msk [vmem:[#allocation3 + $0x70] sm:$0xff] %vm789, %v1668
        %1701 = vst.msk [vmem:[#allocation3 + $0x78] sm:$0xff] %vm789, %v1669
        %1702 = vst.msk [vmem:[#allocation3 + $0x80] sm:$0xff] %vm789, %v1670
        %1703 = vst.msk [vmem:[#allocation3 + $0x88] sm:$0xff] %vm789, %v1671
        %1704 = vst.msk [vmem:[#allocation3 + $0x90] sm:$0xff] %vm789, %v1672
        %1705 = vst.msk [vmem:[#allocation3 + $0x98] sm:$0xff] %vm789, %v1673
        %1706 = vst.msk [vmem:[#allocation3 + $0xa0] sm:$0xff] %vm789, %v1674
        %1707 = vst.msk [vmem:[#allocation3 + $0xa8] sm:$0xff] %vm789, %v1675
        %1708 = vst.msk [vmem:[#allocation3 + $0xb0] sm:$0xff] %vm789, %v1676
        %1709 = vst.msk [vmem:[#allocation3 + $0xb8] sm:$0xff] %vm789, %v1677
        %1710 = vst.msk [vmem:[#allocation3 + $0xc0] sm:$0xff] %vm789, %v1678
        %1711 = vst.msk [vmem:[#allocation3 + $0xc8] sm:$0xff] %vm789, %v1679
        %1712 = vst.msk [vmem:[#allocation3 + $0xd0] sm:$0xff] %vm789, %v1680
        %1713 = vst.msk [vmem:[#allocation3 + $0xd8] sm:$0xff] %vm789, %v1681
        %1714 = vst.msk [vmem:[#allocation3 + $0xe0] sm:$0xff] %vm789, %v1682
        %1715 = vst.msk [vmem:[#allocation3 + $0xe8] sm:$0xff] %vm789, %v1683
        %1716 = vst.msk [vmem:[#allocation3 + $0xf0] sm:$0xff] %vm789, %v1684
        %1717 = vst.msk [vmem:[#allocation3 + $0xf8] sm:$0xff] %vm789, %v1685
        %v1718 = vld [vmem:[#allocation2 + $0x2] sm:$0xff]
        %v1719 = vld [vmem:[#allocation2 + $0xa] sm:$0xff]
        %v1720 = vld [vmem:[#allocation2 + $0x1a] sm:$0xff]
        %v1721 = vld [vmem:[#allocation2 + $0x22] sm:$0xff]
        %v1722 = vld [vmem:[#allocation2 + $0x32] sm:$0xff]
        %v1723 = vld [vmem:[#allocation2 + $0x3a] sm:$0xff]
        %v1724 = vld [vmem:[#allocation2 + $0x4a] sm:$0xff]
        %v1725 = vld [vmem:[#allocation2 + $0x52] sm:$0xff]
        %v1726 = vld [vmem:[#allocation2 + $0x62] sm:$0xff]
        %v1727 = vld [vmem:[#allocation2 + $0x6a] sm:$0xff]
        %v1728 = vld [vmem:[#allocation2 + $0x7a] sm:$0xff]
        %v1729 = vld [vmem:[#allocation2 + $0x82] sm:$0xff]
        %v1730 = vld [vmem:[#allocation2 + $0x92] sm:$0xff]
        %v1731 = vld [vmem:[#allocation2 + $0x9a] sm:$0xff]
        %v1732 = vld [vmem:[#allocation2 + $0xaa] sm:$0xff]
        %v1733 = vld [vmem:[#allocation2 + $0xb2] sm:$0xff]
        %v1734 = vld [vmem:[#allocation2 + $0xc2] sm:$0xff]
        %v1735 = vld [vmem:[#allocation2 + $0xca] sm:$0xff]
        %v1736 = vld [vmem:[#allocation2 + $0xda] sm:$0xff]
        %v1737 = vld [vmem:[#allocation2 + $0xe2] sm:$0xff]
        %v1738 = vld [vmem:[#allocation2 + $0xf2] sm:$0xff]
        %v1739 = vld [vmem:[#allocation2 + $0xfa] sm:$0xff]
        %v1740 = vld [vmem:[#allocation2 + $0x10a] sm:$0xff]
        %v1741 = vld [vmem:[#allocation2 + $0x112] sm:$0xff]
        %v1742 = vld [vmem:[#allocation2 + $0x122] sm:$0xff]
        %v1743 = vld [vmem:[#allocation2 + $0x12a] sm:$0xff]
        %v1744 = vld [vmem:[#allocation2 + $0x13a] sm:$0xff]
        %v1745 = vld [vmem:[#allocation2 + $0x142] sm:$0xff]
        %v1746 = vld [vmem:[#allocation2 + $0x152] sm:$0xff]
        %v1747 = vld [vmem:[#allocation2 + $0x15a] sm:$0xff]
        %v1748 = vld [vmem:[#allocation2 + $0x16a] sm:$0xff]
        %v1749 = vld [vmem:[#allocation2 + $0x172] sm:$0xff]
        %v1750 = vld [vmem:[%s4 + $0x80] sm:$0xff]
        %v1751 = vld [vmem:[%s4 + $0x88] sm:$0xff]
        %v1752 = vld [vmem:[%s4 + $0x90] sm:$0xff]
        %v1753 = vld [vmem:[%s4 + $0x98] sm:$0xff]
        %v1754 = vld [vmem:[%s4 + $0xa0] sm:$0xff]
        %v1755 = vld [vmem:[%s4 + $0xa8] sm:$0xff]
        %v1756 = vld [vmem:[%s4 + $0xb0] sm:$0xff]
        %v1757 = vld [vmem:[%s4 + $0xb8] sm:$0xff]
        %v1759 = vsel %vm789, %v1718, 0
        %v1762 = vsel %vm789, %v1719, 0
        %v1765 = vsel %vm789, %v1720, 0
        %v1768 = vsel %vm789, %v1721, 0
        %v1771 = vsel %vm789, %v1722, 0
        %v1774 = vsel %vm789, %v1723, 0
        %v1777 = vsel %vm789, %v1724, 0
        %v1780 = vsel %vm789, %v1725, 0
        %v1783 = vsel %vm789, %v1726, 0
        %v1786 = vsel %vm789, %v1727, 0
        %v1789 = vsel %vm789, %v1728, 0
        %v1792 = vsel %vm789, %v1729, 0
        %v1795 = vsel %vm789, %v1730, 0
        %v1798 = vsel %vm789, %v1731, 0
        %v1801 = vsel %vm789, %v1732, 0
        %v1804 = vsel %vm789, %v1733, 0
        %v1807 = vsel %vm789, %v1734, 0
        %v1810 = vsel %vm789, %v1735, 0
        %v1813 = vsel %vm789, %v1736, 0
        %v1816 = vsel %vm789, %v1737, 0
        %v1819 = vsel %vm789, %v1738, 0
        %v1822 = vsel %vm789, %v1739, 0
        %v1825 = vsel %vm789, %v1740, 0
        %v1828 = vsel %vm789, %v1741, 0
        %v1831 = vsel %vm789, %v1742, 0
        %v1834 = vsel %vm789, %v1743, 0
        %v1837 = vsel %vm789, %v1744, 0
        %v1840 = vsel %vm789, %v1745, 0
        %v1843 = vsel %vm789, %v1746, 0
        %v1846 = vsel %vm789, %v1747, 0
        %v1849 = vsel %vm789, %v1748, 0
        %v1852 = vsel %vm789, %v1749, 0
        %1854 = vmatprep.subr.mxu0 0.0
        %1855 = vmatpush1.msra.mxu0 %v1750
        %1856 = vmatprep.subr.mxu0 0.0
        %1857 = vmatpush1.msra.mxu0 %v1751
        %1858 = vmatprep.subr.mxu0 0.0
        %1859 = vmatpush1.msra.mxu0 %v1752
        %1860 = vmatprep.subr.mxu0 0.0
        %1861 = vmatpush1.msra.mxu0 %v1753
        %1862 = vmatprep.subr.mxu0 0.0
        %1863 = vmatpush1.msra.mxu0 %v1754
        %1864 = vmatprep.subr.mxu0 0.0
        %1865 = vmatpush1.msra.mxu0 %v1755
        %1866 = vmatprep.subr.mxu0 0.0
        %1867 = vmatpush1.msra.mxu0 %v1756
        %1868 = vmatprep.subr.mxu0 0.0
        %1869 = vmatpush1.msra.mxu0 %v1757
        %1870 = vmatprep.subr.mxu0 0.0
        %1871 = vmatpush1.msra.mxu0 0.0
        %1872 = vmatprep.subr.mxu0 0.0
        %1873 = vmatpush1.msra.mxu0 0.0
        %1874 = vmatprep.subr.mxu0 0.0
        %1875 = vmatpush1.msra.mxu0 0.0
        %1876 = vmatprep.subr.mxu0 0.0
        %1877 = vmatpush1.msra.mxu0 0.0
        %1878 = vmatprep.subr.mxu0 0.0
        %1879 = vmatpush1.msra.mxu0 0.0
        %1880 = vmatprep.subr.mxu0 0.0
        %1881 = vmatpush1.msra.mxu0 0.0
        %1882 = vmatprep.subr.mxu0 0.0
        %1883 = vmatpush1.msra.mxu0 0.0
        %1884 = vmatprep.subr.mxu0 0.0
        %1885 = vmatpush1.msra.mxu0 0.0
        %1886 = vmatprep.subr.mxu0 0.0
        %1887 = vmatpush1.msra.mxu0 0.0
        %1888 = vmatprep.subr.mxu0 0.0
        %1889 = vmatpush1.msra.mxu0 0.0
        %1890 = vmatprep.subr.mxu0 0.0
        %1891 = vmatpush1.msra.mxu0 0.0
        %1892 = vmatprep.subr.mxu0 0.0
        %1893 = vmatpush1.msra.mxu0 0.0
        %1894 = vmatprep.subr.mxu0 0.0
        %1895 = vmatpush1.msra.mxu0 0.0
        %1896 = vmatprep.subr.mxu0 0.0
        %1897 = vmatpush1.msra.mxu0 0.0
        %1898 = vmatprep.subr.mxu0 0.0
        %1899 = vmatpush1.msra.mxu0 0.0
        %1900 = vmatprep.subr.mxu0 0.0
        %1901 = vmatpush1.msra.mxu0 0.0
        %1902 = vmatprep.subr.mxu0 0.0
        %1903 = vmatpush1.msra.mxu0 0.0
        %1904 = vmatprep.subr.mxu0 0.0
        %1905 = vmatpush1.msra.mxu0 0.0
        %1906 = vmatprep.subr.mxu0 0.0
        %1907 = vmatpush1.msra.mxu0 0.0
        %1908 = vmatprep.subr.mxu0 0.0
        %1909 = vmatpush1.msra.mxu0 0.0
        %1910 = vmatprep.subr.mxu0 0.0
        %1911 = vmatpush1.msra.mxu0 0.0
        %1912 = vmatprep.subr.mxu0 0.0
        %1913 = vmatpush1.msra.mxu0 0.0
        %1914 = vmatprep.subr.mxu0 0.0
        %1915 = vmatpush1.msra.mxu0 0.0
        %1916 = vmatprep.subr.mxu0 0.0
        %1917 = vmatpush1.msra.mxu0 0.0
        %1918 = vmatprep.mubr.f32.mxu0 0.0
        %1919 = vmatmul.mubr.f32.gmra.mrb[0].mxu0 %v1759
        %v1920 = vpop.f32.mrb[0].mxu0
        %v1921 = vadd.f32 0.0, %v1920
        %v1922 = vpop.f32.mrb[0].mxu0
        %1923 = vmatprep.mubr.f32.mxu0 0.0
        %1924 = vmatmul.mubr.f32.gmra.mrb[0].mxu0 %v1762
        %v1925 = vpop.f32.mrb[0].mxu0
        %v1926 = vadd.f32 0.0, %v1925
        %v1927 = vpop.f32.mrb[0].mxu0
        %1928 = vmatprep.mubr.f32.mxu0 0.0
        %1929 = vmatmul.mubr.f32.gmra.mrb[0].mxu0 %v1765
        %v1930 = vpop.f32.mrb[0].mxu0
        %v1931 = vadd.f32 0.0, %v1930
        %v1932 = vpop.f32.mrb[0].mxu0
        %1933 = vmatprep.mubr.f32.mxu0 0.0
        %1934 = vmatmul.mubr.f32.gmra.mrb[0].mxu0 %v1768
        %v1935 = vpop.f32.mrb[0].mxu0
        %v1936 = vadd.f32 0.0, %v1935
        %v1937 = vpop.f32.mrb[0].mxu0
        %1938 = vmatprep.mubr.f32.mxu0 0.0
        %1939 = vmatmul.mubr.f32.gmra.mrb[0].mxu0 %v1771
        %v1940 = vpop.f32.mrb[0].mxu0
        %v1941 = vadd.f32 0.0, %v1940
        %v1942 = vpop.f32.mrb[0].mxu0
        %1943 = vmatprep.mubr.f32.mxu0 0.0
        %1944 = vmatmul.mubr.f32.gmra.mrb[0].mxu0 %v1774
        %v1945 = vpop.f32.mrb[0].mxu0
        %v1946 = vadd.f32 0.0, %v1945
        %v1947 = vpop.f32.mrb[0].mxu0
        %1948 = vmatprep.mubr.f32.mxu0 0.0
        %1949 = vmatmul.mubr.f32.gmra.mrb[0].mxu0 %v1777
        %v1950 = vpop.f32.mrb[0].mxu0
        %v1951 = vadd.f32 0.0, %v1950
        %v1952 = vpop.f32.mrb[0].mxu0
        %1953 = vmatprep.mubr.f32.mxu0 0.0
        %1954 = vmatmul.mubr.f32.gmra.mrb[0].mxu0 %v1780
        %v1955 = vpop.f32.mrb[0].mxu0
        %v1956 = vadd.f32 0.0, %v1955
        %v1957 = vpop.f32.mrb[0].mxu0
        %1958 = vmatprep.mubr.f32.mxu0 0.0
        %1959 = vmatmul.mubr.f32.gmra.mrb[0].mxu0 %v1783
        %v1960 = vpop.f32.mrb[0].mxu0
        %v1961 = vadd.f32 0.0, %v1960
        %v1962 = vpop.f32.mrb[0].mxu0
        %1963 = vmatprep.mubr.f32.mxu0 0.0
        %1964 = vmatmul.mubr.f32.gmra.mrb[0].mxu0 %v1786
        %v1965 = vpop.f32.mrb[0].mxu0
        %v1966 = vadd.f32 0.0, %v1965
        %v1967 = vpop.f32.mrb[0].mxu0
        %1968 = vmatprep.mubr.f32.mxu0 0.0
        %1969 = vmatmul.mubr.f32.gmra.mrb[0].mxu0 %v1789
        %v1970 = vpop.f32.mrb[0].mxu0
        %v1971 = vadd.f32 0.0, %v1970
        %v1972 = vpop.f32.mrb[0].mxu0
        %1973 = vmatprep.mubr.f32.mxu0 0.0
        %1974 = vmatmul.mubr.f32.gmra.mrb[0].mxu0 %v1792
        %v1975 = vpop.f32.mrb[0].mxu0
        %v1976 = vadd.f32 0.0, %v1975
        %v1977 = vpop.f32.mrb[0].mxu0
        %1978 = vmatprep.mubr.f32.mxu0 0.0
        %1979 = vmatmul.mubr.f32.gmra.mrb[0].mxu0 %v1795
        %v1980 = vpop.f32.mrb[0].mxu0
        %v1981 = vadd.f32 0.0, %v1980
        %v1982 = vpop.f32.mrb[0].mxu0
        %1983 = vmatprep.mubr.f32.mxu0 0.0
        %1984 = vmatmul.mubr.f32.gmra.mrb[0].mxu0 %v1798
        %v1985 = vpop.f32.mrb[0].mxu0
        %v1986 = vadd.f32 0.0, %v1985
        %v1987 = vpop.f32.mrb[0].mxu0
        %1988 = vmatprep.mubr.f32.mxu0 0.0
        %1989 = vmatmul.mubr.f32.gmra.mrb[0].mxu0 %v1801
        %v1990 = vpop.f32.mrb[0].mxu0
        %v1991 = vadd.f32 0.0, %v1990
        %v1992 = vpop.f32.mrb[0].mxu0
        %1993 = vmatprep.mubr.f32.mxu0 0.0
        %1994 = vmatmul.mubr.f32.gmra.mrb[0].mxu0 %v1804
        %v1995 = vpop.f32.mrb[0].mxu0
        %v1996 = vadd.f32 0.0, %v1995
        %v1997 = vpop.f32.mrb[0].mxu0
        %1998 = vmatprep.mubr.f32.mxu0 0.0
        %1999 = vmatmul.mubr.f32.gmra.mrb[0].mxu0 %v1807
        %v2000 = vpop.f32.mrb[0].mxu0
        %v2001 = vadd.f32 0.0, %v2000
        %v2002 = vpop.f32.mrb[0].mxu0
        %2003 = vmatprep.mubr.f32.mxu0 0.0
        %2004 = vmatmul.mubr.f32.gmra.mrb[0].mxu0 %v1810
        %v2005 = vpop.f32.mrb[0].mxu0
        %v2006 = vadd.f32 0.0, %v2005
        %v2007 = vpop.f32.mrb[0].mxu0
        %2008 = vmatprep.mubr.f32.mxu0 0.0
        %2009 = vmatmul.mubr.f32.gmra.mrb[0].mxu0 %v1813
        %v2010 = vpop.f32.mrb[0].mxu0
        %v2011 = vadd.f32 0.0, %v2010
        %v2012 = vpop.f32.mrb[0].mxu0
        %2013 = vmatprep.mubr.f32.mxu0 0.0
        %2014 = vmatmul.mubr.f32.gmra.mrb[0].mxu0 %v1816
        %v2015 = vpop.f32.mrb[0].mxu0
        %v2016 = vadd.f32 0.0, %v2015
        %v2017 = vpop.f32.mrb[0].mxu0
        %2018 = vmatprep.mubr.f32.mxu0 0.0
        %2019 = vmatmul.mubr.f32.gmra.mrb[0].mxu0 %v1819
        %v2020 = vpop.f32.mrb[0].mxu0
        %v2021 = vadd.f32 0.0, %v2020
        %v2022 = vpop.f32.mrb[0].mxu0
        %2023 = vmatprep.mubr.f32.mxu0 0.0
        %2024 = vmatmul.mubr.f32.gmra.mrb[0].mxu0 %v1822
        %v2025 = vpop.f32.mrb[0].mxu0
        %v2026 = vadd.f32 0.0, %v2025
        %v2027 = vpop.f32.mrb[0].mxu0
        %2028 = vmatprep.mubr.f32.mxu0 0.0
        %2029 = vmatmul.mubr.f32.gmra.mrb[0].mxu0 %v1825
        %v2030 = vpop.f32.mrb[0].mxu0
        %v2031 = vadd.f32 0.0, %v2030
        %v2032 = vpop.f32.mrb[0].mxu0
        %2033 = vmatprep.mubr.f32.mxu0 0.0
        %2034 = vmatmul.mubr.f32.gmra.mrb[0].mxu0 %v1828
        %v2035 = vpop.f32.mrb[0].mxu0
        %v2036 = vadd.f32 0.0, %v2035
        %v2037 = vpop.f32.mrb[0].mxu0
        %2038 = vmatprep.mubr.f32.mxu0 0.0
        %2039 = vmatmul.mubr.f32.gmra.mrb[0].mxu0 %v1831
        %v2040 = vpop.f32.mrb[0].mxu0
        %v2041 = vadd.f32 0.0, %v2040
        %v2042 = vpop.f32.mrb[0].mxu0
        %2043 = vmatprep.mubr.f32.mxu0 0.0
        %2044 = vmatmul.mubr.f32.gmra.mrb[0].mxu0 %v1834
        %v2045 = vpop.f32.mrb[0].mxu0
        %v2046 = vadd.f32 0.0, %v2045
        %v2047 = vpop.f32.mrb[0].mxu0
        %2048 = vmatprep.mubr.f32.mxu0 0.0
        %2049 = vmatmul.mubr.f32.gmra.mrb[0].mxu0 %v1837
        %v2050 = vpop.f32.mrb[0].mxu0
        %v2051 = vadd.f32 0.0, %v2050
        %v2052 = vpop.f32.mrb[0].mxu0
        %2053 = vmatprep.mubr.f32.mxu0 0.0
        %2054 = vmatmul.mubr.f32.gmra.mrb[0].mxu0 %v1840
        %v2055 = vpop.f32.mrb[0].mxu0
        %v2056 = vadd.f32 0.0, %v2055
        %v2057 = vpop.f32.mrb[0].mxu0
        %2058 = vmatprep.mubr.f32.mxu0 0.0
        %2059 = vmatmul.mubr.f32.gmra.mrb[0].mxu0 %v1843
        %v2060 = vpop.f32.mrb[0].mxu0
        %v2061 = vadd.f32 0.0, %v2060
        %v2062 = vpop.f32.mrb[0].mxu0
        %2063 = vmatprep.mubr.f32.mxu0 0.0
        %2064 = vmatmul.mubr.f32.gmra.mrb[0].mxu0 %v1846
        %v2065 = vpop.f32.mrb[0].mxu0
        %v2066 = vadd.f32 0.0, %v2065
        %v2067 = vpop.f32.mrb[0].mxu0
        %2068 = vmatprep.mubr.f32.mxu0 0.0
        %2069 = vmatmul.mubr.f32.gmra.mrb[0].mxu0 %v1849
        %v2070 = vpop.f32.mrb[0].mxu0
        %v2071 = vadd.f32 0.0, %v2070
        %v2072 = vpop.f32.mrb[0].mxu0
        %2073 = vmatprep.mubr.f32.mxu0 0.0
        %2074 = vmatmul.mubr.f32.gmra.mrb[0].mxu0 %v1852
        %v2075 = vpop.f32.mrb[0].mxu0
        %v2076 = vadd.f32 0.0, %v2075
        %v2077 = vpop.f32.mrb[0].mxu0
        %2078 = vdwg.mxu0
        %v2079 = vld [vmem:[#allocation3] sm:$0xff]
        %v2080 = vld [vmem:[#allocation3 + $0x8] sm:$0xff]
        %v2081 = vld [vmem:[#allocation3 + $0x10] sm:$0xff]
        %v2082 = vld [vmem:[#allocation3 + $0x18] sm:$0xff]
        %v2083 = vld [vmem:[#allocation3 + $0x20] sm:$0xff]
        %v2084 = vld [vmem:[#allocation3 + $0x28] sm:$0xff]
        %v2085 = vld [vmem:[#allocation3 + $0x30] sm:$0xff]
        %v2086 = vld [vmem:[#allocation3 + $0x38] sm:$0xff]
        %v2087 = vld [vmem:[#allocation3 + $0x40] sm:$0xff]
        %v2088 = vld [vmem:[#allocation3 + $0x48] sm:$0xff]
        %v2089 = vld [vmem:[#allocation3 + $0x50] sm:$0xff]
        %v2090 = vld [vmem:[#allocation3 + $0x58] sm:$0xff]
        %v2091 = vld [vmem:[#allocation3 + $0x60] sm:$0xff]
        %v2092 = vld [vmem:[#allocation3 + $0x68] sm:$0xff]
        %v2093 = vld [vmem:[#allocation3 + $0x70] sm:$0xff]
        %v2094 = vld [vmem:[#allocation3 + $0x78] sm:$0xff]
        %v2095 = vld [vmem:[#allocation3 + $0x80] sm:$0xff]
        %v2096 = vld [vmem:[#allocation3 + $0x88] sm:$0xff]
        %v2097 = vld [vmem:[#allocation3 + $0x90] sm:$0xff]
        %v2098 = vld [vmem:[#allocation3 + $0x98] sm:$0xff]
        %v2099 = vld [vmem:[#allocation3 + $0xa0] sm:$0xff]
        %v2100 = vld [vmem:[#allocation3 + $0xa8] sm:$0xff]
        %v2101 = vld [vmem:[#allocation3 + $0xb0] sm:$0xff]
        %v2102 = vld [vmem:[#allocation3 + $0xb8] sm:$0xff]
        %v2103 = vld [vmem:[#allocation3 + $0xc0] sm:$0xff]
        %v2104 = vld [vmem:[#allocation3 + $0xc8] sm:$0xff]
        %v2105 = vld [vmem:[#allocation3 + $0xd0] sm:$0xff]
        %v2106 = vld [vmem:[#allocation3 + $0xd8] sm:$0xff]
        %v2107 = vld [vmem:[#allocation3 + $0xe0] sm:$0xff]
        %v2108 = vld [vmem:[#allocation3 + $0xe8] sm:$0xff]
        %v2109 = vld [vmem:[#allocation3 + $0xf0] sm:$0xff]
        %v2110 = vld [vmem:[#allocation3 + $0xf8] sm:$0xff]
        %v2111 = vadd.f32 %v2079, %v1921
        %v2112 = vadd.f32 %v2080, %v1926
        %v2113 = vadd.f32 %v2081, %v1931
        %v2114 = vadd.f32 %v2082, %v1936
        %v2115 = vadd.f32 %v2083, %v1941
        %v2116 = vadd.f32 %v2084, %v1946
        %v2117 = vadd.f32 %v2085, %v1951
        %v2118 = vadd.f32 %v2086, %v1956
        %v2119 = vadd.f32 %v2087, %v1961
        %v2120 = vadd.f32 %v2088, %v1966
        %v2121 = vadd.f32 %v2089, %v1971
        %v2122 = vadd.f32 %v2090, %v1976
        %v2123 = vadd.f32 %v2091, %v1981
        %v2124 = vadd.f32 %v2092, %v1986
        %v2125 = vadd.f32 %v2093, %v1991
        %v2126 = vadd.f32 %v2094, %v1996
        %v2127 = vadd.f32 %v2095, %v2001
        %v2128 = vadd.f32 %v2096, %v2006
        %v2129 = vadd.f32 %v2097, %v2011
        %v2130 = vadd.f32 %v2098, %v2016
        %v2131 = vadd.f32 %v2099, %v2021
        %v2132 = vadd.f32 %v2100, %v2026
        %v2133 = vadd.f32 %v2101, %v2031
        %v2134 = vadd.f32 %v2102, %v2036
        %v2135 = vadd.f32 %v2103, %v2041
        %v2136 = vadd.f32 %v2104, %v2046
        %v2137 = vadd.f32 %v2105, %v2051
        %v2138 = vadd.f32 %v2106, %v2056
        %v2139 = vadd.f32 %v2107, %v2061
        %v2140 = vadd.f32 %v2108, %v2066
        %v2141 = vadd.f32 %v2109, %v2071
        %v2142 = vadd.f32 %v2110, %v2076
        %2143 = vst.msk [vmem:[#allocation3] sm:$0xff] %vm789, %v2111
        %2144 = vst.msk [vmem:[#allocation3 + $0x8] sm:$0xff] %vm789, %v2112
        %2145 = vst.msk [vmem:[#allocation3 + $0x10] sm:$0xff] %vm789, %v2113
        %2146 = vst.msk [vmem:[#allocation3 + $0x18] sm:$0xff] %vm789, %v2114
        %2147 = vst.msk [vmem:[#allocation3 + $0x20] sm:$0xff] %vm789, %v2115
        %2148 = vst.msk [vmem:[#allocation3 + $0x28] sm:$0xff] %vm789, %v2116
        %2149 = vst.msk [vmem:[#allocation3 + $0x30] sm:$0xff] %vm789, %v2117
        %2150 = vst.msk [vmem:[#allocation3 + $0x38] sm:$0xff] %vm789, %v2118
        %2151 = vst.msk [vmem:[#allocation3 + $0x40] sm:$0xff] %vm789, %v2119
        %2152 = vst.msk [vmem:[#allocation3 + $0x48] sm:$0xff] %vm789, %v2120
        %2153 = vst.msk [vmem:[#allocation3 + $0x50] sm:$0xff] %vm789, %v2121
        %2154 = vst.msk [vmem:[#allocation3 + $0x58] sm:$0xff] %vm789, %v2122
        %2155 = vst.msk [vmem:[#allocation3 + $0x60] sm:$0xff] %vm789, %v2123
        %2156 = vst.msk [vmem:[#allocation3 + $0x68] sm:$0xff] %vm789, %v2124
        %2157 = vst.msk [vmem:[#allocation3 + $0x70] sm:$0xff] %vm789, %v2125
        %2158 = vst.msk [vmem:[#allocation3 + $0x78] sm:$0xff] %vm789, %v2126
        %2159 = vst.msk [vmem:[#allocation3 + $0x80] sm:$0xff] %vm789, %v2127
        %2160 = vst.msk [vmem:[#allocation3 + $0x88] sm:$0xff] %vm789, %v2128
        %2161 = vst.msk [vmem:[#allocation3 + $0x90] sm:$0xff] %vm789, %v2129
        %2162 = vst.msk [vmem:[#allocation3 + $0x98] sm:$0xff] %vm789, %v2130
        %2163 = vst.msk [vmem:[#allocation3 + $0xa0] sm:$0xff] %vm789, %v2131
        %2164 = vst.msk [vmem:[#allocation3 + $0xa8] sm:$0xff] %vm789, %v2132
        %2165 = vst.msk [vmem:[#allocation3 + $0xb0] sm:$0xff] %vm789, %v2133
        %2166 = vst.msk [vmem:[#allocation3 + $0xb8] sm:$0xff] %vm789, %v2134
        %2167 = vst.msk [vmem:[#allocation3 + $0xc0] sm:$0xff] %vm789, %v2135
        %2168 = vst.msk [vmem:[#allocation3 + $0xc8] sm:$0xff] %vm789, %v2136
        %2169 = vst.msk [vmem:[#allocation3 + $0xd0] sm:$0xff] %vm789, %v2137
        %2170 = vst.msk [vmem:[#allocation3 + $0xd8] sm:$0xff] %vm789, %v2138
        %2171 = vst.msk [vmem:[#allocation3 + $0xe0] sm:$0xff] %vm789, %v2139
        %2172 = vst.msk [vmem:[#allocation3 + $0xe8] sm:$0xff] %vm789, %v2140
        %2173 = vst.msk [vmem:[#allocation3 + $0xf0] sm:$0xff] %vm789, %v2141
        %2174 = vst.msk [vmem:[#allocation3 + $0xf8] sm:$0xff] %vm789, %v2142
        %v2175 = vld [vmem:[%s835] sm:$0xff]
        %v2176 = vld [vmem:[%s835 + $0x8] sm:$0xff]
        %v2177 = vld [vmem:[%s835 + $0x18] sm:$0xff]
        %v2178 = vld [vmem:[%s835 + $0x20] sm:$0xff]
        %v2179 = vld [vmem:[%s835 + $0x30] sm:$0xff]
        %v2180 = vld [vmem:[%s835 + $0x38] sm:$0xff]
        %v2181 = vld [vmem:[%s835 + $0x48] sm:$0xff]
        %v2182 = vld [vmem:[%s835 + $0x50] sm:$0xff]
        %v2183 = vld [vmem:[%s835 + $0x60] sm:$0xff]
        %v2184 = vld [vmem:[%s835 + $0x68] sm:$0xff]
        %v2185 = vld [vmem:[%s835 + $0x78] sm:$0xff]
        %v2186 = vld [vmem:[%s835 + $0x80] sm:$0xff]
        %v2187 = vld [vmem:[%s835 + $0x90] sm:$0xff]
        %v2188 = vld [vmem:[%s835 + $0x98] sm:$0xff]
        %v2189 = vld [vmem:[%s835 + $0xa8] sm:$0xff]
        %v2190 = vld [vmem:[%s835 + $0xb0] sm:$0xff]
        %v2191 = vld [vmem:[%s835 + $0xc0] sm:$0xff]
        %v2192 = vld [vmem:[%s835 + $0xc8] sm:$0xff]
        %v2193 = vld [vmem:[%s835 + $0xd8] sm:$0xff]
        %v2194 = vld [vmem:[%s835 + $0xe0] sm:$0xff]
        %v2195 = vld [vmem:[%s835 + $0xf0] sm:$0xff]
        %v2196 = vld [vmem:[%s835 + $0xf8] sm:$0xff]
        %v2197 = vld [vmem:[%s835 + $0x108] sm:$0xff]
        %v2198 = vld [vmem:[%s835 + $0x110] sm:$0xff]
        %v2199 = vld [vmem:[%s835 + $0x120] sm:$0xff]
        %v2200 = vld [vmem:[%s835 + $0x128] sm:$0xff]
        %v2201 = vld [vmem:[%s835 + $0x138] sm:$0xff]
        %v2202 = vld [vmem:[%s835 + $0x140] sm:$0xff]
        %v2203 = vld [vmem:[%s835 + $0x150] sm:$0xff]
        %v2204 = vld [vmem:[%s835 + $0x158] sm:$0xff]
        %v2205 = vld [vmem:[%s835 + $0x168] sm:$0xff]
        %v2206 = vld [vmem:[%s835 + $0x170] sm:$0xff]
        %v2207 = vld [vmem:[%s4 + $0xc0] sm:$0xff]
        %v2208 = vld [vmem:[%s4 + $0xc8] sm:$0xff]
        %v2209 = vld [vmem:[%s4 + $0xd0] sm:$0xff]
        %v2210 = vld [vmem:[%s4 + $0xd8] sm:$0xff]
        %v2211 = vld [vmem:[%s4 + $0xe0] sm:$0xff]
        %v2212 = vld [vmem:[%s4 + $0xe8] sm:$0xff]
        %v2213 = vld [vmem:[%s4 + $0xf0] sm:$0xff]
        %v2214 = vld [vmem:[%s4 + $0xf8] sm:$0xff]
        %v2216 = vsel %vm789, %v2175, 0
        %v2219 = vsel %vm789, %v2176, 0
        %v2222 = vsel %vm789, %v2177, 0
        %v2225 = vsel %vm789, %v2178, 0
        %v2228 = vsel %vm789, %v2179, 0
        %v2231 = vsel %vm789, %v2180, 0
        %v2234 = vsel %vm789, %v2181, 0
        %v2237 = vsel %vm789, %v2182, 0
        %v2240 = vsel %vm789, %v2183, 0
        %v2243 = vsel %vm789, %v2184, 0
        %v2246 = vsel %vm789, %v2185, 0
        %v2249 = vsel %vm789, %v2186, 0
        %v2252 = vsel %vm789, %v2187, 0
        %v2255 = vsel %vm789, %v2188, 0
        %v2258 = vsel %vm789, %v2189, 0
        %v2261 = vsel %vm789, %v2190, 0
        %v2264 = vsel %vm789, %v2191, 0
        %v2267 = vsel %vm789, %v2192, 0
        %v2270 = vsel %vm789, %v2193, 0
        %v2273 = vsel %vm789, %v2194, 0
        %v2276 = vsel %vm789, %v2195, 0
        %v2279 = vsel %vm789, %v2196, 0
        %v2282 = vsel %vm789, %v2197, 0
        %v2285 = vsel %vm789, %v2198, 0
        %v2288 = vsel %vm789, %v2199, 0
        %v2291 = vsel %vm789, %v2200, 0
        %v2294 = vsel %vm789, %v2201, 0
        %v2297 = vsel %vm789, %v2202, 0
        %v2300 = vsel %vm789, %v2203, 0
        %v2303 = vsel %vm789, %v2204, 0
        %v2306 = vsel %vm789, %v2205, 0
        %v2309 = vsel %vm789, %v2206, 0
        %2311 = vmatprep.subr.mxu0 0.0
        %2312 = vmatpush1.msra.mxu0 %v2207
        %2313 = vmatprep.subr.mxu0 0.0
        %2314 = vmatpush1.msra.mxu0 %v2208
        %2315 = vmatprep.subr.mxu0 0.0
        %2316 = vmatpush1.msra.mxu0 %v2209
        %2317 = vmatprep.subr.mxu0 0.0
        %2318 = vmatpush1.msra.mxu0 %v2210
        %2319 = vmatprep.subr.mxu0 0.0
        %2320 = vmatpush1.msra.mxu0 %v2211
        %2321 = vmatprep.subr.mxu0 0.0
        %2322 = vmatpush1.msra.mxu0 %v2212
        %2323 = vmatprep.subr.mxu0 0.0
        %2324 = vmatpush1.msra.mxu0 %v2213
        %2325 = vmatprep.subr.mxu0 0.0
        %2326 = vmatpush1.msra.mxu0 %v2214
        %2327 = vmatprep.subr.mxu0 0.0
        %2328 = vmatpush1.msra.mxu0 0.0
        %2329 = vmatprep.subr.mxu0 0.0
        %2330 = vmatpush1.msra.mxu0 0.0
        %2331 = vmatprep.subr.mxu0 0.0
        %2332 = vmatpush1.msra.mxu0 0.0
        %2333 = vmatprep.subr.mxu0 0.0
        %2334 = vmatpush1.msra.mxu0 0.0
        %2335 = vmatprep.subr.mxu0 0.0
        %2336 = vmatpush1.msra.mxu0 0.0
        %2337 = vmatprep.subr.mxu0 0.0
        %2338 = vmatpush1.msra.mxu0 0.0
        %2339 = vmatprep.subr.mxu0 0.0
        %2340 = vmatpush1.msra.mxu0 0.0
        %2341 = vmatprep.subr.mxu0 0.0
        %2342 = vmatpush1.msra.mxu0 0.0
        %2343 = vmatprep.subr.mxu0 0.0
        %2344 = vmatpush1.msra.mxu0 0.0
        %2345 = vmatprep.subr.mxu0 0.0
        %2346 = vmatpush1.msra.mxu0 0.0
        %2347 = vmatprep.subr.mxu0 0.0
        %2348 = vmatpush1.msra.mxu0 0.0
        %2349 = vmatprep.subr.mxu0 0.0
        %2350 = vmatpush1.msra.mxu0 0.0
        %2351 = vmatprep.subr.mxu0 0.0
        %2352 = vmatpush1.msra.mxu0 0.0
        %2353 = vmatprep.subr.mxu0 0.0
        %2354 = vmatpush1.msra.mxu0 0.0
        %2355 = vmatprep.subr.mxu0 0.0
        %2356 = vmatpush1.msra.mxu0 0.0
        %2357 = vmatprep.subr.mxu0 0.0
        %2358 = vmatpush1.msra.mxu0 0.0
        %2359 = vmatprep.subr.mxu0 0.0
        %2360 = vmatpush1.msra.mxu0 0.0
        %2361 = vmatprep.subr.mxu0 0.0
        %2362 = vmatpush1.msra.mxu0 0.0
        %2363 = vmatprep.subr.mxu0 0.0
        %2364 = vmatpush1.msra.mxu0 0.0
        %2365 = vmatprep.subr.mxu0 0.0
        %2366 = vmatpush1.msra.mxu0 0.0
        %2367 = vmatprep.subr.mxu0 0.0
        %2368 = vmatpush1.msra.mxu0 0.0
        %2369 = vmatprep.subr.mxu0 0.0
        %2370 = vmatpush1.msra.mxu0 0.0
        %2371 = vmatprep.subr.mxu0 0.0
        %2372 = vmatpush1.msra.mxu0 0.0
        %2373 = vmatprep.subr.mxu0 0.0
        %2374 = vmatpush1.msra.mxu0 0.0
        %2375 = vmatprep.mubr.f32.mxu0 0.0
        %2376 = vmatmul.mubr.f32.gmra.mrb[0].mxu0 %v2216
        %v2377 = vpop.f32.mrb[0].mxu0
        %v2378 = vadd.f32 0.0, %v2377
        %v2379 = vpop.f32.mrb[0].mxu0
        %2380 = vmatprep.mubr.f32.mxu0 0.0
        %2381 = vmatmul.mubr.f32.gmra.mrb[0].mxu0 %v2219
        %v2382 = vpop.f32.mrb[0].mxu0
        %v2383 = vadd.f32 0.0, %v2382
        %v2384 = vpop.f32.mrb[0].mxu0
        %2385 = vmatprep.mubr.f32.mxu0 0.0
        %2386 = vmatmul.mubr.f32.gmra.mrb[0].mxu0 %v2222
        %v2387 = vpop.f32.mrb[0].mxu0
        %v2388 = vadd.f32 0.0, %v2387
        %v2389 = vpop.f32.mrb[0].mxu0
        %2390 = vmatprep.mubr.f32.mxu0 0.0
        %2391 = vmatmul.mubr.f32.gmra.mrb[0].mxu0 %v2225
        %v2392 = vpop.f32.mrb[0].mxu0
        %v2393 = vadd.f32 0.0, %v2392
        %v2394 = vpop.f32.mrb[0].mxu0
        %2395 = vmatprep.mubr.f32.mxu0 0.0
        %2396 = vmatmul.mubr.f32.gmra.mrb[0].mxu0 %v2228
        %v2397 = vpop.f32.mrb[0].mxu0
        %v2398 = vadd.f32 0.0, %v2397
        %v2399 = vpop.f32.mrb[0].mxu0
        %2400 = vmatprep.mubr.f32.mxu0 0.0
        %2401 = vmatmul.mubr.f32.gmra.mrb[0].mxu0 %v2231
        %v2402 = vpop.f32.mrb[0].mxu0
        %v2403 = vadd.f32 0.0, %v2402
        %v2404 = vpop.f32.mrb[0].mxu0
        %2405 = vmatprep.mubr.f32.mxu0 0.0
        %2406 = vmatmul.mubr.f32.gmra.mrb[0].mxu0 %v2234
        %v2407 = vpop.f32.mrb[0].mxu0
        %v2408 = vadd.f32 0.0, %v2407
        %v2409 = vpop.f32.mrb[0].mxu0
        %2410 = vmatprep.mubr.f32.mxu0 0.0
        %2411 = vmatmul.mubr.f32.gmra.mrb[0].mxu0 %v2237
        %v2412 = vpop.f32.mrb[0].mxu0
        %v2413 = vadd.f32 0.0, %v2412
        %v2414 = vpop.f32.mrb[0].mxu0
        %2415 = vmatprep.mubr.f32.mxu0 0.0
        %2416 = vmatmul.mubr.f32.gmra.mrb[0].mxu0 %v2240
        %v2417 = vpop.f32.mrb[0].mxu0
        %v2418 = vadd.f32 0.0, %v2417
        %v2419 = vpop.f32.mrb[0].mxu0
        %2420 = vmatprep.mubr.f32.mxu0 0.0
        %2421 = vmatmul.mubr.f32.gmra.mrb[0].mxu0 %v2243
        %v2422 = vpop.f32.mrb[0].mxu0
        %v2423 = vadd.f32 0.0, %v2422
        %v2424 = vpop.f32.mrb[0].mxu0
        %2425 = vmatprep.mubr.f32.mxu0 0.0
        %2426 = vmatmul.mubr.f32.gmra.mrb[0].mxu0 %v2246
        %v2427 = vpop.f32.mrb[0].mxu0
        %v2428 = vadd.f32 0.0, %v2427
        %v2429 = vpop.f32.mrb[0].mxu0
        %2430 = vmatprep.mubr.f32.mxu0 0.0
        %2431 = vmatmul.mubr.f32.gmra.mrb[0].mxu0 %v2249
        %v2432 = vpop.f32.mrb[0].mxu0
        %v2433 = vadd.f32 0.0, %v2432
        %v2434 = vpop.f32.mrb[0].mxu0
        %2435 = vmatprep.mubr.f32.mxu0 0.0
        %2436 = vmatmul.mubr.f32.gmra.mrb[0].mxu0 %v2252
        %v2437 = vpop.f32.mrb[0].mxu0
        %v2438 = vadd.f32 0.0, %v2437
        %v2439 = vpop.f32.mrb[0].mxu0
        %2440 = vmatprep.mubr.f32.mxu0 0.0
        %2441 = vmatmul.mubr.f32.gmra.mrb[0].mxu0 %v2255
        %v2442 = vpop.f32.mrb[0].mxu0
        %v2443 = vadd.f32 0.0, %v2442
        %v2444 = vpop.f32.mrb[0].mxu0
        %2445 = vmatprep.mubr.f32.mxu0 0.0
        %2446 = vmatmul.mubr.f32.gmra.mrb[0].mxu0 %v2258
        %v2447 = vpop.f32.mrb[0].mxu0
        %v2448 = vadd.f32 0.0, %v2447
        %v2449 = vpop.f32.mrb[0].mxu0
        %2450 = vmatprep.mubr.f32.mxu0 0.0
        %2451 = vmatmul.mubr.f32.gmra.mrb[0].mxu0 %v2261
        %v2452 = vpop.f32.mrb[0].mxu0
        %v2453 = vadd.f32 0.0, %v2452
        %v2454 = vpop.f32.mrb[0].mxu0
        %2455 = vmatprep.mubr.f32.mxu0 0.0
        %2456 = vmatmul.mubr.f32.gmra.mrb[0].mxu0 %v2264
        %v2457 = vpop.f32.mrb[0].mxu0
        %v2458 = vadd.f32 0.0, %v2457
        %v2459 = vpop.f32.mrb[0].mxu0
        %2460 = vmatprep.mubr.f32.mxu0 0.0
        %2461 = vmatmul.mubr.f32.gmra.mrb[0].mxu0 %v2267
        %v2462 = vpop.f32.mrb[0].mxu0
        %v2463 = vadd.f32 0.0, %v2462
        %v2464 = vpop.f32.mrb[0].mxu0
        %2465 = vmatprep.mubr.f32.mxu0 0.0
        %2466 = vmatmul.mubr.f32.gmra.mrb[0].mxu0 %v2270
        %v2467 = vpop.f32.mrb[0].mxu0
        %v2468 = vadd.f32 0.0, %v2467
        %v2469 = vpop.f32.mrb[0].mxu0
        %2470 = vmatprep.mubr.f32.mxu0 0.0
        %2471 = vmatmul.mubr.f32.gmra.mrb[0].mxu0 %v2273
        %v2472 = vpop.f32.mrb[0].mxu0
        %v2473 = vadd.f32 0.0, %v2472
        %v2474 = vpop.f32.mrb[0].mxu0
        %2475 = vmatprep.mubr.f32.mxu0 0.0
        %2476 = vmatmul.mubr.f32.gmra.mrb[0].mxu0 %v2276
        %v2477 = vpop.f32.mrb[0].mxu0
        %v2478 = vadd.f32 0.0, %v2477
        %v2479 = vpop.f32.mrb[0].mxu0
        %2480 = vmatprep.mubr.f32.mxu0 0.0
        %2481 = vmatmul.mubr.f32.gmra.mrb[0].mxu0 %v2279
        %v2482 = vpop.f32.mrb[0].mxu0
        %v2483 = vadd.f32 0.0, %v2482
        %v2484 = vpop.f32.mrb[0].mxu0
        %2485 = vmatprep.mubr.f32.mxu0 0.0
        %2486 = vmatmul.mubr.f32.gmra.mrb[0].mxu0 %v2282
        %v2487 = vpop.f32.mrb[0].mxu0
        %v2488 = vadd.f32 0.0, %v2487
        %v2489 = vpop.f32.mrb[0].mxu0
        %2490 = vmatprep.mubr.f32.mxu0 0.0
        %2491 = vmatmul.mubr.f32.gmra.mrb[0].mxu0 %v2285
        %v2492 = vpop.f32.mrb[0].mxu0
        %v2493 = vadd.f32 0.0, %v2492
        %v2494 = vpop.f32.mrb[0].mxu0
        %2495 = vmatprep.mubr.f32.mxu0 0.0
        %2496 = vmatmul.mubr.f32.gmra.mrb[0].mxu0 %v2288
        %v2497 = vpop.f32.mrb[0].mxu0
        %v2498 = vadd.f32 0.0, %v2497
        %v2499 = vpop.f32.mrb[0].mxu0
        %2500 = vmatprep.mubr.f32.mxu0 0.0
        %2501 = vmatmul.mubr.f32.gmra.mrb[0].mxu0 %v2291
        %v2502 = vpop.f32.mrb[0].mxu0
        %v2503 = vadd.f32 0.0, %v2502
        %v2504 = vpop.f32.mrb[0].mxu0
        %2505 = vmatprep.mubr.f32.mxu0 0.0
        %2506 = vmatmul.mubr.f32.gmra.mrb[0].mxu0 %v2294
        %v2507 = vpop.f32.mrb[0].mxu0
        %v2508 = vadd.f32 0.0, %v2507
        %v2509 = vpop.f32.mrb[0].mxu0
        %2510 = vmatprep.mubr.f32.mxu0 0.0
        %2511 = vmatmul.mubr.f32.gmra.mrb[0].mxu0 %v2297
        %v2512 = vpop.f32.mrb[0].mxu0
        %v2513 = vadd.f32 0.0, %v2512
        %v2514 = vpop.f32.mrb[0].mxu0
        %2515 = vmatprep.mubr.f32.mxu0 0.0
        %2516 = vmatmul.mubr.f32.gmra.mrb[0].mxu0 %v2300
        %v2517 = vpop.f32.mrb[0].mxu0
        %v2518 = vadd.f32 0.0, %v2517
        %v2519 = vpop.f32.mrb[0].mxu0
        %2520 = vmatprep.mubr.f32.mxu0 0.0
        %2521 = vmatmul.mubr.f32.gmra.mrb[0].mxu0 %v2303
        %v2522 = vpop.f32.mrb[0].mxu0
        %v2523 = vadd.f32 0.0, %v2522
        %v2524 = vpop.f32.mrb[0].mxu0
        %2525 = vmatprep.mubr.f32.mxu0 0.0
        %2526 = vmatmul.mubr.f32.gmra.mrb[0].mxu0 %v2306
        %v2527 = vpop.f32.mrb[0].mxu0
        %v2528 = vadd.f32 0.0, %v2527
        %v2529 = vpop.f32.mrb[0].mxu0
        %2530 = vmatprep.mubr.f32.mxu0 0.0
        %2531 = vmatmul.mubr.f32.gmra.mrb[0].mxu0 %v2309
        %v2532 = vpop.f32.mrb[0].mxu0
        %v2533 = vadd.f32 0.0, %v2532
        %v2534 = vpop.f32.mrb[0].mxu0
        %2535 = vdwg.mxu0
        %v2536 = vld [vmem:[#allocation3] sm:$0xff]
        %v2537 = vld [vmem:[#allocation3 + $0x8] sm:$0xff]
        %v2538 = vld [vmem:[#allocation3 + $0x10] sm:$0xff]
        %v2539 = vld [vmem:[#allocation3 + $0x18] sm:$0xff]
        %v2540 = vld [vmem:[#allocation3 + $0x20] sm:$0xff]
        %v2541 = vld [vmem:[#allocation3 + $0x28] sm:$0xff]
        %v2542 = vld [vmem:[#allocation3 + $0x30] sm:$0xff]
        %v2543 = vld [vmem:[#allocation3 + $0x38] sm:$0xff]
        %v2544 = vld [vmem:[#allocation3 + $0x40] sm:$0xff]
        %v2545 = vld [vmem:[#allocation3 + $0x48] sm:$0xff]
        %v2546 = vld [vmem:[#allocation3 + $0x50] sm:$0xff]
        %v2547 = vld [vmem:[#allocation3 + $0x58] sm:$0xff]
        %v2548 = vld [vmem:[#allocation3 + $0x60] sm:$0xff]
        %v2549 = vld [vmem:[#allocation3 + $0x68] sm:$0xff]
        %v2550 = vld [vmem:[#allocation3 + $0x70] sm:$0xff]
        %v2551 = vld [vmem:[#allocation3 + $0x78] sm:$0xff]
        %v2552 = vld [vmem:[#allocation3 + $0x80] sm:$0xff]
        %v2553 = vld [vmem:[#allocation3 + $0x88] sm:$0xff]
        %v2554 = vld [vmem:[#allocation3 + $0x90] sm:$0xff]
        %v2555 = vld [vmem:[#allocation3 + $0x98] sm:$0xff]
        %v2556 = vld [vmem:[#allocation3 + $0xa0] sm:$0xff]
        %v2557 = vld [vmem:[#allocation3 + $0xa8] sm:$0xff]
        %v2558 = vld [vmem:[#allocation3 + $0xb0] sm:$0xff]
        %v2559 = vld [vmem:[#allocation3 + $0xb8] sm:$0xff]
        %v2560 = vld [vmem:[#allocation3 + $0xc0] sm:$0xff]
        %v2561 = vld [vmem:[#allocation3 + $0xc8] sm:$0xff]
        %v2562 = vld [vmem:[#allocation3 + $0xd0] sm:$0xff]
        %v2563 = vld [vmem:[#allocation3 + $0xd8] sm:$0xff]
        %v2564 = vld [vmem:[#allocation3 + $0xe0] sm:$0xff]
        %v2565 = vld [vmem:[#allocation3 + $0xe8] sm:$0xff]
        %v2566 = vld [vmem:[#allocation3 + $0xf0] sm:$0xff]
        %v2567 = vld [vmem:[#allocation3 + $0xf8] sm:$0xff]
        %v2568 = vadd.f32 %v2536, %v2378
        %v2569 = vadd.f32 %v2537, %v2383
        %v2570 = vadd.f32 %v2538, %v2388
        %v2571 = vadd.f32 %v2539, %v2393
        %v2572 = vadd.f32 %v2540, %v2398
        %v2573 = vadd.f32 %v2541, %v2403
        %v2574 = vadd.f32 %v2542, %v2408
        %v2575 = vadd.f32 %v2543, %v2413
        %v2576 = vadd.f32 %v2544, %v2418
        %v2577 = vadd.f32 %v2545, %v2423
        %v2578 = vadd.f32 %v2546, %v2428
        %v2579 = vadd.f32 %v2547, %v2433
        %v2580 = vadd.f32 %v2548, %v2438
        %v2581 = vadd.f32 %v2549, %v2443
        %v2582 = vadd.f32 %v2550, %v2448
        %v2583 = vadd.f32 %v2551, %v2453
        %v2584 = vadd.f32 %v2552, %v2458
        %v2585 = vadd.f32 %v2553, %v2463
        %v2586 = vadd.f32 %v2554, %v2468
        %v2587 = vadd.f32 %v2555, %v2473
        %v2588 = vadd.f32 %v2556, %v2478
        %v2589 = vadd.f32 %v2557, %v2483
        %v2590 = vadd.f32 %v2558, %v2488
        %v2591 = vadd.f32 %v2559, %v2493
        %v2592 = vadd.f32 %v2560, %v2498
        %v2593 = vadd.f32 %v2561, %v2503
        %v2594 = vadd.f32 %v2562, %v2508
        %v2595 = vadd.f32 %v2563, %v2513
        %v2596 = vadd.f32 %v2564, %v2518
        %v2597 = vadd.f32 %v2565, %v2523
        %v2598 = vadd.f32 %v2566, %v2528
        %v2599 = vadd.f32 %v2567, %v2533
        %2600 = vst.msk [vmem:[#allocation3] sm:$0xff] %vm789, %v2568
        %2601 = vst.msk [vmem:[#allocation3 + $0x8] sm:$0xff] %vm789, %v2569
        %2602 = vst.msk [vmem:[#allocation3 + $0x10] sm:$0xff] %vm789, %v2570
        %2603 = vst.msk [vmem:[#allocation3 + $0x18] sm:$0xff] %vm789, %v2571
        %2604 = vst.msk [vmem:[#allocation3 + $0x20] sm:$0xff] %vm789, %v2572
        %2605 = vst.msk [vmem:[#allocation3 + $0x28] sm:$0xff] %vm789, %v2573
        %2606 = vst.msk [vmem:[#allocation3 + $0x30] sm:$0xff] %vm789, %v2574
        %2607 = vst.msk [vmem:[#allocation3 + $0x38] sm:$0xff] %vm789, %v2575
        %2608 = vst.msk [vmem:[#allocation3 + $0x40] sm:$0xff] %vm789, %v2576
        %2609 = vst.msk [vmem:[#allocation3 + $0x48] sm:$0xff] %vm789, %v2577
        %2610 = vst.msk [vmem:[#allocation3 + $0x50] sm:$0xff] %vm789, %v2578
        %2611 = vst.msk [vmem:[#allocation3 + $0x58] sm:$0xff] %vm789, %v2579
        %2612 = vst.msk [vmem:[#allocation3 + $0x60] sm:$0xff] %vm789, %v2580
        %2613 = vst.msk [vmem:[#allocation3 + $0x68] sm:$0xff] %vm789, %v2581
        %2614 = vst.msk [vmem:[#allocation3 + $0x70] sm:$0xff] %vm789, %v2582
        %2615 = vst.msk [vmem:[#allocation3 + $0x78] sm:$0xff] %vm789, %v2583
        %2616 = vst.msk [vmem:[#allocation3 + $0x80] sm:$0xff] %vm789, %v2584
        %2617 = vst.msk [vmem:[#allocation3 + $0x88] sm:$0xff] %vm789, %v2585
        %2618 = vst.msk [vmem:[#allocation3 + $0x90] sm:$0xff] %vm789, %v2586
        %2619 = vst.msk [vmem:[#allocation3 + $0x98] sm:$0xff] %vm789, %v2587
        %2620 = vst.msk [vmem:[#allocation3 + $0xa0] sm:$0xff] %vm789, %v2588
        %2621 = vst.msk [vmem:[#allocation3 + $0xa8] sm:$0xff] %vm789, %v2589
        %2622 = vst.msk [vmem:[#allocation3 + $0xb0] sm:$0xff] %vm789, %v2590
        %2623 = vst.msk [vmem:[#allocation3 + $0xb8] sm:$0xff] %vm789, %v2591
        %2624 = vst.msk [vmem:[#allocation3 + $0xc0] sm:$0xff] %vm789, %v2592
        %2625 = vst.msk [vmem:[#allocation3 + $0xc8] sm:$0xff] %vm789, %v2593
        %2626 = vst.msk [vmem:[#allocation3 + $0xd0] sm:$0xff] %vm789, %v2594
        %2627 = vst.msk [vmem:[#allocation3 + $0xd8] sm:$0xff] %vm789, %v2595
        %2628 = vst.msk [vmem:[#allocation3 + $0xe0] sm:$0xff] %vm789, %v2596
        %2629 = vst.msk [vmem:[#allocation3 + $0xe8] sm:$0xff] %vm789, %v2597
        %2630 = vst.msk [vmem:[#allocation3 + $0xf0] sm:$0xff] %vm789, %v2598
        %2631 = vst.msk [vmem:[#allocation3 + $0xf8] sm:$0xff] %vm789, %v2599
        %v2632 = vld [vmem:[%s835 + $0x1] sm:$0xff]
        %v2633 = vld [vmem:[%s835 + $0x9] sm:$0xff]
        %v2634 = vld [vmem:[%s835 + $0x19] sm:$0xff]
        %v2635 = vld [vmem:[%s835 + $0x21] sm:$0xff]
        %v2636 = vld [vmem:[%s835 + $0x31] sm:$0xff]
        %v2637 = vld [vmem:[%s835 + $0x39] sm:$0xff]
        %v2638 = vld [vmem:[%s835 + $0x49] sm:$0xff]
        %v2639 = vld [vmem:[%s835 + $0x51] sm:$0xff]
        %v2640 = vld [vmem:[%s835 + $0x61] sm:$0xff]
        %v2641 = vld [vmem:[%s835 + $0x69] sm:$0xff]
        %v2642 = vld [vmem:[%s835 + $0x79] sm:$0xff]
        %v2643 = vld [vmem:[%s835 + $0x81] sm:$0xff]
        %v2644 = vld [vmem:[%s835 + $0x91] sm:$0xff]
        %v2645 = vld [vmem:[%s835 + $0x99] sm:$0xff]
        %v2646 = vld [vmem:[%s835 + $0xa9] sm:$0xff]
        %v2647 = vld [vmem:[%s835 + $0xb1] sm:$0xff]
        %v2648 = vld [vmem:[%s835 + $0xc1] sm:$0xff]
        %v2649 = vld [vmem:[%s835 + $0xc9] sm:$0xff]
        %v2650 = vld [vmem:[%s835 + $0xd9] sm:$0xff]
        %v2651 = vld [vmem:[%s835 + $0xe1] sm:$0xff]
        %v2652 = vld [vmem:[%s835 + $0xf1] sm:$0xff]
        %v2653 = vld [vmem:[%s835 + $0xf9] sm:$0xff]
        %v2654 = vld [vmem:[%s835 + $0x109] sm:$0xff]
        %v2655 = vld [vmem:[%s835 + $0x111] sm:$0xff]
        %v2656 = vld [vmem:[%s835 + $0x121] sm:$0xff]
        %v2657 = vld [vmem:[%s835 + $0x129] sm:$0xff]
        %v2658 = vld [vmem:[%s835 + $0x139] sm:$0xff]
        %v2659 = vld [vmem:[%s835 + $0x141] sm:$0xff]
        %v2660 = vld [vmem:[%s835 + $0x151] sm:$0xff]
        %v2661 = vld [vmem:[%s835 + $0x159] sm:$0xff]
        %v2662 = vld [vmem:[%s835 + $0x169] sm:$0xff]
        %v2663 = vld [vmem:[%s835 + $0x171] sm:$0xff]
        %v2664 = vld [vmem:[%s4 + $0x100] sm:$0xff]
        %v2665 = vld [vmem:[%s4 + $0x108] sm:$0xff]
        %v2666 = vld [vmem:[%s4 + $0x110] sm:$0xff]
        %v2667 = vld [vmem:[%s4 + $0x118] sm:$0xff]
        %v2668 = vld [vmem:[%s4 + $0x120] sm:$0xff]
        %v2669 = vld [vmem:[%s4 + $0x128] sm:$0xff]
        %v2670 = vld [vmem:[%s4 + $0x130] sm:$0xff]
        %v2671 = vld [vmem:[%s4 + $0x138] sm:$0xff]
        %v2673 = vsel %vm789, %v2632, 0
        %v2676 = vsel %vm789, %v2633, 0
        %v2679 = vsel %vm789, %v2634, 0
        %v2682 = vsel %vm789, %v2635, 0
        %v2685 = vsel %vm789, %v2636, 0
        %v2688 = vsel %vm789, %v2637, 0
        %v2691 = vsel %vm789, %v2638, 0
        %v2694 = vsel %vm789, %v2639, 0
        %v2697 = vsel %vm789, %v2640, 0
        %v2700 = vsel %vm789, %v2641, 0
        %v2703 = vsel %vm789, %v2642, 0
        %v2706 = vsel %vm789, %v2643, 0
        %v2709 = vsel %vm789, %v2644, 0
        %v2712 = vsel %vm789, %v2645, 0
        %v2715 = vsel %vm789, %v2646, 0
        %v2718 = vsel %vm789, %v2647, 0
        %v2721 = vsel %vm789, %v2648, 0
        %v2724 = vsel %vm789, %v2649, 0
        %v2727 = vsel %vm789, %v2650, 0
        %v2730 = vsel %vm789, %v2651, 0
        %v2733 = vsel %vm789, %v2652, 0
        %v2736 = vsel %vm789, %v2653, 0
        %v2739 = vsel %vm789, %v2654, 0
        %v2742 = vsel %vm789, %v2655, 0
        %v2745 = vsel %vm789, %v2656, 0
        %v2748 = vsel %vm789, %v2657, 0
        %v2751 = vsel %vm789, %v2658, 0
        %v2754 = vsel %vm789, %v2659, 0
        %v2757 = vsel %vm789, %v2660, 0
        %v2760 = vsel %vm789, %v2661, 0
        %v2763 = vsel %vm789, %v2662, 0
        %v2766 = vsel %vm789, %v2663, 0
        %2768 = vmatprep.subr.mxu0 0.0
        %2769 = vmatpush1.msra.mxu0 %v2664
        %2770 = vmatprep.subr.mxu0 0.0
        %2771 = vmatpush1.msra.mxu0 %v2665
        %2772 = vmatprep.subr.mxu0 0.0
        %2773 = vmatpush1.msra.mxu0 %v2666
        %2774 = vmatprep.subr.mxu0 0.0
        %2775 = vmatpush1.msra.mxu0 %v2667
        %2776 = vmatprep.subr.mxu0 0.0
        %2777 = vmatpush1.msra.mxu0 %v2668
        %2778 = vmatprep.subr.mxu0 0.0
        %2779 = vmatpush1.msra.mxu0 %v2669
        %2780 = vmatprep.subr.mxu0 0.0
        %2781 = vmatpush1.msra.mxu0 %v2670
        %2782 = vmatprep.subr.mxu0 0.0
        %2783 = vmatpush1.msra.mxu0 %v2671
        %2784 = vmatprep.subr.mxu0 0.0
        %2785 = vmatpush1.msra.mxu0 0.0
        %2786 = vmatprep.subr.mxu0 0.0
        %2787 = vmatpush1.msra.mxu0 0.0
        %2788 = vmatprep.subr.mxu0 0.0
        %2789 = vmatpush1.msra.mxu0 0.0
        %2790 = vmatprep.subr.mxu0 0.0
        %2791 = vmatpush1.msra.mxu0 0.0
        %2792 = vmatprep.subr.mxu0 0.0
        %2793 = vmatpush1.msra.mxu0 0.0
        %2794 = vmatprep.subr.mxu0 0.0
        %2795 = vmatpush1.msra.mxu0 0.0
        %2796 = vmatprep.subr.mxu0 0.0
        %2797 = vmatpush1.msra.mxu0 0.0
        %2798 = vmatprep.subr.mxu0 0.0
        %2799 = vmatpush1.msra.mxu0 0.0
        %2800 = vmatprep.subr.mxu0 0.0
        %2801 = vmatpush1.msra.mxu0 0.0
        %2802 = vmatprep.subr.mxu0 0.0
        %2803 = vmatpush1.msra.mxu0 0.0
        %2804 = vmatprep.subr.mxu0 0.0
        %2805 = vmatpush1.msra.mxu0 0.0
        %2806 = vmatprep.subr.mxu0 0.0
        %2807 = vmatpush1.msra.mxu0 0.0
        %2808 = vmatprep.subr.mxu0 0.0
        %2809 = vmatpush1.msra.mxu0 0.0
        %2810 = vmatprep.subr.mxu0 0.0
        %2811 = vmatpush1.msra.mxu0 0.0
        %2812 = vmatprep.subr.mxu0 0.0
        %2813 = vmatpush1.msra.mxu0 0.0
        %2814 = vmatprep.subr.mxu0 0.0
        %2815 = vmatpush1.msra.mxu0 0.0
        %2816 = vmatprep.subr.mxu0 0.0
        %2817 = vmatpush1.msra.mxu0 0.0
        %2818 = vmatprep.subr.mxu0 0.0
        %2819 = vmatpush1.msra.mxu0 0.0
        %2820 = vmatprep.subr.mxu0 0.0
        %2821 = vmatpush1.msra.mxu0 0.0
        %2822 = vmatprep.subr.mxu0 0.0
        %2823 = vmatpush1.msra.mxu0 0.0
        %2824 = vmatprep.subr.mxu0 0.0
        %2825 = vmatpush1.msra.mxu0 0.0
        %2826 = vmatprep.subr.mxu0 0.0
        %2827 = vmatpush1.msra.mxu0 0.0
        %2828 = vmatprep.subr.mxu0 0.0
        %2829 = vmatpush1.msra.mxu0 0.0
        %2830 = vmatprep.subr.mxu0 0.0
        %2831 = vmatpush1.msra.mxu0 0.0
        %2832 = vmatprep.mubr.f32.mxu0 0.0
        %2833 = vmatmul.mubr.f32.gmra.mrb[0].mxu0 %v2673
        %v2834 = vpop.f32.mrb[0].mxu0
        %v2835 = vadd.f32 0.0, %v2834
        %v2836 = vpop.f32.mrb[0].mxu0
        %2837 = vmatprep.mubr.f32.mxu0 0.0
        %2838 = vmatmul.mubr.f32.gmra.mrb[0].mxu0 %v2676
        %v2839 = vpop.f32.mrb[0].mxu0
        %v2840 = vadd.f32 0.0, %v2839
        %v2841 = vpop.f32.mrb[0].mxu0
        %2842 = vmatprep.mubr.f32.mxu0 0.0
        %2843 = vmatmul.mubr.f32.gmra.mrb[0].mxu0 %v2679
        %v2844 = vpop.f32.mrb[0].mxu0
        %v2845 = vadd.f32 0.0, %v2844
        %v2846 = vpop.f32.mrb[0].mxu0
        %2847 = vmatprep.mubr.f32.mxu0 0.0
        %2848 = vmatmul.mubr.f32.gmra.mrb[0].mxu0 %v2682
        %v2849 = vpop.f32.mrb[0].mxu0
        %v2850 = vadd.f32 0.0, %v2849
        %v2851 = vpop.f32.mrb[0].mxu0
        %2852 = vmatprep.mubr.f32.mxu0 0.0
        %2853 = vmatmul.mubr.f32.gmra.mrb[0].mxu0 %v2685
        %v2854 = vpop.f32.mrb[0].mxu0
        %v2855 = vadd.f32 0.0, %v2854
        %v2856 = vpop.f32.mrb[0].mxu0
        %2857 = vmatprep.mubr.f32.mxu0 0.0
        %2858 = vmatmul.mubr.f32.gmra.mrb[0].mxu0 %v2688
        %v2859 = vpop.f32.mrb[0].mxu0
        %v2860 = vadd.f32 0.0, %v2859
        %v2861 = vpop.f32.mrb[0].mxu0
        %2862 = vmatprep.mubr.f32.mxu0 0.0
        %2863 = vmatmul.mubr.f32.gmra.mrb[0].mxu0 %v2691
        %v2864 = vpop.f32.mrb[0].mxu0
        %v2865 = vadd.f32 0.0, %v2864
        %v2866 = vpop.f32.mrb[0].mxu0
        %2867 = vmatprep.mubr.f32.mxu0 0.0
        %2868 = vmatmul.mubr.f32.gmra.mrb[0].mxu0 %v2694
        %v2869 = vpop.f32.mrb[0].mxu0
        %v2870 = vadd.f32 0.0, %v2869
        %v2871 = vpop.f32.mrb[0].mxu0
        %2872 = vmatprep.mubr.f32.mxu0 0.0
        %2873 = vmatmul.mubr.f32.gmra.mrb[0].mxu0 %v2697
        %v2874 = vpop.f32.mrb[0].mxu0
        %v2875 = vadd.f32 0.0, %v2874
        %v2876 = vpop.f32.mrb[0].mxu0
        %2877 = vmatprep.mubr.f32.mxu0 0.0
        %2878 = vmatmul.mubr.f32.gmra.mrb[0].mxu0 %v2700
        %v2879 = vpop.f32.mrb[0].mxu0
        %v2880 = vadd.f32 0.0, %v2879
        %v2881 = vpop.f32.mrb[0].mxu0
        %2882 = vmatprep.mubr.f32.mxu0 0.0
        %2883 = vmatmul.mubr.f32.gmra.mrb[0].mxu0 %v2703
        %v2884 = vpop.f32.mrb[0].mxu0
        %v2885 = vadd.f32 0.0, %v2884
        %v2886 = vpop.f32.mrb[0].mxu0
        %2887 = vmatprep.mubr.f32.mxu0 0.0
        %2888 = vmatmul.mubr.f32.gmra.mrb[0].mxu0 %v2706
        %v2889 = vpop.f32.mrb[0].mxu0
        %v2890 = vadd.f32 0.0, %v2889
        %v2891 = vpop.f32.mrb[0].mxu0
        %2892 = vmatprep.mubr.f32.mxu0 0.0
        %2893 = vmatmul.mubr.f32.gmra.mrb[0].mxu0 %v2709
        %v2894 = vpop.f32.mrb[0].mxu0
        %v2895 = vadd.f32 0.0, %v2894
        %v2896 = vpop.f32.mrb[0].mxu0
        %2897 = vmatprep.mubr.f32.mxu0 0.0
        %2898 = vmatmul.mubr.f32.gmra.mrb[0].mxu0 %v2712
        %v2899 = vpop.f32.mrb[0].mxu0
        %v2900 = vadd.f32 0.0, %v2899
        %v2901 = vpop.f32.mrb[0].mxu0
        %2902 = vmatprep.mubr.f32.mxu0 0.0
        %2903 = vmatmul.mubr.f32.gmra.mrb[0].mxu0 %v2715
        %v2904 = vpop.f32.mrb[0].mxu0
        %v2905 = vadd.f32 0.0, %v2904
        %v2906 = vpop.f32.mrb[0].mxu0
        %2907 = vmatprep.mubr.f32.mxu0 0.0
        %2908 = vmatmul.mubr.f32.gmra.mrb[0].mxu0 %v2718
        %v2909 = vpop.f32.mrb[0].mxu0
        %v2910 = vadd.f32 0.0, %v2909
        %v2911 = vpop.f32.mrb[0].mxu0
        %2912 = vmatprep.mubr.f32.mxu0 0.0
        %2913 = vmatmul.mubr.f32.gmra.mrb[0].mxu0 %v2721
        %v2914 = vpop.f32.mrb[0].mxu0
        %v2915 = vadd.f32 0.0, %v2914
        %v2916 = vpop.f32.mrb[0].mxu0
        %2917 = vmatprep.mubr.f32.mxu0 0.0
        %2918 = vmatmul.mubr.f32.gmra.mrb[0].mxu0 %v2724
        %v2919 = vpop.f32.mrb[0].mxu0
        %v2920 = vadd.f32 0.0, %v2919
        %v2921 = vpop.f32.mrb[0].mxu0
        %2922 = vmatprep.mubr.f32.mxu0 0.0
        %2923 = vmatmul.mubr.f32.gmra.mrb[0].mxu0 %v2727
        %v2924 = vpop.f32.mrb[0].mxu0
        %v2925 = vadd.f32 0.0, %v2924
        %v2926 = vpop.f32.mrb[0].mxu0
        %2927 = vmatprep.mubr.f32.mxu0 0.0
        %2928 = vmatmul.mubr.f32.gmra.mrb[0].mxu0 %v2730
        %v2929 = vpop.f32.mrb[0].mxu0
        %v2930 = vadd.f32 0.0, %v2929
        %v2931 = vpop.f32.mrb[0].mxu0
        %2932 = vmatprep.mubr.f32.mxu0 0.0
        %2933 = vmatmul.mubr.f32.gmra.mrb[0].mxu0 %v2733
        %v2934 = vpop.f32.mrb[0].mxu0
        %v2935 = vadd.f32 0.0, %v2934
        %v2936 = vpop.f32.mrb[0].mxu0
        %2937 = vmatprep.mubr.f32.mxu0 0.0
        %2938 = vmatmul.mubr.f32.gmra.mrb[0].mxu0 %v2736
        %v2939 = vpop.f32.mrb[0].mxu0
        %v2940 = vadd.f32 0.0, %v2939
        %v2941 = vpop.f32.mrb[0].mxu0
        %2942 = vmatprep.mubr.f32.mxu0 0.0
        %2943 = vmatmul.mubr.f32.gmra.mrb[0].mxu0 %v2739
        %v2944 = vpop.f32.mrb[0].mxu0
        %v2945 = vadd.f32 0.0, %v2944
        %v2946 = vpop.f32.mrb[0].mxu0
        %2947 = vmatprep.mubr.f32.mxu0 0.0
        %2948 = vmatmul.mubr.f32.gmra.mrb[0].mxu0 %v2742
        %v2949 = vpop.f32.mrb[0].mxu0
        %v2950 = vadd.f32 0.0, %v2949
        %v2951 = vpop.f32.mrb[0].mxu0
        %2952 = vmatprep.mubr.f32.mxu0 0.0
        %2953 = vmatmul.mubr.f32.gmra.mrb[0].mxu0 %v2745
        %v2954 = vpop.f32.mrb[0].mxu0
        %v2955 = vadd.f32 0.0, %v2954
        %v2956 = vpop.f32.mrb[0].mxu0
        %2957 = vmatprep.mubr.f32.mxu0 0.0
        %2958 = vmatmul.mubr.f32.gmra.mrb[0].mxu0 %v2748
        %v2959 = vpop.f32.mrb[0].mxu0
        %v2960 = vadd.f32 0.0, %v2959
        %v2961 = vpop.f32.mrb[0].mxu0
        %2962 = vmatprep.mubr.f32.mxu0 0.0
        %2963 = vmatmul.mubr.f32.gmra.mrb[0].mxu0 %v2751
        %v2964 = vpop.f32.mrb[0].mxu0
        %v2965 = vadd.f32 0.0, %v2964
        %v2966 = vpop.f32.mrb[0].mxu0
        %2967 = vmatprep.mubr.f32.mxu0 0.0
        %2968 = vmatmul.mubr.f32.gmra.mrb[0].mxu0 %v2754
        %v2969 = vpop.f32.mrb[0].mxu0
        %v2970 = vadd.f32 0.0, %v2969
        %v2971 = vpop.f32.mrb[0].mxu0
        %2972 = vmatprep.mubr.f32.mxu0 0.0
        %2973 = vmatmul.mubr.f32.gmra.mrb[0].mxu0 %v2757
        %v2974 = vpop.f32.mrb[0].mxu0
        %v2975 = vadd.f32 0.0, %v2974
        %v2976 = vpop.f32.mrb[0].mxu0
        %2977 = vmatprep.mubr.f32.mxu0 0.0
        %2978 = vmatmul.mubr.f32.gmra.mrb[0].mxu0 %v2760
        %v2979 = vpop.f32.mrb[0].mxu0
        %v2980 = vadd.f32 0.0, %v2979
        %v2981 = vpop.f32.mrb[0].mxu0
        %2982 = vmatprep.mubr.f32.mxu0 0.0
        %2983 = vmatmul.mubr.f32.gmra.mrb[0].mxu0 %v2763
        %v2984 = vpop.f32.mrb[0].mxu0
        %v2985 = vadd.f32 0.0, %v2984
        %v2986 = vpop.f32.mrb[0].mxu0
        %2987 = vmatprep.mubr.f32.mxu0 0.0
        %2988 = vmatmul.mubr.f32.gmra.mrb[0].mxu0 %v2766
        %v2989 = vpop.f32.mrb[0].mxu0
        %v2990 = vadd.f32 0.0, %v2989
        %v2991 = vpop.f32.mrb[0].mxu0
        %2992 = vdwg.mxu0
        %v2993 = vld [vmem:[#allocation3] sm:$0xff]
        %v2994 = vld [vmem:[#allocation3 + $0x8] sm:$0xff]
        %v2995 = vld [vmem:[#allocation3 + $0x10] sm:$0xff]
        %v2996 = vld [vmem:[#allocation3 + $0x18] sm:$0xff]
        %v2997 = vld [vmem:[#allocation3 + $0x20] sm:$0xff]
        %v2998 = vld [vmem:[#allocation3 + $0x28] sm:$0xff]
        %v2999 = vld [vmem:[#allocation3 + $0x30] sm:$0xff]
        %v3000 = vld [vmem:[#allocation3 + $0x38] sm:$0xff]
        %v3001 = vld [vmem:[#allocation3 + $0x40] sm:$0xff]
        %v3002 = vld [vmem:[#allocation3 + $0x48] sm:$0xff]
        %v3003 = vld [vmem:[#allocation3 + $0x50] sm:$0xff]
        %v3004 = vld [vmem:[#allocation3 + $0x58] sm:$0xff]
        %v3005 = vld [vmem:[#allocation3 + $0x60] sm:$0xff]
        %v3006 = vld [vmem:[#allocation3 + $0x68] sm:$0xff]
        %v3007 = vld [vmem:[#allocation3 + $0x70] sm:$0xff]
        %v3008 = vld [vmem:[#allocation3 + $0x78] sm:$0xff]
        %v3009 = vld [vmem:[#allocation3 + $0x80] sm:$0xff]
        %v3010 = vld [vmem:[#allocation3 + $0x88] sm:$0xff]
        %v3011 = vld [vmem:[#allocation3 + $0x90] sm:$0xff]
        %v3012 = vld [vmem:[#allocation3 + $0x98] sm:$0xff]
        %v3013 = vld [vmem:[#allocation3 + $0xa0] sm:$0xff]
        %v3014 = vld [vmem:[#allocation3 + $0xa8] sm:$0xff]
        %v3015 = vld [vmem:[#allocation3 + $0xb0] sm:$0xff]
        %v3016 = vld [vmem:[#allocation3 + $0xb8] sm:$0xff]
        %v3017 = vld [vmem:[#allocation3 + $0xc0] sm:$0xff]
        %v3018 = vld [vmem:[#allocation3 + $0xc8] sm:$0xff]
        %v3019 = vld [vmem:[#allocation3 + $0xd0] sm:$0xff]
        %v3020 = vld [vmem:[#allocation3 + $0xd8] sm:$0xff]
        %v3021 = vld [vmem:[#allocation3 + $0xe0] sm:$0xff]
        %v3022 = vld [vmem:[#allocation3 + $0xe8] sm:$0xff]
        %v3023 = vld [vmem:[#allocation3 + $0xf0] sm:$0xff]
        %v3024 = vld [vmem:[#allocation3 + $0xf8] sm:$0xff]
        %v3025 = vadd.f32 %v2993, %v2835
        %v3026 = vadd.f32 %v2994, %v2840
        %v3027 = vadd.f32 %v2995, %v2845
        %v3028 = vadd.f32 %v2996, %v2850
        %v3029 = vadd.f32 %v2997, %v2855
        %v3030 = vadd.f32 %v2998, %v2860
        %v3031 = vadd.f32 %v2999, %v2865
        %v3032 = vadd.f32 %v3000, %v2870
        %v3033 = vadd.f32 %v3001, %v2875
        %v3034 = vadd.f32 %v3002, %v2880
        %v3035 = vadd.f32 %v3003, %v2885
        %v3036 = vadd.f32 %v3004, %v2890
        %v3037 = vadd.f32 %v3005, %v2895
        %v3038 = vadd.f32 %v3006, %v2900
        %v3039 = vadd.f32 %v3007, %v2905
        %v3040 = vadd.f32 %v3008, %v2910
        %v3041 = vadd.f32 %v3009, %v2915
        %v3042 = vadd.f32 %v3010, %v2920
        %v3043 = vadd.f32 %v3011, %v2925
        %v3044 = vadd.f32 %v3012, %v2930
        %v3045 = vadd.f32 %v3013, %v2935
        %v3046 = vadd.f32 %v3014, %v2940
        %v3047 = vadd.f32 %v3015, %v2945
        %v3048 = vadd.f32 %v3016, %v2950
        %v3049 = vadd.f32 %v3017, %v2955
        %v3050 = vadd.f32 %v3018, %v2960
        %v3051 = vadd.f32 %v3019, %v2965
        %v3052 = vadd.f32 %v3020, %v2970
        %v3053 = vadd.f32 %v3021, %v2975
        %v3054 = vadd.f32 %v3022, %v2980
        %v3055 = vadd.f32 %v3023, %v2985
        %v3056 = vadd.f32 %v3024, %v2990
        %3057 = vst.msk [vmem:[#allocation3] sm:$0xff] %vm789, %v3025
        %3058 = vst.msk [vmem:[#allocation3 + $0x8] sm:$0xff] %vm789, %v3026
        %3059 = vst.msk [vmem:[#allocation3 + $0x10] sm:$0xff] %vm789, %v3027
        %3060 = vst.msk [vmem:[#allocation3 + $0x18] sm:$0xff] %vm789, %v3028
        %3061 = vst.msk [vmem:[#allocation3 + $0x20] sm:$0xff] %vm789, %v3029
        %3062 = vst.msk [vmem:[#allocation3 + $0x28] sm:$0xff] %vm789, %v3030
        %3063 = vst.msk [vmem:[#allocation3 + $0x30] sm:$0xff] %vm789, %v3031
        %3064 = vst.msk [vmem:[#allocation3 + $0x38] sm:$0xff] %vm789, %v3032
        %3065 = vst.msk [vmem:[#allocation3 + $0x40] sm:$0xff] %vm789, %v3033
        %3066 = vst.msk [vmem:[#allocation3 + $0x48] sm:$0xff] %vm789, %v3034
        %3067 = vst.msk [vmem:[#allocation3 + $0x50] sm:$0xff] %vm789, %v3035
        %3068 = vst.msk [vmem:[#allocation3 + $0x58] sm:$0xff] %vm789, %v3036
        %3069 = vst.msk [vmem:[#allocation3 + $0x60] sm:$0xff] %vm789, %v3037
        %3070 = vst.msk [vmem:[#allocation3 + $0x68] sm:$0xff] %vm789, %v3038
        %3071 = vst.msk [vmem:[#allocation3 + $0x70] sm:$0xff] %vm789, %v3039
        %3072 = vst.msk [vmem:[#allocation3 + $0x78] sm:$0xff] %vm789, %v3040
        %3073 = vst.msk [vmem:[#allocation3 + $0x80] sm:$0xff] %vm789, %v3041
        %3074 = vst.msk [vmem:[#allocation3 + $0x88] sm:$0xff] %vm789, %v3042
        %3075 = vst.msk [vmem:[#allocation3 + $0x90] sm:$0xff] %vm789, %v3043
        %3076 = vst.msk [vmem:[#allocation3 + $0x98] sm:$0xff] %vm789, %v3044
        %3077 = vst.msk [vmem:[#allocation3 + $0xa0] sm:$0xff] %vm789, %v3045
        %3078 = vst.msk [vmem:[#allocation3 + $0xa8] sm:$0xff] %vm789, %v3046
        %3079 = vst.msk [vmem:[#allocation3 + $0xb0] sm:$0xff] %vm789, %v3047
        %3080 = vst.msk [vmem:[#allocation3 + $0xb8] sm:$0xff] %vm789, %v3048
        %3081 = vst.msk [vmem:[#allocation3 + $0xc0] sm:$0xff] %vm789, %v3049
        %3082 = vst.msk [vmem:[#allocation3 + $0xc8] sm:$0xff] %vm789, %v3050
        %3083 = vst.msk [vmem:[#allocation3 + $0xd0] sm:$0xff] %vm789, %v3051
        %3084 = vst.msk [vmem:[#allocation3 + $0xd8] sm:$0xff] %vm789, %v3052
        %3085 = vst.msk [vmem:[#allocation3 + $0xe0] sm:$0xff] %vm789, %v3053
        %3086 = vst.msk [vmem:[#allocation3 + $0xe8] sm:$0xff] %vm789, %v3054
        %3087 = vst.msk [vmem:[#allocation3 + $0xf0] sm:$0xff] %vm789, %v3055
        %3088 = vst.msk [vmem:[#allocation3 + $0xf8] sm:$0xff] %vm789, %v3056
        %v3089 = vld [vmem:[%s835 + $0x2] sm:$0xff]
        %v3090 = vld [vmem:[%s835 + $0xa] sm:$0xff]
        %v3091 = vld [vmem:[%s835 + $0x1a] sm:$0xff]
        %v3092 = vld [vmem:[%s835 + $0x22] sm:$0xff]
        %v3093 = vld [vmem:[%s835 + $0x32] sm:$0xff]
        %v3094 = vld [vmem:[%s835 + $0x3a] sm:$0xff]
        %v3095 = vld [vmem:[%s835 + $0x4a] sm:$0xff]
        %v3096 = vld [vmem:[%s835 + $0x52] sm:$0xff]
        %v3097 = vld [vmem:[%s835 + $0x62] sm:$0xff]
        %v3098 = vld [vmem:[%s835 + $0x6a] sm:$0xff]
        %v3099 = vld [vmem:[%s835 + $0x7a] sm:$0xff]
        %v3100 = vld [vmem:[%s835 + $0x82] sm:$0xff]
        %v3101 = vld [vmem:[%s835 + $0x92] sm:$0xff]
        %v3102 = vld [vmem:[%s835 + $0x9a] sm:$0xff]
        %v3103 = vld [vmem:[%s835 + $0xaa] sm:$0xff]
        %v3104 = vld [vmem:[%s835 + $0xb2] sm:$0xff]
        %v3105 = vld [vmem:[%s835 + $0xc2] sm:$0xff]
        %v3106 = vld [vmem:[%s835 + $0xca] sm:$0xff]
        %v3107 = vld [vmem:[%s835 + $0xda] sm:$0xff]
        %v3108 = vld [vmem:[%s835 + $0xe2] sm:$0xff]
        %v3109 = vld [vmem:[%s835 + $0xf2] sm:$0xff]
        %v3110 = vld [vmem:[%s835 + $0xfa] sm:$0xff]
        %v3111 = vld [vmem:[%s835 + $0x10a] sm:$0xff]
        %v3112 = vld [vmem:[%s835 + $0x112] sm:$0xff]
        %v3113 = vld [vmem:[%s835 + $0x122] sm:$0xff]
        %v3114 = vld [vmem:[%s835 + $0x12a] sm:$0xff]
        %v3115 = vld [vmem:[%s835 + $0x13a] sm:$0xff]
        %v3116 = vld [vmem:[%s835 + $0x142] sm:$0xff]
        %v3117 = vld [vmem:[%s835 + $0x152] sm:$0xff]
        %v3118 = vld [vmem:[%s835 + $0x15a] sm:$0xff]
        %v3119 = vld [vmem:[%s835 + $0x16a] sm:$0xff]
        %v3120 = vld [vmem:[%s835 + $0x172] sm:$0xff]
        %v3121 = vld [vmem:[%s4 + $0x140] sm:$0xff]
        %v3122 = vld [vmem:[%s4 + $0x148] sm:$0xff]
        %v3123 = vld [vmem:[%s4 + $0x150] sm:$0xff]
        %v3124 = vld [vmem:[%s4 + $0x158] sm:$0xff]
        %v3125 = vld [vmem:[%s4 + $0x160] sm:$0xff]
        %v3126 = vld [vmem:[%s4 + $0x168] sm:$0xff]
        %v3127 = vld [vmem:[%s4 + $0x170] sm:$0xff]
        %v3128 = vld [vmem:[%s4 + $0x178] sm:$0xff]
        %v3130 = vsel %vm789, %v3089, 0
        %v3133 = vsel %vm789, %v3090, 0
        %v3136 = vsel %vm789, %v3091, 0
        %v3139 = vsel %vm789, %v3092, 0
        %v3142 = vsel %vm789, %v3093, 0
        %v3145 = vsel %vm789, %v3094, 0
        %v3148 = vsel %vm789, %v3095, 0
        %v3151 = vsel %vm789, %v3096, 0
        %v3154 = vsel %vm789, %v3097, 0
        %v3157 = vsel %vm789, %v3098, 0
        %v3160 = vsel %vm789, %v3099, 0
        %v3163 = vsel %vm789, %v3100, 0
        %v3166 = vsel %vm789, %v3101, 0
        %v3169 = vsel %vm789, %v3102, 0
        %v3172 = vsel %vm789, %v3103, 0
        %v3175 = vsel %vm789, %v3104, 0
        %v3178 = vsel %vm789, %v3105, 0
        %v3181 = vsel %vm789, %v3106, 0
        %v3184 = vsel %vm789, %v3107, 0
        %v3187 = vsel %vm789, %v3108, 0
        %v3190 = vsel %vm789, %v3109, 0
        %v3193 = vsel %vm789, %v3110, 0
        %v3196 = vsel %vm789, %v3111, 0
        %v3199 = vsel %vm789, %v3112, 0
        %v3202 = vsel %vm789, %v3113, 0
        %v3205 = vsel %vm789, %v3114, 0
        %v3208 = vsel %vm789, %v3115, 0
        %v3211 = vsel %vm789, %v3116, 0
        %v3214 = vsel %vm789, %v3117, 0
        %v3217 = vsel %vm789, %v3118, 0
        %v3220 = vsel %vm789, %v3119, 0
        %v3223 = vsel %vm789, %v3120, 0
        %3225 = vmatprep.subr.mxu0 0.0
        %3226 = vmatpush1.msra.mxu0 %v3121
        %3227 = vmatprep.subr.mxu0 0.0
        %3228 = vmatpush1.msra.mxu0 %v3122
        %3229 = vmatprep.subr.mxu0 0.0
        %3230 = vmatpush1.msra.mxu0 %v3123
        %3231 = vmatprep.subr.mxu0 0.0
        %3232 = vmatpush1.msra.mxu0 %v3124
        %3233 = vmatprep.subr.mxu0 0.0
        %3234 = vmatpush1.msra.mxu0 %v3125
        %3235 = vmatprep.subr.mxu0 0.0
        %3236 = vmatpush1.msra.mxu0 %v3126
        %3237 = vmatprep.subr.mxu0 0.0
        %3238 = vmatpush1.msra.mxu0 %v3127
        %3239 = vmatprep.subr.mxu0 0.0
        %3240 = vmatpush1.msra.mxu0 %v3128
        %3241 = vmatprep.subr.mxu0 0.0
        %3242 = vmatpush1.msra.mxu0 0.0
        %3243 = vmatprep.subr.mxu0 0.0
        %3244 = vmatpush1.msra.mxu0 0.0
        %3245 = vmatprep.subr.mxu0 0.0
        %3246 = vmatpush1.msra.mxu0 0.0
        %3247 = vmatprep.subr.mxu0 0.0
        %3248 = vmatpush1.msra.mxu0 0.0
        %3249 = vmatprep.subr.mxu0 0.0
        %3250 = vmatpush1.msra.mxu0 0.0
        %3251 = vmatprep.subr.mxu0 0.0
        %3252 = vmatpush1.msra.mxu0 0.0
        %3253 = vmatprep.subr.mxu0 0.0
        %3254 = vmatpush1.msra.mxu0 0.0
        %3255 = vmatprep.subr.mxu0 0.0
        %3256 = vmatpush1.msra.mxu0 0.0
        %3257 = vmatprep.subr.mxu0 0.0
        %3258 = vmatpush1.msra.mxu0 0.0
        %3259 = vmatprep.subr.mxu0 0.0
        %3260 = vmatpush1.msra.mxu0 0.0
        %3261 = vmatprep.subr.mxu0 0.0
        %3262 = vmatpush1.msra.mxu0 0.0
        %3263 = vmatprep.subr.mxu0 0.0
        %3264 = vmatpush1.msra.mxu0 0.0
        %3265 = vmatprep.subr.mxu0 0.0
        %3266 = vmatpush1.msra.mxu0 0.0
        %3267 = vmatprep.subr.mxu0 0.0
        %3268 = vmatpush1.msra.mxu0 0.0
        %3269 = vmatprep.subr.mxu0 0.0
        %3270 = vmatpush1.msra.mxu0 0.0
        %3271 = vmatprep.subr.mxu0 0.0
        %3272 = vmatpush1.msra.mxu0 0.0
        %3273 = vmatprep.subr.mxu0 0.0
        %3274 = vmatpush1.msra.mxu0 0.0
        %3275 = vmatprep.subr.mxu0 0.0
        %3276 = vmatpush1.msra.mxu0 0.0
        %3277 = vmatprep.subr.mxu0 0.0
        %3278 = vmatpush1.msra.mxu0 0.0
        %3279 = vmatprep.subr.mxu0 0.0
        %3280 = vmatpush1.msra.mxu0 0.0
        %3281 = vmatprep.subr.mxu0 0.0
        %3282 = vmatpush1.msra.mxu0 0.0
        %3283 = vmatprep.subr.mxu0 0.0
        %3284 = vmatpush1.msra.mxu0 0.0
        %3285 = vmatprep.subr.mxu0 0.0
        %3286 = vmatpush1.msra.mxu0 0.0
        %3287 = vmatprep.subr.mxu0 0.0
        %3288 = vmatpush1.msra.mxu0 0.0
        %3289 = vmatprep.mubr.f32.mxu0 0.0
        %3290 = vmatmul.mubr.f32.gmra.mrb[0].mxu0 %v3130
        %v3291 = vpop.f32.mrb[0].mxu0
        %v3292 = vadd.f32 0.0, %v3291
        %v3293 = vpop.f32.mrb[0].mxu0
        %3294 = vmatprep.mubr.f32.mxu0 0.0
        %3295 = vmatmul.mubr.f32.gmra.mrb[0].mxu0 %v3133
        %v3296 = vpop.f32.mrb[0].mxu0
        %v3297 = vadd.f32 0.0, %v3296
        %v3298 = vpop.f32.mrb[0].mxu0
        %3299 = vmatprep.mubr.f32.mxu0 0.0
        %3300 = vmatmul.mubr.f32.gmra.mrb[0].mxu0 %v3136
        %v3301 = vpop.f32.mrb[0].mxu0
        %v3302 = vadd.f32 0.0, %v3301
        %v3303 = vpop.f32.mrb[0].mxu0
        %3304 = vmatprep.mubr.f32.mxu0 0.0
        %3305 = vmatmul.mubr.f32.gmra.mrb[0].mxu0 %v3139
        %v3306 = vpop.f32.mrb[0].mxu0
        %v3307 = vadd.f32 0.0, %v3306
        %v3308 = vpop.f32.mrb[0].mxu0
        %3309 = vmatprep.mubr.f32.mxu0 0.0
        %3310 = vmatmul.mubr.f32.gmra.mrb[0].mxu0 %v3142
        %v3311 = vpop.f32.mrb[0].mxu0
        %v3312 = vadd.f32 0.0, %v3311
        %v3313 = vpop.f32.mrb[0].mxu0
        %3314 = vmatprep.mubr.f32.mxu0 0.0
        %3315 = vmatmul.mubr.f32.gmra.mrb[0].mxu0 %v3145
        %v3316 = vpop.f32.mrb[0].mxu0
        %v3317 = vadd.f32 0.0, %v3316
        %v3318 = vpop.f32.mrb[0].mxu0
        %3319 = vmatprep.mubr.f32.mxu0 0.0
        %3320 = vmatmul.mubr.f32.gmra.mrb[0].mxu0 %v3148
        %v3321 = vpop.f32.mrb[0].mxu0
        %v3322 = vadd.f32 0.0, %v3321
        %v3323 = vpop.f32.mrb[0].mxu0
        %3324 = vmatprep.mubr.f32.mxu0 0.0
        %3325 = vmatmul.mubr.f32.gmra.mrb[0].mxu0 %v3151
        %v3326 = vpop.f32.mrb[0].mxu0
        %v3327 = vadd.f32 0.0, %v3326
        %v3328 = vpop.f32.mrb[0].mxu0
        %3329 = vmatprep.mubr.f32.mxu0 0.0
        %3330 = vmatmul.mubr.f32.gmra.mrb[0].mxu0 %v3154
        %v3331 = vpop.f32.mrb[0].mxu0
        %v3332 = vadd.f32 0.0, %v3331
        %v3333 = vpop.f32.mrb[0].mxu0
        %3334 = vmatprep.mubr.f32.mxu0 0.0
        %3335 = vmatmul.mubr.f32.gmra.mrb[0].mxu0 %v3157
        %v3336 = vpop.f32.mrb[0].mxu0
        %v3337 = vadd.f32 0.0, %v3336
        %v3338 = vpop.f32.mrb[0].mxu0
        %3339 = vmatprep.mubr.f32.mxu0 0.0
        %3340 = vmatmul.mubr.f32.gmra.mrb[0].mxu0 %v3160
        %v3341 = vpop.f32.mrb[0].mxu0
        %v3342 = vadd.f32 0.0, %v3341
        %v3343 = vpop.f32.mrb[0].mxu0
        %3344 = vmatprep.mubr.f32.mxu0 0.0
        %3345 = vmatmul.mubr.f32.gmra.mrb[0].mxu0 %v3163
        %v3346 = vpop.f32.mrb[0].mxu0
        %v3347 = vadd.f32 0.0, %v3346
        %v3348 = vpop.f32.mrb[0].mxu0
        %3349 = vmatprep.mubr.f32.mxu0 0.0
        %3350 = vmatmul.mubr.f32.gmra.mrb[0].mxu0 %v3166
        %v3351 = vpop.f32.mrb[0].mxu0
        %v3352 = vadd.f32 0.0, %v3351
        %v3353 = vpop.f32.mrb[0].mxu0
        %3354 = vmatprep.mubr.f32.mxu0 0.0
        %3355 = vmatmul.mubr.f32.gmra.mrb[0].mxu0 %v3169
        %v3356 = vpop.f32.mrb[0].mxu0
        %v3357 = vadd.f32 0.0, %v3356
        %v3358 = vpop.f32.mrb[0].mxu0
        %3359 = vmatprep.mubr.f32.mxu0 0.0
        %3360 = vmatmul.mubr.f32.gmra.mrb[0].mxu0 %v3172
        %v3361 = vpop.f32.mrb[0].mxu0
        %v3362 = vadd.f32 0.0, %v3361
        %v3363 = vpop.f32.mrb[0].mxu0
        %3364 = vmatprep.mubr.f32.mxu0 0.0
        %3365 = vmatmul.mubr.f32.gmra.mrb[0].mxu0 %v3175
        %v3366 = vpop.f32.mrb[0].mxu0
        %v3367 = vadd.f32 0.0, %v3366
        %v3368 = vpop.f32.mrb[0].mxu0
        %3369 = vmatprep.mubr.f32.mxu0 0.0
        %3370 = vmatmul.mubr.f32.gmra.mrb[0].mxu0 %v3178
        %v3371 = vpop.f32.mrb[0].mxu0
        %v3372 = vadd.f32 0.0, %v3371
        %v3373 = vpop.f32.mrb[0].mxu0
        %3374 = vmatprep.mubr.f32.mxu0 0.0
        %3375 = vmatmul.mubr.f32.gmra.mrb[0].mxu0 %v3181
        %v3376 = vpop.f32.mrb[0].mxu0
        %v3377 = vadd.f32 0.0, %v3376
        %v3378 = vpop.f32.mrb[0].mxu0
        %3379 = vmatprep.mubr.f32.mxu0 0.0
        %3380 = vmatmul.mubr.f32.gmra.mrb[0].mxu0 %v3184
        %v3381 = vpop.f32.mrb[0].mxu0
        %v3382 = vadd.f32 0.0, %v3381
        %v3383 = vpop.f32.mrb[0].mxu0
        %3384 = vmatprep.mubr.f32.mxu0 0.0
        %3385 = vmatmul.mubr.f32.gmra.mrb[0].mxu0 %v3187
        %v3386 = vpop.f32.mrb[0].mxu0
        %v3387 = vadd.f32 0.0, %v3386
        %v3388 = vpop.f32.mrb[0].mxu0
        %3389 = vmatprep.mubr.f32.mxu0 0.0
        %3390 = vmatmul.mubr.f32.gmra.mrb[0].mxu0 %v3190
        %v3391 = vpop.f32.mrb[0].mxu0
        %v3392 = vadd.f32 0.0, %v3391
        %v3393 = vpop.f32.mrb[0].mxu0
        %3394 = vmatprep.mubr.f32.mxu0 0.0
        %3395 = vmatmul.mubr.f32.gmra.mrb[0].mxu0 %v3193
        %v3396 = vpop.f32.mrb[0].mxu0
        %v3397 = vadd.f32 0.0, %v3396
        %v3398 = vpop.f32.mrb[0].mxu0
        %3399 = vmatprep.mubr.f32.mxu0 0.0
        %3400 = vmatmul.mubr.f32.gmra.mrb[0].mxu0 %v3196
        %v3401 = vpop.f32.mrb[0].mxu0
        %v3402 = vadd.f32 0.0, %v3401
        %v3403 = vpop.f32.mrb[0].mxu0
        %3404 = vmatprep.mubr.f32.mxu0 0.0
        %3405 = vmatmul.mubr.f32.gmra.mrb[0].mxu0 %v3199
        %v3406 = vpop.f32.mrb[0].mxu0
        %v3407 = vadd.f32 0.0, %v3406
        %v3408 = vpop.f32.mrb[0].mxu0
        %3409 = vmatprep.mubr.f32.mxu0 0.0
        %3410 = vmatmul.mubr.f32.gmra.mrb[0].mxu0 %v3202
        %v3411 = vpop.f32.mrb[0].mxu0
        %v3412 = vadd.f32 0.0, %v3411
        %v3413 = vpop.f32.mrb[0].mxu0
        %3414 = vmatprep.mubr.f32.mxu0 0.0
        %3415 = vmatmul.mubr.f32.gmra.mrb[0].mxu0 %v3205
        %v3416 = vpop.f32.mrb[0].mxu0
        %v3417 = vadd.f32 0.0, %v3416
        %v3418 = vpop.f32.mrb[0].mxu0
        %3419 = vmatprep.mubr.f32.mxu0 0.0
        %3420 = vmatmul.mubr.f32.gmra.mrb[0].mxu0 %v3208
        %v3421 = vpop.f32.mrb[0].mxu0
        %v3422 = vadd.f32 0.0, %v3421
        %v3423 = vpop.f32.mrb[0].mxu0
        %3424 = vmatprep.mubr.f32.mxu0 0.0
        %3425 = vmatmul.mubr.f32.gmra.mrb[0].mxu0 %v3211
        %v3426 = vpop.f32.mrb[0].mxu0
        %v3427 = vadd.f32 0.0, %v3426
        %v3428 = vpop.f32.mrb[0].mxu0
        %3429 = vmatprep.mubr.f32.mxu0 0.0
        %3430 = vmatmul.mubr.f32.gmra.mrb[0].mxu0 %v3214
        %v3431 = vpop.f32.mrb[0].mxu0
        %v3432 = vadd.f32 0.0, %v3431
        %v3433 = vpop.f32.mrb[0].mxu0
        %3434 = vmatprep.mubr.f32.mxu0 0.0
        %3435 = vmatmul.mubr.f32.gmra.mrb[0].mxu0 %v3217
        %v3436 = vpop.f32.mrb[0].mxu0
        %v3437 = vadd.f32 0.0, %v3436
        %v3438 = vpop.f32.mrb[0].mxu0
        %3439 = vmatprep.mubr.f32.mxu0 0.0
        %3440 = vmatmul.mubr.f32.gmra.mrb[0].mxu0 %v3220
        %v3441 = vpop.f32.mrb[0].mxu0
        %v3442 = vadd.f32 0.0, %v3441
        %v3443 = vpop.f32.mrb[0].mxu0
        %3444 = vmatprep.mubr.f32.mxu0 0.0
        %3445 = vmatmul.mubr.f32.gmra.mrb[0].mxu0 %v3223
        %v3446 = vpop.f32.mrb[0].mxu0
        %v3447 = vadd.f32 0.0, %v3446
        %v3448 = vpop.f32.mrb[0].mxu0
        %3449 = vdwg.mxu0
        %v3450 = vld [vmem:[#allocation3] sm:$0xff]
        %v3451 = vld [vmem:[#allocation3 + $0x8] sm:$0xff]
        %v3452 = vld [vmem:[#allocation3 + $0x10] sm:$0xff]
        %v3453 = vld [vmem:[#allocation3 + $0x18] sm:$0xff]
        %v3454 = vld [vmem:[#allocation3 + $0x20] sm:$0xff]
        %v3455 = vld [vmem:[#allocation3 + $0x28] sm:$0xff]
        %v3456 = vld [vmem:[#allocation3 + $0x30] sm:$0xff]
        %v3457 = vld [vmem:[#allocation3 + $0x38] sm:$0xff]
        %v3458 = vld [vmem:[#allocation3 + $0x40] sm:$0xff]
        %v3459 = vld [vmem:[#allocation3 + $0x48] sm:$0xff]
        %v3460 = vld [vmem:[#allocation3 + $0x50] sm:$0xff]
        %v3461 = vld [vmem:[#allocation3 + $0x58] sm:$0xff]
        %v3462 = vld [vmem:[#allocation3 + $0x60] sm:$0xff]
        %v3463 = vld [vmem:[#allocation3 + $0x68] sm:$0xff]
        %v3464 = vld [vmem:[#allocation3 + $0x70] sm:$0xff]
        %v3465 = vld [vmem:[#allocation3 + $0x78] sm:$0xff]
        %v3466 = vld [vmem:[#allocation3 + $0x80] sm:$0xff]
        %v3467 = vld [vmem:[#allocation3 + $0x88] sm:$0xff]
        %v3468 = vld [vmem:[#allocation3 + $0x90] sm:$0xff]
        %v3469 = vld [vmem:[#allocation3 + $0x98] sm:$0xff]
        %v3470 = vld [vmem:[#allocation3 + $0xa0] sm:$0xff]
        %v3471 = vld [vmem:[#allocation3 + $0xa8] sm:$0xff]
        %v3472 = vld [vmem:[#allocation3 + $0xb0] sm:$0xff]
        %v3473 = vld [vmem:[#allocation3 + $0xb8] sm:$0xff]
        %v3474 = vld [vmem:[#allocation3 + $0xc0] sm:$0xff]
        %v3475 = vld [vmem:[#allocation3 + $0xc8] sm:$0xff]
        %v3476 = vld [vmem:[#allocation3 + $0xd0] sm:$0xff]
        %v3477 = vld [vmem:[#allocation3 + $0xd8] sm:$0xff]
        %v3478 = vld [vmem:[#allocation3 + $0xe0] sm:$0xff]
        %v3479 = vld [vmem:[#allocation3 + $0xe8] sm:$0xff]
        %v3480 = vld [vmem:[#allocation3 + $0xf0] sm:$0xff]
        %v3481 = vld [vmem:[#allocation3 + $0xf8] sm:$0xff]
        %v3482 = vadd.f32 %v3450, %v3292
        %v3483 = vadd.f32 %v3451, %v3297
        %v3484 = vadd.f32 %v3452, %v3302
        %v3485 = vadd.f32 %v3453, %v3307
        %v3486 = vadd.f32 %v3454, %v3312
        %v3487 = vadd.f32 %v3455, %v3317
        %v3488 = vadd.f32 %v3456, %v3322
        %v3489 = vadd.f32 %v3457, %v3327
        %v3490 = vadd.f32 %v3458, %v3332
        %v3491 = vadd.f32 %v3459, %v3337
        %v3492 = vadd.f32 %v3460, %v3342
        %v3493 = vadd.f32 %v3461, %v3347
        %v3494 = vadd.f32 %v3462, %v3352
        %v3495 = vadd.f32 %v3463, %v3357
        %v3496 = vadd.f32 %v3464, %v3362
        %v3497 = vadd.f32 %v3465, %v3367
        %v3498 = vadd.f32 %v3466, %v3372
        %v3499 = vadd.f32 %v3467, %v3377
        %v3500 = vadd.f32 %v3468, %v3382
        %v3501 = vadd.f32 %v3469, %v3387
        %v3502 = vadd.f32 %v3470, %v3392
        %v3503 = vadd.f32 %v3471, %v3397
        %v3504 = vadd.f32 %v3472, %v3402
        %v3505 = vadd.f32 %v3473, %v3407
        %v3506 = vadd.f32 %v3474, %v3412
        %v3507 = vadd.f32 %v3475, %v3417
        %v3508 = vadd.f32 %v3476, %v3422
        %v3509 = vadd.f32 %v3477, %v3427
        %v3510 = vadd.f32 %v3478, %v3432
        %v3511 = vadd.f32 %v3479, %v3437
        %v3512 = vadd.f32 %v3480, %v3442
        %v3513 = vadd.f32 %v3481, %v3447
        %3514 = vst.msk [vmem:[#allocation3] sm:$0xff] %vm789, %v3482
        %3515 = vst.msk [vmem:[#allocation3 + $0x8] sm:$0xff] %vm789, %v3483
        %3516 = vst.msk [vmem:[#allocation3 + $0x10] sm:$0xff] %vm789, %v3484
        %3517 = vst.msk [vmem:[#allocation3 + $0x18] sm:$0xff] %vm789, %v3485
        %3518 = vst.msk [vmem:[#allocation3 + $0x20] sm:$0xff] %vm789, %v3486
        %3519 = vst.msk [vmem:[#allocation3 + $0x28] sm:$0xff] %vm789, %v3487
        %3520 = vst.msk [vmem:[#allocation3 + $0x30] sm:$0xff] %vm789, %v3488
        %3521 = vst.msk [vmem:[#allocation3 + $0x38] sm:$0xff] %vm789, %v3489
        %3522 = vst.msk [vmem:[#allocation3 + $0x40] sm:$0xff] %vm789, %v3490
        %3523 = vst.msk [vmem:[#allocation3 + $0x48] sm:$0xff] %vm789, %v3491
        %3524 = vst.msk [vmem:[#allocation3 + $0x50] sm:$0xff] %vm789, %v3492
        %3525 = vst.msk [vmem:[#allocation3 + $0x58] sm:$0xff] %vm789, %v3493
        %3526 = vst.msk [vmem:[#allocation3 + $0x60] sm:$0xff] %vm789, %v3494
        %3527 = vst.msk [vmem:[#allocation3 + $0x68] sm:$0xff] %vm789, %v3495
        %3528 = vst.msk [vmem:[#allocation3 + $0x70] sm:$0xff] %vm789, %v3496
        %3529 = vst.msk [vmem:[#allocation3 + $0x78] sm:$0xff] %vm789, %v3497
        %3530 = vst.msk [vmem:[#allocation3 + $0x80] sm:$0xff] %vm789, %v3498
        %3531 = vst.msk [vmem:[#allocation3 + $0x88] sm:$0xff] %vm789, %v3499
        %3532 = vst.msk [vmem:[#allocation3 + $0x90] sm:$0xff] %vm789, %v3500
        %3533 = vst.msk [vmem:[#allocation3 + $0x98] sm:$0xff] %vm789, %v3501
        %3534 = vst.msk [vmem:[#allocation3 + $0xa0] sm:$0xff] %vm789, %v3502
        %3535 = vst.msk [vmem:[#allocation3 + $0xa8] sm:$0xff] %vm789, %v3503
        %3536 = vst.msk [vmem:[#allocation3 + $0xb0] sm:$0xff] %vm789, %v3504
        %3537 = vst.msk [vmem:[#allocation3 + $0xb8] sm:$0xff] %vm789, %v3505
        %3538 = vst.msk [vmem:[#allocation3 + $0xc0] sm:$0xff] %vm789, %v3506
        %3539 = vst.msk [vmem:[#allocation3 + $0xc8] sm:$0xff] %vm789, %v3507
        %3540 = vst.msk [vmem:[#allocation3 + $0xd0] sm:$0xff] %vm789, %v3508
        %3541 = vst.msk [vmem:[#allocation3 + $0xd8] sm:$0xff] %vm789, %v3509
        %3542 = vst.msk [vmem:[#allocation3 + $0xe0] sm:$0xff] %vm789, %v3510
        %3543 = vst.msk [vmem:[#allocation3 + $0xe8] sm:$0xff] %vm789, %v3511
        %3544 = vst.msk [vmem:[#allocation3 + $0xf0] sm:$0xff] %vm789, %v3512
        %3545 = vst.msk [vmem:[#allocation3 + $0xf8] sm:$0xff] %vm789, %v3513
        %s3546 = scalar_lea.vmem [#allocation2], 48
        %v3547 = vld [vmem:[%s3546] sm:$0xff]
        %v3548 = vld [vmem:[%s3546 + $0x8] sm:$0xff]
        %v3549 = vld [vmem:[%s3546 + $0x18] sm:$0xff]
        %v3550 = vld [vmem:[%s3546 + $0x20] sm:$0xff]
        %v3551 = vld [vmem:[%s3546 + $0x30] sm:$0xff]
        %v3552 = vld [vmem:[%s3546 + $0x38] sm:$0xff]
        %v3553 = vld [vmem:[%s3546 + $0x48] sm:$0xff]
        %v3554 = vld [vmem:[%s3546 + $0x50] sm:$0xff]
        %v3555 = vld [vmem:[%s3546 + $0x60] sm:$0xff]
        %v3556 = vld [vmem:[%s3546 + $0x68] sm:$0xff]
        %v3557 = vld [vmem:[%s3546 + $0x78] sm:$0xff]
        %v3558 = vld [vmem:[%s3546 + $0x80] sm:$0xff]
        %v3559 = vld [vmem:[%s3546 + $0x90] sm:$0xff]
        %v3560 = vld [vmem:[%s3546 + $0x98] sm:$0xff]
        %v3561 = vld [vmem:[%s3546 + $0xa8] sm:$0xff]
        %v3562 = vld [vmem:[%s3546 + $0xb0] sm:$0xff]
        %v3563 = vld [vmem:[%s3546 + $0xc0] sm:$0xff]
        %v3564 = vld [vmem:[%s3546 + $0xc8] sm:$0xff]
        %v3565 = vld [vmem:[%s3546 + $0xd8] sm:$0xff]
        %v3566 = vld [vmem:[%s3546 + $0xe0] sm:$0xff]
        %v3567 = vld [vmem:[%s3546 + $0xf0] sm:$0xff]
        %v3568 = vld [vmem:[%s3546 + $0xf8] sm:$0xff]
        %v3569 = vld [vmem:[%s3546 + $0x108] sm:$0xff]
        %v3570 = vld [vmem:[%s3546 + $0x110] sm:$0xff]
        %v3571 = vld [vmem:[%s3546 + $0x120] sm:$0xff]
        %v3572 = vld [vmem:[%s3546 + $0x128] sm:$0xff]
        %v3573 = vld [vmem:[%s3546 + $0x138] sm:$0xff]
        %v3574 = vld [vmem:[%s3546 + $0x140] sm:$0xff]
        %v3575 = vld [vmem:[%s3546 + $0x150] sm:$0xff]
        %v3576 = vld [vmem:[%s3546 + $0x158] sm:$0xff]
        %v3577 = vld [vmem:[%s3546 + $0x168] sm:$0xff]
        %v3578 = vld [vmem:[%s3546 + $0x170] sm:$0xff]
        %v3579 = vld [vmem:[%s4 + $0x180] sm:$0xff]
        %v3580 = vld [vmem:[%s4 + $0x188] sm:$0xff]
        %v3581 = vld [vmem:[%s4 + $0x190] sm:$0xff]
        %v3582 = vld [vmem:[%s4 + $0x198] sm:$0xff]
        %v3583 = vld [vmem:[%s4 + $0x1a0] sm:$0xff]
        %v3584 = vld [vmem:[%s4 + $0x1a8] sm:$0xff]
        %v3585 = vld [vmem:[%s4 + $0x1b0] sm:$0xff]
        %v3586 = vld [vmem:[%s4 + $0x1b8] sm:$0xff]
        %v3588 = vsel %vm789, %v3547, 0
        %v3591 = vsel %vm789, %v3548, 0
        %v3594 = vsel %vm789, %v3549, 0
        %v3597 = vsel %vm789, %v3550, 0
        %v3600 = vsel %vm789, %v3551, 0
        %v3603 = vsel %vm789, %v3552, 0
        %v3606 = vsel %vm789, %v3553, 0
        %v3609 = vsel %vm789, %v3554, 0
        %v3612 = vsel %vm789, %v3555, 0
        %v3615 = vsel %vm789, %v3556, 0
        %v3618 = vsel %vm789, %v3557, 0
        %v3621 = vsel %vm789, %v3558, 0
        %v3624 = vsel %vm789, %v3559, 0
        %v3627 = vsel %vm789, %v3560, 0
        %v3630 = vsel %vm789, %v3561, 0
        %v3633 = vsel %vm789, %v3562, 0
        %v3636 = vsel %vm789, %v3563, 0
        %v3639 = vsel %vm789, %v3564, 0
        %v3642 = vsel %vm789, %v3565, 0
        %v3645 = vsel %vm789, %v3566, 0
        %v3648 = vsel %vm789, %v3567, 0
        %v3651 = vsel %vm789, %v3568, 0
        %v3654 = vsel %vm789, %v3569, 0
        %v3657 = vsel %vm789, %v3570, 0
        %v3660 = vsel %vm789, %v3571, 0
        %v3663 = vsel %vm789, %v3572, 0
        %v3666 = vsel %vm789, %v3573, 0
        %v3669 = vsel %vm789, %v3574, 0
        %v3672 = vsel %vm789, %v3575, 0
        %v3675 = vsel %vm789, %v3576, 0
        %v3678 = vsel %vm789, %v3577, 0
        %v3681 = vsel %vm789, %v3578, 0
        %3683 = vmatprep.subr.mxu0 0.0
        %3684 = vmatpush1.msra.mxu0 %v3579
        %3685 = vmatprep.subr.mxu0 0.0
        %3686 = vmatpush1.msra.mxu0 %v3580
        %3687 = vmatprep.subr.mxu0 0.0
        %3688 = vmatpush1.msra.mxu0 %v3581
        %3689 = vmatprep.subr.mxu0 0.0
        %3690 = vmatpush1.msra.mxu0 %v3582
        %3691 = vmatprep.subr.mxu0 0.0
        %3692 = vmatpush1.msra.mxu0 %v3583
        %3693 = vmatprep.subr.mxu0 0.0
        %3694 = vmatpush1.msra.mxu0 %v3584
        %3695 = vmatprep.subr.mxu0 0.0
        %3696 = vmatpush1.msra.mxu0 %v3585
        %3697 = vmatprep.subr.mxu0 0.0
        %3698 = vmatpush1.msra.mxu0 %v3586
        %3699 = vmatprep.subr.mxu0 0.0
        %3700 = vmatpush1.msra.mxu0 0.0
        %3701 = vmatprep.subr.mxu0 0.0
        %3702 = vmatpush1.msra.mxu0 0.0
        %3703 = vmatprep.subr.mxu0 0.0
        %3704 = vmatpush1.msra.mxu0 0.0
        %3705 = vmatprep.subr.mxu0 0.0
        %3706 = vmatpush1.msra.mxu0 0.0
        %3707 = vmatprep.subr.mxu0 0.0
        %3708 = vmatpush1.msra.mxu0 0.0
        %3709 = vmatprep.subr.mxu0 0.0
        %3710 = vmatpush1.msra.mxu0 0.0
        %3711 = vmatprep.subr.mxu0 0.0
        %3712 = vmatpush1.msra.mxu0 0.0
        %3713 = vmatprep.subr.mxu0 0.0
        %3714 = vmatpush1.msra.mxu0 0.0
        %3715 = vmatprep.subr.mxu0 0.0
        %3716 = vmatpush1.msra.mxu0 0.0
        %3717 = vmatprep.subr.mxu0 0.0
        %3718 = vmatpush1.msra.mxu0 0.0
        %3719 = vmatprep.subr.mxu0 0.0
        %3720 = vmatpush1.msra.mxu0 0.0
        %3721 = vmatprep.subr.mxu0 0.0
        %3722 = vmatpush1.msra.mxu0 0.0
        %3723 = vmatprep.subr.mxu0 0.0
        %3724 = vmatpush1.msra.mxu0 0.0
        %3725 = vmatprep.subr.mxu0 0.0
        %3726 = vmatpush1.msra.mxu0 0.0
        %3727 = vmatprep.subr.mxu0 0.0
        %3728 = vmatpush1.msra.mxu0 0.0
        %3729 = vmatprep.subr.mxu0 0.0
        %3730 = vmatpush1.msra.mxu0 0.0
        %3731 = vmatprep.subr.mxu0 0.0
        %3732 = vmatpush1.msra.mxu0 0.0
        %3733 = vmatprep.subr.mxu0 0.0
        %3734 = vmatpush1.msra.mxu0 0.0
        %3735 = vmatprep.subr.mxu0 0.0
        %3736 = vmatpush1.msra.mxu0 0.0
        %3737 = vmatprep.subr.mxu0 0.0
        %3738 = vmatpush1.msra.mxu0 0.0
        %3739 = vmatprep.subr.mxu0 0.0
        %3740 = vmatpush1.msra.mxu0 0.0
        %3741 = vmatprep.subr.mxu0 0.0
        %3742 = vmatpush1.msra.mxu0 0.0
        %3743 = vmatprep.subr.mxu0 0.0
        %3744 = vmatpush1.msra.mxu0 0.0
        %3745 = vmatprep.subr.mxu0 0.0
        %3746 = vmatpush1.msra.mxu0 0.0
        %3747 = vmatprep.mubr.f32.mxu0 0.0
        %3748 = vmatmul.mubr.f32.gmra.mrb[0].mxu0 %v3588
        %v3749 = vpop.f32.mrb[0].mxu0
        %v3750 = vadd.f32 0.0, %v3749
        %v3751 = vpop.f32.mrb[0].mxu0
        %3752 = vmatprep.mubr.f32.mxu0 0.0
        %3753 = vmatmul.mubr.f32.gmra.mrb[0].mxu0 %v3591
        %v3754 = vpop.f32.mrb[0].mxu0
        %v3755 = vadd.f32 0.0, %v3754
        %v3756 = vpop.f32.mrb[0].mxu0
        %3757 = vmatprep.mubr.f32.mxu0 0.0
        %3758 = vmatmul.mubr.f32.gmra.mrb[0].mxu0 %v3594
        %v3759 = vpop.f32.mrb[0].mxu0
        %v3760 = vadd.f32 0.0, %v3759
        %v3761 = vpop.f32.mrb[0].mxu0
        %3762 = vmatprep.mubr.f32.mxu0 0.0
        %3763 = vmatmul.mubr.f32.gmra.mrb[0].mxu0 %v3597
        %v3764 = vpop.f32.mrb[0].mxu0
        %v3765 = vadd.f32 0.0, %v3764
        %v3766 = vpop.f32.mrb[0].mxu0
        %3767 = vmatprep.mubr.f32.mxu0 0.0
        %3768 = vmatmul.mubr.f32.gmra.mrb[0].mxu0 %v3600
        %v3769 = vpop.f32.mrb[0].mxu0
        %v3770 = vadd.f32 0.0, %v3769
        %v3771 = vpop.f32.mrb[0].mxu0
        %3772 = vmatprep.mubr.f32.mxu0 0.0
        %3773 = vmatmul.mubr.f32.gmra.mrb[0].mxu0 %v3603
        %v3774 = vpop.f32.mrb[0].mxu0
        %v3775 = vadd.f32 0.0, %v3774
        %v3776 = vpop.f32.mrb[0].mxu0
        %3777 = vmatprep.mubr.f32.mxu0 0.0
        %3778 = vmatmul.mubr.f32.gmra.mrb[0].mxu0 %v3606
        %v3779 = vpop.f32.mrb[0].mxu0
        %v3780 = vadd.f32 0.0, %v3779
        %v3781 = vpop.f32.mrb[0].mxu0
        %3782 = vmatprep.mubr.f32.mxu0 0.0
        %3783 = vmatmul.mubr.f32.gmra.mrb[0].mxu0 %v3609
        %v3784 = vpop.f32.mrb[0].mxu0
        %v3785 = vadd.f32 0.0, %v3784
        %v3786 = vpop.f32.mrb[0].mxu0
        %3787 = vmatprep.mubr.f32.mxu0 0.0
        %3788 = vmatmul.mubr.f32.gmra.mrb[0].mxu0 %v3612
        %v3789 = vpop.f32.mrb[0].mxu0
        %v3790 = vadd.f32 0.0, %v3789
        %v3791 = vpop.f32.mrb[0].mxu0
        %3792 = vmatprep.mubr.f32.mxu0 0.0
        %3793 = vmatmul.mubr.f32.gmra.mrb[0].mxu0 %v3615
        %v3794 = vpop.f32.mrb[0].mxu0
        %v3795 = vadd.f32 0.0, %v3794
        %v3796 = vpop.f32.mrb[0].mxu0
        %3797 = vmatprep.mubr.f32.mxu0 0.0
        %3798 = vmatmul.mubr.f32.gmra.mrb[0].mxu0 %v3618
        %v3799 = vpop.f32.mrb[0].mxu0
        %v3800 = vadd.f32 0.0, %v3799
        %v3801 = vpop.f32.mrb[0].mxu0
        %3802 = vmatprep.mubr.f32.mxu0 0.0
        %3803 = vmatmul.mubr.f32.gmra.mrb[0].mxu0 %v3621
        %v3804 = vpop.f32.mrb[0].mxu0
        %v3805 = vadd.f32 0.0, %v3804
        %v3806 = vpop.f32.mrb[0].mxu0
        %3807 = vmatprep.mubr.f32.mxu0 0.0
        %3808 = vmatmul.mubr.f32.gmra.mrb[0].mxu0 %v3624
        %v3809 = vpop.f32.mrb[0].mxu0
        %v3810 = vadd.f32 0.0, %v3809
        %v3811 = vpop.f32.mrb[0].mxu0
        %3812 = vmatprep.mubr.f32.mxu0 0.0
        %3813 = vmatmul.mubr.f32.gmra.mrb[0].mxu0 %v3627
        %v3814 = vpop.f32.mrb[0].mxu0
        %v3815 = vadd.f32 0.0, %v3814
        %v3816 = vpop.f32.mrb[0].mxu0
        %3817 = vmatprep.mubr.f32.mxu0 0.0
        %3818 = vmatmul.mubr.f32.gmra.mrb[0].mxu0 %v3630
        %v3819 = vpop.f32.mrb[0].mxu0
        %v3820 = vadd.f32 0.0, %v3819
        %v3821 = vpop.f32.mrb[0].mxu0
        %3822 = vmatprep.mubr.f32.mxu0 0.0
        %3823 = vmatmul.mubr.f32.gmra.mrb[0].mxu0 %v3633
        %v3824 = vpop.f32.mrb[0].mxu0
        %v3825 = vadd.f32 0.0, %v3824
        %v3826 = vpop.f32.mrb[0].mxu0
        %3827 = vmatprep.mubr.f32.mxu0 0.0
        %3828 = vmatmul.mubr.f32.gmra.mrb[0].mxu0 %v3636
        %v3829 = vpop.f32.mrb[0].mxu0
        %v3830 = vadd.f32 0.0, %v3829
        %v3831 = vpop.f32.mrb[0].mxu0
        %3832 = vmatprep.mubr.f32.mxu0 0.0
        %3833 = vmatmul.mubr.f32.gmra.mrb[0].mxu0 %v3639
        %v3834 = vpop.f32.mrb[0].mxu0
        %v3835 = vadd.f32 0.0, %v3834
        %v3836 = vpop.f32.mrb[0].mxu0
        %3837 = vmatprep.mubr.f32.mxu0 0.0
        %3838 = vmatmul.mubr.f32.gmra.mrb[0].mxu0 %v3642
        %v3839 = vpop.f32.mrb[0].mxu0
        %v3840 = vadd.f32 0.0, %v3839
        %v3841 = vpop.f32.mrb[0].mxu0
        %3842 = vmatprep.mubr.f32.mxu0 0.0
        %3843 = vmatmul.mubr.f32.gmra.mrb[0].mxu0 %v3645
        %v3844 = vpop.f32.mrb[0].mxu0
        %v3845 = vadd.f32 0.0, %v3844
        %v3846 = vpop.f32.mrb[0].mxu0
        %3847 = vmatprep.mubr.f32.mxu0 0.0
        %3848 = vmatmul.mubr.f32.gmra.mrb[0].mxu0 %v3648
        %v3849 = vpop.f32.mrb[0].mxu0
        %v3850 = vadd.f32 0.0, %v3849
        %v3851 = vpop.f32.mrb[0].mxu0
        %3852 = vmatprep.mubr.f32.mxu0 0.0
        %3853 = vmatmul.mubr.f32.gmra.mrb[0].mxu0 %v3651
        %v3854 = vpop.f32.mrb[0].mxu0
        %v3855 = vadd.f32 0.0, %v3854
        %v3856 = vpop.f32.mrb[0].mxu0
        %3857 = vmatprep.mubr.f32.mxu0 0.0
        %3858 = vmatmul.mubr.f32.gmra.mrb[0].mxu0 %v3654
        %v3859 = vpop.f32.mrb[0].mxu0
        %v3860 = vadd.f32 0.0, %v3859
        %v3861 = vpop.f32.mrb[0].mxu0
        %3862 = vmatprep.mubr.f32.mxu0 0.0
        %3863 = vmatmul.mubr.f32.gmra.mrb[0].mxu0 %v3657
        %v3864 = vpop.f32.mrb[0].mxu0
        %v3865 = vadd.f32 0.0, %v3864
        %v3866 = vpop.f32.mrb[0].mxu0
        %3867 = vmatprep.mubr.f32.mxu0 0.0
        %3868 = vmatmul.mubr.f32.gmra.mrb[0].mxu0 %v3660
        %v3869 = vpop.f32.mrb[0].mxu0
        %v3870 = vadd.f32 0.0, %v3869
        %v3871 = vpop.f32.mrb[0].mxu0
        %3872 = vmatprep.mubr.f32.mxu0 0.0
        %3873 = vmatmul.mubr.f32.gmra.mrb[0].mxu0 %v3663
        %v3874 = vpop.f32.mrb[0].mxu0
        %v3875 = vadd.f32 0.0, %v3874
        %v3876 = vpop.f32.mrb[0].mxu0
        %3877 = vmatprep.mubr.f32.mxu0 0.0
        %3878 = vmatmul.mubr.f32.gmra.mrb[0].mxu0 %v3666
        %v3879 = vpop.f32.mrb[0].mxu0
        %v3880 = vadd.f32 0.0, %v3879
        %v3881 = vpop.f32.mrb[0].mxu0
        %3882 = vmatprep.mubr.f32.mxu0 0.0
        %3883 = vmatmul.mubr.f32.gmra.mrb[0].mxu0 %v3669
        %v3884 = vpop.f32.mrb[0].mxu0
        %v3885 = vadd.f32 0.0, %v3884
        %v3886 = vpop.f32.mrb[0].mxu0
        %3887 = vmatprep.mubr.f32.mxu0 0.0
        %3888 = vmatmul.mubr.f32.gmra.mrb[0].mxu0 %v3672
        %v3889 = vpop.f32.mrb[0].mxu0
        %v3890 = vadd.f32 0.0, %v3889
        %v3891 = vpop.f32.mrb[0].mxu0
        %3892 = vmatprep.mubr.f32.mxu0 0.0
        %3893 = vmatmul.mubr.f32.gmra.mrb[0].mxu0 %v3675
        %v3894 = vpop.f32.mrb[0].mxu0
        %v3895 = vadd.f32 0.0, %v3894
        %v3896 = vpop.f32.mrb[0].mxu0
        %3897 = vmatprep.mubr.f32.mxu0 0.0
        %3898 = vmatmul.mubr.f32.gmra.mrb[0].mxu0 %v3678
        %v3899 = vpop.f32.mrb[0].mxu0
        %v3900 = vadd.f32 0.0, %v3899
        %v3901 = vpop.f32.mrb[0].mxu0
        %3902 = vmatprep.mubr.f32.mxu0 0.0
        %3903 = vmatmul.mubr.f32.gmra.mrb[0].mxu0 %v3681
        %v3904 = vpop.f32.mrb[0].mxu0
        %v3905 = vadd.f32 0.0, %v3904
        %v3906 = vpop.f32.mrb[0].mxu0
        %3907 = vdwg.mxu0
        %v3908 = vld [vmem:[#allocation3] sm:$0xff]
        %v3909 = vld [vmem:[#allocation3 + $0x8] sm:$0xff]
        %v3910 = vld [vmem:[#allocation3 + $0x10] sm:$0xff]
        %v3911 = vld [vmem:[#allocation3 + $0x18] sm:$0xff]
        %v3912 = vld [vmem:[#allocation3 + $0x20] sm:$0xff]
        %v3913 = vld [vmem:[#allocation3 + $0x28] sm:$0xff]
        %v3914 = vld [vmem:[#allocation3 + $0x30] sm:$0xff]
        %v3915 = vld [vmem:[#allocation3 + $0x38] sm:$0xff]
        %v3916 = vld [vmem:[#allocation3 + $0x40] sm:$0xff]
        %v3917 = vld [vmem:[#allocation3 + $0x48] sm:$0xff]
        %v3918 = vld [vmem:[#allocation3 + $0x50] sm:$0xff]
        %v3919 = vld [vmem:[#allocation3 + $0x58] sm:$0xff]
        %v3920 = vld [vmem:[#allocation3 + $0x60] sm:$0xff]
        %v3921 = vld [vmem:[#allocation3 + $0x68] sm:$0xff]
        %v3922 = vld [vmem:[#allocation3 + $0x70] sm:$0xff]
        %v3923 = vld [vmem:[#allocation3 + $0x78] sm:$0xff]
        %v3924 = vld [vmem:[#allocation3 + $0x80] sm:$0xff]
        %v3925 = vld [vmem:[#allocation3 + $0x88] sm:$0xff]
        %v3926 = vld [vmem:[#allocation3 + $0x90] sm:$0xff]
        %v3927 = vld [vmem:[#allocation3 + $0x98] sm:$0xff]
        %v3928 = vld [vmem:[#allocation3 + $0xa0] sm:$0xff]
        %v3929 = vld [vmem:[#allocation3 + $0xa8] sm:$0xff]
        %v3930 = vld [vmem:[#allocation3 + $0xb0] sm:$0xff]
        %v3931 = vld [vmem:[#allocation3 + $0xb8] sm:$0xff]
        %v3932 = vld [vmem:[#allocation3 + $0xc0] sm:$0xff]
        %v3933 = vld [vmem:[#allocation3 + $0xc8] sm:$0xff]
        %v3934 = vld [vmem:[#allocation3 + $0xd0] sm:$0xff]
        %v3935 = vld [vmem:[#allocation3 + $0xd8] sm:$0xff]
        %v3936 = vld [vmem:[#allocation3 + $0xe0] sm:$0xff]
        %v3937 = vld [vmem:[#allocation3 + $0xe8] sm:$0xff]
        %v3938 = vld [vmem:[#allocation3 + $0xf0] sm:$0xff]
        %v3939 = vld [vmem:[#allocation3 + $0xf8] sm:$0xff]
        %v3940 = vadd.f32 %v3908, %v3750
        %v3941 = vadd.f32 %v3909, %v3755
        %v3942 = vadd.f32 %v3910, %v3760
        %v3943 = vadd.f32 %v3911, %v3765
        %v3944 = vadd.f32 %v3912, %v3770
        %v3945 = vadd.f32 %v3913, %v3775
        %v3946 = vadd.f32 %v3914, %v3780
        %v3947 = vadd.f32 %v3915, %v3785
        %v3948 = vadd.f32 %v3916, %v3790
        %v3949 = vadd.f32 %v3917, %v3795
        %v3950 = vadd.f32 %v3918, %v3800
        %v3951 = vadd.f32 %v3919, %v3805
        %v3952 = vadd.f32 %v3920, %v3810
        %v3953 = vadd.f32 %v3921, %v3815
        %v3954 = vadd.f32 %v3922, %v3820
        %v3955 = vadd.f32 %v3923, %v3825
        %v3956 = vadd.f32 %v3924, %v3830
        %v3957 = vadd.f32 %v3925, %v3835
        %v3958 = vadd.f32 %v3926, %v3840
        %v3959 = vadd.f32 %v3927, %v3845
        %v3960 = vadd.f32 %v3928, %v3850
        %v3961 = vadd.f32 %v3929, %v3855
        %v3962 = vadd.f32 %v3930, %v3860
        %v3963 = vadd.f32 %v3931, %v3865
        %v3964 = vadd.f32 %v3932, %v3870
        %v3965 = vadd.f32 %v3933, %v3875
        %v3966 = vadd.f32 %v3934, %v3880
        %v3967 = vadd.f32 %v3935, %v3885
        %v3968 = vadd.f32 %v3936, %v3890
        %v3969 = vadd.f32 %v3937, %v3895
        %v3970 = vadd.f32 %v3938, %v3900
        %v3971 = vadd.f32 %v3939, %v3905
        %3972 = vst.msk [vmem:[#allocation3] sm:$0xff] %vm789, %v3940
        %3973 = vst.msk [vmem:[#allocation3 + $0x8] sm:$0xff] %vm789, %v3941
        %3974 = vst.msk [vmem:[#allocation3 + $0x10] sm:$0xff] %vm789, %v3942
        %3975 = vst.msk [vmem:[#allocation3 + $0x18] sm:$0xff] %vm789, %v3943
        %3976 = vst.msk [vmem:[#allocation3 + $0x20] sm:$0xff] %vm789, %v3944
        %3977 = vst.msk [vmem:[#allocation3 + $0x28] sm:$0xff] %vm789, %v3945
        %3978 = vst.msk [vmem:[#allocation3 + $0x30] sm:$0xff] %vm789, %v3946
        %3979 = vst.msk [vmem:[#allocation3 + $0x38] sm:$0xff] %vm789, %v3947
        %3980 = vst.msk [vmem:[#allocation3 + $0x40] sm:$0xff] %vm789, %v3948
        %3981 = vst.msk [vmem:[#allocation3 + $0x48] sm:$0xff] %vm789, %v3949
        %3982 = vst.msk [vmem:[#allocation3 + $0x50] sm:$0xff] %vm789, %v3950
        %3983 = vst.msk [vmem:[#allocation3 + $0x58] sm:$0xff] %vm789, %v3951
        %3984 = vst.msk [vmem:[#allocation3 + $0x60] sm:$0xff] %vm789, %v3952
        %3985 = vst.msk [vmem:[#allocation3 + $0x68] sm:$0xff] %vm789, %v3953
        %3986 = vst.msk [vmem:[#allocation3 + $0x70] sm:$0xff] %vm789, %v3954
        %3987 = vst.msk [vmem:[#allocation3 + $0x78] sm:$0xff] %vm789, %v3955
        %3988 = vst.msk [vmem:[#allocation3 + $0x80] sm:$0xff] %vm789, %v3956
        %3989 = vst.msk [vmem:[#allocation3 + $0x88] sm:$0xff] %vm789, %v3957
        %3990 = vst.msk [vmem:[#allocation3 + $0x90] sm:$0xff] %vm789, %v3958
        %3991 = vst.msk [vmem:[#allocation3 + $0x98] sm:$0xff] %vm789, %v3959
        %3992 = vst.msk [vmem:[#allocation3 + $0xa0] sm:$0xff] %vm789, %v3960
        %3993 = vst.msk [vmem:[#allocation3 + $0xa8] sm:$0xff] %vm789, %v3961
        %3994 = vst.msk [vmem:[#allocation3 + $0xb0] sm:$0xff] %vm789, %v3962
        %3995 = vst.msk [vmem:[#allocation3 + $0xb8] sm:$0xff] %vm789, %v3963
        %3996 = vst.msk [vmem:[#allocation3 + $0xc0] sm:$0xff] %vm789, %v3964
        %3997 = vst.msk [vmem:[#allocation3 + $0xc8] sm:$0xff] %vm789, %v3965
        %3998 = vst.msk [vmem:[#allocation3 + $0xd0] sm:$0xff] %vm789, %v3966
        %3999 = vst.msk [vmem:[#allocation3 + $0xd8] sm:$0xff] %vm789, %v3967
        %4000 = vst.msk [vmem:[#allocation3 + $0xe0] sm:$0xff] %vm789, %v3968
        %4001 = vst.msk [vmem:[#allocation3 + $0xe8] sm:$0xff] %vm789, %v3969
        %4002 = vst.msk [vmem:[#allocation3 + $0xf0] sm:$0xff] %vm789, %v3970
        %4003 = vst.msk [vmem:[#allocation3 + $0xf8] sm:$0xff] %vm789, %v3971
        %v4004 = vld [vmem:[%s3546 + $0x1] sm:$0xff]
        %v4005 = vld [vmem:[%s3546 + $0x9] sm:$0xff]
        %v4006 = vld [vmem:[%s3546 + $0x19] sm:$0xff]
        %v4007 = vld [vmem:[%s3546 + $0x21] sm:$0xff]
        %v4008 = vld [vmem:[%s3546 + $0x31] sm:$0xff]
        %v4009 = vld [vmem:[%s3546 + $0x39] sm:$0xff]
        %v4010 = vld [vmem:[%s3546 + $0x49] sm:$0xff]
        %v4011 = vld [vmem:[%s3546 + $0x51] sm:$0xff]
        %v4012 = vld [vmem:[%s3546 + $0x61] sm:$0xff]
        %v4013 = vld [vmem:[%s3546 + $0x69] sm:$0xff]
        %v4014 = vld [vmem:[%s3546 + $0x79] sm:$0xff]
        %v4015 = vld [vmem:[%s3546 + $0x81] sm:$0xff]
        %v4016 = vld [vmem:[%s3546 + $0x91] sm:$0xff]
        %v4017 = vld [vmem:[%s3546 + $0x99] sm:$0xff]
        %v4018 = vld [vmem:[%s3546 + $0xa9] sm:$0xff]
        %v4019 = vld [vmem:[%s3546 + $0xb1] sm:$0xff]
        %v4020 = vld [vmem:[%s3546 + $0xc1] sm:$0xff]
        %v4021 = vld [vmem:[%s3546 + $0xc9] sm:$0xff]
        %v4022 = vld [vmem:[%s3546 + $0xd9] sm:$0xff]
        %v4023 = vld [vmem:[%s3546 + $0xe1] sm:$0xff]
        %v4024 = vld [vmem:[%s3546 + $0xf1] sm:$0xff]
        %v4025 = vld [vmem:[%s3546 + $0xf9] sm:$0xff]
        %v4026 = vld [vmem:[%s3546 + $0x109] sm:$0xff]
        %v4027 = vld [vmem:[%s3546 + $0x111] sm:$0xff]
        %v4028 = vld [vmem:[%s3546 + $0x121] sm:$0xff]
        %v4029 = vld [vmem:[%s3546 + $0x129] sm:$0xff]
        %v4030 = vld [vmem:[%s3546 + $0x139] sm:$0xff]
        %v4031 = vld [vmem:[%s3546 + $0x141] sm:$0xff]
        %v4032 = vld [vmem:[%s3546 + $0x151] sm:$0xff]
        %v4033 = vld [vmem:[%s3546 + $0x159] sm:$0xff]
        %v4034 = vld [vmem:[%s3546 + $0x169] sm:$0xff]
        %v4035 = vld [vmem:[%s3546 + $0x171] sm:$0xff]
        %v4036 = vld [vmem:[%s4 + $0x1c0] sm:$0xff]
        %v4037 = vld [vmem:[%s4 + $0x1c8] sm:$0xff]
        %v4038 = vld [vmem:[%s4 + $0x1d0] sm:$0xff]
        %v4039 = vld [vmem:[%s4 + $0x1d8] sm:$0xff]
        %v4040 = vld [vmem:[%s4 + $0x1e0] sm:$0xff]
        %v4041 = vld [vmem:[%s4 + $0x1e8] sm:$0xff]
        %v4042 = vld [vmem:[%s4 + $0x1f0] sm:$0xff]
        %v4043 = vld [vmem:[%s4 + $0x1f8] sm:$0xff]
        %v4045 = vsel %vm789, %v4004, 0
        %v4048 = vsel %vm789, %v4005, 0
        %v4051 = vsel %vm789, %v4006, 0
        %v4054 = vsel %vm789, %v4007, 0
        %v4057 = vsel %vm789, %v4008, 0
        %v4060 = vsel %vm789, %v4009, 0
        %v4063 = vsel %vm789, %v4010, 0
        %v4066 = vsel %vm789, %v4011, 0
        %v4069 = vsel %vm789, %v4012, 0
        %v4072 = vsel %vm789, %v4013, 0
        %v4075 = vsel %vm789, %v4014, 0
        %v4078 = vsel %vm789, %v4015, 0
        %v4081 = vsel %vm789, %v4016, 0
        %v4084 = vsel %vm789, %v4017, 0
        %v4087 = vsel %vm789, %v4018, 0
        %v4090 = vsel %vm789, %v4019, 0
        %v4093 = vsel %vm789, %v4020, 0
        %v4096 = vsel %vm789, %v4021, 0
        %v4099 = vsel %vm789, %v4022, 0
        %v4102 = vsel %vm789, %v4023, 0
        %v4105 = vsel %vm789, %v4024, 0
        %v4108 = vsel %vm789, %v4025, 0
        %v4111 = vsel %vm789, %v4026, 0
        %v4114 = vsel %vm789, %v4027, 0
        %v4117 = vsel %vm789, %v4028, 0
        %v4120 = vsel %vm789, %v4029, 0
        %v4123 = vsel %vm789, %v4030, 0
        %v4126 = vsel %vm789, %v4031, 0
        %v4129 = vsel %vm789, %v4032, 0
        %v4132 = vsel %vm789, %v4033, 0
        %v4135 = vsel %vm789, %v4034, 0
        %v4138 = vsel %vm789, %v4035, 0
        %4140 = vmatprep.subr.mxu0 0.0
        %4141 = vmatpush1.msra.mxu0 %v4036
        %4142 = vmatprep.subr.mxu0 0.0
        %4143 = vmatpush1.msra.mxu0 %v4037
        %4144 = vmatprep.subr.mxu0 0.0
        %4145 = vmatpush1.msra.mxu0 %v4038
        %4146 = vmatprep.subr.mxu0 0.0
        %4147 = vmatpush1.msra.mxu0 %v4039
        %4148 = vmatprep.subr.mxu0 0.0
        %4149 = vmatpush1.msra.mxu0 %v4040
        %4150 = vmatprep.subr.mxu0 0.0
        %4151 = vmatpush1.msra.mxu0 %v4041
        %4152 = vmatprep.subr.mxu0 0.0
        %4153 = vmatpush1.msra.mxu0 %v4042
        %4154 = vmatprep.subr.mxu0 0.0
        %4155 = vmatpush1.msra.mxu0 %v4043
        %4156 = vmatprep.subr.mxu0 0.0
        %4157 = vmatpush1.msra.mxu0 0.0
        %4158 = vmatprep.subr.mxu0 0.0
        %4159 = vmatpush1.msra.mxu0 0.0
        %4160 = vmatprep.subr.mxu0 0.0
        %4161 = vmatpush1.msra.mxu0 0.0
        %4162 = vmatprep.subr.mxu0 0.0
        %4163 = vmatpush1.msra.mxu0 0.0
        %4164 = vmatprep.subr.mxu0 0.0
        %4165 = vmatpush1.msra.mxu0 0.0
        %4166 = vmatprep.subr.mxu0 0.0
        %4167 = vmatpush1.msra.mxu0 0.0
        %4168 = vmatprep.subr.mxu0 0.0
        %4169 = vmatpush1.msra.mxu0 0.0
        %4170 = vmatprep.subr.mxu0 0.0
        %4171 = vmatpush1.msra.mxu0 0.0
        %4172 = vmatprep.subr.mxu0 0.0
        %4173 = vmatpush1.msra.mxu0 0.0
        %4174 = vmatprep.subr.mxu0 0.0
        %4175 = vmatpush1.msra.mxu0 0.0
        %4176 = vmatprep.subr.mxu0 0.0
        %4177 = vmatpush1.msra.mxu0 0.0
        %4178 = vmatprep.subr.mxu0 0.0
        %4179 = vmatpush1.msra.mxu0 0.0
        %4180 = vmatprep.subr.mxu0 0.0
        %4181 = vmatpush1.msra.mxu0 0.0
        %4182 = vmatprep.subr.mxu0 0.0
        %4183 = vmatpush1.msra.mxu0 0.0
        %4184 = vmatprep.subr.mxu0 0.0
        %4185 = vmatpush1.msra.mxu0 0.0
        %4186 = vmatprep.subr.mxu0 0.0
        %4187 = vmatpush1.msra.mxu0 0.0
        %4188 = vmatprep.subr.mxu0 0.0
        %4189 = vmatpush1.msra.mxu0 0.0
        %4190 = vmatprep.subr.mxu0 0.0
        %4191 = vmatpush1.msra.mxu0 0.0
        %4192 = vmatprep.subr.mxu0 0.0
        %4193 = vmatpush1.msra.mxu0 0.0
        %4194 = vmatprep.subr.mxu0 0.0
        %4195 = vmatpush1.msra.mxu0 0.0
        %4196 = vmatprep.subr.mxu0 0.0
        %4197 = vmatpush1.msra.mxu0 0.0
        %4198 = vmatprep.subr.mxu0 0.0
        %4199 = vmatpush1.msra.mxu0 0.0
        %4200 = vmatprep.subr.mxu0 0.0
        %4201 = vmatpush1.msra.mxu0 0.0
        %4202 = vmatprep.subr.mxu0 0.0
        %4203 = vmatpush1.msra.mxu0 0.0
        %4204 = vmatprep.mubr.f32.mxu0 0.0
        %4205 = vmatmul.mubr.f32.gmra.mrb[0].mxu0 %v4045
        %v4206 = vpop.f32.mrb[0].mxu0
        %v4207 = vadd.f32 0.0, %v4206
        %v4208 = vpop.f32.mrb[0].mxu0
        %4209 = vmatprep.mubr.f32.mxu0 0.0
        %4210 = vmatmul.mubr.f32.gmra.mrb[0].mxu0 %v4048
        %v4211 = vpop.f32.mrb[0].mxu0
        %v4212 = vadd.f32 0.0, %v4211
        %v4213 = vpop.f32.mrb[0].mxu0
        %4214 = vmatprep.mubr.f32.mxu0 0.0
        %4215 = vmatmul.mubr.f32.gmra.mrb[0].mxu0 %v4051
        %v4216 = vpop.f32.mrb[0].mxu0
        %v4217 = vadd.f32 0.0, %v4216
        %v4218 = vpop.f32.mrb[0].mxu0
        %4219 = vmatprep.mubr.f32.mxu0 0.0
        %4220 = vmatmul.mubr.f32.gmra.mrb[0].mxu0 %v4054
        %v4221 = vpop.f32.mrb[0].mxu0
        %v4222 = vadd.f32 0.0, %v4221
        %v4223 = vpop.f32.mrb[0].mxu0
        %4224 = vmatprep.mubr.f32.mxu0 0.0
        %4225 = vmatmul.mubr.f32.gmra.mrb[0].mxu0 %v4057
        %v4226 = vpop.f32.mrb[0].mxu0
        %v4227 = vadd.f32 0.0, %v4226
        %v4228 = vpop.f32.mrb[0].mxu0
        %4229 = vmatprep.mubr.f32.mxu0 0.0
        %4230 = vmatmul.mubr.f32.gmra.mrb[0].mxu0 %v4060
        %v4231 = vpop.f32.mrb[0].mxu0
        %v4232 = vadd.f32 0.0, %v4231
        %v4233 = vpop.f32.mrb[0].mxu0
        %4234 = vmatprep.mubr.f32.mxu0 0.0
        %4235 = vmatmul.mubr.f32.gmra.mrb[0].mxu0 %v4063
        %v4236 = vpop.f32.mrb[0].mxu0
        %v4237 = vadd.f32 0.0, %v4236
        %v4238 = vpop.f32.mrb[0].mxu0
        %4239 = vmatprep.mubr.f32.mxu0 0.0
        %4240 = vmatmul.mubr.f32.gmra.mrb[0].mxu0 %v4066
        %v4241 = vpop.f32.mrb[0].mxu0
        %v4242 = vadd.f32 0.0, %v4241
        %v4243 = vpop.f32.mrb[0].mxu0
        %4244 = vmatprep.mubr.f32.mxu0 0.0
        %4245 = vmatmul.mubr.f32.gmra.mrb[0].mxu0 %v4069
        %v4246 = vpop.f32.mrb[0].mxu0
        %v4247 = vadd.f32 0.0, %v4246
        %v4248 = vpop.f32.mrb[0].mxu0
        %4249 = vmatprep.mubr.f32.mxu0 0.0
        %4250 = vmatmul.mubr.f32.gmra.mrb[0].mxu0 %v4072
        %v4251 = vpop.f32.mrb[0].mxu0
        %v4252 = vadd.f32 0.0, %v4251
        %v4253 = vpop.f32.mrb[0].mxu0
        %4254 = vmatprep.mubr.f32.mxu0 0.0
        %4255 = vmatmul.mubr.f32.gmra.mrb[0].mxu0 %v4075
        %v4256 = vpop.f32.mrb[0].mxu0
        %v4257 = vadd.f32 0.0, %v4256
        %v4258 = vpop.f32.mrb[0].mxu0
        %4259 = vmatprep.mubr.f32.mxu0 0.0
        %4260 = vmatmul.mubr.f32.gmra.mrb[0].mxu0 %v4078
        %v4261 = vpop.f32.mrb[0].mxu0
        %v4262 = vadd.f32 0.0, %v4261
        %v4263 = vpop.f32.mrb[0].mxu0
        %4264 = vmatprep.mubr.f32.mxu0 0.0
        %4265 = vmatmul.mubr.f32.gmra.mrb[0].mxu0 %v4081
        %v4266 = vpop.f32.mrb[0].mxu0
        %v4267 = vadd.f32 0.0, %v4266
        %v4268 = vpop.f32.mrb[0].mxu0
        %4269 = vmatprep.mubr.f32.mxu0 0.0
        %4270 = vmatmul.mubr.f32.gmra.mrb[0].mxu0 %v4084
        %v4271 = vpop.f32.mrb[0].mxu0
        %v4272 = vadd.f32 0.0, %v4271
        %v4273 = vpop.f32.mrb[0].mxu0
        %4274 = vmatprep.mubr.f32.mxu0 0.0
        %4275 = vmatmul.mubr.f32.gmra.mrb[0].mxu0 %v4087
        %v4276 = vpop.f32.mrb[0].mxu0
        %v4277 = vadd.f32 0.0, %v4276
        %v4278 = vpop.f32.mrb[0].mxu0
        %4279 = vmatprep.mubr.f32.mxu0 0.0
        %4280 = vmatmul.mubr.f32.gmra.mrb[0].mxu0 %v4090
        %v4281 = vpop.f32.mrb[0].mxu0
        %v4282 = vadd.f32 0.0, %v4281
        %v4283 = vpop.f32.mrb[0].mxu0
        %4284 = vmatprep.mubr.f32.mxu0 0.0
        %4285 = vmatmul.mubr.f32.gmra.mrb[0].mxu0 %v4093
        %v4286 = vpop.f32.mrb[0].mxu0
        %v4287 = vadd.f32 0.0, %v4286
        %v4288 = vpop.f32.mrb[0].mxu0
        %4289 = vmatprep.mubr.f32.mxu0 0.0
        %4290 = vmatmul.mubr.f32.gmra.mrb[0].mxu0 %v4096
        %v4291 = vpop.f32.mrb[0].mxu0
        %v4292 = vadd.f32 0.0, %v4291
        %v4293 = vpop.f32.mrb[0].mxu0
        %4294 = vmatprep.mubr.f32.mxu0 0.0
        %4295 = vmatmul.mubr.f32.gmra.mrb[0].mxu0 %v4099
        %v4296 = vpop.f32.mrb[0].mxu0
        %v4297 = vadd.f32 0.0, %v4296
        %v4298 = vpop.f32.mrb[0].mxu0
        %4299 = vmatprep.mubr.f32.mxu0 0.0
        %4300 = vmatmul.mubr.f32.gmra.mrb[0].mxu0 %v4102
        %v4301 = vpop.f32.mrb[0].mxu0
        %v4302 = vadd.f32 0.0, %v4301
        %v4303 = vpop.f32.mrb[0].mxu0
        %4304 = vmatprep.mubr.f32.mxu0 0.0
        %4305 = vmatmul.mubr.f32.gmra.mrb[0].mxu0 %v4105
        %v4306 = vpop.f32.mrb[0].mxu0
        %v4307 = vadd.f32 0.0, %v4306
        %v4308 = vpop.f32.mrb[0].mxu0
        %4309 = vmatprep.mubr.f32.mxu0 0.0
        %4310 = vmatmul.mubr.f32.gmra.mrb[0].mxu0 %v4108
        %v4311 = vpop.f32.mrb[0].mxu0
        %v4312 = vadd.f32 0.0, %v4311
        %v4313 = vpop.f32.mrb[0].mxu0
        %4314 = vmatprep.mubr.f32.mxu0 0.0
        %4315 = vmatmul.mubr.f32.gmra.mrb[0].mxu0 %v4111
        %v4316 = vpop.f32.mrb[0].mxu0
        %v4317 = vadd.f32 0.0, %v4316
        %v4318 = vpop.f32.mrb[0].mxu0
        %4319 = vmatprep.mubr.f32.mxu0 0.0
        %4320 = vmatmul.mubr.f32.gmra.mrb[0].mxu0 %v4114
        %v4321 = vpop.f32.mrb[0].mxu0
        %v4322 = vadd.f32 0.0, %v4321
        %v4323 = vpop.f32.mrb[0].mxu0
        %4324 = vmatprep.mubr.f32.mxu0 0.0
        %4325 = vmatmul.mubr.f32.gmra.mrb[0].mxu0 %v4117
        %v4326 = vpop.f32.mrb[0].mxu0
        %v4327 = vadd.f32 0.0, %v4326
        %v4328 = vpop.f32.mrb[0].mxu0
        %4329 = vmatprep.mubr.f32.mxu0 0.0
        %4330 = vmatmul.mubr.f32.gmra.mrb[0].mxu0 %v4120
        %v4331 = vpop.f32.mrb[0].mxu0
        %v4332 = vadd.f32 0.0, %v4331
        %v4333 = vpop.f32.mrb[0].mxu0
        %4334 = vmatprep.mubr.f32.mxu0 0.0
        %4335 = vmatmul.mubr.f32.gmra.mrb[0].mxu0 %v4123
        %v4336 = vpop.f32.mrb[0].mxu0
        %v4337 = vadd.f32 0.0, %v4336
        %v4338 = vpop.f32.mrb[0].mxu0
        %4339 = vmatprep.mubr.f32.mxu0 0.0
        %4340 = vmatmul.mubr.f32.gmra.mrb[0].mxu0 %v4126
        %v4341 = vpop.f32.mrb[0].mxu0
        %v4342 = vadd.f32 0.0, %v4341
        %v4343 = vpop.f32.mrb[0].mxu0
        %4344 = vmatprep.mubr.f32.mxu0 0.0
        %4345 = vmatmul.mubr.f32.gmra.mrb[0].mxu0 %v4129
        %v4346 = vpop.f32.mrb[0].mxu0
        %v4347 = vadd.f32 0.0, %v4346
        %v4348 = vpop.f32.mrb[0].mxu0
        %4349 = vmatprep.mubr.f32.mxu0 0.0
        %4350 = vmatmul.mubr.f32.gmra.mrb[0].mxu0 %v4132
        %v4351 = vpop.f32.mrb[0].mxu0
        %v4352 = vadd.f32 0.0, %v4351
        %v4353 = vpop.f32.mrb[0].mxu0
        %4354 = vmatprep.mubr.f32.mxu0 0.0
        %4355 = vmatmul.mubr.f32.gmra.mrb[0].mxu0 %v4135
        %v4356 = vpop.f32.mrb[0].mxu0
        %v4357 = vadd.f32 0.0, %v4356
        %v4358 = vpop.f32.mrb[0].mxu0
        %4359 = vmatprep.mubr.f32.mxu0 0.0
        %4360 = vmatmul.mubr.f32.gmra.mrb[0].mxu0 %v4138
        %v4361 = vpop.f32.mrb[0].mxu0
        %v4362 = vadd.f32 0.0, %v4361
        %v4363 = vpop.f32.mrb[0].mxu0
        %4364 = vdwg.mxu0
        %v4365 = vld [vmem:[#allocation3] sm:$0xff]
        %v4366 = vld [vmem:[#allocation3 + $0x8] sm:$0xff]
        %v4367 = vld [vmem:[#allocation3 + $0x10] sm:$0xff]
        %v4368 = vld [vmem:[#allocation3 + $0x18] sm:$0xff]
        %v4369 = vld [vmem:[#allocation3 + $0x20] sm:$0xff]
        %v4370 = vld [vmem:[#allocation3 + $0x28] sm:$0xff]
        %v4371 = vld [vmem:[#allocation3 + $0x30] sm:$0xff]
        %v4372 = vld [vmem:[#allocation3 + $0x38] sm:$0xff]
        %v4373 = vld [vmem:[#allocation3 + $0x40] sm:$0xff]
        %v4374 = vld [vmem:[#allocation3 + $0x48] sm:$0xff]
        %v4375 = vld [vmem:[#allocation3 + $0x50] sm:$0xff]
        %v4376 = vld [vmem:[#allocation3 + $0x58] sm:$0xff]
        %v4377 = vld [vmem:[#allocation3 + $0x60] sm:$0xff]
        %v4378 = vld [vmem:[#allocation3 + $0x68] sm:$0xff]
        %v4379 = vld [vmem:[#allocation3 + $0x70] sm:$0xff]
        %v4380 = vld [vmem:[#allocation3 + $0x78] sm:$0xff]
        %v4381 = vld [vmem:[#allocation3 + $0x80] sm:$0xff]
        %v4382 = vld [vmem:[#allocation3 + $0x88] sm:$0xff]
        %v4383 = vld [vmem:[#allocation3 + $0x90] sm:$0xff]
        %v4384 = vld [vmem:[#allocation3 + $0x98] sm:$0xff]
        %v4385 = vld [vmem:[#allocation3 + $0xa0] sm:$0xff]
        %v4386 = vld [vmem:[#allocation3 + $0xa8] sm:$0xff]
        %v4387 = vld [vmem:[#allocation3 + $0xb0] sm:$0xff]
        %v4388 = vld [vmem:[#allocation3 + $0xb8] sm:$0xff]
        %v4389 = vld [vmem:[#allocation3 + $0xc0] sm:$0xff]
        %v4390 = vld [vmem:[#allocation3 + $0xc8] sm:$0xff]
        %v4391 = vld [vmem:[#allocation3 + $0xd0] sm:$0xff]
        %v4392 = vld [vmem:[#allocation3 + $0xd8] sm:$0xff]
        %v4393 = vld [vmem:[#allocation3 + $0xe0] sm:$0xff]
        %v4394 = vld [vmem:[#allocation3 + $0xe8] sm:$0xff]
        %v4395 = vld [vmem:[#allocation3 + $0xf0] sm:$0xff]
        %v4396 = vld [vmem:[#allocation3 + $0xf8] sm:$0xff]
        %v4397 = vadd.f32 %v4365, %v4207
        %v4398 = vadd.f32 %v4366, %v4212
        %v4399 = vadd.f32 %v4367, %v4217
        %v4400 = vadd.f32 %v4368, %v4222
        %v4401 = vadd.f32 %v4369, %v4227
        %v4402 = vadd.f32 %v4370, %v4232
        %v4403 = vadd.f32 %v4371, %v4237
        %v4404 = vadd.f32 %v4372, %v4242
        %v4405 = vadd.f32 %v4373, %v4247
        %v4406 = vadd.f32 %v4374, %v4252
        %v4407 = vadd.f32 %v4375, %v4257
        %v4408 = vadd.f32 %v4376, %v4262
        %v4409 = vadd.f32 %v4377, %v4267
        %v4410 = vadd.f32 %v4378, %v4272
        %v4411 = vadd.f32 %v4379, %v4277
        %v4412 = vadd.f32 %v4380, %v4282
        %v4413 = vadd.f32 %v4381, %v4287
        %v4414 = vadd.f32 %v4382, %v4292
        %v4415 = vadd.f32 %v4383, %v4297
        %v4416 = vadd.f32 %v4384, %v4302
        %v4417 = vadd.f32 %v4385, %v4307
        %v4418 = vadd.f32 %v4386, %v4312
        %v4419 = vadd.f32 %v4387, %v4317
        %v4420 = vadd.f32 %v4388, %v4322
        %v4421 = vadd.f32 %v4389, %v4327
        %v4422 = vadd.f32 %v4390, %v4332
        %v4423 = vadd.f32 %v4391, %v4337
        %v4424 = vadd.f32 %v4392, %v4342
        %v4425 = vadd.f32 %v4393, %v4347
        %v4426 = vadd.f32 %v4394, %v4352
        %v4427 = vadd.f32 %v4395, %v4357
        %v4428 = vadd.f32 %v4396, %v4362
        %4429 = vst.msk [vmem:[#allocation3] sm:$0xff] %vm789, %v4397
        %4430 = vst.msk [vmem:[#allocation3 + $0x8] sm:$0xff] %vm789, %v4398
        %4431 = vst.msk [vmem:[#allocation3 + $0x10] sm:$0xff] %vm789, %v4399
        %4432 = vst.msk [vmem:[#allocation3 + $0x18] sm:$0xff] %vm789, %v4400
        %4433 = vst.msk [vmem:[#allocation3 + $0x20] sm:$0xff] %vm789, %v4401
        %4434 = vst.msk [vmem:[#allocation3 + $0x28] sm:$0xff] %vm789, %v4402
        %4435 = vst.msk [vmem:[#allocation3 + $0x30] sm:$0xff] %vm789, %v4403
        %4436 = vst.msk [vmem:[#allocation3 + $0x38] sm:$0xff] %vm789, %v4404
        %4437 = vst.msk [vmem:[#allocation3 + $0x40] sm:$0xff] %vm789, %v4405
        %4438 = vst.msk [vmem:[#allocation3 + $0x48] sm:$0xff] %vm789, %v4406
        %4439 = vst.msk [vmem:[#allocation3 + $0x50] sm:$0xff] %vm789, %v4407
        %4440 = vst.msk [vmem:[#allocation3 + $0x58] sm:$0xff] %vm789, %v4408
        %4441 = vst.msk [vmem:[#allocation3 + $0x60] sm:$0xff] %vm789, %v4409
        %4442 = vst.msk [vmem:[#allocation3 + $0x68] sm:$0xff] %vm789, %v4410
        %4443 = vst.msk [vmem:[#allocation3 + $0x70] sm:$0xff] %vm789, %v4411
        %4444 = vst.msk [vmem:[#allocation3 + $0x78] sm:$0xff] %vm789, %v4412
        %4445 = vst.msk [vmem:[#allocation3 + $0x80] sm:$0xff] %vm789, %v4413
        %4446 = vst.msk [vmem:[#allocation3 + $0x88] sm:$0xff] %vm789, %v4414
        %4447 = vst.msk [vmem:[#allocation3 + $0x90] sm:$0xff] %vm789, %v4415
        %4448 = vst.msk [vmem:[#allocation3 + $0x98] sm:$0xff] %vm789, %v4416
        %4449 = vst.msk [vmem:[#allocation3 + $0xa0] sm:$0xff] %vm789, %v4417
        %4450 = vst.msk [vmem:[#allocation3 + $0xa8] sm:$0xff] %vm789, %v4418
        %4451 = vst.msk [vmem:[#allocation3 + $0xb0] sm:$0xff] %vm789, %v4419
        %4452 = vst.msk [vmem:[#allocation3 + $0xb8] sm:$0xff] %vm789, %v4420
        %4453 = vst.msk [vmem:[#allocation3 + $0xc0] sm:$0xff] %vm789, %v4421
        %4454 = vst.msk [vmem:[#allocation3 + $0xc8] sm:$0xff] %vm789, %v4422
        %4455 = vst.msk [vmem:[#allocation3 + $0xd0] sm:$0xff] %vm789, %v4423
        %4456 = vst.msk [vmem:[#allocation3 + $0xd8] sm:$0xff] %vm789, %v4424
        %4457 = vst.msk [vmem:[#allocation3 + $0xe0] sm:$0xff] %vm789, %v4425
        %4458 = vst.msk [vmem:[#allocation3 + $0xe8] sm:$0xff] %vm789, %v4426
        %4459 = vst.msk [vmem:[#allocation3 + $0xf0] sm:$0xff] %vm789, %v4427
        %4460 = vst.msk [vmem:[#allocation3 + $0xf8] sm:$0xff] %vm789, %v4428
        %v4461 = vld [vmem:[%s3546 + $0x2] sm:$0xff]
        %v4462 = vld [vmem:[%s3546 + $0xa] sm:$0xff]
        %v4463 = vld [vmem:[%s3546 + $0x1a] sm:$0xff]
        %v4464 = vld [vmem:[%s3546 + $0x22] sm:$0xff]
        %v4465 = vld [vmem:[%s3546 + $0x32] sm:$0xff]
        %v4466 = vld [vmem:[%s3546 + $0x3a] sm:$0xff]
        %v4467 = vld [vmem:[%s3546 + $0x4a] sm:$0xff]
        %v4468 = vld [vmem:[%s3546 + $0x52] sm:$0xff]
        %v4469 = vld [vmem:[%s3546 + $0x62] sm:$0xff]
        %v4470 = vld [vmem:[%s3546 + $0x6a] sm:$0xff]
        %v4471 = vld [vmem:[%s3546 + $0x7a] sm:$0xff]
        %v4472 = vld [vmem:[%s3546 + $0x82] sm:$0xff]
        %v4473 = vld [vmem:[%s3546 + $0x92] sm:$0xff]
        %v4474 = vld [vmem:[%s3546 + $0x9a] sm:$0xff]
        %v4475 = vld [vmem:[%s3546 + $0xaa] sm:$0xff]
        %v4476 = vld [vmem:[%s3546 + $0xb2] sm:$0xff]
        %v4477 = vld [vmem:[%s3546 + $0xc2] sm:$0xff]
        %v4478 = vld [vmem:[%s3546 + $0xca] sm:$0xff]
        %v4479 = vld [vmem:[%s3546 + $0xda] sm:$0xff]
        %v4480 = vld [vmem:[%s3546 + $0xe2] sm:$0xff]
        %v4481 = vld [vmem:[%s3546 + $0xf2] sm:$0xff]
        %v4482 = vld [vmem:[%s3546 + $0xfa] sm:$0xff]
        %v4483 = vld [vmem:[%s3546 + $0x10a] sm:$0xff]
        %v4484 = vld [vmem:[%s3546 + $0x112] sm:$0xff]
        %v4485 = vld [vmem:[%s3546 + $0x122] sm:$0xff]
        %v4486 = vld [vmem:[%s3546 + $0x12a] sm:$0xff]
        %v4487 = vld [vmem:[%s3546 + $0x13a] sm:$0xff]
        %v4488 = vld [vmem:[%s3546 + $0x142] sm:$0xff]
        %v4489 = vld [vmem:[%s3546 + $0x152] sm:$0xff]
        %v4490 = vld [vmem:[%s3546 + $0x15a] sm:$0xff]
        %v4491 = vld [vmem:[%s3546 + $0x16a] sm:$0xff]
        %v4492 = vld [vmem:[%s3546 + $0x172] sm:$0xff]
        %v4493 = vld [vmem:[%s4 + $0x200] sm:$0xff]
        %v4494 = vld [vmem:[%s4 + $0x208] sm:$0xff]
        %v4495 = vld [vmem:[%s4 + $0x210] sm:$0xff]
        %v4496 = vld [vmem:[%s4 + $0x218] sm:$0xff]
        %v4497 = vld [vmem:[%s4 + $0x220] sm:$0xff]
        %v4498 = vld [vmem:[%s4 + $0x228] sm:$0xff]
        %v4499 = vld [vmem:[%s4 + $0x230] sm:$0xff]
        %v4500 = vld [vmem:[%s4 + $0x238] sm:$0xff]
        %v4502 = vsel %vm789, %v4461, 0
        %v4505 = vsel %vm789, %v4462, 0
        %v4508 = vsel %vm789, %v4463, 0
        %v4511 = vsel %vm789, %v4464, 0
        %v4514 = vsel %vm789, %v4465, 0
        %v4517 = vsel %vm789, %v4466, 0
        %v4520 = vsel %vm789, %v4467, 0
        %v4523 = vsel %vm789, %v4468, 0
        %v4526 = vsel %vm789, %v4469, 0
        %v4529 = vsel %vm789, %v4470, 0
        %v4532 = vsel %vm789, %v4471, 0
        %v4535 = vsel %vm789, %v4472, 0
        %v4538 = vsel %vm789, %v4473, 0
        %v4541 = vsel %vm789, %v4474, 0
        %v4544 = vsel %vm789, %v4475, 0
        %v4547 = vsel %vm789, %v4476, 0
        %v4550 = vsel %vm789, %v4477, 0
        %v4553 = vsel %vm789, %v4478, 0
        %v4556 = vsel %vm789, %v4479, 0
        %v4559 = vsel %vm789, %v4480, 0
        %v4562 = vsel %vm789, %v4481, 0
        %v4565 = vsel %vm789, %v4482, 0
        %v4568 = vsel %vm789, %v4483, 0
        %v4571 = vsel %vm789, %v4484, 0
        %v4574 = vsel %vm789, %v4485, 0
        %v4577 = vsel %vm789, %v4486, 0
        %v4580 = vsel %vm789, %v4487, 0
        %v4583 = vsel %vm789, %v4488, 0
        %v4586 = vsel %vm789, %v4489, 0
        %v4589 = vsel %vm789, %v4490, 0
        %v4592 = vsel %vm789, %v4491, 0
        %v4595 = vsel %vm789, %v4492, 0
        %4597 = vmatprep.subr.mxu0 0.0
        %4598 = vmatpush1.msra.mxu0 %v4493
        %4599 = vmatprep.subr.mxu0 0.0
        %4600 = vmatpush1.msra.mxu0 %v4494
        %4601 = vmatprep.subr.mxu0 0.0
        %4602 = vmatpush1.msra.mxu0 %v4495
        %4603 = vmatprep.subr.mxu0 0.0
        %4604 = vmatpush1.msra.mxu0 %v4496
        %4605 = vmatprep.subr.mxu0 0.0
        %4606 = vmatpush1.msra.mxu0 %v4497
        %4607 = vmatprep.subr.mxu0 0.0
        %4608 = vmatpush1.msra.mxu0 %v4498
        %4609 = vmatprep.subr.mxu0 0.0
        %4610 = vmatpush1.msra.mxu0 %v4499
        %4611 = vmatprep.subr.mxu0 0.0
        %4612 = vmatpush1.msra.mxu0 %v4500
        %4613 = vmatprep.subr.mxu0 0.0
        %4614 = vmatpush1.msra.mxu0 0.0
        %4615 = vmatprep.subr.mxu0 0.0
        %4616 = vmatpush1.msra.mxu0 0.0
        %4617 = vmatprep.subr.mxu0 0.0
        %4618 = vmatpush1.msra.mxu0 0.0
        %4619 = vmatprep.subr.mxu0 0.0
        %4620 = vmatpush1.msra.mxu0 0.0
        %4621 = vmatprep.subr.mxu0 0.0
        %4622 = vmatpush1.msra.mxu0 0.0
        %4623 = vmatprep.subr.mxu0 0.0
        %4624 = vmatpush1.msra.mxu0 0.0
        %4625 = vmatprep.subr.mxu0 0.0
        %4626 = vmatpush1.msra.mxu0 0.0
        %4627 = vmatprep.subr.mxu0 0.0
        %4628 = vmatpush1.msra.mxu0 0.0
        %4629 = vmatprep.subr.mxu0 0.0
        %4630 = vmatpush1.msra.mxu0 0.0
        %4631 = vmatprep.subr.mxu0 0.0
        %4632 = vmatpush1.msra.mxu0 0.0
        %4633 = vmatprep.subr.mxu0 0.0
        %4634 = vmatpush1.msra.mxu0 0.0
        %4635 = vmatprep.subr.mxu0 0.0
        %4636 = vmatpush1.msra.mxu0 0.0
        %4637 = vmatprep.subr.mxu0 0.0
        %4638 = vmatpush1.msra.mxu0 0.0
        %4639 = vmatprep.subr.mxu0 0.0
        %4640 = vmatpush1.msra.mxu0 0.0
        %4641 = vmatprep.subr.mxu0 0.0
        %4642 = vmatpush1.msra.mxu0 0.0
        %4643 = vmatprep.subr.mxu0 0.0
        %4644 = vmatpush1.msra.mxu0 0.0
        %4645 = vmatprep.subr.mxu0 0.0
        %4646 = vmatpush1.msra.mxu0 0.0
        %4647 = vmatprep.subr.mxu0 0.0
        %4648 = vmatpush1.msra.mxu0 0.0
        %4649 = vmatprep.subr.mxu0 0.0
        %4650 = vmatpush1.msra.mxu0 0.0
        %4651 = vmatprep.subr.mxu0 0.0
        %4652 = vmatpush1.msra.mxu0 0.0
        %4653 = vmatprep.subr.mxu0 0.0
        %4654 = vmatpush1.msra.mxu0 0.0
        %4655 = vmatprep.subr.mxu0 0.0
        %4656 = vmatpush1.msra.mxu0 0.0
        %4657 = vmatprep.subr.mxu0 0.0
        %4658 = vmatpush1.msra.mxu0 0.0
        %4659 = vmatprep.subr.mxu0 0.0
        %4660 = vmatpush1.msra.mxu0 0.0
        %4661 = vmatprep.mubr.f32.mxu0 0.0
        %4662 = vmatmul.mubr.f32.gmra.mrb[0].mxu0 %v4502
        %v4663 = vpop.f32.mrb[0].mxu0
        %v4664 = vadd.f32 0.0, %v4663
        %v4665 = vpop.f32.mrb[0].mxu0
        %4666 = vmatprep.mubr.f32.mxu0 0.0
        %4667 = vmatmul.mubr.f32.gmra.mrb[0].mxu0 %v4505
        %v4668 = vpop.f32.mrb[0].mxu0
        %v4669 = vadd.f32 0.0, %v4668
        %v4670 = vpop.f32.mrb[0].mxu0
        %4671 = vmatprep.mubr.f32.mxu0 0.0
        %4672 = vmatmul.mubr.f32.gmra.mrb[0].mxu0 %v4508
        %v4673 = vpop.f32.mrb[0].mxu0
        %v4674 = vadd.f32 0.0, %v4673
        %v4675 = vpop.f32.mrb[0].mxu0
        %4676 = vmatprep.mubr.f32.mxu0 0.0
        %4677 = vmatmul.mubr.f32.gmra.mrb[0].mxu0 %v4511
        %v4678 = vpop.f32.mrb[0].mxu0
        %v4679 = vadd.f32 0.0, %v4678
        %v4680 = vpop.f32.mrb[0].mxu0
        %4681 = vmatprep.mubr.f32.mxu0 0.0
        %4682 = vmatmul.mubr.f32.gmra.mrb[0].mxu0 %v4514
        %v4683 = vpop.f32.mrb[0].mxu0
        %v4684 = vadd.f32 0.0, %v4683
        %v4685 = vpop.f32.mrb[0].mxu0
        %4686 = vmatprep.mubr.f32.mxu0 0.0
        %4687 = vmatmul.mubr.f32.gmra.mrb[0].mxu0 %v4517
        %v4688 = vpop.f32.mrb[0].mxu0
        %v4689 = vadd.f32 0.0, %v4688
        %v4690 = vpop.f32.mrb[0].mxu0
        %4691 = vmatprep.mubr.f32.mxu0 0.0
        %4692 = vmatmul.mubr.f32.gmra.mrb[0].mxu0 %v4520
        %v4693 = vpop.f32.mrb[0].mxu0
        %v4694 = vadd.f32 0.0, %v4693
        %v4695 = vpop.f32.mrb[0].mxu0
        %4696 = vmatprep.mubr.f32.mxu0 0.0
        %4697 = vmatmul.mubr.f32.gmra.mrb[0].mxu0 %v4523
        %v4698 = vpop.f32.mrb[0].mxu0
        %v4699 = vadd.f32 0.0, %v4698
        %v4700 = vpop.f32.mrb[0].mxu0
        %4701 = vmatprep.mubr.f32.mxu0 0.0
        %4702 = vmatmul.mubr.f32.gmra.mrb[0].mxu0 %v4526
        %v4703 = vpop.f32.mrb[0].mxu0
        %v4704 = vadd.f32 0.0, %v4703
        %v4705 = vpop.f32.mrb[0].mxu0
        %4706 = vmatprep.mubr.f32.mxu0 0.0
        %4707 = vmatmul.mubr.f32.gmra.mrb[0].mxu0 %v4529
        %v4708 = vpop.f32.mrb[0].mxu0
        %v4709 = vadd.f32 0.0, %v4708
        %v4710 = vpop.f32.mrb[0].mxu0
        %4711 = vmatprep.mubr.f32.mxu0 0.0
        %4712 = vmatmul.mubr.f32.gmra.mrb[0].mxu0 %v4532
        %v4713 = vpop.f32.mrb[0].mxu0
        %v4714 = vadd.f32 0.0, %v4713
        %v4715 = vpop.f32.mrb[0].mxu0
        %4716 = vmatprep.mubr.f32.mxu0 0.0
        %4717 = vmatmul.mubr.f32.gmra.mrb[0].mxu0 %v4535
        %v4718 = vpop.f32.mrb[0].mxu0
        %v4719 = vadd.f32 0.0, %v4718
        %v4720 = vpop.f32.mrb[0].mxu0
        %4721 = vmatprep.mubr.f32.mxu0 0.0
        %4722 = vmatmul.mubr.f32.gmra.mrb[0].mxu0 %v4538
        %v4723 = vpop.f32.mrb[0].mxu0
        %v4724 = vadd.f32 0.0, %v4723
        %v4725 = vpop.f32.mrb[0].mxu0
        %4726 = vmatprep.mubr.f32.mxu0 0.0
        %4727 = vmatmul.mubr.f32.gmra.mrb[0].mxu0 %v4541
        %v4728 = vpop.f32.mrb[0].mxu0
        %v4729 = vadd.f32 0.0, %v4728
        %v4730 = vpop.f32.mrb[0].mxu0
        %4731 = vmatprep.mubr.f32.mxu0 0.0
        %4732 = vmatmul.mubr.f32.gmra.mrb[0].mxu0 %v4544
        %v4733 = vpop.f32.mrb[0].mxu0
        %v4734 = vadd.f32 0.0, %v4733
        %v4735 = vpop.f32.mrb[0].mxu0
        %4736 = vmatprep.mubr.f32.mxu0 0.0
        %4737 = vmatmul.mubr.f32.gmra.mrb[0].mxu0 %v4547
        %v4738 = vpop.f32.mrb[0].mxu0
        %v4739 = vadd.f32 0.0, %v4738
        %v4740 = vpop.f32.mrb[0].mxu0
        %4741 = vmatprep.mubr.f32.mxu0 0.0
        %4742 = vmatmul.mubr.f32.gmra.mrb[0].mxu0 %v4550
        %v4743 = vpop.f32.mrb[0].mxu0
        %v4744 = vadd.f32 0.0, %v4743
        %v4745 = vpop.f32.mrb[0].mxu0
        %4746 = vmatprep.mubr.f32.mxu0 0.0
        %4747 = vmatmul.mubr.f32.gmra.mrb[0].mxu0 %v4553
        %v4748 = vpop.f32.mrb[0].mxu0
        %v4749 = vadd.f32 0.0, %v4748
        %v4750 = vpop.f32.mrb[0].mxu0
        %4751 = vmatprep.mubr.f32.mxu0 0.0
        %4752 = vmatmul.mubr.f32.gmra.mrb[0].mxu0 %v4556
        %v4753 = vpop.f32.mrb[0].mxu0
        %v4754 = vadd.f32 0.0, %v4753
        %v4755 = vpop.f32.mrb[0].mxu0
        %4756 = vmatprep.mubr.f32.mxu0 0.0
        %4757 = vmatmul.mubr.f32.gmra.mrb[0].mxu0 %v4559
        %v4758 = vpop.f32.mrb[0].mxu0
        %v4759 = vadd.f32 0.0, %v4758
        %v4760 = vpop.f32.mrb[0].mxu0
        %4761 = vmatprep.mubr.f32.mxu0 0.0
        %4762 = vmatmul.mubr.f32.gmra.mrb[0].mxu0 %v4562
        %v4763 = vpop.f32.mrb[0].mxu0
        %v4764 = vadd.f32 0.0, %v4763
        %v4765 = vpop.f32.mrb[0].mxu0
        %4766 = vmatprep.mubr.f32.mxu0 0.0
        %4767 = vmatmul.mubr.f32.gmra.mrb[0].mxu0 %v4565
        %v4768 = vpop.f32.mrb[0].mxu0
        %v4769 = vadd.f32 0.0, %v4768
        %v4770 = vpop.f32.mrb[0].mxu0
        %4771 = vmatprep.mubr.f32.mxu0 0.0
        %4772 = vmatmul.mubr.f32.gmra.mrb[0].mxu0 %v4568
        %v4773 = vpop.f32.mrb[0].mxu0
        %v4774 = vadd.f32 0.0, %v4773
        %v4775 = vpop.f32.mrb[0].mxu0
        %4776 = vmatprep.mubr.f32.mxu0 0.0
        %4777 = vmatmul.mubr.f32.gmra.mrb[0].mxu0 %v4571
        %v4778 = vpop.f32.mrb[0].mxu0
        %v4779 = vadd.f32 0.0, %v4778
        %v4780 = vpop.f32.mrb[0].mxu0
        %4781 = vmatprep.mubr.f32.mxu0 0.0
        %4782 = vmatmul.mubr.f32.gmra.mrb[0].mxu0 %v4574
        %v4783 = vpop.f32.mrb[0].mxu0
        %v4784 = vadd.f32 0.0, %v4783
        %v4785 = vpop.f32.mrb[0].mxu0
        %4786 = vmatprep.mubr.f32.mxu0 0.0
        %4787 = vmatmul.mubr.f32.gmra.mrb[0].mxu0 %v4577
        %v4788 = vpop.f32.mrb[0].mxu0
        %v4789 = vadd.f32 0.0, %v4788
        %v4790 = vpop.f32.mrb[0].mxu0
        %4791 = vmatprep.mubr.f32.mxu0 0.0
        %4792 = vmatmul.mubr.f32.gmra.mrb[0].mxu0 %v4580
        %v4793 = vpop.f32.mrb[0].mxu0
        %v4794 = vadd.f32 0.0, %v4793
        %v4795 = vpop.f32.mrb[0].mxu0
        %4796 = vmatprep.mubr.f32.mxu0 0.0
        %4797 = vmatmul.mubr.f32.gmra.mrb[0].mxu0 %v4583
        %v4798 = vpop.f32.mrb[0].mxu0
        %v4799 = vadd.f32 0.0, %v4798
        %v4800 = vpop.f32.mrb[0].mxu0
        %4801 = vmatprep.mubr.f32.mxu0 0.0
        %4802 = vmatmul.mubr.f32.gmra.mrb[0].mxu0 %v4586
        %v4803 = vpop.f32.mrb[0].mxu0
        %v4804 = vadd.f32 0.0, %v4803
        %v4805 = vpop.f32.mrb[0].mxu0
        %4806 = vmatprep.mubr.f32.mxu0 0.0
        %4807 = vmatmul.mubr.f32.gmra.mrb[0].mxu0 %v4589
        %v4808 = vpop.f32.mrb[0].mxu0
        %v4809 = vadd.f32 0.0, %v4808
        %v4810 = vpop.f32.mrb[0].mxu0
        %4811 = vmatprep.mubr.f32.mxu0 0.0
        %4812 = vmatmul.mubr.f32.gmra.mrb[0].mxu0 %v4592
        %v4813 = vpop.f32.mrb[0].mxu0
        %v4814 = vadd.f32 0.0, %v4813
        %v4815 = vpop.f32.mrb[0].mxu0
        %4816 = vmatprep.mubr.f32.mxu0 0.0
        %4817 = vmatmul.mubr.f32.gmra.mrb[0].mxu0 %v4595
        %v4818 = vpop.f32.mrb[0].mxu0
        %v4819 = vadd.f32 0.0, %v4818
        %v4820 = vpop.f32.mrb[0].mxu0
        %4821 = vdwg.mxu0
        %v4822 = vld [vmem:[#allocation3] sm:$0xff]
        %v4823 = vld [vmem:[#allocation3 + $0x8] sm:$0xff]
        %v4824 = vld [vmem:[#allocation3 + $0x10] sm:$0xff]
        %v4825 = vld [vmem:[#allocation3 + $0x18] sm:$0xff]
        %v4826 = vld [vmem:[#allocation3 + $0x20] sm:$0xff]
        %v4827 = vld [vmem:[#allocation3 + $0x28] sm:$0xff]
        %v4828 = vld [vmem:[#allocation3 + $0x30] sm:$0xff]
        %v4829 = vld [vmem:[#allocation3 + $0x38] sm:$0xff]
        %v4830 = vld [vmem:[#allocation3 + $0x40] sm:$0xff]
        %v4831 = vld [vmem:[#allocation3 + $0x48] sm:$0xff]
        %v4832 = vld [vmem:[#allocation3 + $0x50] sm:$0xff]
        %v4833 = vld [vmem:[#allocation3 + $0x58] sm:$0xff]
        %v4834 = vld [vmem:[#allocation3 + $0x60] sm:$0xff]
        %v4835 = vld [vmem:[#allocation3 + $0x68] sm:$0xff]
        %v4836 = vld [vmem:[#allocation3 + $0x70] sm:$0xff]
        %v4837 = vld [vmem:[#allocation3 + $0x78] sm:$0xff]
        %v4838 = vld [vmem:[#allocation3 + $0x80] sm:$0xff]
        %v4839 = vld [vmem:[#allocation3 + $0x88] sm:$0xff]
        %v4840 = vld [vmem:[#allocation3 + $0x90] sm:$0xff]
        %v4841 = vld [vmem:[#allocation3 + $0x98] sm:$0xff]
        %v4842 = vld [vmem:[#allocation3 + $0xa0] sm:$0xff]
        %v4843 = vld [vmem:[#allocation3 + $0xa8] sm:$0xff]
        %v4844 = vld [vmem:[#allocation3 + $0xb0] sm:$0xff]
        %v4845 = vld [vmem:[#allocation3 + $0xb8] sm:$0xff]
        %v4846 = vld [vmem:[#allocation3 + $0xc0] sm:$0xff]
        %v4847 = vld [vmem:[#allocation3 + $0xc8] sm:$0xff]
        %v4848 = vld [vmem:[#allocation3 + $0xd0] sm:$0xff]
        %v4849 = vld [vmem:[#allocation3 + $0xd8] sm:$0xff]
        %v4850 = vld [vmem:[#allocation3 + $0xe0] sm:$0xff]
        %v4851 = vld [vmem:[#allocation3 + $0xe8] sm:$0xff]
        %v4852 = vld [vmem:[#allocation3 + $0xf0] sm:$0xff]
        %v4853 = vld [vmem:[#allocation3 + $0xf8] sm:$0xff]
        %v4854 = vadd.f32 %v4822, %v4664
        %v4855 = vadd.f32 %v4823, %v4669
        %v4856 = vadd.f32 %v4824, %v4674
        %v4857 = vadd.f32 %v4825, %v4679
        %v4858 = vadd.f32 %v4826, %v4684
        %v4859 = vadd.f32 %v4827, %v4689
        %v4860 = vadd.f32 %v4828, %v4694
        %v4861 = vadd.f32 %v4829, %v4699
        %v4862 = vadd.f32 %v4830, %v4704
        %v4863 = vadd.f32 %v4831, %v4709
        %v4864 = vadd.f32 %v4832, %v4714
        %v4865 = vadd.f32 %v4833, %v4719
        %v4866 = vadd.f32 %v4834, %v4724
        %v4867 = vadd.f32 %v4835, %v4729
        %v4868 = vadd.f32 %v4836, %v4734
        %v4869 = vadd.f32 %v4837, %v4739
        %v4870 = vadd.f32 %v4838, %v4744
        %v4871 = vadd.f32 %v4839, %v4749
        %v4872 = vadd.f32 %v4840, %v4754
        %v4873 = vadd.f32 %v4841, %v4759
        %v4874 = vadd.f32 %v4842, %v4764
        %v4875 = vadd.f32 %v4843, %v4769
        %v4876 = vadd.f32 %v4844, %v4774
        %v4877 = vadd.f32 %v4845, %v4779
        %v4878 = vadd.f32 %v4846, %v4784
        %v4879 = vadd.f32 %v4847, %v4789
        %v4880 = vadd.f32 %v4848, %v4794
        %v4881 = vadd.f32 %v4849, %v4799
        %v4882 = vadd.f32 %v4850, %v4804
        %v4883 = vadd.f32 %v4851, %v4809
        %v4884 = vadd.f32 %v4852, %v4814
        %v4885 = vadd.f32 %v4853, %v4819
        %4886 = vst.msk [vmem:[#allocation3] sm:$0xff] %vm789, %v4854
        %4887 = vst.msk [vmem:[#allocation3 + $0x8] sm:$0xff] %vm789, %v4855
        %4888 = vst.msk [vmem:[#allocation3 + $0x10] sm:$0xff] %vm789, %v4856
        %4889 = vst.msk [vmem:[#allocation3 + $0x18] sm:$0xff] %vm789, %v4857
        %4890 = vst.msk [vmem:[#allocation3 + $0x20] sm:$0xff] %vm789, %v4858
        %4891 = vst.msk [vmem:[#allocation3 + $0x28] sm:$0xff] %vm789, %v4859
        %4892 = vst.msk [vmem:[#allocation3 + $0x30] sm:$0xff] %vm789, %v4860
        %4893 = vst.msk [vmem:[#allocation3 + $0x38] sm:$0xff] %vm789, %v4861
        %4894 = vst.msk [vmem:[#allocation3 + $0x40] sm:$0xff] %vm789, %v4862
        %4895 = vst.msk [vmem:[#allocation3 + $0x48] sm:$0xff] %vm789, %v4863
        %4896 = vst.msk [vmem:[#allocation3 + $0x50] sm:$0xff] %vm789, %v4864
        %4897 = vst.msk [vmem:[#allocation3 + $0x58] sm:$0xff] %vm789, %v4865
        %4898 = vst.msk [vmem:[#allocation3 + $0x60] sm:$0xff] %vm789, %v4866
        %4899 = vst.msk [vmem:[#allocation3 + $0x68] sm:$0xff] %vm789, %v4867
        %4900 = vst.msk [vmem:[#allocation3 + $0x70] sm:$0xff] %vm789, %v4868
        %4901 = vst.msk [vmem:[#allocation3 + $0x78] sm:$0xff] %vm789, %v4869
        %4902 = vst.msk [vmem:[#allocation3 + $0x80] sm:$0xff] %vm789, %v4870
        %4903 = vst.msk [vmem:[#allocation3 + $0x88] sm:$0xff] %vm789, %v4871
        %4904 = vst.msk [vmem:[#allocation3 + $0x90] sm:$0xff] %vm789, %v4872
        %4905 = vst.msk [vmem:[#allocation3 + $0x98] sm:$0xff] %vm789, %v4873
        %4906 = vst.msk [vmem:[#allocation3 + $0xa0] sm:$0xff] %vm789, %v4874
        %4907 = vst.msk [vmem:[#allocation3 + $0xa8] sm:$0xff] %vm789, %v4875
        %4908 = vst.msk [vmem:[#allocation3 + $0xb0] sm:$0xff] %vm789, %v4876
        %4909 = vst.msk [vmem:[#allocation3 + $0xb8] sm:$0xff] %vm789, %v4877
        %4910 = vst.msk [vmem:[#allocation3 + $0xc0] sm:$0xff] %vm789, %v4878
        %4911 = vst.msk [vmem:[#allocation3 + $0xc8] sm:$0xff] %vm789, %v4879
        %4912 = vst.msk [vmem:[#allocation3 + $0xd0] sm:$0xff] %vm789, %v4880
        %4913 = vst.msk [vmem:[#allocation3 + $0xd8] sm:$0xff] %vm789, %v4881
        %4914 = vst.msk [vmem:[#allocation3 + $0xe0] sm:$0xff] %vm789, %v4882
        %4915 = vst.msk [vmem:[#allocation3 + $0xe8] sm:$0xff] %vm789, %v4883
        %4916 = vst.msk [vmem:[#allocation3 + $0xf0] sm:$0xff] %vm789, %v4884
        %4917 = vst.msk [vmem:[#allocation3 + $0xf8] sm:$0xff] %vm789, %v4885
        %v4918 = vld [vmem:[#allocation3] sm:$0xff]
        %v4919 = vld [vmem:[#allocation3 + $0x8] sm:$0xff]
        %v4920 = vld [vmem:[#allocation3 + $0x10] sm:$0xff]
        %v4921 = vld [vmem:[#allocation3 + $0x18] sm:$0xff]
        %v4922 = vld [vmem:[#allocation3 + $0x20] sm:$0xff]
        %v4923 = vld [vmem:[#allocation3 + $0x28] sm:$0xff]
        %v4924 = vld [vmem:[#allocation3 + $0x30] sm:$0xff]
        %v4925 = vld [vmem:[#allocation3 + $0x38] sm:$0xff]
        %v4926 = vld [vmem:[#allocation3 + $0x40] sm:$0xff]
        %v4927 = vld [vmem:[#allocation3 + $0x48] sm:$0xff]
        %v4928 = vld [vmem:[#allocation3 + $0x50] sm:$0xff]
        %v4929 = vld [vmem:[#allocation3 + $0x58] sm:$0xff]
        %v4930 = vld [vmem:[#allocation3 + $0x60] sm:$0xff]
        %v4931 = vld [vmem:[#allocation3 + $0x68] sm:$0xff]
        %v4932 = vld [vmem:[#allocation3 + $0x70] sm:$0xff]
        %v4933 = vld [vmem:[#allocation3 + $0x78] sm:$0xff]
        %v4934 = vld [vmem:[#allocation3 + $0x80] sm:$0xff]
        %v4935 = vld [vmem:[#allocation3 + $0x88] sm:$0xff]
        %v4936 = vld [vmem:[#allocation3 + $0x90] sm:$0xff]
        %v4937 = vld [vmem:[#allocation3 + $0x98] sm:$0xff]
        %v4938 = vld [vmem:[#allocation3 + $0xa0] sm:$0xff]
        %v4939 = vld [vmem:[#allocation3 + $0xa8] sm:$0xff]
        %v4940 = vld [vmem:[#allocation3 + $0xb0] sm:$0xff]
        %v4941 = vld [vmem:[#allocation3 + $0xb8] sm:$0xff]
        %v4942 = vld [vmem:[#allocation3 + $0xc0] sm:$0xff]
        %v4943 = vld [vmem:[#allocation3 + $0xc8] sm:$0xff]
        %v4944 = vld [vmem:[#allocation3 + $0xd0] sm:$0xff]
        %v4945 = vld [vmem:[#allocation3 + $0xd8] sm:$0xff]
        %v4946 = vld [vmem:[#allocation3 + $0xe0] sm:$0xff]
        %v4947 = vld [vmem:[#allocation3 + $0xe8] sm:$0xff]
        %v4948 = vld [vmem:[#allocation3 + $0xf0] sm:$0xff]
        %v4949 = vld [vmem:[#allocation3 + $0xf8] sm:$0xff]
        %v4950 = vld [vmem:[%s5] sm:$0x1]
        %v4952 = vlaneseq
        %v4953 = vshrl.u32 %v4952, 7
        %v4954 = vsub.s32 0, %v4953
        %v4955 = vrot.slane %v4950, %v4954
        %v4957 = vmul.f32 %v4918, %v4955
        %v4958 = vmul.f32 %v4919, %v4955
        %v4959 = vmul.f32 %v4920, %v4955
        %v4960 = vmul.f32 %v4921, %v4955
        %v4961 = vmul.f32 %v4922, %v4955
        %v4962 = vmul.f32 %v4923, %v4955
        %v4963 = vmul.f32 %v4924, %v4955
        %v4964 = vmul.f32 %v4925, %v4955
        %v4965 = vmul.f32 %v4926, %v4955
        %v4966 = vmul.f32 %v4927, %v4955
        %v4967 = vmul.f32 %v4928, %v4955
        %v4968 = vmul.f32 %v4929, %v4955
        %v4969 = vmul.f32 %v4930, %v4955
        %v4970 = vmul.f32 %v4931, %v4955
        %v4971 = vmul.f32 %v4932, %v4955
        %v4972 = vmul.f32 %v4933, %v4955
        %v4973 = vmul.f32 %v4934, %v4955
        %v4974 = vmul.f32 %v4935, %v4955
        %v4975 = vmul.f32 %v4936, %v4955
        %v4976 = vmul.f32 %v4937, %v4955
        %v4977 = vmul.f32 %v4938, %v4955
        %v4978 = vmul.f32 %v4939, %v4955
        %v4979 = vmul.f32 %v4940, %v4955
        %v4980 = vmul.f32 %v4941, %v4955
        %v4981 = vmul.f32 %v4942, %v4955
        %v4982 = vmul.f32 %v4943, %v4955
        %v4983 = vmul.f32 %v4944, %v4955
        %v4984 = vmul.f32 %v4945, %v4955
        %v4985 = vmul.f32 %v4946, %v4955
        %v4986 = vmul.f32 %v4947, %v4955
        %v4987 = vmul.f32 %v4948, %v4955
        %v4988 = vmul.f32 %v4949, %v4955
        %v4989 = vld [vmem:[%s6] sm:$0x1]
        %v4991 = vlaneseq
        %v4992 = vshrl.u32 %v4991, 7
        %v4993 = vsub.s32 0, %v4992
        %v4994 = vrot.slane %v4989, %v4993
        %v4996 = vadd.f32 %v4957, %v4994
        %v4997 = vadd.f32 %v4958, %v4994
        %v4998 = vadd.f32 %v4959, %v4994
        %v4999 = vadd.f32 %v4960, %v4994
        %v5000 = vadd.f32 %v4961, %v4994
        %v5001 = vadd.f32 %v4962, %v4994
        %v5002 = vadd.f32 %v4963, %v4994
        %v5003 = vadd.f32 %v4964, %v4994
        %v5004 = vadd.f32 %v4965, %v4994
        %v5005 = vadd.f32 %v4966, %v4994
        %v5006 = vadd.f32 %v4967, %v4994
        %v5007 = vadd.f32 %v4968, %v4994
        %v5008 = vadd.f32 %v4969, %v4994
        %v5009 = vadd.f32 %v4970, %v4994
        %v5010 = vadd.f32 %v4971, %v4994
        %v5011 = vadd.f32 %v4972, %v4994
        %v5012 = vadd.f32 %v4973, %v4994
        %v5013 = vadd.f32 %v4974, %v4994
        %v5014 = vadd.f32 %v4975, %v4994
        %v5015 = vadd.f32 %v4976, %v4994
        %v5016 = vadd.f32 %v4977, %v4994
        %v5017 = vadd.f32 %v4978, %v4994
        %v5018 = vadd.f32 %v4979, %v4994
        %v5019 = vadd.f32 %v4980, %v4994
        %v5020 = vadd.f32 %v4981, %v4994
        %v5021 = vadd.f32 %v4982, %v4994
        %v5022 = vadd.f32 %v4983, %v4994
        %v5023 = vadd.f32 %v4984, %v4994
        %v5024 = vadd.f32 %v4985, %v4994
        %v5025 = vadd.f32 %v4986, %v4994
        %v5026 = vadd.f32 %v4987, %v4994
        %v5027 = vadd.f32 %v4988, %v4994
        %v5028 = vmax.f32 %v4996, 0.0
        %v5029 = vmax.f32 %v4997, 0.0
        %v5030 = vmax.f32 %v4998, 0.0
        %v5031 = vmax.f32 %v4999, 0.0
        %v5032 = vmax.f32 %v5000, 0.0
        %v5033 = vmax.f32 %v5001, 0.0
        %v5034 = vmax.f32 %v5002, 0.0
        %v5035 = vmax.f32 %v5003, 0.0
        %v5036 = vmax.f32 %v5004, 0.0
        %v5037 = vmax.f32 %v5005, 0.0
        %v5038 = vmax.f32 %v5006, 0.0
        %v5039 = vmax.f32 %v5007, 0.0
        %v5040 = vmax.f32 %v5008, 0.0
        %v5041 = vmax.f32 %v5009, 0.0
        %v5042 = vmax.f32 %v5010, 0.0
        %v5043 = vmax.f32 %v5011, 0.0
        %v5044 = vmax.f32 %v5012, 0.0
        %v5045 = vmax.f32 %v5013, 0.0
        %v5046 = vmax.f32 %v5014, 0.0
        %v5047 = vmax.f32 %v5015, 0.0
        %v5048 = vmax.f32 %v5016, 0.0
        %v5049 = vmax.f32 %v5017, 0.0
        %v5050 = vmax.f32 %v5018, 0.0
        %v5051 = vmax.f32 %v5019, 0.0
        %v5052 = vmax.f32 %v5020, 0.0
        %v5053 = vmax.f32 %v5021, 0.0
        %v5054 = vmax.f32 %v5022, 0.0
        %v5055 = vmax.f32 %v5023, 0.0
        %v5056 = vmax.f32 %v5024, 0.0
        %v5057 = vmax.f32 %v5025, 0.0
        %v5058 = vmax.f32 %v5026, 0.0
        %v5059 = vmax.f32 %v5027, 0.0
        %v5060 = vld [vmem:[%s7] sm:$0xff]
        %v5061 = vld [vmem:[%s7 + $0x8] sm:$0xff]
        %v5062 = vld [vmem:[%s7 + $0x10] sm:$0xff]
        %v5063 = vld [vmem:[%s7 + $0x18] sm:$0xff]
        %v5064 = vld [vmem:[%s7 + $0x20] sm:$0xff]
        %v5065 = vld [vmem:[%s7 + $0x28] sm:$0xff]
        %v5066 = vld [vmem:[%s7 + $0x30] sm:$0xff]
        %v5067 = vld [vmem:[%s7 + $0x38] sm:$0xff]
        %v5068 = vld [vmem:[%s7 + $0x40] sm:$0xff]
        %v5069 = vld [vmem:[%s7 + $0x48] sm:$0xff]
        %v5070 = vld [vmem:[%s7 + $0x50] sm:$0xff]
        %v5071 = vld [vmem:[%s7 + $0x58] sm:$0xff]
        %v5072 = vld [vmem:[%s7 + $0x60] sm:$0xff]
        %v5073 = vld [vmem:[%s7 + $0x68] sm:$0xff]
        %v5074 = vld [vmem:[%s7 + $0x70] sm:$0xff]
        %v5075 = vld [vmem:[%s7 + $0x78] sm:$0xff]
        %v5077 = vsel %vm789, %v5028, 0
        %v5080 = vsel %vm789, %v5029, 0
        %v5083 = vsel %vm789, %v5030, 0
        %v5086 = vsel %vm789, %v5031, 0
        %v5089 = vsel %vm789, %v5032, 0
        %v5092 = vsel %vm789, %v5033, 0
        %v5095 = vsel %vm789, %v5034, 0
        %v5098 = vsel %vm789, %v5035, 0
        %v5101 = vsel %vm789, %v5036, 0
        %v5104 = vsel %vm789, %v5037, 0
        %v5107 = vsel %vm789, %v5038, 0
        %v5110 = vsel %vm789, %v5039, 0
        %v5113 = vsel %vm789, %v5040, 0
        %v5116 = vsel %vm789, %v5041, 0
        %v5119 = vsel %vm789, %v5042, 0
        %v5122 = vsel %vm789, %v5043, 0
        %v5125 = vsel %vm789, %v5044, 0
        %v5128 = vsel %vm789, %v5045, 0
        %v5131 = vsel %vm789, %v5046, 0
        %v5134 = vsel %vm789, %v5047, 0
        %v5137 = vsel %vm789, %v5048, 0
        %v5140 = vsel %vm789, %v5049, 0
        %v5143 = vsel %vm789, %v5050, 0
        %v5146 = vsel %vm789, %v5051, 0
        %v5149 = vsel %vm789, %v5052, 0
        %v5152 = vsel %vm789, %v5053, 0
        %v5155 = vsel %vm789, %v5054, 0
        %v5158 = vsel %vm789, %v5055, 0
        %v5161 = vsel %vm789, %v5056, 0
        %v5164 = vsel %vm789, %v5057, 0
        %v5167 = vsel %vm789, %v5058, 0
        %v5170 = vsel %vm789, %v5059, 0
        %5172 = vmatprep.subr.mxu0 %v5061
        %5173 = vmatpush1.msra.mxu0 %v5060
        %5174 = vmatprep.subr.mxu0 %v5063
        %5175 = vmatpush1.msra.mxu0 %v5062
        %5176 = vmatprep.subr.mxu0 %v5065
        %5177 = vmatpush1.msra.mxu0 %v5064
        %5178 = vmatprep.subr.mxu0 %v5067
        %5179 = vmatpush1.msra.mxu0 %v5066
        %5180 = vmatprep.subr.mxu0 %v5069
        %5181 = vmatpush1.msra.mxu0 %v5068
        %5182 = vmatprep.subr.mxu0 %v5071
        %5183 = vmatpush1.msra.mxu0 %v5070
        %5184 = vmatprep.subr.mxu0 %v5073
        %5185 = vmatpush1.msra.mxu0 %v5072
        %5186 = vmatprep.subr.mxu0 %v5075
        %5187 = vmatpush1.msra.mxu0 %v5074
        %5188 = vmatprep.subr.mxu0 0.0
        %5189 = vmatpush1.msra.mxu0 0.0
        %5190 = vmatprep.subr.mxu0 0.0
        %5191 = vmatpush1.msra.mxu0 0.0
        %5192 = vmatprep.subr.mxu0 0.0
        %5193 = vmatpush1.msra.mxu0 0.0
        %5194 = vmatprep.subr.mxu0 0.0
        %5195 = vmatpush1.msra.mxu0 0.0
        %5196 = vmatprep.subr.mxu0 0.0
        %5197 = vmatpush1.msra.mxu0 0.0
        %5198 = vmatprep.subr.mxu0 0.0
        %5199 = vmatpush1.msra.mxu0 0.0
        %5200 = vmatprep.subr.mxu0 0.0
        %5201 = vmatpush1.msra.mxu0 0.0
        %5202 = vmatprep.subr.mxu0 0.0
        %5203 = vmatpush1.msra.mxu0 0.0
        %5204 = vmatprep.subr.mxu0 0.0
        %5205 = vmatpush1.msra.mxu0 0.0
        %5206 = vmatprep.subr.mxu0 0.0
        %5207 = vmatpush1.msra.mxu0 0.0
        %5208 = vmatprep.subr.mxu0 0.0
        %5209 = vmatpush1.msra.mxu0 0.0
        %5210 = vmatprep.subr.mxu0 0.0
        %5211 = vmatpush1.msra.mxu0 0.0
        %5212 = vmatprep.subr.mxu0 0.0
        %5213 = vmatpush1.msra.mxu0 0.0
        %5214 = vmatprep.subr.mxu0 0.0
        %5215 = vmatpush1.msra.mxu0 0.0
        %5216 = vmatprep.subr.mxu0 0.0
        %5217 = vmatpush1.msra.mxu0 0.0
        %5218 = vmatprep.subr.mxu0 0.0
        %5219 = vmatpush1.msra.mxu0 0.0
        %5220 = vmatprep.subr.mxu0 0.0
        %5221 = vmatpush1.msra.mxu0 0.0
        %5222 = vmatprep.subr.mxu0 0.0
        %5223 = vmatpush1.msra.mxu0 0.0
        %5224 = vmatprep.subr.mxu0 0.0
        %5225 = vmatpush1.msra.mxu0 0.0
        %5226 = vmatprep.subr.mxu0 0.0
        %5227 = vmatpush1.msra.mxu0 0.0
        %5228 = vmatprep.subr.mxu0 0.0
        %5229 = vmatpush1.msra.mxu0 0.0
        %5230 = vmatprep.subr.mxu0 0.0
        %5231 = vmatpush1.msra.mxu0 0.0
        %5232 = vmatprep.subr.mxu0 0.0
        %5233 = vmatpush1.msra.mxu0 0.0
        %5234 = vmatprep.subr.mxu0 0.0
        %5235 = vmatpush1.msra.mxu0 0.0
        %5236 = vmatprep.mubr.f32.mxu0 0.0
        %5237 = vmatmul.mubr.f32.gmra.mrb[0].mxu0 %v5077
        %v5238 = vpop.f32.mrb[0].mxu0
        %v5239 = vadd.f32 0.0, %v5238
        %v5240 = vpop.f32.mrb[0].mxu0
        %v5241 = vadd.f32 0.0, %v5240
        %5242 = vmatprep.mubr.f32.mxu0 0.0
        %5243 = vmatmul.mubr.f32.gmra.mrb[0].mxu0 %v5080
        %v5244 = vpop.f32.mrb[0].mxu0
        %v5245 = vadd.f32 0.0, %v5244
        %v5246 = vpop.f32.mrb[0].mxu0
        %v5247 = vadd.f32 0.0, %v5246
        %5248 = vmatprep.mubr.f32.mxu0 0.0
        %5249 = vmatmul.mubr.f32.gmra.mrb[0].mxu0 %v5083
        %v5250 = vpop.f32.mrb[0].mxu0
        %v5251 = vadd.f32 0.0, %v5250
        %v5252 = vpop.f32.mrb[0].mxu0
        %v5253 = vadd.f32 0.0, %v5252
        %5254 = vmatprep.mubr.f32.mxu0 0.0
        %5255 = vmatmul.mubr.f32.gmra.mrb[0].mxu0 %v5086
        %v5256 = vpop.f32.mrb[0].mxu0
        %v5257 = vadd.f32 0.0, %v5256
        %v5258 = vpop.f32.mrb[0].mxu0
        %v5259 = vadd.f32 0.0, %v5258
        %5260 = vmatprep.mubr.f32.mxu0 0.0
        %5261 = vmatmul.mubr.f32.gmra.mrb[0].mxu0 %v5089
        %v5262 = vpop.f32.mrb[0].mxu0
        %v5263 = vadd.f32 0.0, %v5262
        %v5264 = vpop.f32.mrb[0].mxu0
        %v5265 = vadd.f32 0.0, %v5264
        %5266 = vmatprep.mubr.f32.mxu0 0.0
        %5267 = vmatmul.mubr.f32.gmra.mrb[0].mxu0 %v5092
        %v5268 = vpop.f32.mrb[0].mxu0
        %v5269 = vadd.f32 0.0, %v5268
        %v5270 = vpop.f32.mrb[0].mxu0
        %v5271 = vadd.f32 0.0, %v5270
        %5272 = vmatprep.mubr.f32.mxu0 0.0
        %5273 = vmatmul.mubr.f32.gmra.mrb[0].mxu0 %v5095
        %v5274 = vpop.f32.mrb[0].mxu0
        %v5275 = vadd.f32 0.0, %v5274
        %v5276 = vpop.f32.mrb[0].mxu0
        %v5277 = vadd.f32 0.0, %v5276
        %5278 = vmatprep.mubr.f32.mxu0 0.0
        %5279 = vmatmul.mubr.f32.gmra.mrb[0].mxu0 %v5098
        %v5280 = vpop.f32.mrb[0].mxu0
        %v5281 = vadd.f32 0.0, %v5280
        %v5282 = vpop.f32.mrb[0].mxu0
        %v5283 = vadd.f32 0.0, %v5282
        %5284 = vmatprep.mubr.f32.mxu0 0.0
        %5285 = vmatmul.mubr.f32.gmra.mrb[0].mxu0 %v5101
        %v5286 = vpop.f32.mrb[0].mxu0
        %v5287 = vadd.f32 0.0, %v5286
        %v5288 = vpop.f32.mrb[0].mxu0
        %v5289 = vadd.f32 0.0, %v5288
        %5290 = vmatprep.mubr.f32.mxu0 0.0
        %5291 = vmatmul.mubr.f32.gmra.mrb[0].mxu0 %v5104
        %v5292 = vpop.f32.mrb[0].mxu0
        %v5293 = vadd.f32 0.0, %v5292
        %v5294 = vpop.f32.mrb[0].mxu0
        %v5295 = vadd.f32 0.0, %v5294
        %5296 = vmatprep.mubr.f32.mxu0 0.0
        %5297 = vmatmul.mubr.f32.gmra.mrb[0].mxu0 %v5107
        %v5298 = vpop.f32.mrb[0].mxu0
        %v5299 = vadd.f32 0.0, %v5298
        %v5300 = vpop.f32.mrb[0].mxu0
        %v5301 = vadd.f32 0.0, %v5300
        %5302 = vmatprep.mubr.f32.mxu0 0.0
        %5303 = vmatmul.mubr.f32.gmra.mrb[0].mxu0 %v5110
        %v5304 = vpop.f32.mrb[0].mxu0
        %v5305 = vadd.f32 0.0, %v5304
        %v5306 = vpop.f32.mrb[0].mxu0
        %v5307 = vadd.f32 0.0, %v5306
        %5308 = vmatprep.mubr.f32.mxu0 0.0
        %5309 = vmatmul.mubr.f32.gmra.mrb[0].mxu0 %v5113
        %v5310 = vpop.f32.mrb[0].mxu0
        %v5311 = vadd.f32 0.0, %v5310
        %v5312 = vpop.f32.mrb[0].mxu0
        %v5313 = vadd.f32 0.0, %v5312
        %5314 = vmatprep.mubr.f32.mxu0 0.0
        %5315 = vmatmul.mubr.f32.gmra.mrb[0].mxu0 %v5116
        %v5316 = vpop.f32.mrb[0].mxu0
        %v5317 = vadd.f32 0.0, %v5316
        %v5318 = vpop.f32.mrb[0].mxu0
        %v5319 = vadd.f32 0.0, %v5318
        %5320 = vmatprep.mubr.f32.mxu0 0.0
        %5321 = vmatmul.mubr.f32.gmra.mrb[0].mxu0 %v5119
        %v5322 = vpop.f32.mrb[0].mxu0
        %v5323 = vadd.f32 0.0, %v5322
        %v5324 = vpop.f32.mrb[0].mxu0
        %v5325 = vadd.f32 0.0, %v5324
        %5326 = vmatprep.mubr.f32.mxu0 0.0
        %5327 = vmatmul.mubr.f32.gmra.mrb[0].mxu0 %v5122
        %v5328 = vpop.f32.mrb[0].mxu0
        %v5329 = vadd.f32 0.0, %v5328
        %v5330 = vpop.f32.mrb[0].mxu0
        %v5331 = vadd.f32 0.0, %v5330
        %5332 = vmatprep.mubr.f32.mxu0 0.0
        %5333 = vmatmul.mubr.f32.gmra.mrb[0].mxu0 %v5125
        %v5334 = vpop.f32.mrb[0].mxu0
        %v5335 = vadd.f32 0.0, %v5334
        %v5336 = vpop.f32.mrb[0].mxu0
        %v5337 = vadd.f32 0.0, %v5336
        %5338 = vmatprep.mubr.f32.mxu0 0.0
        %5339 = vmatmul.mubr.f32.gmra.mrb[0].mxu0 %v5128
        %v5340 = vpop.f32.mrb[0].mxu0
        %v5341 = vadd.f32 0.0, %v5340
        %v5342 = vpop.f32.mrb[0].mxu0
        %v5343 = vadd.f32 0.0, %v5342
        %5344 = vmatprep.mubr.f32.mxu0 0.0
        %5345 = vmatmul.mubr.f32.gmra.mrb[0].mxu0 %v5131
        %v5346 = vpop.f32.mrb[0].mxu0
        %v5347 = vadd.f32 0.0, %v5346
        %v5348 = vpop.f32.mrb[0].mxu0
        %v5349 = vadd.f32 0.0, %v5348
        %5350 = vmatprep.mubr.f32.mxu0 0.0
        %5351 = vmatmul.mubr.f32.gmra.mrb[0].mxu0 %v5134
        %v5352 = vpop.f32.mrb[0].mxu0
        %v5353 = vadd.f32 0.0, %v5352
        %v5354 = vpop.f32.mrb[0].mxu0
        %v5355 = vadd.f32 0.0, %v5354
        %5356 = vmatprep.mubr.f32.mxu0 0.0
        %5357 = vmatmul.mubr.f32.gmra.mrb[0].mxu0 %v5137
        %v5358 = vpop.f32.mrb[0].mxu0
        %v5359 = vadd.f32 0.0, %v5358
        %v5360 = vpop.f32.mrb[0].mxu0
        %v5361 = vadd.f32 0.0, %v5360
        %5362 = vmatprep.mubr.f32.mxu0 0.0
        %5363 = vmatmul.mubr.f32.gmra.mrb[0].mxu0 %v5140
        %v5364 = vpop.f32.mrb[0].mxu0
        %v5365 = vadd.f32 0.0, %v5364
        %v5366 = vpop.f32.mrb[0].mxu0
        %v5367 = vadd.f32 0.0, %v5366
        %5368 = vmatprep.mubr.f32.mxu0 0.0
        %5369 = vmatmul.mubr.f32.gmra.mrb[0].mxu0 %v5143
        %v5370 = vpop.f32.mrb[0].mxu0
        %v5371 = vadd.f32 0.0, %v5370
        %v5372 = vpop.f32.mrb[0].mxu0
        %v5373 = vadd.f32 0.0, %v5372
        %5374 = vmatprep.mubr.f32.mxu0 0.0
        %5375 = vmatmul.mubr.f32.gmra.mrb[0].mxu0 %v5146
        %v5376 = vpop.f32.mrb[0].mxu0
        %v5377 = vadd.f32 0.0, %v5376
        %v5378 = vpop.f32.mrb[0].mxu0
        %v5379 = vadd.f32 0.0, %v5378
        %5380 = vmatprep.mubr.f32.mxu0 0.0
        %5381 = vmatmul.mubr.f32.gmra.mrb[0].mxu0 %v5149
        %v5382 = vpop.f32.mrb[0].mxu0
        %v5383 = vadd.f32 0.0, %v5382
        %v5384 = vpop.f32.mrb[0].mxu0
        %v5385 = vadd.f32 0.0, %v5384
        %5386 = vmatprep.mubr.f32.mxu0 0.0
        %5387 = vmatmul.mubr.f32.gmra.mrb[0].mxu0 %v5152
        %v5388 = vpop.f32.mrb[0].mxu0
        %v5389 = vadd.f32 0.0, %v5388
        %v5390 = vpop.f32.mrb[0].mxu0
        %v5391 = vadd.f32 0.0, %v5390
        %5392 = vmatprep.mubr.f32.mxu0 0.0
        %5393 = vmatmul.mubr.f32.gmra.mrb[0].mxu0 %v5155
        %v5394 = vpop.f32.mrb[0].mxu0
        %v5395 = vadd.f32 0.0, %v5394
        %v5396 = vpop.f32.mrb[0].mxu0
        %v5397 = vadd.f32 0.0, %v5396
        %5398 = vmatprep.mubr.f32.mxu0 0.0
        %5399 = vmatmul.mubr.f32.gmra.mrb[0].mxu0 %v5158
        %v5400 = vpop.f32.mrb[0].mxu0
        %v5401 = vadd.f32 0.0, %v5400
        %v5402 = vpop.f32.mrb[0].mxu0
        %v5403 = vadd.f32 0.0, %v5402
        %5404 = vmatprep.mubr.f32.mxu0 0.0
        %5405 = vmatmul.mubr.f32.gmra.mrb[0].mxu0 %v5161
        %v5406 = vpop.f32.mrb[0].mxu0
        %v5407 = vadd.f32 0.0, %v5406
        %v5408 = vpop.f32.mrb[0].mxu0
        %v5409 = vadd.f32 0.0, %v5408
        %5410 = vmatprep.mubr.f32.mxu0 0.0
        %5411 = vmatmul.mubr.f32.gmra.mrb[0].mxu0 %v5164
        %v5412 = vpop.f32.mrb[0].mxu0
        %v5413 = vadd.f32 0.0, %v5412
        %v5414 = vpop.f32.mrb[0].mxu0
        %v5415 = vadd.f32 0.0, %v5414
        %5416 = vmatprep.mubr.f32.mxu0 0.0
        %5417 = vmatmul.mubr.f32.gmra.mrb[0].mxu0 %v5167
        %v5418 = vpop.f32.mrb[0].mxu0
        %v5419 = vadd.f32 0.0, %v5418
        %v5420 = vpop.f32.mrb[0].mxu0
        %v5421 = vadd.f32 0.0, %v5420
        %5422 = vmatprep.mubr.f32.mxu0 0.0
        %5423 = vmatmul.mubr.f32.gmra.mrb[0].mxu0 %v5170
        %v5424 = vpop.f32.mrb[0].mxu0
        %v5425 = vadd.f32 0.0, %v5424
        %v5426 = vpop.f32.mrb[0].mxu0
        %v5427 = vadd.f32 0.0, %v5426
        %5428 = vdwg.mxu0
        %v5429 = vld [vmem:[%s8] sm:$0x3]
        %v5431 = vlaneseq
        %v5432 = vshrl.u32 %v5431, 7
        %v5433 = vsub.s32 0, %v5432
        %v5434 = vrot.slane %v5429, %v5433
        %v5435 = vlaneseq
        %v5436 = vshrl.u32 %v5435, 7
        %v5437 = vsub.s32 1, %v5436
        %v5438 = vrot.slane %v5429, %v5437
        %v5441 = vmul.f32 %v5239, %v5434
        %v5442 = vmul.f32 %v5241, %v5438
        %v5443 = vmul.f32 %v5245, %v5434
        %v5444 = vmul.f32 %v5247, %v5438
        %v5445 = vmul.f32 %v5251, %v5434
        %v5446 = vmul.f32 %v5253, %v5438
        %v5447 = vmul.f32 %v5257, %v5434
        %v5448 = vmul.f32 %v5259, %v5438
        %v5449 = vmul.f32 %v5263, %v5434
        %v5450 = vmul.f32 %v5265, %v5438
        %v5451 = vmul.f32 %v5269, %v5434
        %v5452 = vmul.f32 %v5271, %v5438
        %v5453 = vmul.f32 %v5275, %v5434
        %v5454 = vmul.f32 %v5277, %v5438
        %v5455 = vmul.f32 %v5281, %v5434
        %v5456 = vmul.f32 %v5283, %v5438
        %v5457 = vmul.f32 %v5287, %v5434
        %v5458 = vmul.f32 %v5289, %v5438
        %v5459 = vmul.f32 %v5293, %v5434
        %v5460 = vmul.f32 %v5295, %v5438
        %v5461 = vmul.f32 %v5299, %v5434
        %v5462 = vmul.f32 %v5301, %v5438
        %v5463 = vmul.f32 %v5305, %v5434
        %v5464 = vmul.f32 %v5307, %v5438
        %v5465 = vmul.f32 %v5311, %v5434
        %v5466 = vmul.f32 %v5313, %v5438
        %v5467 = vmul.f32 %v5317, %v5434
        %v5468 = vmul.f32 %v5319, %v5438
        %v5469 = vmul.f32 %v5323, %v5434
        %v5470 = vmul.f32 %v5325, %v5438
        %v5471 = vmul.f32 %v5329, %v5434
        %v5472 = vmul.f32 %v5331, %v5438
        %v5473 = vmul.f32 %v5335, %v5434
        %v5474 = vmul.f32 %v5337, %v5438
        %v5475 = vmul.f32 %v5341, %v5434
        %v5476 = vmul.f32 %v5343, %v5438
        %v5477 = vmul.f32 %v5347, %v5434
        %v5478 = vmul.f32 %v5349, %v5438
        %v5479 = vmul.f32 %v5353, %v5434
        %v5480 = vmul.f32 %v5355, %v5438
        %v5481 = vmul.f32 %v5359, %v5434
        %v5482 = vmul.f32 %v5361, %v5438
        %v5483 = vmul.f32 %v5365, %v5434
        %v5484 = vmul.f32 %v5367, %v5438
        %v5485 = vmul.f32 %v5371, %v5434
        %v5486 = vmul.f32 %v5373, %v5438
        %v5487 = vmul.f32 %v5377, %v5434
        %v5488 = vmul.f32 %v5379, %v5438
        %v5489 = vmul.f32 %v5383, %v5434
        %v5490 = vmul.f32 %v5385, %v5438
        %v5491 = vmul.f32 %v5389, %v5434
        %v5492 = vmul.f32 %v5391, %v5438
        %v5493 = vmul.f32 %v5395, %v5434
        %v5494 = vmul.f32 %v5397, %v5438
        %v5495 = vmul.f32 %v5401, %v5434
        %v5496 = vmul.f32 %v5403, %v5438
        %v5497 = vmul.f32 %v5407, %v5434
        %v5498 = vmul.f32 %v5409, %v5438
        %v5499 = vmul.f32 %v5413, %v5434
        %v5500 = vmul.f32 %v5415, %v5438
        %v5501 = vmul.f32 %v5419, %v5434
        %v5502 = vmul.f32 %v5421, %v5438
        %v5503 = vmul.f32 %v5425, %v5434
        %v5504 = vmul.f32 %v5427, %v5438
        %v5505 = vld [vmem:[%s9] sm:$0x3]
        %v5507 = vlaneseq
        %v5508 = vshrl.u32 %v5507, 7
        %v5509 = vsub.s32 0, %v5508
        %v5510 = vrot.slane %v5505, %v5509
        %v5511 = vlaneseq
        %v5512 = vshrl.u32 %v5511, 7
        %v5513 = vsub.s32 1, %v5512
        %v5514 = vrot.slane %v5505, %v5513
        %v5517 = vadd.f32 %v5441, %v5510
        %v5518 = vadd.f32 %v5442, %v5514
        %v5519 = vadd.f32 %v5443, %v5510
        %v5520 = vadd.f32 %v5444, %v5514
        %v5521 = vadd.f32 %v5445, %v5510
        %v5522 = vadd.f32 %v5446, %v5514
        %v5523 = vadd.f32 %v5447, %v5510
        %v5524 = vadd.f32 %v5448, %v5514
        %v5525 = vadd.f32 %v5449, %v5510
        %v5526 = vadd.f32 %v5450, %v5514
        %v5527 = vadd.f32 %v5451, %v5510
        %v5528 = vadd.f32 %v5452, %v5514
        %v5529 = vadd.f32 %v5453, %v5510
        %v5530 = vadd.f32 %v5454, %v5514
        %v5531 = vadd.f32 %v5455, %v5510
        %v5532 = vadd.f32 %v5456, %v5514
        %v5533 = vadd.f32 %v5457, %v5510
        %v5534 = vadd.f32 %v5458, %v5514
        %v5535 = vadd.f32 %v5459, %v5510
        %v5536 = vadd.f32 %v5460, %v5514
        %v5537 = vadd.f32 %v5461, %v5510
        %v5538 = vadd.f32 %v5462, %v5514
        %v5539 = vadd.f32 %v5463, %v5510
        %v5540 = vadd.f32 %v5464, %v5514
        %v5541 = vadd.f32 %v5465, %v5510
        %v5542 = vadd.f32 %v5466, %v5514
        %v5543 = vadd.f32 %v5467, %v5510
        %v5544 = vadd.f32 %v5468, %v5514
        %v5545 = vadd.f32 %v5469, %v5510
        %v5546 = vadd.f32 %v5470, %v5514
        %v5547 = vadd.f32 %v5471, %v5510
        %v5548 = vadd.f32 %v5472, %v5514
        %v5549 = vadd.f32 %v5473, %v5510
        %v5550 = vadd.f32 %v5474, %v5514
        %v5551 = vadd.f32 %v5475, %v5510
        %v5552 = vadd.f32 %v5476, %v5514
        %v5553 = vadd.f32 %v5477, %v5510
        %v5554 = vadd.f32 %v5478, %v5514
        %v5555 = vadd.f32 %v5479, %v5510
        %v5556 = vadd.f32 %v5480, %v5514
        %v5557 = vadd.f32 %v5481, %v5510
        %v5558 = vadd.f32 %v5482, %v5514
        %v5559 = vadd.f32 %v5483, %v5510
        %v5560 = vadd.f32 %v5484, %v5514
        %v5561 = vadd.f32 %v5485, %v5510
        %v5562 = vadd.f32 %v5486, %v5514
        %v5563 = vadd.f32 %v5487, %v5510
        %v5564 = vadd.f32 %v5488, %v5514
        %v5565 = vadd.f32 %v5489, %v5510
        %v5566 = vadd.f32 %v5490, %v5514
        %v5567 = vadd.f32 %v5491, %v5510
        %v5568 = vadd.f32 %v5492, %v5514
        %v5569 = vadd.f32 %v5493, %v5510
        %v5570 = vadd.f32 %v5494, %v5514
        %v5571 = vadd.f32 %v5495, %v5510
        %v5572 = vadd.f32 %v5496, %v5514
        %v5573 = vadd.f32 %v5497, %v5510
        %v5574 = vadd.f32 %v5498, %v5514
        %v5575 = vadd.f32 %v5499, %v5510
        %v5576 = vadd.f32 %v5500, %v5514
        %v5577 = vadd.f32 %v5501, %v5510
        %v5578 = vadd.f32 %v5502, %v5514
        %v5579 = vadd.f32 %v5503, %v5510
        %v5580 = vadd.f32 %v5504, %v5514
        %v5581 = vld [vmem:[%s357] sm:$0xff]
        %v5582 = vld [vmem:[%s357 + $0x8] sm:$0xff]
        %v5583 = vld [vmem:[%s357 + $0x10] sm:$0xff]
        %v5584 = vld [vmem:[%s357 + $0x18] sm:$0xff]
        %v5585 = vld [vmem:[%s357 + $0x20] sm:$0xff]
        %v5586 = vld [vmem:[%s357 + $0x28] sm:$0xff]
        %v5587 = vld [vmem:[%s357 + $0x30] sm:$0xff]
        %v5588 = vld [vmem:[%s357 + $0x38] sm:$0xff]
        %v5589 = vld [vmem:[%s357 + $0x40] sm:$0xff]
        %v5590 = vld [vmem:[%s357 + $0x48] sm:$0xff]
        %v5591 = vld [vmem:[%s357 + $0x50] sm:$0xff]
        %v5592 = vld [vmem:[%s357 + $0x58] sm:$0xff]
        %v5593 = vld [vmem:[%s357 + $0x60] sm:$0xff]
        %v5594 = vld [vmem:[%s357 + $0x68] sm:$0xff]
        %v5595 = vld [vmem:[%s357 + $0x70] sm:$0xff]
        %v5596 = vld [vmem:[%s357 + $0x78] sm:$0xff]
        %v5597 = vld [vmem:[%s357 + $0x80] sm:$0xff]
        %v5598 = vld [vmem:[%s357 + $0x88] sm:$0xff]
        %v5599 = vld [vmem:[%s357 + $0x90] sm:$0xff]
        %v5600 = vld [vmem:[%s357 + $0x98] sm:$0xff]
        %v5601 = vld [vmem:[%s357 + $0xa0] sm:$0xff]
        %v5602 = vld [vmem:[%s357 + $0xa8] sm:$0xff]
        %v5603 = vld [vmem:[%s357 + $0xb0] sm:$0xff]
        %v5604 = vld [vmem:[%s357 + $0xb8] sm:$0xff]
        %v5605 = vld [vmem:[%s357 + $0xc0] sm:$0xff]
        %v5606 = vld [vmem:[%s357 + $0xc8] sm:$0xff]
        %v5607 = vld [vmem:[%s357 + $0xd0] sm:$0xff]
        %v5608 = vld [vmem:[%s357 + $0xd8] sm:$0xff]
        %v5609 = vld [vmem:[%s357 + $0xe0] sm:$0xff]
        %v5610 = vld [vmem:[%s357 + $0xe8] sm:$0xff]
        %v5611 = vld [vmem:[%s357 + $0xf0] sm:$0xff]
        %v5612 = vld [vmem:[%s357 + $0xf8] sm:$0xff]
        %v5613 = vld [vmem:[%s357 + $0x100] sm:$0xff]
        %v5614 = vld [vmem:[%s357 + $0x108] sm:$0xff]
        %v5615 = vld [vmem:[%s357 + $0x110] sm:$0xff]
        %v5616 = vld [vmem:[%s357 + $0x118] sm:$0xff]
        %v5617 = vld [vmem:[%s357 + $0x120] sm:$0xff]
        %v5618 = vld [vmem:[%s357 + $0x128] sm:$0xff]
        %v5619 = vld [vmem:[%s357 + $0x130] sm:$0xff]
        %v5620 = vld [vmem:[%s357 + $0x138] sm:$0xff]
        %v5621 = vld [vmem:[%s357 + $0x140] sm:$0xff]
        %v5622 = vld [vmem:[%s357 + $0x148] sm:$0xff]
        %v5623 = vld [vmem:[%s357 + $0x150] sm:$0xff]
        %v5624 = vld [vmem:[%s357 + $0x158] sm:$0xff]
        %v5625 = vld [vmem:[%s357 + $0x160] sm:$0xff]
        %v5626 = vld [vmem:[%s357 + $0x168] sm:$0xff]
        %v5627 = vld [vmem:[%s357 + $0x170] sm:$0xff]
        %v5628 = vld [vmem:[%s357 + $0x178] sm:$0xff]
        %v5629 = vld [vmem:[%s357 + $0x180] sm:$0xff]
        %v5630 = vld [vmem:[%s357 + $0x188] sm:$0xff]
        %v5631 = vld [vmem:[%s357 + $0x190] sm:$0xff]
        %v5632 = vld [vmem:[%s357 + $0x198] sm:$0xff]
        %v5633 = vld [vmem:[%s357 + $0x1a0] sm:$0xff]
        %v5634 = vld [vmem:[%s357 + $0x1a8] sm:$0xff]
        %v5635 = vld [vmem:[%s357 + $0x1b0] sm:$0xff]
        %v5636 = vld [vmem:[%s357 + $0x1b8] sm:$0xff]
        %v5637 = vld [vmem:[%s357 + $0x1c0] sm:$0xff]
        %v5638 = vld [vmem:[%s357 + $0x1c8] sm:$0xff]
        %v5639 = vld [vmem:[%s357 + $0x1d0] sm:$0xff]
        %v5640 = vld [vmem:[%s357 + $0x1d8] sm:$0xff]
        %v5641 = vld [vmem:[%s357 + $0x1e0] sm:$0xff]
        %v5642 = vld [vmem:[%s357 + $0x1e8] sm:$0xff]
        %v5643 = vld [vmem:[%s357 + $0x1f0] sm:$0xff]
        %v5644 = vld [vmem:[%s357 + $0x1f8] sm:$0xff]
        %v5645 = vadd.f32 %v5517, %v5581
        %v5646 = vadd.f32 %v5518, %v5582
        %v5647 = vadd.f32 %v5519, %v5583
        %v5648 = vadd.f32 %v5520, %v5584
        %v5649 = vadd.f32 %v5521, %v5585
        %v5650 = vadd.f32 %v5522, %v5586
        %v5651 = vadd.f32 %v5523, %v5587
        %v5652 = vadd.f32 %v5524, %v5588
        %v5653 = vadd.f32 %v5525, %v5589
        %v5654 = vadd.f32 %v5526, %v5590
        %v5655 = vadd.f32 %v5527, %v5591
        %v5656 = vadd.f32 %v5528, %v5592
        %v5657 = vadd.f32 %v5529, %v5593
        %v5658 = vadd.f32 %v5530, %v5594
        %v5659 = vadd.f32 %v5531, %v5595
        %v5660 = vadd.f32 %v5532, %v5596
        %v5661 = vadd.f32 %v5533, %v5597
        %v5662 = vadd.f32 %v5534, %v5598
        %v5663 = vadd.f32 %v5535, %v5599
        %v5664 = vadd.f32 %v5536, %v5600
        %v5665 = vadd.f32 %v5537, %v5601
        %v5666 = vadd.f32 %v5538, %v5602
        %v5667 = vadd.f32 %v5539, %v5603
        %v5668 = vadd.f32 %v5540, %v5604
        %v5669 = vadd.f32 %v5541, %v5605
        %v5670 = vadd.f32 %v5542, %v5606
        %v5671 = vadd.f32 %v5543, %v5607
        %v5672 = vadd.f32 %v5544, %v5608
        %v5673 = vadd.f32 %v5545, %v5609
        %v5674 = vadd.f32 %v5546, %v5610
        %v5675 = vadd.f32 %v5547, %v5611
        %v5676 = vadd.f32 %v5548, %v5612
        %v5677 = vadd.f32 %v5549, %v5613
        %v5678 = vadd.f32 %v5550, %v5614
        %v5679 = vadd.f32 %v5551, %v5615
        %v5680 = vadd.f32 %v5552, %v5616
        %v5681 = vadd.f32 %v5553, %v5617
        %v5682 = vadd.f32 %v5554, %v5618
        %v5683 = vadd.f32 %v5555, %v5619
        %v5684 = vadd.f32 %v5556, %v5620
        %v5685 = vadd.f32 %v5557, %v5621
        %v5686 = vadd.f32 %v5558, %v5622
        %v5687 = vadd.f32 %v5559, %v5623
        %v5688 = vadd.f32 %v5560, %v5624
        %v5689 = vadd.f32 %v5561, %v5625
        %v5690 = vadd.f32 %v5562, %v5626
        %v5691 = vadd.f32 %v5563, %v5627
        %v5692 = vadd.f32 %v5564, %v5628
        %v5693 = vadd.f32 %v5565, %v5629
        %v5694 = vadd.f32 %v5566, %v5630
        %v5695 = vadd.f32 %v5567, %v5631
        %v5696 = vadd.f32 %v5568, %v5632
        %v5697 = vadd.f32 %v5569, %v5633
        %v5698 = vadd.f32 %v5570, %v5634
        %v5699 = vadd.f32 %v5571, %v5635
        %v5700 = vadd.f32 %v5572, %v5636
        %v5701 = vadd.f32 %v5573, %v5637
        %v5702 = vadd.f32 %v5574, %v5638
        %v5703 = vadd.f32 %v5575, %v5639
        %v5704 = vadd.f32 %v5576, %v5640
        %v5705 = vadd.f32 %v5577, %v5641
        %v5706 = vadd.f32 %v5578, %v5642
        %v5707 = vadd.f32 %v5579, %v5643
        %v5708 = vadd.f32 %v5580, %v5644
        %v5709 = vmax.f32 %v5645, 0.0
        %v5710 = vmax.f32 %v5646, 0.0
        %v5711 = vmax.f32 %v5647, 0.0
        %v5712 = vmax.f32 %v5648, 0.0
        %v5713 = vmax.f32 %v5649, 0.0
        %v5714 = vmax.f32 %v5650, 0.0
        %v5715 = vmax.f32 %v5651, 0.0
        %v5716 = vmax.f32 %v5652, 0.0
        %v5717 = vmax.f32 %v5653, 0.0
        %v5718 = vmax.f32 %v5654, 0.0
        %v5719 = vmax.f32 %v5655, 0.0
        %v5720 = vmax.f32 %v5656, 0.0
        %v5721 = vmax.f32 %v5657, 0.0
        %v5722 = vmax.f32 %v5658, 0.0
        %v5723 = vmax.f32 %v5659, 0.0
        %v5724 = vmax.f32 %v5660, 0.0
        %v5725 = vmax.f32 %v5661, 0.0
        %v5726 = vmax.f32 %v5662, 0.0
        %v5727 = vmax.f32 %v5663, 0.0
        %v5728 = vmax.f32 %v5664, 0.0
        %v5729 = vmax.f32 %v5665, 0.0
        %v5730 = vmax.f32 %v5666, 0.0
        %v5731 = vmax.f32 %v5667, 0.0
        %v5732 = vmax.f32 %v5668, 0.0
        %v5733 = vmax.f32 %v5669, 0.0
        %v5734 = vmax.f32 %v5670, 0.0
        %v5735 = vmax.f32 %v5671, 0.0
        %v5736 = vmax.f32 %v5672, 0.0
        %v5737 = vmax.f32 %v5673, 0.0
        %v5738 = vmax.f32 %v5674, 0.0
        %v5739 = vmax.f32 %v5675, 0.0
        %v5740 = vmax.f32 %v5676, 0.0
        %v5741 = vmax.f32 %v5677, 0.0
        %v5742 = vmax.f32 %v5678, 0.0
        %v5743 = vmax.f32 %v5679, 0.0
        %v5744 = vmax.f32 %v5680, 0.0
        %v5745 = vmax.f32 %v5681, 0.0
        %v5746 = vmax.f32 %v5682, 0.0
        %v5747 = vmax.f32 %v5683, 0.0
        %v5748 = vmax.f32 %v5684, 0.0
        %v5749 = vmax.f32 %v5685, 0.0
        %v5750 = vmax.f32 %v5686, 0.0
        %v5751 = vmax.f32 %v5687, 0.0
        %v5752 = vmax.f32 %v5688, 0.0
        %v5753 = vmax.f32 %v5689, 0.0
        %v5754 = vmax.f32 %v5690, 0.0
        %v5755 = vmax.f32 %v5691, 0.0
        %v5756 = vmax.f32 %v5692, 0.0
        %v5757 = vmax.f32 %v5693, 0.0
        %v5758 = vmax.f32 %v5694, 0.0
        %v5759 = vmax.f32 %v5695, 0.0
        %v5760 = vmax.f32 %v5696, 0.0
        %v5761 = vmax.f32 %v5697, 0.0
        %v5762 = vmax.f32 %v5698, 0.0
        %v5763 = vmax.f32 %v5699, 0.0
        %v5764 = vmax.f32 %v5700, 0.0
        %v5765 = vmax.f32 %v5701, 0.0
        %v5766 = vmax.f32 %v5702, 0.0
        %v5767 = vmax.f32 %v5703, 0.0
        %v5768 = vmax.f32 %v5704, 0.0
        %v5769 = vmax.f32 %v5705, 0.0
        %v5770 = vmax.f32 %v5706, 0.0
        %v5771 = vmax.f32 %v5707, 0.0
        %v5772 = vmax.f32 %v5708, 0.0
        %5773 = vst [vmem:[%s352] sm:$0xff] %v5709
        %5774 = vst [vmem:[%s352 + $0x8] sm:$0xff] %v5710
        %5775 = vst [vmem:[%s352 + $0x10] sm:$0xff] %v5711
        %5776 = vst [vmem:[%s352 + $0x18] sm:$0xff] %v5712
        %5777 = vst [vmem:[%s352 + $0x20] sm:$0xff] %v5713
        %5778 = vst [vmem:[%s352 + $0x28] sm:$0xff] %v5714
        %5779 = vst [vmem:[%s352 + $0x30] sm:$0xff] %v5715
        %5780 = vst [vmem:[%s352 + $0x38] sm:$0xff] %v5716
        %5781 = vst [vmem:[%s352 + $0x40] sm:$0xff] %v5717
        %5782 = vst [vmem:[%s352 + $0x48] sm:$0xff] %v5718
        %5783 = vst [vmem:[%s352 + $0x50] sm:$0xff] %v5719
        %5784 = vst [vmem:[%s352 + $0x58] sm:$0xff] %v5720
        %5785 = vst [vmem:[%s352 + $0x60] sm:$0xff] %v5721
        %5786 = vst [vmem:[%s352 + $0x68] sm:$0xff] %v5722
        %5787 = vst [vmem:[%s352 + $0x70] sm:$0xff] %v5723
        %5788 = vst [vmem:[%s352 + $0x78] sm:$0xff] %v5724
        %5789 = vst [vmem:[%s352 + $0x80] sm:$0xff] %v5725
        %5790 = vst [vmem:[%s352 + $0x88] sm:$0xff] %v5726
        %5791 = vst [vmem:[%s352 + $0x90] sm:$0xff] %v5727
        %5792 = vst [vmem:[%s352 + $0x98] sm:$0xff] %v5728
        %5793 = vst [vmem:[%s352 + $0xa0] sm:$0xff] %v5729
        %5794 = vst [vmem:[%s352 + $0xa8] sm:$0xff] %v5730
        %5795 = vst [vmem:[%s352 + $0xb0] sm:$0xff] %v5731
        %5796 = vst [vmem:[%s352 + $0xb8] sm:$0xff] %v5732
        %5797 = vst [vmem:[%s352 + $0xc0] sm:$0xff] %v5733
        %5798 = vst [vmem:[%s352 + $0xc8] sm:$0xff] %v5734
        %5799 = vst [vmem:[%s352 + $0xd0] sm:$0xff] %v5735
        %5800 = vst [vmem:[%s352 + $0xd8] sm:$0xff] %v5736
        %5801 = vst [vmem:[%s352 + $0xe0] sm:$0xff] %v5737
        %5802 = vst [vmem:[%s352 + $0xe8] sm:$0xff] %v5738
        %5803 = vst [vmem:[%s352 + $0xf0] sm:$0xff] %v5739
        %5804 = vst [vmem:[%s352 + $0xf8] sm:$0xff] %v5740
        %5805 = vst [vmem:[%s352 + $0x100] sm:$0xff] %v5741
        %5806 = vst [vmem:[%s352 + $0x108] sm:$0xff] %v5742
        %5807 = vst [vmem:[%s352 + $0x110] sm:$0xff] %v5743
        %5808 = vst [vmem:[%s352 + $0x118] sm:$0xff] %v5744
        %5809 = vst [vmem:[%s352 + $0x120] sm:$0xff] %v5745
        %5810 = vst [vmem:[%s352 + $0x128] sm:$0xff] %v5746
        %5811 = vst [vmem:[%s352 + $0x130] sm:$0xff] %v5747
        %5812 = vst [vmem:[%s352 + $0x138] sm:$0xff] %v5748
        %5813 = vst [vmem:[%s352 + $0x140] sm:$0xff] %v5749
        %5814 = vst [vmem:[%s352 + $0x148] sm:$0xff] %v5750
        %5815 = vst [vmem:[%s352 + $0x150] sm:$0xff] %v5751
        %5816 = vst [vmem:[%s352 + $0x158] sm:$0xff] %v5752
        %5817 = vst [vmem:[%s352 + $0x160] sm:$0xff] %v5753
        %5818 = vst [vmem:[%s352 + $0x168] sm:$0xff] %v5754
        %5819 = vst [vmem:[%s352 + $0x170] sm:$0xff] %v5755
        %5820 = vst [vmem:[%s352 + $0x178] sm:$0xff] %v5756
        %5821 = vst [vmem:[%s352 + $0x180] sm:$0xff] %v5757
        %5822 = vst [vmem:[%s352 + $0x188] sm:$0xff] %v5758
        %5823 = vst [vmem:[%s352 + $0x190] sm:$0xff] %v5759
        %5824 = vst [vmem:[%s352 + $0x198] sm:$0xff] %v5760
        %5825 = vst [vmem:[%s352 + $0x1a0] sm:$0xff] %v5761
        %5826 = vst [vmem:[%s352 + $0x1a8] sm:$0xff] %v5762
        %5827 = vst [vmem:[%s352 + $0x1b0] sm:$0xff] %v5763
        %5828 = vst [vmem:[%s352 + $0x1b8] sm:$0xff] %v5764
        %5829 = vst [vmem:[%s352 + $0x1c0] sm:$0xff] %v5765
        %5830 = vst [vmem:[%s352 + $0x1c8] sm:$0xff] %v5766
        %5831 = vst [vmem:[%s352 + $0x1d0] sm:$0xff] %v5767
        %5832 = vst [vmem:[%s352 + $0x1d8] sm:$0xff] %v5768
        %5833 = vst [vmem:[%s352 + $0x1e0] sm:$0xff] %v5769
        %5834 = vst [vmem:[%s352 + $0x1e8] sm:$0xff] %v5770
        %5835 = vst [vmem:[%s352 + $0x1f0] sm:$0xff] %v5771
        %5836 = vst [vmem:[%s352 + $0x1f8] sm:$0xff] %v5772
        %s5837 = sand.u32 %s247, 1
        %s5838 = scalar_lea.sflag [#allocation5], %s5837
        %s5839 = sand.u32 %s247, 1
        %s5840 = smul.addr %s5839, 512
        %s5841 = scalar_lea.vmem [#allocation4], %s5840
        // Predicated region
        $region61: #{tpu_custom_call.1} parent=59 // pred_check
          %p5842 = pneg %p257
        $region62: #{tpu_custom_call.1} parent=59 // pred_check_branch
          %5844 = sbr.rel (%p5842) target = $region64
        $region63: #{tpu_custom_call.1} parent=59 // pred_region
          %s5846 = ssub.s32 8192, 8192
          %5847 = vsyncadd %s5838, %s5846
          %s5848 = smul.addr %s24, 64
          %s5849 = smul.addr %s5848, 128
          %s5850 = scalar_lea.hbm %s10, %s5849
          %s5851 = sshll.u32 %s5841, 4
          %s5852 = int_to_ptr.vmem [resolvable:$true] %s5851
          %5857 = dma.vmem_to_hbm [thread:$0]  %s5852, 8192, %s5850, %s5838, 256, 256, 16
        $region64: #{tpu_custom_call.1} parent=59 // pred_fallthru
          _
      $region60: #{tpu_custom_call.1} parent=5 // pred_fallthru
        _
      %p5858 = scmp.le.s32.totalorder 2, %s19
      // Predicated region
      $region65: #{tpu_custom_call.1} parent=5 // pred_check
        %p5859 = pneg %p5858
      $region66: #{tpu_custom_call.1} parent=5 // pred_check_branch
        %5861 = sbr.rel (%p5859) target = $region68
      $region67: #{tpu_custom_call.1} parent=5 // pred_region
        %s5862 = ssub.s32 %s19, 2
        // Predicated region
        $region69: #{tpu_custom_call.1} parent=67 // pred_check
          %p5863 = pneg %p263
        $region70: #{tpu_custom_call.1} parent=67 // pred_check_branch
          %5865 = sbr.rel (%p5863) target = $region72
        $region71: #{tpu_custom_call.1} parent=67 // pred_region
          %s5866 = sand.u32 %s248, 1
          %s5867 = scalar_lea.sflag [#allocation5], %s5866
          %s5868 = sand.u32 %s248, 1
          %s5869 = smul.addr %s5868, 512
          %s5870 = scalar_lea.vmem [#allocation4], %s5869
          %5871 = dma.done %s5867, 8192
        $region72: #{tpu_custom_call.1} parent=67 // pred_fallthru
          _
      $region68: #{tpu_custom_call.1} parent=5 // pred_fallthru
        _
    $region6: #{tpu_custom_call.1} parent=1 // loop_footer
      %s23 = sadd.s32 1, %s19
    $region7: #{tpu_custom_call.1} parent=1 // loop_footer_branch
      %18 = sbr.rel target = $region3
    $region8: #{tpu_custom_call.1} parent=1 // loop_exit
      _
    %5872 = vsyncpa [#allocation5], 1
    %s5873 = scalar_lea.sflag [#allocation5], 1
    %5874 = vsyncpa %s5873, 1

</llo_original>
